<compile_context>
chip_gen: v5e
topology: v5e:2x2
jax: 0.10.0
libtpu: 0.0.40
codegen_flags: <defaults>
</compile_context>

<pallas_src>
import functools

import jax
import jax.numpy as jnp
from jax.experimental import pallas as pl
from jax.experimental.pallas import tpu as pltpu

_EPS = 1e-5


# ------------------------------------------------------------------ kernel --
def _resblock_kernel(x_ref, w1_ref, b1_ref, w2_ref, b2_ref, o_ref, t_ref, *,
                     H, W, C):
    """One batch image per grid step.

    x_ref : (1, H+2, W+2, C) f32   zero-padded input (halo == conv padding)
    wN_ref: (9, C, C)        bf16  folded conv+BN weights, tap-major (di*3+dj)
    bN_ref: (1, C)           f32   folded bias (b*s + beta - mean*s)
    o_ref : (1, H, W, C)     f32   output
    t_ref : (H+2, W+2, C)    bf16  VMEM scratch for the padded intermediate
    """
    HW = H * W

    # ---- conv1 (+ folded BN1) + ReLU -------------------------------------
    acc = jnp.zeros((HW, C), jnp.float32)
    for di in range(3):
        for dj in range(3):
            patch = x_ref[0, di:di + H, dj:dj + W, :].reshape(HW, C)
            acc = acc + jnp.dot(patch.astype(jnp.bfloat16),
                                w1_ref[di * 3 + dj],
                                preferred_element_type=jnp.float32)
    t = jnp.maximum(acc + b1_ref[...], 0.0)

    # Stage the intermediate activation in VMEM with a zero halo; the zero
    # border plays the role of conv2's zero padding.
    t_ref[...] = jnp.zeros_like(t_ref)
    t_ref[1:1 + H, 1:1 + W, :] = t.reshape(H, W, C).astype(t_ref.dtype)

    # ---- conv2 (+ folded BN2) + residual add (no post-add activation) ----
    acc2 = jnp.zeros((HW, C), jnp.float32)
    for di in range(3):
        for dj in range(3):
            patch = t_ref[di:di + H, dj:dj + W, :].reshape(HW, C)
            acc2 = acc2 + jnp.dot(patch, w2_ref[di * 3 + dj],
                                  preferred_element_type=jnp.float32)
    res = acc2 + b2_ref[...] + x_ref[0, 1:1 + H, 1:1 + W, :].reshape(HW, C)
    o_ref[0] = res.reshape(H, W, C).astype(o_ref.dtype)


# --------------------------------------------------------- trace-time glue --
def _fold_conv_bn(conv_p, bn_p):
    """Fold eval-mode BN into conv weights/bias; weights tap-major bf16."""
    w, b = conv_p['w'], conv_p['b']                 # (cout, cin, 3, 3), (cout,)
    cout, cin = w.shape[0], w.shape[1]
    s = bn_p['gamma'] / jnp.sqrt(bn_p['var'] + _EPS)            # (cout,)
    w_taps = jnp.transpose(w, (2, 3, 1, 0)).reshape(9, cin, cout)
    w_eff = (w_taps * s[None, None, :]).astype(jnp.bfloat16)     # (9, cin, cout)
    b_eff = (b * s + bn_p['beta'] - bn_p['mean'] * s)
    b_eff = b_eff.reshape(1, cout).astype(jnp.float32)
    return w_eff, b_eff


def resblock_forward(params, x_nchw):
    """ResBlock: x -> conv3x3 -> BN -> ReLU -> conv3x3 -> BN -> (+x)."""
    w1, b1 = _fold_conv_bn(params['conv1'], params['bn1'])
    w2, b2 = _fold_conv_bn(params['conv2'], params['bn2'])

    x = jnp.transpose(x_nchw, (0, 2, 3, 1)).astype(jnp.float32)   # NHWC
    N, H, W, C = x.shape
    xp = jnp.pad(x, ((0, 0), (1, 1), (1, 1), (0, 0)))             # zero halo

    kernel = functools.partial(_resblock_kernel, H=H, W=W, C=C)
    out = pl.pallas_call(
        kernel,
        out_shape=jax.ShapeDtypeStruct((N, H, W, C), jnp.float32),
        grid=(N,),
        in_specs=[
            pl.BlockSpec((1, H + 2, W + 2, C), lambda n: (n, 0, 0, 0)),  # x
            pl.BlockSpec((9, C, C), lambda n: (0, 0, 0)),                # w1
            pl.BlockSpec((1, C), lambda n: (0, 0)),                      # b1
            pl.BlockSpec((9, C, C), lambda n: (0, 0, 0)),                # w2
            pl.BlockSpec((1, C), lambda n: (0, 0)),                      # b2
        ],
        out_specs=pl.BlockSpec((1, H, W, C), lambda n: (n, 0, 0, 0)),
        scratch_shapes=[pltpu.VMEM((H + 2, W + 2, C), jnp.bfloat16)],
        compiler_params=pltpu.CompilerParams(
            dimension_semantics=("parallel",)),
    )(xp, w1, b1, w2, b2)
    return jnp.transpose(out, (0, 3, 1, 2))                      # back to NCHW


# --------------------------------------------------------------- reference --
def resblock_ref(params, x_nchw):
    def conv2d(x, p):
        y = jax.lax.conv_general_dilated(
            x, p['w'], window_strides=(1, 1), padding=((1, 1), (1, 1)),
            dimension_numbers=('NCHW', 'OIHW', 'NCHW'))
        return y + p['b'][None, :, None, None]

    def bn(x, p):
        s = p['gamma'] / jnp.sqrt(p['var'] + _EPS)
        sh = p['beta'] - p['mean'] * s
        return x * s[None, :, None, None] + sh[None, :, None, None]

    t = jax.nn.relu(bn(conv2d(x_nchw, params['conv1']), params['bn1']))
    r = bn(conv2d(t, params['conv2']), params['bn2'])
    return r + x_nchw


# ------------------------------------------------------------------ params --
def init_params(key, n_feats, k=3):
    keys = jax.random.split(key, 4)

    def conv_p(kk):
        w = jax.random.normal(kk, (n_feats, n_feats, k, k), jnp.float32) * 0.05
        b = jax.random.normal(jax.random.fold_in(kk, 1), (n_feats,),
                              jnp.float32) * 0.05
        return {'w': w, 'b': b}

    def bn_p(kk):
        return {
            'gamma': 1.0 + 0.1 * jax.random.normal(kk, (n_feats,), jnp.float32),
            'beta': 0.1 * jax.random.normal(jax.random.fold_in(kk, 1),
                                            (n_feats,), jnp.float32),
            'mean': 0.1 * jax.random.normal(jax.random.fold_in(kk, 2),
                                            (n_feats,), jnp.float32),
            'var': jnp.ones((n_feats,), jnp.float32),
        }

    return {'conv1': conv_p(keys[0]), 'bn1': bn_p(keys[1]),
            'conv2': conv_p(keys[2]), 'bn2': bn_p(keys[3])}


# -------------------------------------------------------------------- main --
if __name__ == "__main__":
    key = jax.random.PRNGKey(0)
    kp, kx = jax.random.split(key)

    # n_feats=128 -> lane-dense channel dim; H, W multiples of 8 for cheap
    # in-kernel (H, W, C) <-> (H*W, C) reshapes.
    n_feats, N, H, W = 128, 2, 16, 16
    params = init_params(kp, n_feats)
    x = jax.random.normal(kx, (N, n_feats, H, W), jnp.float32)

    out = resblock_forward(params, x)
    jax.block_until_ready(out)
    assert out.shape == (N, n_feats, H, W), out.shape
    assert bool(jnp.all(jnp.isfinite(out)))

    ref = resblock_ref(params, x)
    max_err = float(jnp.max(jnp.abs(out - ref)))
    assert max_err < 0.35, f"max abs error vs f32 reference: {max_err}"

    print("KERNEL_OK")
</pallas_src>

<mosaic_0001>
module attributes {stable_mosaic.version = 11 : i64} {
  func.func @_resblock_kernel(%arg0: i32, %arg1: memref<1x18x18x128xf32, #tpu.memory_space<vmem>>, %arg2: memref<9x128x128xbf16, #tpu.memory_space<vmem>>, %arg3: memref<1x128xf32, #tpu.memory_space<vmem>>, %arg4: memref<9x128x128xbf16, #tpu.memory_space<vmem>>, %arg5: memref<1x128xf32, #tpu.memory_space<vmem>>, %arg6: memref<1x16x16x128xf32, #tpu.memory_space<vmem>>, %arg7: memref<18x18x128xbf16, #tpu.memory_space<vmem>>) attributes {dimension_semantics = [#tpu.dimension_semantics<parallel>], iteration_bounds = array<i64: 2>, scalar_prefetch = 0 : i64, scratch_operands = 1 : i64, tpu.core_type = #tpu.core_type<tc>, window_params = [{transform_indices = @transform_0, window_bounds = array<i64: 1, 18, 18, 128>}, {pipeline_mode = #tpu.pipeline_mode<synchronous>, transform_indices = @transform_1, window_bounds = array<i64: 9, 128, 128>}, {pipeline_mode = #tpu.pipeline_mode<synchronous>, transform_indices = @transform_2, window_bounds = array<i64: 1, 128>}, {pipeline_mode = #tpu.pipeline_mode<synchronous>, transform_indices = @transform_3, window_bounds = array<i64: 9, 128, 128>}, {pipeline_mode = #tpu.pipeline_mode<synchronous>, transform_indices = @transform_4, window_bounds = array<i64: 1, 128>}, {transform_indices = @transform_5, window_bounds = array<i64: 1, 16, 16, 128>}]} {
    %cst = arith.constant 0.000000e+00 : f32
    %0 = vector.broadcast %cst : f32 to vector<256x128xf32>
    %c0 = arith.constant 0 : index
    %c0_0 = arith.constant 0 : index
    %c0_1 = arith.constant 0 : index
    %c0_2 = arith.constant 0 : index
    %1 = vector.load %arg1[%c0, %c0_0, %c0_1, %c0_2] : memref<1x18x18x128xf32, #tpu.memory_space<vmem>>, vector<1x16x16x128xf32>
    %2 = vector.shape_cast %1 : vector<1x16x16x128xf32> to vector<16x16x128xf32>
    %3 = vector.shape_cast %2 : vector<16x16x128xf32> to vector<256x128xf32>
    %4 = arith.truncf %3 : vector<256x128xf32> to vector<256x128xbf16>
    %c0_3 = arith.constant 0 : index
    %c0_4 = arith.constant 0 : index
    %c0_5 = arith.constant 0 : index
    %5 = vector.load %arg2[%c0_3, %c0_4, %c0_5] : memref<9x128x128xbf16, #tpu.memory_space<vmem>>, vector<1x128x128xbf16>
    %6 = vector.shape_cast %5 : vector<1x128x128xbf16> to vector<128x128xbf16>
    %cst_6 = arith.constant dense<0.000000e+00> : vector<256x128xf32>
    %7 = tpu.matmul %4, %6, %cst_6 {dimension_numbers = #tpu.dot_dimension_numbers<[1], [0], [0], [1], [0, 0, 1, 1], [], []>} : vector<256x128xbf16>, vector<128x128xbf16>, vector<256x128xf32> -> vector<256x128xf32>
    %8 = arith.addf %0, %7 : vector<256x128xf32>
    %c0_7 = arith.constant 0 : index
    %c0_8 = arith.constant 0 : index
    %c1 = arith.constant 1 : index
    %c0_9 = arith.constant 0 : index
    %9 = vector.load %arg1[%c0_7, %c0_8, %c1, %c0_9] : memref<1x18x18x128xf32, #tpu.memory_space<vmem>>, vector<1x16x16x128xf32>
    %10 = vector.shape_cast %9 : vector<1x16x16x128xf32> to vector<16x16x128xf32>
    %11 = vector.shape_cast %10 : vector<16x16x128xf32> to vector<256x128xf32>
    %12 = arith.truncf %11 : vector<256x128xf32> to vector<256x128xbf16>
    %c1_10 = arith.constant 1 : index
    %c0_11 = arith.constant 0 : index
    %c0_12 = arith.constant 0 : index
    %13 = vector.load %arg2[%c1_10, %c0_11, %c0_12] : memref<9x128x128xbf16, #tpu.memory_space<vmem>>, vector<1x128x128xbf16>
    %14 = vector.shape_cast %13 : vector<1x128x128xbf16> to vector<128x128xbf16>
    %cst_13 = arith.constant dense<0.000000e+00> : vector<256x128xf32>
    %15 = tpu.matmul %12, %14, %cst_13 {dimension_numbers = #tpu.dot_dimension_numbers<[1], [0], [0], [1], [0, 0, 1, 1], [], []>} : vector<256x128xbf16>, vector<128x128xbf16>, vector<256x128xf32> -> vector<256x128xf32>
    %16 = arith.addf %8, %15 : vector<256x128xf32>
    %c0_14 = arith.constant 0 : index
    %c0_15 = arith.constant 0 : index
    %c2 = arith.constant 2 : index
    %c0_16 = arith.constant 0 : index
    %17 = vector.load %arg1[%c0_14, %c0_15, %c2, %c0_16] : memref<1x18x18x128xf32, #tpu.memory_space<vmem>>, vector<1x16x16x128xf32>
    %18 = vector.shape_cast %17 : vector<1x16x16x128xf32> to vector<16x16x128xf32>
    %19 = vector.shape_cast %18 : vector<16x16x128xf32> to vector<256x128xf32>
    %20 = arith.truncf %19 : vector<256x128xf32> to vector<256x128xbf16>
    %c2_17 = arith.constant 2 : index
    %c0_18 = arith.constant 0 : index
    %c0_19 = arith.constant 0 : index
    %21 = vector.load %arg2[%c2_17, %c0_18, %c0_19] : memref<9x128x128xbf16, #tpu.memory_space<vmem>>, vector<1x128x128xbf16>
    %22 = vector.shape_cast %21 : vector<1x128x128xbf16> to vector<128x128xbf16>
    %cst_20 = arith.constant dense<0.000000e+00> : vector<256x128xf32>
    %23 = tpu.matmul %20, %22, %cst_20 {dimension_numbers = #tpu.dot_dimension_numbers<[1], [0], [0], [1], [0, 0, 1, 1], [], []>} : vector<256x128xbf16>, vector<128x128xbf16>, vector<256x128xf32> -> vector<256x128xf32>
    %24 = arith.addf %16, %23 : vector<256x128xf32>
    %c0_21 = arith.constant 0 : index
    %c1_22 = arith.constant 1 : index
    %c0_23 = arith.constant 0 : index
    %c0_24 = arith.constant 0 : index
    %25 = vector.load %arg1[%c0_21, %c1_22, %c0_23, %c0_24] : memref<1x18x18x128xf32, #tpu.memory_space<vmem>>, vector<1x16x16x128xf32>
    %26 = vector.shape_cast %25 : vector<1x16x16x128xf32> to vector<16x16x128xf32>
    %27 = vector.shape_cast %26 : vector<16x16x128xf32> to vector<256x128xf32>
    %28 = arith.truncf %27 : vector<256x128xf32> to vector<256x128xbf16>
    %c3 = arith.constant 3 : index
    %c0_25 = arith.constant 0 : index
    %c0_26 = arith.constant 0 : index
    %29 = vector.load %arg2[%c3, %c0_25, %c0_26] : memref<9x128x128xbf16, #tpu.memory_space<vmem>>, vector<1x128x128xbf16>
    %30 = vector.shape_cast %29 : vector<1x128x128xbf16> to vector<128x128xbf16>
    %cst_27 = arith.constant dense<0.000000e+00> : vector<256x128xf32>
    %31 = tpu.matmul %28, %30, %cst_27 {dimension_numbers = #tpu.dot_dimension_numbers<[1], [0], [0], [1], [0, 0, 1, 1], [], []>} : vector<256x128xbf16>, vector<128x128xbf16>, vector<256x128xf32> -> vector<256x128xf32>
    %32 = arith.addf %24, %31 : vector<256x128xf32>
    %c0_28 = arith.constant 0 : index
    %c1_29 = arith.constant 1 : index
    %c1_30 = arith.constant 1 : index
    %c0_31 = arith.constant 0 : index
    %33 = vector.load %arg1[%c0_28, %c1_29, %c1_30, %c0_31] : memref<1x18x18x128xf32, #tpu.memory_space<vmem>>, vector<1x16x16x128xf32>
    %34 = vector.shape_cast %33 : vector<1x16x16x128xf32> to vector<16x16x128xf32>
    %35 = vector.shape_cast %34 : vector<16x16x128xf32> to vector<256x128xf32>
    %36 = arith.truncf %35 : vector<256x128xf32> to vector<256x128xbf16>
    %c4 = arith.constant 4 : index
    %c0_32 = arith.constant 0 : index
    %c0_33 = arith.constant 0 : index
    %37 = vector.load %arg2[%c4, %c0_32, %c0_33] : memref<9x128x128xbf16, #tpu.memory_space<vmem>>, vector<1x128x128xbf16>
    %38 = vector.shape_cast %37 : vector<1x128x128xbf16> to vector<128x128xbf16>
    %cst_34 = arith.constant dense<0.000000e+00> : vector<256x128xf32>
    %39 = tpu.matmul %36, %38, %cst_34 {dimension_numbers = #tpu.dot_dimension_numbers<[1], [0], [0], [1], [0, 0, 1, 1], [], []>} : vector<256x128xbf16>, vector<128x128xbf16>, vector<256x128xf32> -> vector<256x128xf32>
    %40 = arith.addf %32, %39 : vector<256x128xf32>
    %c0_35 = arith.constant 0 : index
    %c1_36 = arith.constant 1 : index
    %c2_37 = arith.constant 2 : index
    %c0_38 = arith.constant 0 : index
    %41 = vector.load %arg1[%c0_35, %c1_36, %c2_37, %c0_38] : memref<1x18x18x128xf32, #tpu.memory_space<vmem>>, vector<1x16x16x128xf32>
    %42 = vector.shape_cast %41 : vector<1x16x16x128xf32> to vector<16x16x128xf32>
    %43 = vector.shape_cast %42 : vector<16x16x128xf32> to vector<256x128xf32>
    %44 = arith.truncf %43 : vector<256x128xf32> to vector<256x128xbf16>
    %c5 = arith.constant 5 : index
    %c0_39 = arith.constant 0 : index
    %c0_40 = arith.constant 0 : index
    %45 = vector.load %arg2[%c5, %c0_39, %c0_40] : memref<9x128x128xbf16, #tpu.memory_space<vmem>>, vector<1x128x128xbf16>
    %46 = vector.shape_cast %45 : vector<1x128x128xbf16> to vector<128x128xbf16>
    %cst_41 = arith.constant dense<0.000000e+00> : vector<256x128xf32>
    %47 = tpu.matmul %44, %46, %cst_41 {dimension_numbers = #tpu.dot_dimension_numbers<[1], [0], [0], [1], [0, 0, 1, 1], [], []>} : vector<256x128xbf16>, vector<128x128xbf16>, vector<256x128xf32> -> vector<256x128xf32>
    %48 = arith.addf %40, %47 : vector<256x128xf32>
    %c0_42 = arith.constant 0 : index
    %c2_43 = arith.constant 2 : index
    %c0_44 = arith.constant 0 : index
    %c0_45 = arith.constant 0 : index
    %49 = vector.load %arg1[%c0_42, %c2_43, %c0_44, %c0_45] : memref<1x18x18x128xf32, #tpu.memory_space<vmem>>, vector<1x16x16x128xf32>
    %50 = vector.shape_cast %49 : vector<1x16x16x128xf32> to vector<16x16x128xf32>
    %51 = vector.shape_cast %50 : vector<16x16x128xf32> to vector<256x128xf32>
    %52 = arith.truncf %51 : vector<256x128xf32> to vector<256x128xbf16>
    %c6 = arith.constant 6 : index
    %c0_46 = arith.constant 0 : index
    %c0_47 = arith.constant 0 : index
    %53 = vector.load %arg2[%c6, %c0_46, %c0_47] : memref<9x128x128xbf16, #tpu.memory_space<vmem>>, vector<1x128x128xbf16>
    %54 = vector.shape_cast %53 : vector<1x128x128xbf16> to vector<128x128xbf16>
    %cst_48 = arith.constant dense<0.000000e+00> : vector<256x128xf32>
    %55 = tpu.matmul %52, %54, %cst_48 {dimension_numbers = #tpu.dot_dimension_numbers<[1], [0], [0], [1], [0, 0, 1, 1], [], []>} : vector<256x128xbf16>, vector<128x128xbf16>, vector<256x128xf32> -> vector<256x128xf32>
    %56 = arith.addf %48, %55 : vector<256x128xf32>
    %c0_49 = arith.constant 0 : index
    %c2_50 = arith.constant 2 : index
    %c1_51 = arith.constant 1 : index
    %c0_52 = arith.constant 0 : index
    %57 = vector.load %arg1[%c0_49, %c2_50, %c1_51, %c0_52] : memref<1x18x18x128xf32, #tpu.memory_space<vmem>>, vector<1x16x16x128xf32>
    %58 = vector.shape_cast %57 : vector<1x16x16x128xf32> to vector<16x16x128xf32>
    %59 = vector.shape_cast %58 : vector<16x16x128xf32> to vector<256x128xf32>
    %60 = arith.truncf %59 : vector<256x128xf32> to vector<256x128xbf16>
    %c7 = arith.constant 7 : index
    %c0_53 = arith.constant 0 : index
    %c0_54 = arith.constant 0 : index
    %61 = vector.load %arg2[%c7, %c0_53, %c0_54] : memref<9x128x128xbf16, #tpu.memory_space<vmem>>, vector<1x128x128xbf16>
    %62 = vector.shape_cast %61 : vector<1x128x128xbf16> to vector<128x128xbf16>
    %cst_55 = arith.constant dense<0.000000e+00> : vector<256x128xf32>
    %63 = tpu.matmul %60, %62, %cst_55 {dimension_numbers = #tpu.dot_dimension_numbers<[1], [0], [0], [1], [0, 0, 1, 1], [], []>} : vector<256x128xbf16>, vector<128x128xbf16>, vector<256x128xf32> -> vector<256x128xf32>
    %64 = arith.addf %56, %63 : vector<256x128xf32>
    %c0_56 = arith.constant 0 : index
    %c2_57 = arith.constant 2 : index
    %c2_58 = arith.constant 2 : index
    %c0_59 = arith.constant 0 : index
    %65 = vector.load %arg1[%c0_56, %c2_57, %c2_58, %c0_59] : memref<1x18x18x128xf32, #tpu.memory_space<vmem>>, vector<1x16x16x128xf32>
    %66 = vector.shape_cast %65 : vector<1x16x16x128xf32> to vector<16x16x128xf32>
    %67 = vector.shape_cast %66 : vector<16x16x128xf32> to vector<256x128xf32>
    %68 = arith.truncf %67 : vector<256x128xf32> to vector<256x128xbf16>
    %c8 = arith.constant 8 : index
    %c0_60 = arith.constant 0 : index
    %c0_61 = arith.constant 0 : index
    %69 = vector.load %arg2[%c8, %c0_60, %c0_61] : memref<9x128x128xbf16, #tpu.memory_space<vmem>>, vector<1x128x128xbf16>
    %70 = vector.shape_cast %69 : vector<1x128x128xbf16> to vector<128x128xbf16>
    %cst_62 = arith.constant dense<0.000000e+00> : vector<256x128xf32>
    %71 = tpu.matmul %68, %70, %cst_62 {dimension_numbers = #tpu.dot_dimension_numbers<[1], [0], [0], [1], [0, 0, 1, 1], [], []>} : vector<256x128xbf16>, vector<128x128xbf16>, vector<256x128xf32> -> vector<256x128xf32>
    %72 = arith.addf %64, %71 : vector<256x128xf32>
    %c0_63 = arith.constant 0 : index
    %c0_64 = arith.constant 0 : index
    %73 = vector.load %arg3[%c0_63, %c0_64] : memref<1x128xf32, #tpu.memory_space<vmem>>, vector<1x128xf32>
    %74 = vector.broadcast %73 : vector<1x128xf32> to vector<256x128xf32>
    %75 = arith.addf %72, %74 : vector<256x128xf32>
    %cst_65 = arith.constant 0.000000e+00 : f32
    %76 = vector.broadcast %cst_65 : f32 to vector<256x128xf32>
    %77 = arith.maximumf %75, %76 : vector<256x128xf32>
    %cst_66 = arith.constant 0.000000e+00 : bf16
    %78 = vector.broadcast %cst_66 : bf16 to vector<18x18x128xbf16>
    %c0_67 = arith.constant 0 : index
    %c0_68 = arith.constant 0 : index
    %c0_69 = arith.constant 0 : index
    %79 = vector.load %arg7[%c0_67, %c0_68, %c0_69] : memref<18x18x128xbf16, #tpu.memory_space<vmem>>, vector<18x18x128xbf16>
    tpu.vector_store %arg7[%c0_67, %c0_68, %c0_69], %78 {strides = array<i32>} : memref<18x18x128xbf16, #tpu.memory_space<vmem>>, vector<18x18x128xbf16>,
    %80 = vector.shape_cast %77 : vector<256x128xf32> to vector<16x16x128xf32>
    %81 = arith.truncf %80 : vector<16x16x128xf32> to vector<16x16x128xbf16>
    %c1_70 = arith.constant 1 : index
    %c1_71 = arith.constant 1 : index
    %c0_72 = arith.constant 0 : index
    %82 = vector.load %arg7[%c1_70, %c1_71, %c0_72] : memref<18x18x128xbf16, #tpu.memory_space<vmem>>, vector<16x16x128xbf16>
    tpu.vector_store %arg7[%c1_70, %c1_71, %c0_72], %81 {strides = array<i32>} : memref<18x18x128xbf16, #tpu.memory_space<vmem>>, vector<16x16x128xbf16>,
    %cst_73 = arith.constant 0.000000e+00 : f32
    %83 = vector.broadcast %cst_73 : f32 to vector<256x128xf32>
    %c0_74 = arith.constant 0 : index
    %c0_75 = arith.constant 0 : index
    %c0_76 = arith.constant 0 : index
    %84 = vector.load %arg7[%c0_74, %c0_75, %c0_76] : memref<18x18x128xbf16, #tpu.memory_space<vmem>>, vector<16x16x128xbf16>
    %85 = vector.shape_cast %84 : vector<16x16x128xbf16> to vector<256x128xbf16>
    %c0_77 = arith.constant 0 : index
    %c0_78 = arith.constant 0 : index
    %c0_79 = arith.constant 0 : index
    %86 = vector.load %arg4[%c0_77, %c0_78, %c0_79] : memref<9x128x128xbf16, #tpu.memory_space<vmem>>, vector<1x128x128xbf16>
    %87 = vector.shape_cast %86 : vector<1x128x128xbf16> to vector<128x128xbf16>
    %cst_80 = arith.constant dense<0.000000e+00> : vector<256x128xf32>
    %88 = tpu.matmul %85, %87, %cst_80 {dimension_numbers = #tpu.dot_dimension_numbers<[1], [0], [0], [1], [0, 0, 1, 1], [], []>} : vector<256x128xbf16>, vector<128x128xbf16>, vector<256x128xf32> -> vector<256x128xf32>
    %89 = arith.addf %83, %88 : vector<256x128xf32>
    %c0_81 = arith.constant 0 : index
    %c1_82 = arith.constant 1 : index
    %c0_83 = arith.constant 0 : index
    %90 = vector.load %arg7[%c0_81, %c1_82, %c0_83] : memref<18x18x128xbf16, #tpu.memory_space<vmem>>, vector<16x16x128xbf16>
    %91 = vector.shape_cast %90 : vector<16x16x128xbf16> to vector<256x128xbf16>
    %c1_84 = arith.constant 1 : index
    %c0_85 = arith.constant 0 : index
    %c0_86 = arith.constant 0 : index
    %92 = vector.load %arg4[%c1_84, %c0_85, %c0_86] : memref<9x128x128xbf16, #tpu.memory_space<vmem>>, vector<1x128x128xbf16>
    %93 = vector.shape_cast %92 : vector<1x128x128xbf16> to vector<128x128xbf16>
    %cst_87 = arith.constant dense<0.000000e+00> : vector<256x128xf32>
    %94 = tpu.matmul %91, %93, %cst_87 {dimension_numbers = #tpu.dot_dimension_numbers<[1], [0], [0], [1], [0, 0, 1, 1], [], []>} : vector<256x128xbf16>, vector<128x128xbf16>, vector<256x128xf32> -> vector<256x128xf32>
    %95 = arith.addf %89, %94 : vector<256x128xf32>
    %c0_88 = arith.constant 0 : index
    %c2_89 = arith.constant 2 : index
    %c0_90 = arith.constant 0 : index
    %96 = vector.load %arg7[%c0_88, %c2_89, %c0_90] : memref<18x18x128xbf16, #tpu.memory_space<vmem>>, vector<16x16x128xbf16>
    %97 = vector.shape_cast %96 : vector<16x16x128xbf16> to vector<256x128xbf16>
    %c2_91 = arith.constant 2 : index
    %c0_92 = arith.constant 0 : index
    %c0_93 = arith.constant 0 : index
    %98 = vector.load %arg4[%c2_91, %c0_92, %c0_93] : memref<9x128x128xbf16, #tpu.memory_space<vmem>>, vector<1x128x128xbf16>
    %99 = vector.shape_cast %98 : vector<1x128x128xbf16> to vector<128x128xbf16>
    %cst_94 = arith.constant dense<0.000000e+00> : vector<256x128xf32>
    %100 = tpu.matmul %97, %99, %cst_94 {dimension_numbers = #tpu.dot_dimension_numbers<[1], [0], [0], [1], [0, 0, 1, 1], [], []>} : vector<256x128xbf16>, vector<128x128xbf16>, vector<256x128xf32> -> vector<256x128xf32>
    %101 = arith.addf %95, %100 : vector<256x128xf32>
    %c1_95 = arith.constant 1 : index
    %c0_96 = arith.constant 0 : index
    %c0_97 = arith.constant 0 : index
    %102 = vector.load %arg7[%c1_95, %c0_96, %c0_97] : memref<18x18x128xbf16, #tpu.memory_space<vmem>>, vector<16x16x128xbf16>
    %103 = vector.shape_cast %102 : vector<16x16x128xbf16> to vector<256x128xbf16>
    %c3_98 = arith.constant 3 : index
    %c0_99 = arith.constant 0 : index
    %c0_100 = arith.constant 0 : index
    %104 = vector.load %arg4[%c3_98, %c0_99, %c0_100] : memref<9x128x128xbf16, #tpu.memory_space<vmem>>, vector<1x128x128xbf16>
    %105 = vector.shape_cast %104 : vector<1x128x128xbf16> to vector<128x128xbf16>
    %cst_101 = arith.constant dense<0.000000e+00> : vector<256x128xf32>
    %106 = tpu.matmul %103, %105, %cst_101 {dimension_numbers = #tpu.dot_dimension_numbers<[1], [0], [0], [1], [0, 0, 1, 1], [], []>} : vector<256x128xbf16>, vector<128x128xbf16>, vector<256x128xf32> -> vector<256x128xf32>
    %107 = arith.addf %101, %106 : vector<256x128xf32>
    %c1_102 = arith.constant 1 : index
    %c1_103 = arith.constant 1 : index
    %c0_104 = arith.constant 0 : index
    %108 = vector.load %arg7[%c1_102, %c1_103, %c0_104] : memref<18x18x128xbf16, #tpu.memory_space<vmem>>, vector<16x16x128xbf16>
    %109 = vector.shape_cast %108 : vector<16x16x128xbf16> to vector<256x128xbf16>
    %c4_105 = arith.constant 4 : index
    %c0_106 = arith.constant 0 : index
    %c0_107 = arith.constant 0 : index
    %110 = vector.load %arg4[%c4_105, %c0_106, %c0_107] : memref<9x128x128xbf16, #tpu.memory_space<vmem>>, vector<1x128x128xbf16>
    %111 = vector.shape_cast %110 : vector<1x128x128xbf16> to vector<128x128xbf16>
    %cst_108 = arith.constant dense<0.000000e+00> : vector<256x128xf32>
    %112 = tpu.matmul %109, %111, %cst_108 {dimension_numbers = #tpu.dot_dimension_numbers<[1], [0], [0], [1], [0, 0, 1, 1], [], []>} : vector<256x128xbf16>, vector<128x128xbf16>, vector<256x128xf32> -> vector<256x128xf32>
    %113 = arith.addf %107, %112 : vector<256x128xf32>
    %c1_109 = arith.constant 1 : index
    %c2_110 = arith.constant 2 : index
    %c0_111 = arith.constant 0 : index
    %114 = vector.load %arg7[%c1_109, %c2_110, %c0_111] : memref<18x18x128xbf16, #tpu.memory_space<vmem>>, vector<16x16x128xbf16>
    %115 = vector.shape_cast %114 : vector<16x16x128xbf16> to vector<256x128xbf16>
    %c5_112 = arith.constant 5 : index
    %c0_113 = arith.constant 0 : index
    %c0_114 = arith.constant 0 : index
    %116 = vector.load %arg4[%c5_112, %c0_113, %c0_114] : memref<9x128x128xbf16, #tpu.memory_space<vmem>>, vector<1x128x128xbf16>
    %117 = vector.shape_cast %116 : vector<1x128x128xbf16> to vector<128x128xbf16>
    %cst_115 = arith.constant dense<0.000000e+00> : vector<256x128xf32>
    %118 = tpu.matmul %115, %117, %cst_115 {dimension_numbers = #tpu.dot_dimension_numbers<[1], [0], [0], [1], [0, 0, 1, 1], [], []>} : vector<256x128xbf16>, vector<128x128xbf16>, vector<256x128xf32> -> vector<256x128xf32>
    %119 = arith.addf %113, %118 : vector<256x128xf32>
    %c2_116 = arith.constant 2 : index
    %c0_117 = arith.constant 0 : index
    %c0_118 = arith.constant 0 : index
    %120 = vector.load %arg7[%c2_116, %c0_117, %c0_118] : memref<18x18x128xbf16, #tpu.memory_space<vmem>>, vector<16x16x128xbf16>
    %121 = vector.shape_cast %120 : vector<16x16x128xbf16> to vector<256x128xbf16>
    %c6_119 = arith.constant 6 : index
    %c0_120 = arith.constant 0 : index
    %c0_121 = arith.constant 0 : index
    %122 = vector.load %arg4[%c6_119, %c0_120, %c0_121] : memref<9x128x128xbf16, #tpu.memory_space<vmem>>, vector<1x128x128xbf16>
    %123 = vector.shape_cast %122 : vector<1x128x128xbf16> to vector<128x128xbf16>
    %cst_122 = arith.constant dense<0.000000e+00> : vector<256x128xf32>
    %124 = tpu.matmul %121, %123, %cst_122 {dimension_numbers = #tpu.dot_dimension_numbers<[1], [0], [0], [1], [0, 0, 1, 1], [], []>} : vector<256x128xbf16>, vector<128x128xbf16>, vector<256x128xf32> -> vector<256x128xf32>
    %125 = arith.addf %119, %124 : vector<256x128xf32>
    %c2_123 = arith.constant 2 : index
    %c1_124 = arith.constant 1 : index
    %c0_125 = arith.constant 0 : index
    %126 = vector.load %arg7[%c2_123, %c1_124, %c0_125] : memref<18x18x128xbf16, #tpu.memory_space<vmem>>, vector<16x16x128xbf16>
    %127 = vector.shape_cast %126 : vector<16x16x128xbf16> to vector<256x128xbf16>
    %c7_126 = arith.constant 7 : index
    %c0_127 = arith.constant 0 : index
    %c0_128 = arith.constant 0 : index
    %128 = vector.load %arg4[%c7_126, %c0_127, %c0_128] : memref<9x128x128xbf16, #tpu.memory_space<vmem>>, vector<1x128x128xbf16>
    %129 = vector.shape_cast %128 : vector<1x128x128xbf16> to vector<128x128xbf16>
    %cst_129 = arith.constant dense<0.000000e+00> : vector<256x128xf32>
    %130 = tpu.matmul %127, %129, %cst_129 {dimension_numbers = #tpu.dot_dimension_numbers<[1], [0], [0], [1], [0, 0, 1, 1], [], []>} : vector<256x128xbf16>, vector<128x128xbf16>, vector<256x128xf32> -> vector<256x128xf32>
    %131 = arith.addf %125, %130 : vector<256x128xf32>
    %c2_130 = arith.constant 2 : index
    %c2_131 = arith.constant 2 : index
    %c0_132 = arith.constant 0 : index
    %132 = vector.load %arg7[%c2_130, %c2_131, %c0_132] : memref<18x18x128xbf16, #tpu.memory_space<vmem>>, vector<16x16x128xbf16>
    %133 = vector.shape_cast %132 : vector<16x16x128xbf16> to vector<256x128xbf16>
    %c8_133 = arith.constant 8 : index
    %c0_134 = arith.constant 0 : index
    %c0_135 = arith.constant 0 : index
    %134 = vector.load %arg4[%c8_133, %c0_134, %c0_135] : memref<9x128x128xbf16, #tpu.memory_space<vmem>>, vector<1x128x128xbf16>
    %135 = vector.shape_cast %134 : vector<1x128x128xbf16> to vector<128x128xbf16>
    %cst_136 = arith.constant dense<0.000000e+00> : vector<256x128xf32>
    %136 = tpu.matmul %133, %135, %cst_136 {dimension_numbers = #tpu.dot_dimension_numbers<[1], [0], [0], [1], [0, 0, 1, 1], [], []>} : vector<256x128xbf16>, vector<128x128xbf16>, vector<256x128xf32> -> vector<256x128xf32>
    %137 = arith.addf %131, %136 : vector<256x128xf32>
    %c0_137 = arith.constant 0 : index
    %c0_138 = arith.constant 0 : index
    %138 = vector.load %arg5[%c0_137, %c0_138] : memref<1x128xf32, #tpu.memory_space<vmem>>, vector<1x128xf32>
    %139 = vector.broadcast %138 : vector<1x128xf32> to vector<256x128xf32>
    %140 = arith.addf %137, %139 : vector<256x128xf32>
    %c0_139 = arith.constant 0 : index
    %c1_140 = arith.constant 1 : index
    %c1_141 = arith.constant 1 : index
    %c0_142 = arith.constant 0 : index
    %141 = vector.load %arg1[%c0_139, %c1_140, %c1_141, %c0_142] : memref<1x18x18x128xf32, #tpu.memory_space<vmem>>, vector<1x16x16x128xf32>
    %142 = vector.shape_cast %141 : vector<1x16x16x128xf32> to vector<16x16x128xf32>
    %143 = vector.shape_cast %142 : vector<16x16x128xf32> to vector<256x128xf32>
    %144 = arith.addf %140, %143 : vector<256x128xf32>
    %145 = vector.shape_cast %144 : vector<256x128xf32> to vector<16x16x128xf32>
    %c0_143 = arith.constant 0 : index
    %c0_144 = arith.constant 0 : index
    %c0_145 = arith.constant 0 : index
    %c0_146 = arith.constant 0 : index
    %146 = vector.load %arg6[%c0_143, %c0_144, %c0_145, %c0_146] : memref<1x16x16x128xf32, #tpu.memory_space<vmem>>, vector<1x16x16x128xf32>
    %147 = vector.shape_cast %146 : vector<1x16x16x128xf32> to vector<16x16x128xf32>
    %148 = vector.shape_cast %145 : vector<16x16x128xf32> to vector<1x16x16x128xf32>
    tpu.vector_store %arg6[%c0_143, %c0_144, %c0_145, %c0_146], %148 {strides = array<i32>} : memref<1x16x16x128xf32, #tpu.memory_space<vmem>>, vector<1x16x16x128xf32>,
    return
  }
  func.func @transform_0(%arg0: i32) -> (i32, i32, i32, i32) {
    %c0_i32 = arith.constant 0 : i32
    %c0_i32_0 = arith.constant 0 : i32
    %c0_i32_1 = arith.constant 0 : i32
    %c0_i32_2 = arith.constant 0 : i32
    return %arg0, %c0_i32, %c0_i32_0, %c0_i32_1 : i32, i32, i32, i32
  }
  func.func @transform_1(%arg0: i32) -> (i32, i32, i32) {
    %c0_i32 = arith.constant 0 : i32
    %c0_i32_0 = arith.constant 0 : i32
    %c0_i32_1 = arith.constant 0 : i32
    %c0_i32_2 = arith.constant 0 : i32
    return %c0_i32, %c0_i32_0, %c0_i32_1 : i32, i32, i32
  }
  func.func @transform_2(%arg0: i32) -> (i32, i32) {
    %c0_i32 = arith.constant 0 : i32
    %c0_i32_0 = arith.constant 0 : i32
    %c0_i32_1 = arith.constant 0 : i32
    return %c0_i32, %c0_i32_0 : i32, i32
  }
  func.func @transform_3(%arg0: i32) -> (i32, i32, i32) {
    %c0_i32 = arith.constant 0 : i32
    %c0_i32_0 = arith.constant 0 : i32
    %c0_i32_1 = arith.constant 0 : i32
    %c0_i32_2 = arith.constant 0 : i32
    return %c0_i32, %c0_i32_0, %c0_i32_1 : i32, i32, i32
  }
  func.func @transform_4(%arg0: i32) -> (i32, i32) {
    %c0_i32 = arith.constant 0 : i32
    %c0_i32_0 = arith.constant 0 : i32
    %c0_i32_1 = arith.constant 0 : i32
    return %c0_i32, %c0_i32_0 : i32, i32
  }
  func.func @transform_5(%arg0: i32) -> (i32, i32, i32, i32) {
    %c0_i32 = arith.constant 0 : i32
    %c0_i32_0 = arith.constant 0 : i32
    %c0_i32_1 = arith.constant 0 : i32
    %c0_i32_2 = arith.constant 0 : i32
    return %arg0, %c0_i32, %c0_i32_0, %c0_i32_1 : i32, i32, i32, i32
  }
}

</mosaic_0001>

<llo_original>
// kernel: tpu_custom_call.1
$region0: #{tpu_custom_call.1}
  #allocation0 [shape = 'u32[]', space=smem, size = 0x4, offset = 0x4, fixed_abs, tag = 'smem constant byte address 0x4 - core index']
  #allocation1 [shape = 'u32[72,128]{1,0:T(1,128)}', space=vmem, size = 0x9000, scoped, tag = 'internal scratch']
  #allocation2 [shape = 'bf16[18,18,128]{2,1,0:T(8,128)(2,1)}', space=vmem, size = 0x1b000, scoped, tag = 'scratch operand']
  %s0 = inlined_call_operand.vmem [shape: f32[2,18,18,128], index: 0, kind: input, shape index: {}]
  %s1 = inlined_call_operand.vmem [shape: bf16[9,128,128], index: 1, kind: input, shape index: {}]
  %s2 = inlined_call_operand.vmem [shape: f32[1,128], index: 2, kind: input, shape index: {}]
  %s3 = inlined_call_operand.vmem [shape: bf16[9,128,128], index: 3, kind: input, shape index: {}]
  %s4 = inlined_call_operand.vmem [shape: f32[1,128], index: 4, kind: input, shape index: {}]
  %s5 = inlined_call_operand.hbm [shape: f32[2,16,16,128], index: 5, kind: output, shape index: {}]
  %s6 = sld [smem:[#allocation0]]
  $region53: #{tpu_custom_call.1} parent=0
    _
  %s8 = ssub.s32 1, %s6
  %s9 = scalar_select 0, %s8, %s6
  $region1: #{tpu_custom_call.1} parent=0
    #allocation3 [shape = 'u8[262144]{0}', space=vmem, size = 0x40000, scoped, tag = 'output window, operand 0']
    #allocation4 [shape = 's32[2]{0}', space=sflag, size = 0x8, scoped, tag = 'scoped memory for tpu_custom_call.1']
    %10 = vsyncpa [#allocation4], 0
    %s11 = scalar_lea.sflag [#allocation4], 1
    %12 = vsyncpa %s11, 0
    loop: start=0, step=1, limit=4
    $region2: #{tpu_custom_call.1} parent=1 // loop_pre_header
      _
    $region3: #{tpu_custom_call.1} parent=1 // loop_header
      %s14 = sphi 0, %s18
      %p15 = scmp.ge.s32.totalorder %s14, 4
      %s24 = sphi 0, %s26
      %s27 = sphi 0, %s24
      %s28 = sphi 0, %s27
      %s44 = sphi 0, %s28
      %s48 = sphi 0, %s48
      %s50 = sphi 0, %s48
      %s51 = sphi 0, %s50
      %s65 = sphi 0, %s51
      %s69 = sphi 0, %s69
      %s71 = sphi 0, %s69
      %s72 = sphi 0, %s71
      %s86 = sphi 0, %s72
      %s90 = sphi 0, %s90
      %s92 = sphi 0, %s90
      %s93 = sphi 0, %s92
      %s107 = sphi 0, %s93
      %s111 = sphi 0, %s111
      %s113 = sphi 0, %s111
      %s114 = sphi 0, %s113
      %s128 = sphi 0, %s114
      %s134 = sphi 0, %s136
      %s137 = sphi 0, %s134
      %s138 = sphi 0, %s137
      %s154 = sphi 0, %s138
    $region4: #{tpu_custom_call.1} parent=1 // loop_header_branch
      %17 = sbr.rel (%p15) target = $region8
    $region5: #{tpu_custom_call.1} parent=1 // loop_body
      %s19 = ssub.s32 %s14, 1
      %s20 = ssub.s32 %s14, 2
      %s21 = sadd.s32 %s14, 1
      %s22 = ssub.s32 %s14, %s21
      %p23 = scmp.eq.s32.totalorder %s22, 0
      %s25 = sadd.s32 %s24, 1
      %s26 = scalar_select %p23, %s24, %s25
      %p29 = pneg %p23
      %p30 = scmp.eq.s32.totalorder %s14, 1
      %p31 = por %p29, %p30
      %p32 = scmp.ne.s32.totalorder %s24, %s27
      %p33 = scmp.eq.s32.totalorder %s14, 0
      %p34 = por %p32, %p33
      %p35 = scmp.ne.s32.totalorder %s24, %s27
      %p36 = scmp.eq.s32.totalorder %s19, 1
      %p37 = por %p35, %p36
      %p38 = scmp.ne.s32.totalorder %s27, %s28
      %p39 = scmp.eq.s32.totalorder %s19, 0
      %p40 = por %p38, %p39
      %p41 = scmp.ne.s32.totalorder %s27, %s28
      %p42 = scmp.eq.s32.totalorder %s20, 1
      %p43 = por %p41, %p42
      %p45 = scmp.ne.s32.totalorder %s28, %s44
      %p46 = scmp.eq.s32.totalorder %s20, 0
      %p47 = por %p45, %p46
      %s49 = sadd.s32 %s48, 1
      %p52 = scmp.eq.s32.totalorder %s14, 1
      %p53 = scmp.ne.s32.totalorder %s48, %s50
      %p54 = scmp.eq.s32.totalorder %s14, 0
      %p55 = por %p53, %p54
      %p56 = scmp.ne.s32.totalorder %s48, %s50
      %p57 = scmp.eq.s32.totalorder %s19, 1
      %p58 = por %p56, %p57
      %p59 = scmp.ne.s32.totalorder %s50, %s51
      %p60 = scmp.eq.s32.totalorder %s19, 0
      %p61 = por %p59, %p60
      %p62 = scmp.ne.s32.totalorder %s50, %s51
      %p63 = scmp.eq.s32.totalorder %s20, 1
      %p64 = por %p62, %p63
      %p66 = scmp.ne.s32.totalorder %s51, %s65
      %p67 = scmp.eq.s32.totalorder %s20, 0
      %p68 = por %p66, %p67
      %s70 = sadd.s32 %s69, 1
      %p73 = scmp.eq.s32.totalorder %s14, 1
      %p74 = scmp.ne.s32.totalorder %s69, %s71
      %p75 = scmp.eq.s32.totalorder %s14, 0
      %p76 = por %p74, %p75
      %p77 = scmp.ne.s32.totalorder %s69, %s71
      %p78 = scmp.eq.s32.totalorder %s19, 1
      %p79 = por %p77, %p78
      %p80 = scmp.ne.s32.totalorder %s71, %s72
      %p81 = scmp.eq.s32.totalorder %s19, 0
      %p82 = por %p80, %p81
      %p83 = scmp.ne.s32.totalorder %s71, %s72
      %p84 = scmp.eq.s32.totalorder %s20, 1
      %p85 = por %p83, %p84
      %p87 = scmp.ne.s32.totalorder %s72, %s86
      %p88 = scmp.eq.s32.totalorder %s20, 0
      %p89 = por %p87, %p88
      %s91 = sadd.s32 %s90, 1
      %p94 = scmp.eq.s32.totalorder %s14, 1
      %p95 = scmp.ne.s32.totalorder %s90, %s92
      %p96 = scmp.eq.s32.totalorder %s14, 0
      %p97 = por %p95, %p96
      %p98 = scmp.ne.s32.totalorder %s90, %s92
      %p99 = scmp.eq.s32.totalorder %s19, 1
      %p100 = por %p98, %p99
      %p101 = scmp.ne.s32.totalorder %s92, %s93
      %p102 = scmp.eq.s32.totalorder %s19, 0
      %p103 = por %p101, %p102
      %p104 = scmp.ne.s32.totalorder %s92, %s93
      %p105 = scmp.eq.s32.totalorder %s20, 1
      %p106 = por %p104, %p105
      %p108 = scmp.ne.s32.totalorder %s93, %s107
      %p109 = scmp.eq.s32.totalorder %s20, 0
      %p110 = por %p108, %p109
      %s112 = sadd.s32 %s111, 1
      %p115 = scmp.eq.s32.totalorder %s14, 1
      %p116 = scmp.ne.s32.totalorder %s111, %s113
      %p117 = scmp.eq.s32.totalorder %s14, 0
      %p118 = por %p116, %p117
      %p119 = scmp.ne.s32.totalorder %s111, %s113
      %p120 = scmp.eq.s32.totalorder %s19, 1
      %p121 = por %p119, %p120
      %p122 = scmp.ne.s32.totalorder %s113, %s114
      %p123 = scmp.eq.s32.totalorder %s19, 0
      %p124 = por %p122, %p123
      %p125 = scmp.ne.s32.totalorder %s113, %s114
      %p126 = scmp.eq.s32.totalorder %s20, 1
      %p127 = por %p125, %p126
      %p129 = scmp.ne.s32.totalorder %s114, %s128
      %p130 = scmp.eq.s32.totalorder %s20, 0
      %p131 = por %p129, %p130
      %s132 = ssub.s32 %s14, %s21
      %p133 = scmp.eq.s32.totalorder %s132, 0
      %s135 = sadd.s32 %s134, 1
      %s136 = scalar_select %p133, %s134, %s135
      %p139 = pneg %p133
      %p140 = scmp.eq.s32.totalorder %s14, 1
      %p141 = por %p139, %p140
      %p142 = scmp.ne.s32.totalorder %s134, %s137
      %p143 = scmp.eq.s32.totalorder %s14, 0
      %p144 = por %p142, %p143
      %p145 = scmp.ne.s32.totalorder %s134, %s137
      %p146 = scmp.eq.s32.totalorder %s19, 1
      %p147 = por %p145, %p146
      %p148 = scmp.ne.s32.totalorder %s137, %s138
      %p149 = scmp.eq.s32.totalorder %s19, 0
      %p150 = por %p148, %p149
      %p151 = scmp.ne.s32.totalorder %s137, %s138
      %p152 = scmp.eq.s32.totalorder %s20, 1
      %p153 = por %p151, %p152
      %p155 = scmp.ne.s32.totalorder %s138, %s154
      %p156 = scmp.eq.s32.totalorder %s20, 0
      %p157 = por %p155, %p156
      %p158 = scmp.le.s32.totalorder 1, %s14
      %p159 = scmp.lt.s32.totalorder %s14, 3
      %p160 = pnand %p158, %p159
      %p161 = pneg %p160
      // Predicated region
      $region9: #{tpu_custom_call.1} parent=5 // pred_check
        _
      $region10: #{tpu_custom_call.1} parent=5 // pred_check_branch
        %163 = sbr.rel (%p160) target = $region12
      $region11: #{tpu_custom_call.1} parent=5 // pred_region
        %s164 = ssub.s32 %s14, 1
        // Predicated region
        $region13: #{tpu_custom_call.1} parent=11 // pred_check
          %p165 = pneg %p61
        $region14: #{tpu_custom_call.1} parent=11 // pred_check_branch
          %167 = sbr.rel (%p165) target = $region16
        $region15: #{tpu_custom_call.1} parent=11 // pred_region
          _
        $region16: #{tpu_custom_call.1} parent=11 // pred_fallthru
          _
        // Predicated region
        $region17: #{tpu_custom_call.1} parent=11 // pred_check
          %p168 = pneg %p82
        $region18: #{tpu_custom_call.1} parent=11 // pred_check_branch
          %170 = sbr.rel (%p168) target = $region20
        $region19: #{tpu_custom_call.1} parent=11 // pred_region
          _
        $region20: #{tpu_custom_call.1} parent=11 // pred_fallthru
          _
        // Predicated region
        $region21: #{tpu_custom_call.1} parent=11 // pred_check
          %p171 = pneg %p103
        $region22: #{tpu_custom_call.1} parent=11 // pred_check_branch
          %173 = sbr.rel (%p171) target = $region24
        $region23: #{tpu_custom_call.1} parent=11 // pred_region
          _
        $region24: #{tpu_custom_call.1} parent=11 // pred_fallthru
          _
        // Predicated region
        $region25: #{tpu_custom_call.1} parent=11 // pred_check
          %p174 = pneg %p124
        $region26: #{tpu_custom_call.1} parent=11 // pred_check_branch
          %176 = sbr.rel (%p174) target = $region28
        $region27: #{tpu_custom_call.1} parent=11 // pred_region
          _
        $region28: #{tpu_custom_call.1} parent=11 // pred_fallthru
          _
      $region12: #{tpu_custom_call.1} parent=5 // pred_fallthru
        _
      %p177 = scmp.lt.s32.totalorder %s14, 2
      // Predicated region
      $region29: #{tpu_custom_call.1} parent=5 // pred_check
        %p178 = pneg %p177
      $region30: #{tpu_custom_call.1} parent=5 // pred_check_branch
        %180 = sbr.rel (%p178) target = $region32
      $region31: #{tpu_custom_call.1} parent=5 // pred_region
        // Predicated region
        $region33: #{tpu_custom_call.1} parent=31 // pred_check
          %p181 = pneg %p34
        $region34: #{tpu_custom_call.1} parent=31 // pred_check_branch
          %183 = sbr.rel (%p181) target = $region36
        $region35: #{tpu_custom_call.1} parent=31 // pred_region
          %p184 = scmp.lt.s32.totalorder %s14, 1
          %s185 = scalar_select %p184, %s14, 1
          %s186 = smul.addr %s185, 54
          %s187 = smul.addr %s186, 8
          %s188 = scalar_lea.vmem %s0, %s187
        $region36: #{tpu_custom_call.1} parent=31 // pred_fallthru
          _
      $region32: #{tpu_custom_call.1} parent=5 // pred_fallthru
        _
      %p189 = scmp.le.s32.totalorder 1, %s14
      %p190 = scmp.lt.s32.totalorder %s14, 3
      %p191 = pnand %p189, %p190
      %p192 = pneg %p191
      // Predicated region
      $region37: #{tpu_custom_call.1} parent=5 // pred_check
        _
      $region38: #{tpu_custom_call.1} parent=5 // pred_check_branch
        %194 = sbr.rel (%p191) target = $region40
      $region39: #{tpu_custom_call.1} parent=5 // pred_region
        %s195 = ssub.s32 %s14, 1
        %p196 = scmp.lt.s32.totalorder %s19, 1
        %s197 = scalar_select %p196, %s19, 1
        %s198 = smul.addr %s197, 54
        %s199 = smul.addr %s198, 8
        %s200 = scalar_lea.vmem %s0, %s199
        %p201 = pneg %p40
        %p202 = pneg %p37
        %p203 = pneg %p61
        %p204 = pneg %p58
        %p205 = pneg %p82
        %p206 = pneg %p79
        %p207 = pneg %p103
        %p208 = pneg %p100
        %p209 = pneg %p124
        %p210 = pneg %p121
        %p211 = pneg %p150
        %p212 = pneg %p147
        %s213 = sand.u32 %s137, 1
        %s214 = scalar_lea.sflag [#allocation4], %s213
        %s215 = sand.u32 %s137, 1
        %s216 = smul.addr %s215, 256
        %s217 = scalar_lea.vmem [#allocation3], %s216
        %p218 = scmp.lt.s32.totalorder %s19, 1
        %s219 = scalar_select %p218, %s19, 1
        %s220 = smul.addr %s219, 54
        %s221 = smul.addr %s220, 8
        %s222 = scalar_lea.vmem %s0, %s221
        %v224 = vld [vmem:[%s222] sm:$0xff]
        %v225 = vld [vmem:[%s222 + $0x8] sm:$0xff]
        %v226 = vld [vmem:[%s222 + $0x18] sm:$0xff]
        %v227 = vld [vmem:[%s222 + $0x20] sm:$0xff]
        %v228 = vld [vmem:[%s222 + $0x30] sm:$0xff]
        %v229 = vld [vmem:[%s222 + $0x38] sm:$0xff]
        %v230 = vld [vmem:[%s222 + $0x48] sm:$0xff]
        %v231 = vld [vmem:[%s222 + $0x50] sm:$0xff]
        %v232 = vld [vmem:[%s222 + $0x60] sm:$0xff]
        %v233 = vld [vmem:[%s222 + $0x68] sm:$0xff]
        %v234 = vld [vmem:[%s222 + $0x78] sm:$0xff]
        %v235 = vld [vmem:[%s222 + $0x80] sm:$0xff]
        %v236 = vld [vmem:[%s222 + $0x90] sm:$0xff]
        %v237 = vld [vmem:[%s222 + $0x98] sm:$0xff]
        %v238 = vld [vmem:[%s222 + $0xa8] sm:$0xff]
        %v239 = vld [vmem:[%s222 + $0xb0] sm:$0xff]
        %v240 = vld [vmem:[%s222 + $0xc0] sm:$0xff]
        %v241 = vld [vmem:[%s222 + $0xc8] sm:$0xff]
        %v242 = vld [vmem:[%s222 + $0xd8] sm:$0xff]
        %v243 = vld [vmem:[%s222 + $0xe0] sm:$0xff]
        %v244 = vld [vmem:[%s222 + $0xf0] sm:$0xff]
        %v245 = vld [vmem:[%s222 + $0xf8] sm:$0xff]
        %v246 = vld [vmem:[%s222 + $0x108] sm:$0xff]
        %v247 = vld [vmem:[%s222 + $0x110] sm:$0xff]
        %v248 = vld [vmem:[%s222 + $0x120] sm:$0xff]
        %v249 = vld [vmem:[%s222 + $0x128] sm:$0xff]
        %v250 = vld [vmem:[%s222 + $0x138] sm:$0xff]
        %v251 = vld [vmem:[%s222 + $0x140] sm:$0xff]
        %v252 = vld [vmem:[%s222 + $0x150] sm:$0xff]
        %v253 = vld [vmem:[%s222 + $0x158] sm:$0xff]
        %v254 = vld [vmem:[%s222 + $0x168] sm:$0xff]
        %v255 = vld [vmem:[%s222 + $0x170] sm:$0xff]
        %v256 = vpack.c.bf16 %v225, %v224
        %v257 = vpack.c.bf16 %v227, %v226
        %v258 = vpack.c.bf16 %v229, %v228
        %v259 = vpack.c.bf16 %v231, %v230
        %v260 = vpack.c.bf16 %v233, %v232
        %v261 = vpack.c.bf16 %v235, %v234
        %v262 = vpack.c.bf16 %v237, %v236
        %v263 = vpack.c.bf16 %v239, %v238
        %v264 = vpack.c.bf16 %v241, %v240
        %v265 = vpack.c.bf16 %v243, %v242
        %v266 = vpack.c.bf16 %v245, %v244
        %v267 = vpack.c.bf16 %v247, %v246
        %v268 = vpack.c.bf16 %v249, %v248
        %v269 = vpack.c.bf16 %v251, %v250
        %v270 = vpack.c.bf16 %v253, %v252
        %v271 = vpack.c.bf16 %v255, %v254
        %v272 = vld [vmem:[%s1] sm:$0xf]
        %v273 = vld [vmem:[%s1 + $0x4] sm:$0xf]
        %v274 = vld [vmem:[%s1 + $0x8] sm:$0xf]
        %v275 = vld [vmem:[%s1 + $0xc] sm:$0xf]
        %v276 = vld [vmem:[%s1 + $0x10] sm:$0xf]
        %v277 = vld [vmem:[%s1 + $0x14] sm:$0xf]
        %v278 = vld [vmem:[%s1 + $0x18] sm:$0xf]
        %v279 = vld [vmem:[%s1 + $0x1c] sm:$0xf]
        %v280 = vld [vmem:[%s1 + $0x20] sm:$0xf]
        %v281 = vld [vmem:[%s1 + $0x24] sm:$0xf]
        %v282 = vld [vmem:[%s1 + $0x28] sm:$0xf]
        %v283 = vld [vmem:[%s1 + $0x2c] sm:$0xf]
        %v284 = vld [vmem:[%s1 + $0x30] sm:$0xf]
        %v285 = vld [vmem:[%s1 + $0x34] sm:$0xf]
        %v286 = vld [vmem:[%s1 + $0x38] sm:$0xf]
        %v287 = vld [vmem:[%s1 + $0x3c] sm:$0xf]
        %v288 = vld [vmem:[%s222 + $0x1] sm:$0xff]
        %v289 = vld [vmem:[%s222 + $0x9] sm:$0xff]
        %v290 = vld [vmem:[%s222 + $0x19] sm:$0xff]
        %v291 = vld [vmem:[%s222 + $0x21] sm:$0xff]
        %v292 = vld [vmem:[%s222 + $0x31] sm:$0xff]
        %v293 = vld [vmem:[%s222 + $0x39] sm:$0xff]
        %v294 = vld [vmem:[%s222 + $0x49] sm:$0xff]
        %v295 = vld [vmem:[%s222 + $0x51] sm:$0xff]
        %v296 = vld [vmem:[%s222 + $0x61] sm:$0xff]
        %v297 = vld [vmem:[%s222 + $0x69] sm:$0xff]
        %v298 = vld [vmem:[%s222 + $0x79] sm:$0xff]
        %v299 = vld [vmem:[%s222 + $0x81] sm:$0xff]
        %v300 = vld [vmem:[%s222 + $0x91] sm:$0xff]
        %v301 = vld [vmem:[%s222 + $0x99] sm:$0xff]
        %v302 = vld [vmem:[%s222 + $0xa9] sm:$0xff]
        %v303 = vld [vmem:[%s222 + $0xb1] sm:$0xff]
        %v304 = vld [vmem:[%s222 + $0xc1] sm:$0xff]
        %v305 = vld [vmem:[%s222 + $0xc9] sm:$0xff]
        %v306 = vld [vmem:[%s222 + $0xd9] sm:$0xff]
        %v307 = vld [vmem:[%s222 + $0xe1] sm:$0xff]
        %v308 = vld [vmem:[%s222 + $0xf1] sm:$0xff]
        %v309 = vld [vmem:[%s222 + $0xf9] sm:$0xff]
        %v310 = vld [vmem:[%s222 + $0x109] sm:$0xff]
        %v311 = vld [vmem:[%s222 + $0x111] sm:$0xff]
        %v312 = vld [vmem:[%s222 + $0x121] sm:$0xff]
        %v313 = vld [vmem:[%s222 + $0x129] sm:$0xff]
        %v314 = vld [vmem:[%s222 + $0x139] sm:$0xff]
        %v315 = vld [vmem:[%s222 + $0x141] sm:$0xff]
        %v316 = vld [vmem:[%s222 + $0x151] sm:$0xff]
        %v317 = vld [vmem:[%s222 + $0x159] sm:$0xff]
        %v318 = vld [vmem:[%s222 + $0x169] sm:$0xff]
        %v319 = vld [vmem:[%s222 + $0x171] sm:$0xff]
        %v320 = vpack.c.bf16 %v289, %v288
        %v321 = vpack.c.bf16 %v291, %v290
        %v322 = vpack.c.bf16 %v293, %v292
        %v323 = vpack.c.bf16 %v295, %v294
        %v324 = vpack.c.bf16 %v297, %v296
        %v325 = vpack.c.bf16 %v299, %v298
        %v326 = vpack.c.bf16 %v301, %v300
        %v327 = vpack.c.bf16 %v303, %v302
        %v328 = vpack.c.bf16 %v305, %v304
        %v329 = vpack.c.bf16 %v307, %v306
        %v330 = vpack.c.bf16 %v309, %v308
        %v331 = vpack.c.bf16 %v311, %v310
        %v332 = vpack.c.bf16 %v313, %v312
        %v333 = vpack.c.bf16 %v315, %v314
        %v334 = vpack.c.bf16 %v317, %v316
        %v335 = vpack.c.bf16 %v319, %v318
        %s336 = scalar_lea.vmem %s1, 64
        %v337 = vld [vmem:[%s336] sm:$0xf]
        %v338 = vld [vmem:[%s336 + $0x4] sm:$0xf]
        %v339 = vld [vmem:[%s336 + $0x8] sm:$0xf]
        %v340 = vld [vmem:[%s336 + $0xc] sm:$0xf]
        %v341 = vld [vmem:[%s336 + $0x10] sm:$0xf]
        %v342 = vld [vmem:[%s336 + $0x14] sm:$0xf]
        %v343 = vld [vmem:[%s336 + $0x18] sm:$0xf]
        %v344 = vld [vmem:[%s336 + $0x1c] sm:$0xf]
        %v345 = vld [vmem:[%s336 + $0x20] sm:$0xf]
        %v346 = vld [vmem:[%s336 + $0x24] sm:$0xf]
        %v347 = vld [vmem:[%s336 + $0x28] sm:$0xf]
        %v348 = vld [vmem:[%s336 + $0x2c] sm:$0xf]
        %v349 = vld [vmem:[%s336 + $0x30] sm:$0xf]
        %v350 = vld [vmem:[%s336 + $0x34] sm:$0xf]
        %v351 = vld [vmem:[%s336 + $0x38] sm:$0xf]
        %v352 = vld [vmem:[%s336 + $0x3c] sm:$0xf]
        %v369 = vunpack.c.l.b16 %v337
        %v370 = vunpack.c.l.b16 %v338
        %v371 = vunpack.c.l.b16 %v339
        %v372 = vunpack.c.l.b16 %v340
        %v373 = vunpack.c.l.b16 %v341
        %v374 = vunpack.c.l.b16 %v342
        %v375 = vunpack.c.l.b16 %v343
        %v376 = vunpack.c.l.b16 %v344
        %v377 = vunpack.c.l.b16 %v345
        %v378 = vunpack.c.l.b16 %v346
        %v379 = vunpack.c.l.b16 %v347
        %v380 = vunpack.c.l.b16 %v348
        %v381 = vunpack.c.l.b16 %v349
        %v382 = vunpack.c.l.b16 %v350
        %v383 = vunpack.c.l.b16 %v351
        %v384 = vunpack.c.l.b16 %v352
        %v385 = vpack.c.b16 %v370, %v369
        %v386 = vpack.c.b16 %v372, %v371
        %v387 = vpack.c.b16 %v374, %v373
        %v388 = vpack.c.b16 %v376, %v375
        %v389 = vpack.c.b16 %v378, %v377
        %v390 = vpack.c.b16 %v380, %v379
        %v391 = vpack.c.b16 %v382, %v381
        %v392 = vpack.c.b16 %v384, %v383
        %401 = vmatpush.bf16.msra.mxu0 %v392
        %402 = vmatpush.bf16.msra.mxu0 %v391
        %403 = vmatpush.bf16.msra.mxu0 %v390
        %404 = vmatpush.bf16.msra.mxu0 %v389
        %405 = vmatpush.bf16.msra.mxu0 %v388
        %406 = vmatpush.bf16.msra.mxu0 %v387
        %407 = vmatpush.bf16.msra.mxu0 %v386
        %408 = vmatpush.bf16.msra.mxu0 %v385
        %409 = vmatmul.bf16.gmra.mxu0 %v320
        %v410 = vpop.f32.mrf.mxu0
        %v411 = vadd.f32 0.0, %v410
        %v412 = vpop.f32.mrf.mxu0
        %v413 = vadd.f32 0.0, %v412
        %414 = vmatmul.bf16.gmra.mxu0 %v321
        %v415 = vpop.f32.mrf.mxu0
        %v416 = vadd.f32 0.0, %v415
        %v417 = vpop.f32.mrf.mxu0
        %v418 = vadd.f32 0.0, %v417
        %419 = vmatmul.bf16.gmra.mxu0 %v322
        %v420 = vpop.f32.mrf.mxu0
        %v421 = vadd.f32 0.0, %v420
        %v422 = vpop.f32.mrf.mxu0
        %v423 = vadd.f32 0.0, %v422
        %424 = vmatmul.bf16.gmra.mxu0 %v323
        %v425 = vpop.f32.mrf.mxu0
        %v426 = vadd.f32 0.0, %v425
        %v427 = vpop.f32.mrf.mxu0
        %v428 = vadd.f32 0.0, %v427
        %429 = vmatmul.bf16.gmra.mxu0 %v324
        %v430 = vpop.f32.mrf.mxu0
        %v431 = vadd.f32 0.0, %v430
        %v432 = vpop.f32.mrf.mxu0
        %v433 = vadd.f32 0.0, %v432
        %434 = vmatmul.bf16.gmra.mxu0 %v325
        %v435 = vpop.f32.mrf.mxu0
        %v436 = vadd.f32 0.0, %v435
        %v437 = vpop.f32.mrf.mxu0
        %v438 = vadd.f32 0.0, %v437
        %439 = vmatmul.bf16.gmra.mxu0 %v326
        %v440 = vpop.f32.mrf.mxu0
        %v441 = vadd.f32 0.0, %v440
        %v442 = vpop.f32.mrf.mxu0
        %v443 = vadd.f32 0.0, %v442
        %444 = vmatmul.bf16.gmra.mxu0 %v327
        %v445 = vpop.f32.mrf.mxu0
        %v446 = vadd.f32 0.0, %v445
        %v447 = vpop.f32.mrf.mxu0
        %v448 = vadd.f32 0.0, %v447
        %449 = vmatmul.bf16.gmra.mxu0 %v328
        %v450 = vpop.f32.mrf.mxu0
        %v451 = vadd.f32 0.0, %v450
        %v452 = vpop.f32.mrf.mxu0
        %v453 = vadd.f32 0.0, %v452
        %454 = vmatmul.bf16.gmra.mxu0 %v329
        %v455 = vpop.f32.mrf.mxu0
        %v456 = vadd.f32 0.0, %v455
        %v457 = vpop.f32.mrf.mxu0
        %v458 = vadd.f32 0.0, %v457
        %459 = vmatmul.bf16.gmra.mxu0 %v330
        %v460 = vpop.f32.mrf.mxu0
        %v461 = vadd.f32 0.0, %v460
        %v462 = vpop.f32.mrf.mxu0
        %v463 = vadd.f32 0.0, %v462
        %464 = vmatmul.bf16.gmra.mxu0 %v331
        %v465 = vpop.f32.mrf.mxu0
        %v466 = vadd.f32 0.0, %v465
        %v467 = vpop.f32.mrf.mxu0
        %v468 = vadd.f32 0.0, %v467
        %469 = vmatmul.bf16.gmra.mxu0 %v332
        %v470 = vpop.f32.mrf.mxu0
        %v471 = vadd.f32 0.0, %v470
        %v472 = vpop.f32.mrf.mxu0
        %v473 = vadd.f32 0.0, %v472
        %474 = vmatmul.bf16.gmra.mxu0 %v333
        %v475 = vpop.f32.mrf.mxu0
        %v476 = vadd.f32 0.0, %v475
        %v477 = vpop.f32.mrf.mxu0
        %v478 = vadd.f32 0.0, %v477
        %479 = vmatmul.bf16.gmra.mxu0 %v334
        %v480 = vpop.f32.mrf.mxu0
        %v481 = vadd.f32 0.0, %v480
        %v482 = vpop.f32.mrf.mxu0
        %v483 = vadd.f32 0.0, %v482
        %484 = vmatmul.bf16.gmra.mxu0 %v335
        %v485 = vpop.f32.mrf.mxu0
        %v486 = vadd.f32 0.0, %v485
        %v487 = vpop.f32.mrf.mxu0
        %v488 = vadd.f32 0.0, %v487
        %489 = vdwg.mxu0
        %v506 = vunpack.c.l.b16 %v272
        %v507 = vunpack.c.l.b16 %v273
        %v508 = vunpack.c.l.b16 %v274
        %v509 = vunpack.c.l.b16 %v275
        %v510 = vunpack.c.l.b16 %v276
        %v511 = vunpack.c.l.b16 %v277
        %v512 = vunpack.c.l.b16 %v278
        %v513 = vunpack.c.l.b16 %v279
        %v514 = vunpack.c.l.b16 %v280
        %v515 = vunpack.c.l.b16 %v281
        %v516 = vunpack.c.l.b16 %v282
        %v517 = vunpack.c.l.b16 %v283
        %v518 = vunpack.c.l.b16 %v284
        %v519 = vunpack.c.l.b16 %v285
        %v520 = vunpack.c.l.b16 %v286
        %v521 = vunpack.c.l.b16 %v287
        %v522 = vpack.c.b16 %v507, %v506
        %v523 = vpack.c.b16 %v509, %v508
        %v524 = vpack.c.b16 %v511, %v510
        %v525 = vpack.c.b16 %v513, %v512
        %v526 = vpack.c.b16 %v515, %v514
        %v527 = vpack.c.b16 %v517, %v516
        %v528 = vpack.c.b16 %v519, %v518
        %v529 = vpack.c.b16 %v521, %v520
        %538 = vmatpush.bf16.msra.mxu0 %v529
        %539 = vmatpush.bf16.msra.mxu0 %v528
        %540 = vmatpush.bf16.msra.mxu0 %v527
        %541 = vmatpush.bf16.msra.mxu0 %v526
        %542 = vmatpush.bf16.msra.mxu0 %v525
        %543 = vmatpush.bf16.msra.mxu0 %v524
        %544 = vmatpush.bf16.msra.mxu0 %v523
        %545 = vmatpush.bf16.msra.mxu0 %v522
        %546 = vmatmul.bf16.gmra.mxu0 %v256
        %v547 = vpop.f32.mrf.mxu0
        %v548 = vadd.f32 %v411, %v547
        %v549 = vpop.f32.mrf.mxu0
        %v550 = vadd.f32 %v413, %v549
        %551 = vmatmul.bf16.gmra.mxu0 %v257
        %v552 = vpop.f32.mrf.mxu0
        %v553 = vadd.f32 %v416, %v552
        %v554 = vpop.f32.mrf.mxu0
        %v555 = vadd.f32 %v418, %v554
        %556 = vmatmul.bf16.gmra.mxu0 %v258
        %v557 = vpop.f32.mrf.mxu0
        %v558 = vadd.f32 %v421, %v557
        %v559 = vpop.f32.mrf.mxu0
        %v560 = vadd.f32 %v423, %v559
        %561 = vmatmul.bf16.gmra.mxu0 %v259
        %v562 = vpop.f32.mrf.mxu0
        %v563 = vadd.f32 %v426, %v562
        %v564 = vpop.f32.mrf.mxu0
        %v565 = vadd.f32 %v428, %v564
        %566 = vmatmul.bf16.gmra.mxu0 %v260
        %v567 = vpop.f32.mrf.mxu0
        %v568 = vadd.f32 %v431, %v567
        %v569 = vpop.f32.mrf.mxu0
        %v570 = vadd.f32 %v433, %v569
        %571 = vmatmul.bf16.gmra.mxu0 %v261
        %v572 = vpop.f32.mrf.mxu0
        %v573 = vadd.f32 %v436, %v572
        %v574 = vpop.f32.mrf.mxu0
        %v575 = vadd.f32 %v438, %v574
        %576 = vmatmul.bf16.gmra.mxu0 %v262
        %v577 = vpop.f32.mrf.mxu0
        %v578 = vadd.f32 %v441, %v577
        %v579 = vpop.f32.mrf.mxu0
        %v580 = vadd.f32 %v443, %v579
        %581 = vmatmul.bf16.gmra.mxu0 %v263
        %v582 = vpop.f32.mrf.mxu0
        %v583 = vadd.f32 %v446, %v582
        %v584 = vpop.f32.mrf.mxu0
        %v585 = vadd.f32 %v448, %v584
        %586 = vmatmul.bf16.gmra.mxu0 %v264
        %v587 = vpop.f32.mrf.mxu0
        %v588 = vadd.f32 %v451, %v587
        %v589 = vpop.f32.mrf.mxu0
        %v590 = vadd.f32 %v453, %v589
        %591 = vmatmul.bf16.gmra.mxu0 %v265
        %v592 = vpop.f32.mrf.mxu0
        %v593 = vadd.f32 %v456, %v592
        %v594 = vpop.f32.mrf.mxu0
        %v595 = vadd.f32 %v458, %v594
        %596 = vmatmul.bf16.gmra.mxu0 %v266
        %v597 = vpop.f32.mrf.mxu0
        %v598 = vadd.f32 %v461, %v597
        %v599 = vpop.f32.mrf.mxu0
        %v600 = vadd.f32 %v463, %v599
        %601 = vmatmul.bf16.gmra.mxu0 %v267
        %v602 = vpop.f32.mrf.mxu0
        %v603 = vadd.f32 %v466, %v602
        %v604 = vpop.f32.mrf.mxu0
        %v605 = vadd.f32 %v468, %v604
        %606 = vmatmul.bf16.gmra.mxu0 %v268
        %v607 = vpop.f32.mrf.mxu0
        %v608 = vadd.f32 %v471, %v607
        %v609 = vpop.f32.mrf.mxu0
        %v610 = vadd.f32 %v473, %v609
        %611 = vmatmul.bf16.gmra.mxu0 %v269
        %v612 = vpop.f32.mrf.mxu0
        %v613 = vadd.f32 %v476, %v612
        %v614 = vpop.f32.mrf.mxu0
        %v615 = vadd.f32 %v478, %v614
        %616 = vmatmul.bf16.gmra.mxu0 %v270
        %v617 = vpop.f32.mrf.mxu0
        %v618 = vadd.f32 %v481, %v617
        %v619 = vpop.f32.mrf.mxu0
        %v620 = vadd.f32 %v483, %v619
        %621 = vmatmul.bf16.gmra.mxu0 %v271
        %v622 = vpop.f32.mrf.mxu0
        %v623 = vadd.f32 %v486, %v622
        %v624 = vpop.f32.mrf.mxu0
        %v625 = vadd.f32 %v488, %v624
        %626 = vdwg.mxu0
        %v627 = vld [vmem:[%s222 + $0x2] sm:$0xff]
        %v628 = vld [vmem:[%s222 + $0xa] sm:$0xff]
        %v629 = vld [vmem:[%s222 + $0x1a] sm:$0xff]
        %v630 = vld [vmem:[%s222 + $0x22] sm:$0xff]
        %v631 = vld [vmem:[%s222 + $0x32] sm:$0xff]
        %v632 = vld [vmem:[%s222 + $0x3a] sm:$0xff]
        %v633 = vld [vmem:[%s222 + $0x4a] sm:$0xff]
        %v634 = vld [vmem:[%s222 + $0x52] sm:$0xff]
        %v635 = vld [vmem:[%s222 + $0x62] sm:$0xff]
        %v636 = vld [vmem:[%s222 + $0x6a] sm:$0xff]
        %v637 = vld [vmem:[%s222 + $0x7a] sm:$0xff]
        %v638 = vld [vmem:[%s222 + $0x82] sm:$0xff]
        %v639 = vld [vmem:[%s222 + $0x92] sm:$0xff]
        %v640 = vld [vmem:[%s222 + $0x9a] sm:$0xff]
        %v641 = vld [vmem:[%s222 + $0xaa] sm:$0xff]
        %v642 = vld [vmem:[%s222 + $0xb2] sm:$0xff]
        %v643 = vld [vmem:[%s222 + $0xc2] sm:$0xff]
        %v644 = vld [vmem:[%s222 + $0xca] sm:$0xff]
        %v645 = vld [vmem:[%s222 + $0xda] sm:$0xff]
        %v646 = vld [vmem:[%s222 + $0xe2] sm:$0xff]
        %v647 = vld [vmem:[%s222 + $0xf2] sm:$0xff]
        %v648 = vld [vmem:[%s222 + $0xfa] sm:$0xff]
        %v649 = vld [vmem:[%s222 + $0x10a] sm:$0xff]
        %v650 = vld [vmem:[%s222 + $0x112] sm:$0xff]
        %v651 = vld [vmem:[%s222 + $0x122] sm:$0xff]
        %v652 = vld [vmem:[%s222 + $0x12a] sm:$0xff]
        %v653 = vld [vmem:[%s222 + $0x13a] sm:$0xff]
        %v654 = vld [vmem:[%s222 + $0x142] sm:$0xff]
        %v655 = vld [vmem:[%s222 + $0x152] sm:$0xff]
        %v656 = vld [vmem:[%s222 + $0x15a] sm:$0xff]
        %v657 = vld [vmem:[%s222 + $0x16a] sm:$0xff]
        %v658 = vld [vmem:[%s222 + $0x172] sm:$0xff]
        %v659 = vpack.c.bf16 %v628, %v627
        %v660 = vpack.c.bf16 %v630, %v629
        %v661 = vpack.c.bf16 %v632, %v631
        %v662 = vpack.c.bf16 %v634, %v633
        %v663 = vpack.c.bf16 %v636, %v635
        %v664 = vpack.c.bf16 %v638, %v637
        %v665 = vpack.c.bf16 %v640, %v639
        %v666 = vpack.c.bf16 %v642, %v641
        %v667 = vpack.c.bf16 %v644, %v643
        %v668 = vpack.c.bf16 %v646, %v645
        %v669 = vpack.c.bf16 %v648, %v647
        %v670 = vpack.c.bf16 %v650, %v649
        %v671 = vpack.c.bf16 %v652, %v651
        %v672 = vpack.c.bf16 %v654, %v653
        %v673 = vpack.c.bf16 %v656, %v655
        %v674 = vpack.c.bf16 %v658, %v657
        %s675 = scalar_lea.vmem %s1, 128
        %v676 = vld [vmem:[%s675] sm:$0xf]
        %v677 = vld [vmem:[%s675 + $0x4] sm:$0xf]
        %v678 = vld [vmem:[%s675 + $0x8] sm:$0xf]
        %v679 = vld [vmem:[%s675 + $0xc] sm:$0xf]
        %v680 = vld [vmem:[%s675 + $0x10] sm:$0xf]
        %v681 = vld [vmem:[%s675 + $0x14] sm:$0xf]
        %v682 = vld [vmem:[%s675 + $0x18] sm:$0xf]
        %v683 = vld [vmem:[%s675 + $0x1c] sm:$0xf]
        %v684 = vld [vmem:[%s675 + $0x20] sm:$0xf]
        %v685 = vld [vmem:[%s675 + $0x24] sm:$0xf]
        %v686 = vld [vmem:[%s675 + $0x28] sm:$0xf]
        %v687 = vld [vmem:[%s675 + $0x2c] sm:$0xf]
        %v688 = vld [vmem:[%s675 + $0x30] sm:$0xf]
        %v689 = vld [vmem:[%s675 + $0x34] sm:$0xf]
        %v690 = vld [vmem:[%s675 + $0x38] sm:$0xf]
        %v691 = vld [vmem:[%s675 + $0x3c] sm:$0xf]
        %v708 = vunpack.c.l.b16 %v676
        %v709 = vunpack.c.l.b16 %v677
        %v710 = vunpack.c.l.b16 %v678
        %v711 = vunpack.c.l.b16 %v679
        %v712 = vunpack.c.l.b16 %v680
        %v713 = vunpack.c.l.b16 %v681
        %v714 = vunpack.c.l.b16 %v682
        %v715 = vunpack.c.l.b16 %v683
        %v716 = vunpack.c.l.b16 %v684
        %v717 = vunpack.c.l.b16 %v685
        %v718 = vunpack.c.l.b16 %v686
        %v719 = vunpack.c.l.b16 %v687
        %v720 = vunpack.c.l.b16 %v688
        %v721 = vunpack.c.l.b16 %v689
        %v722 = vunpack.c.l.b16 %v690
        %v723 = vunpack.c.l.b16 %v691
        %v724 = vpack.c.b16 %v709, %v708
        %v725 = vpack.c.b16 %v711, %v710
        %v726 = vpack.c.b16 %v713, %v712
        %v727 = vpack.c.b16 %v715, %v714
        %v728 = vpack.c.b16 %v717, %v716
        %v729 = vpack.c.b16 %v719, %v718
        %v730 = vpack.c.b16 %v721, %v720
        %v731 = vpack.c.b16 %v723, %v722
        %740 = vmatpush.bf16.msra.mxu0 %v731
        %741 = vmatpush.bf16.msra.mxu0 %v730
        %742 = vmatpush.bf16.msra.mxu0 %v729
        %743 = vmatpush.bf16.msra.mxu0 %v728
        %744 = vmatpush.bf16.msra.mxu0 %v727
        %745 = vmatpush.bf16.msra.mxu0 %v726
        %746 = vmatpush.bf16.msra.mxu0 %v725
        %747 = vmatpush.bf16.msra.mxu0 %v724
        %748 = vmatmul.bf16.gmra.mxu0 %v659
        %v749 = vpop.f32.mrf.mxu0
        %v750 = vadd.f32 0.0, %v749
        %v751 = vpop.f32.mrf.mxu0
        %v752 = vadd.f32 0.0, %v751
        %753 = vmatmul.bf16.gmra.mxu0 %v660
        %v754 = vpop.f32.mrf.mxu0
        %v755 = vadd.f32 0.0, %v754
        %v756 = vpop.f32.mrf.mxu0
        %v757 = vadd.f32 0.0, %v756
        %758 = vmatmul.bf16.gmra.mxu0 %v661
        %v759 = vpop.f32.mrf.mxu0
        %v760 = vadd.f32 0.0, %v759
        %v761 = vpop.f32.mrf.mxu0
        %v762 = vadd.f32 0.0, %v761
        %763 = vmatmul.bf16.gmra.mxu0 %v662
        %v764 = vpop.f32.mrf.mxu0
        %v765 = vadd.f32 0.0, %v764
        %v766 = vpop.f32.mrf.mxu0
        %v767 = vadd.f32 0.0, %v766
        %768 = vmatmul.bf16.gmra.mxu0 %v663
        %v769 = vpop.f32.mrf.mxu0
        %v770 = vadd.f32 0.0, %v769
        %v771 = vpop.f32.mrf.mxu0
        %v772 = vadd.f32 0.0, %v771
        %773 = vmatmul.bf16.gmra.mxu0 %v664
        %v774 = vpop.f32.mrf.mxu0
        %v775 = vadd.f32 0.0, %v774
        %v776 = vpop.f32.mrf.mxu0
        %v777 = vadd.f32 0.0, %v776
        %778 = vmatmul.bf16.gmra.mxu0 %v665
        %v779 = vpop.f32.mrf.mxu0
        %v780 = vadd.f32 0.0, %v779
        %v781 = vpop.f32.mrf.mxu0
        %v782 = vadd.f32 0.0, %v781
        %783 = vmatmul.bf16.gmra.mxu0 %v666
        %v784 = vpop.f32.mrf.mxu0
        %v785 = vadd.f32 0.0, %v784
        %v786 = vpop.f32.mrf.mxu0
        %v787 = vadd.f32 0.0, %v786
        %788 = vmatmul.bf16.gmra.mxu0 %v667
        %v789 = vpop.f32.mrf.mxu0
        %v790 = vadd.f32 0.0, %v789
        %v791 = vpop.f32.mrf.mxu0
        %v792 = vadd.f32 0.0, %v791
        %793 = vmatmul.bf16.gmra.mxu0 %v668
        %v794 = vpop.f32.mrf.mxu0
        %v795 = vadd.f32 0.0, %v794
        %v796 = vpop.f32.mrf.mxu0
        %v797 = vadd.f32 0.0, %v796
        %798 = vmatmul.bf16.gmra.mxu0 %v669
        %v799 = vpop.f32.mrf.mxu0
        %v800 = vadd.f32 0.0, %v799
        %v801 = vpop.f32.mrf.mxu0
        %v802 = vadd.f32 0.0, %v801
        %803 = vmatmul.bf16.gmra.mxu0 %v670
        %v804 = vpop.f32.mrf.mxu0
        %v805 = vadd.f32 0.0, %v804
        %v806 = vpop.f32.mrf.mxu0
        %v807 = vadd.f32 0.0, %v806
        %808 = vmatmul.bf16.gmra.mxu0 %v671
        %v809 = vpop.f32.mrf.mxu0
        %v810 = vadd.f32 0.0, %v809
        %v811 = vpop.f32.mrf.mxu0
        %v812 = vadd.f32 0.0, %v811
        %813 = vmatmul.bf16.gmra.mxu0 %v672
        %v814 = vpop.f32.mrf.mxu0
        %v815 = vadd.f32 0.0, %v814
        %v816 = vpop.f32.mrf.mxu0
        %v817 = vadd.f32 0.0, %v816
        %818 = vmatmul.bf16.gmra.mxu0 %v673
        %v819 = vpop.f32.mrf.mxu0
        %v820 = vadd.f32 0.0, %v819
        %v821 = vpop.f32.mrf.mxu0
        %v822 = vadd.f32 0.0, %v821
        %823 = vmatmul.bf16.gmra.mxu0 %v674
        %v824 = vpop.f32.mrf.mxu0
        %v825 = vadd.f32 0.0, %v824
        %v826 = vpop.f32.mrf.mxu0
        %v827 = vadd.f32 0.0, %v826
        %828 = vdwg.mxu0
        %v829 = vadd.f32 %v548, %v750
        %v830 = vadd.f32 %v550, %v752
        %v831 = vadd.f32 %v553, %v755
        %v832 = vadd.f32 %v555, %v757
        %v833 = vadd.f32 %v558, %v760
        %v834 = vadd.f32 %v560, %v762
        %v835 = vadd.f32 %v563, %v765
        %v836 = vadd.f32 %v565, %v767
        %v837 = vadd.f32 %v568, %v770
        %v838 = vadd.f32 %v570, %v772
        %v839 = vadd.f32 %v573, %v775
        %v840 = vadd.f32 %v575, %v777
        %v841 = vadd.f32 %v578, %v780
        %v842 = vadd.f32 %v580, %v782
        %v843 = vadd.f32 %v583, %v785
        %v844 = vadd.f32 %v585, %v787
        %v845 = vadd.f32 %v588, %v790
        %v846 = vadd.f32 %v590, %v792
        %v847 = vadd.f32 %v593, %v795
        %v848 = vadd.f32 %v595, %v797
        %v849 = vadd.f32 %v598, %v800
        %v850 = vadd.f32 %v600, %v802
        %v851 = vadd.f32 %v603, %v805
        %v852 = vadd.f32 %v605, %v807
        %v853 = vadd.f32 %v608, %v810
        %v854 = vadd.f32 %v610, %v812
        %v855 = vadd.f32 %v613, %v815
        %v856 = vadd.f32 %v615, %v817
        %v857 = vadd.f32 %v618, %v820
        %v858 = vadd.f32 %v620, %v822
        %v859 = vadd.f32 %v623, %v825
        %v860 = vadd.f32 %v625, %v827
        %s861 = scalar_lea.vmem %s222, 24
        %v862 = vld [vmem:[%s861] sm:$0xff]
        %v863 = vld [vmem:[%s861 + $0x8] sm:$0xff]
        %v864 = vld [vmem:[%s861 + $0x18] sm:$0xff]
        %v865 = vld [vmem:[%s861 + $0x20] sm:$0xff]
        %v866 = vld [vmem:[%s861 + $0x30] sm:$0xff]
        %v867 = vld [vmem:[%s861 + $0x38] sm:$0xff]
        %v868 = vld [vmem:[%s861 + $0x48] sm:$0xff]
        %v869 = vld [vmem:[%s861 + $0x50] sm:$0xff]
        %v870 = vld [vmem:[%s861 + $0x60] sm:$0xff]
        %v871 = vld [vmem:[%s861 + $0x68] sm:$0xff]
        %v872 = vld [vmem:[%s861 + $0x78] sm:$0xff]
        %v873 = vld [vmem:[%s861 + $0x80] sm:$0xff]
        %v874 = vld [vmem:[%s861 + $0x90] sm:$0xff]
        %v875 = vld [vmem:[%s861 + $0x98] sm:$0xff]
        %v876 = vld [vmem:[%s861 + $0xa8] sm:$0xff]
        %v877 = vld [vmem:[%s861 + $0xb0] sm:$0xff]
        %v878 = vld [vmem:[%s861 + $0xc0] sm:$0xff]
        %v879 = vld [vmem:[%s861 + $0xc8] sm:$0xff]
        %v880 = vld [vmem:[%s861 + $0xd8] sm:$0xff]
        %v881 = vld [vmem:[%s861 + $0xe0] sm:$0xff]
        %v882 = vld [vmem:[%s861 + $0xf0] sm:$0xff]
        %v883 = vld [vmem:[%s861 + $0xf8] sm:$0xff]
        %v884 = vld [vmem:[%s861 + $0x108] sm:$0xff]
        %v885 = vld [vmem:[%s861 + $0x110] sm:$0xff]
        %v886 = vld [vmem:[%s861 + $0x120] sm:$0xff]
        %v887 = vld [vmem:[%s861 + $0x128] sm:$0xff]
        %v888 = vld [vmem:[%s861 + $0x138] sm:$0xff]
        %v889 = vld [vmem:[%s861 + $0x140] sm:$0xff]
        %v890 = vld [vmem:[%s861 + $0x150] sm:$0xff]
        %v891 = vld [vmem:[%s861 + $0x158] sm:$0xff]
        %v892 = vld [vmem:[%s861 + $0x168] sm:$0xff]
        %v893 = vld [vmem:[%s861 + $0x170] sm:$0xff]
        %v894 = vpack.c.bf16 %v863, %v862
        %v895 = vpack.c.bf16 %v865, %v864
        %v896 = vpack.c.bf16 %v867, %v866
        %v897 = vpack.c.bf16 %v869, %v868
        %v898 = vpack.c.bf16 %v871, %v870
        %v899 = vpack.c.bf16 %v873, %v872
        %v900 = vpack.c.bf16 %v875, %v874
        %v901 = vpack.c.bf16 %v877, %v876
        %v902 = vpack.c.bf16 %v879, %v878
        %v903 = vpack.c.bf16 %v881, %v880
        %v904 = vpack.c.bf16 %v883, %v882
        %v905 = vpack.c.bf16 %v885, %v884
        %v906 = vpack.c.bf16 %v887, %v886
        %v907 = vpack.c.bf16 %v889, %v888
        %v908 = vpack.c.bf16 %v891, %v890
        %v909 = vpack.c.bf16 %v893, %v892
        %s910 = scalar_lea.vmem %s1, 192
        %v911 = vld [vmem:[%s910] sm:$0xf]
        %v912 = vld [vmem:[%s910 + $0x4] sm:$0xf]
        %v913 = vld [vmem:[%s910 + $0x8] sm:$0xf]
        %v914 = vld [vmem:[%s910 + $0xc] sm:$0xf]
        %v915 = vld [vmem:[%s910 + $0x10] sm:$0xf]
        %v916 = vld [vmem:[%s910 + $0x14] sm:$0xf]
        %v917 = vld [vmem:[%s910 + $0x18] sm:$0xf]
        %v918 = vld [vmem:[%s910 + $0x1c] sm:$0xf]
        %v919 = vld [vmem:[%s910 + $0x20] sm:$0xf]
        %v920 = vld [vmem:[%s910 + $0x24] sm:$0xf]
        %v921 = vld [vmem:[%s910 + $0x28] sm:$0xf]
        %v922 = vld [vmem:[%s910 + $0x2c] sm:$0xf]
        %v923 = vld [vmem:[%s910 + $0x30] sm:$0xf]
        %v924 = vld [vmem:[%s910 + $0x34] sm:$0xf]
        %v925 = vld [vmem:[%s910 + $0x38] sm:$0xf]
        %v926 = vld [vmem:[%s910 + $0x3c] sm:$0xf]
        %v943 = vunpack.c.l.b16 %v911
        %v944 = vunpack.c.l.b16 %v912
        %v945 = vunpack.c.l.b16 %v913
        %v946 = vunpack.c.l.b16 %v914
        %v947 = vunpack.c.l.b16 %v915
        %v948 = vunpack.c.l.b16 %v916
        %v949 = vunpack.c.l.b16 %v917
        %v950 = vunpack.c.l.b16 %v918
        %v951 = vunpack.c.l.b16 %v919
        %v952 = vunpack.c.l.b16 %v920
        %v953 = vunpack.c.l.b16 %v921
        %v954 = vunpack.c.l.b16 %v922
        %v955 = vunpack.c.l.b16 %v923
        %v956 = vunpack.c.l.b16 %v924
        %v957 = vunpack.c.l.b16 %v925
        %v958 = vunpack.c.l.b16 %v926
        %v959 = vpack.c.b16 %v944, %v943
        %v960 = vpack.c.b16 %v946, %v945
        %v961 = vpack.c.b16 %v948, %v947
        %v962 = vpack.c.b16 %v950, %v949
        %v963 = vpack.c.b16 %v952, %v951
        %v964 = vpack.c.b16 %v954, %v953
        %v965 = vpack.c.b16 %v956, %v955
        %v966 = vpack.c.b16 %v958, %v957
        %975 = vmatpush.bf16.msra.mxu0 %v966
        %976 = vmatpush.bf16.msra.mxu0 %v965
        %977 = vmatpush.bf16.msra.mxu0 %v964
        %978 = vmatpush.bf16.msra.mxu0 %v963
        %979 = vmatpush.bf16.msra.mxu0 %v962
        %980 = vmatpush.bf16.msra.mxu0 %v961
        %981 = vmatpush.bf16.msra.mxu0 %v960
        %982 = vmatpush.bf16.msra.mxu0 %v959
        %983 = vmatmul.bf16.gmra.mxu0 %v894
        %v984 = vpop.f32.mrf.mxu0
        %v985 = vadd.f32 0.0, %v984
        %v986 = vpop.f32.mrf.mxu0
        %v987 = vadd.f32 0.0, %v986
        %988 = vmatmul.bf16.gmra.mxu0 %v895
        %v989 = vpop.f32.mrf.mxu0
        %v990 = vadd.f32 0.0, %v989
        %v991 = vpop.f32.mrf.mxu0
        %v992 = vadd.f32 0.0, %v991
        %993 = vmatmul.bf16.gmra.mxu0 %v896
        %v994 = vpop.f32.mrf.mxu0
        %v995 = vadd.f32 0.0, %v994
        %v996 = vpop.f32.mrf.mxu0
        %v997 = vadd.f32 0.0, %v996
        %998 = vmatmul.bf16.gmra.mxu0 %v897
        %v999 = vpop.f32.mrf.mxu0
        %v1000 = vadd.f32 0.0, %v999
        %v1001 = vpop.f32.mrf.mxu0
        %v1002 = vadd.f32 0.0, %v1001
        %1003 = vmatmul.bf16.gmra.mxu0 %v898
        %v1004 = vpop.f32.mrf.mxu0
        %v1005 = vadd.f32 0.0, %v1004
        %v1006 = vpop.f32.mrf.mxu0
        %v1007 = vadd.f32 0.0, %v1006
        %1008 = vmatmul.bf16.gmra.mxu0 %v899
        %v1009 = vpop.f32.mrf.mxu0
        %v1010 = vadd.f32 0.0, %v1009
        %v1011 = vpop.f32.mrf.mxu0
        %v1012 = vadd.f32 0.0, %v1011
        %1013 = vmatmul.bf16.gmra.mxu0 %v900
        %v1014 = vpop.f32.mrf.mxu0
        %v1015 = vadd.f32 0.0, %v1014
        %v1016 = vpop.f32.mrf.mxu0
        %v1017 = vadd.f32 0.0, %v1016
        %1018 = vmatmul.bf16.gmra.mxu0 %v901
        %v1019 = vpop.f32.mrf.mxu0
        %v1020 = vadd.f32 0.0, %v1019
        %v1021 = vpop.f32.mrf.mxu0
        %v1022 = vadd.f32 0.0, %v1021
        %1023 = vmatmul.bf16.gmra.mxu0 %v902
        %v1024 = vpop.f32.mrf.mxu0
        %v1025 = vadd.f32 0.0, %v1024
        %v1026 = vpop.f32.mrf.mxu0
        %v1027 = vadd.f32 0.0, %v1026
        %1028 = vmatmul.bf16.gmra.mxu0 %v903
        %v1029 = vpop.f32.mrf.mxu0
        %v1030 = vadd.f32 0.0, %v1029
        %v1031 = vpop.f32.mrf.mxu0
        %v1032 = vadd.f32 0.0, %v1031
        %1033 = vmatmul.bf16.gmra.mxu0 %v904
        %v1034 = vpop.f32.mrf.mxu0
        %v1035 = vadd.f32 0.0, %v1034
        %v1036 = vpop.f32.mrf.mxu0
        %v1037 = vadd.f32 0.0, %v1036
        %1038 = vmatmul.bf16.gmra.mxu0 %v905
        %v1039 = vpop.f32.mrf.mxu0
        %v1040 = vadd.f32 0.0, %v1039
        %v1041 = vpop.f32.mrf.mxu0
        %v1042 = vadd.f32 0.0, %v1041
        %1043 = vmatmul.bf16.gmra.mxu0 %v906
        %v1044 = vpop.f32.mrf.mxu0
        %v1045 = vadd.f32 0.0, %v1044
        %v1046 = vpop.f32.mrf.mxu0
        %v1047 = vadd.f32 0.0, %v1046
        %1048 = vmatmul.bf16.gmra.mxu0 %v907
        %v1049 = vpop.f32.mrf.mxu0
        %v1050 = vadd.f32 0.0, %v1049
        %v1051 = vpop.f32.mrf.mxu0
        %v1052 = vadd.f32 0.0, %v1051
        %1053 = vmatmul.bf16.gmra.mxu0 %v908
        %v1054 = vpop.f32.mrf.mxu0
        %v1055 = vadd.f32 0.0, %v1054
        %v1056 = vpop.f32.mrf.mxu0
        %v1057 = vadd.f32 0.0, %v1056
        %1058 = vmatmul.bf16.gmra.mxu0 %v909
        %v1059 = vpop.f32.mrf.mxu0
        %v1060 = vadd.f32 0.0, %v1059
        %v1061 = vpop.f32.mrf.mxu0
        %v1062 = vadd.f32 0.0, %v1061
        %1063 = vdwg.mxu0
        %v1064 = vadd.f32 %v829, %v985
        %v1065 = vadd.f32 %v830, %v987
        %v1066 = vadd.f32 %v831, %v990
        %v1067 = vadd.f32 %v832, %v992
        %v1068 = vadd.f32 %v833, %v995
        %v1069 = vadd.f32 %v834, %v997
        %v1070 = vadd.f32 %v835, %v1000
        %v1071 = vadd.f32 %v836, %v1002
        %v1072 = vadd.f32 %v837, %v1005
        %v1073 = vadd.f32 %v838, %v1007
        %v1074 = vadd.f32 %v839, %v1010
        %v1075 = vadd.f32 %v840, %v1012
        %v1076 = vadd.f32 %v841, %v1015
        %v1077 = vadd.f32 %v842, %v1017
        %v1078 = vadd.f32 %v843, %v1020
        %v1079 = vadd.f32 %v844, %v1022
        %v1080 = vadd.f32 %v845, %v1025
        %v1081 = vadd.f32 %v846, %v1027
        %v1082 = vadd.f32 %v847, %v1030
        %v1083 = vadd.f32 %v848, %v1032
        %v1084 = vadd.f32 %v849, %v1035
        %v1085 = vadd.f32 %v850, %v1037
        %v1086 = vadd.f32 %v851, %v1040
        %v1087 = vadd.f32 %v852, %v1042
        %v1088 = vadd.f32 %v853, %v1045
        %v1089 = vadd.f32 %v854, %v1047
        %v1090 = vadd.f32 %v855, %v1050
        %v1091 = vadd.f32 %v856, %v1052
        %v1092 = vadd.f32 %v857, %v1055
        %v1093 = vadd.f32 %v858, %v1057
        %v1094 = vadd.f32 %v859, %v1060
        %v1095 = vadd.f32 %v860, %v1062
        %v1096 = vld [vmem:[%s861 + $0x1] sm:$0xff]
        %v1097 = vld [vmem:[%s861 + $0x9] sm:$0xff]
        %v1098 = vld [vmem:[%s861 + $0x19] sm:$0xff]
        %v1099 = vld [vmem:[%s861 + $0x21] sm:$0xff]
        %v1100 = vld [vmem:[%s861 + $0x31] sm:$0xff]
        %v1101 = vld [vmem:[%s861 + $0x39] sm:$0xff]
        %v1102 = vld [vmem:[%s861 + $0x49] sm:$0xff]
        %v1103 = vld [vmem:[%s861 + $0x51] sm:$0xff]
        %v1104 = vld [vmem:[%s861 + $0x61] sm:$0xff]
        %v1105 = vld [vmem:[%s861 + $0x69] sm:$0xff]
        %v1106 = vld [vmem:[%s861 + $0x79] sm:$0xff]
        %v1107 = vld [vmem:[%s861 + $0x81] sm:$0xff]
        %v1108 = vld [vmem:[%s861 + $0x91] sm:$0xff]
        %v1109 = vld [vmem:[%s861 + $0x99] sm:$0xff]
        %v1110 = vld [vmem:[%s861 + $0xa9] sm:$0xff]
        %v1111 = vld [vmem:[%s861 + $0xb1] sm:$0xff]
        %v1112 = vld [vmem:[%s861 + $0xc1] sm:$0xff]
        %v1113 = vld [vmem:[%s861 + $0xc9] sm:$0xff]
        %v1114 = vld [vmem:[%s861 + $0xd9] sm:$0xff]
        %v1115 = vld [vmem:[%s861 + $0xe1] sm:$0xff]
        %v1116 = vld [vmem:[%s861 + $0xf1] sm:$0xff]
        %v1117 = vld [vmem:[%s861 + $0xf9] sm:$0xff]
        %v1118 = vld [vmem:[%s861 + $0x109] sm:$0xff]
        %v1119 = vld [vmem:[%s861 + $0x111] sm:$0xff]
        %v1120 = vld [vmem:[%s861 + $0x121] sm:$0xff]
        %v1121 = vld [vmem:[%s861 + $0x129] sm:$0xff]
        %v1122 = vld [vmem:[%s861 + $0x139] sm:$0xff]
        %v1123 = vld [vmem:[%s861 + $0x141] sm:$0xff]
        %v1124 = vld [vmem:[%s861 + $0x151] sm:$0xff]
        %v1125 = vld [vmem:[%s861 + $0x159] sm:$0xff]
        %v1126 = vld [vmem:[%s861 + $0x169] sm:$0xff]
        %v1127 = vld [vmem:[%s861 + $0x171] sm:$0xff]
        %v1128 = vpack.c.bf16 %v1097, %v1096
        %v1129 = vpack.c.bf16 %v1099, %v1098
        %v1130 = vpack.c.bf16 %v1101, %v1100
        %v1131 = vpack.c.bf16 %v1103, %v1102
        %v1132 = vpack.c.bf16 %v1105, %v1104
        %v1133 = vpack.c.bf16 %v1107, %v1106
        %v1134 = vpack.c.bf16 %v1109, %v1108
        %v1135 = vpack.c.bf16 %v1111, %v1110
        %v1136 = vpack.c.bf16 %v1113, %v1112
        %v1137 = vpack.c.bf16 %v1115, %v1114
        %v1138 = vpack.c.bf16 %v1117, %v1116
        %v1139 = vpack.c.bf16 %v1119, %v1118
        %v1140 = vpack.c.bf16 %v1121, %v1120
        %v1141 = vpack.c.bf16 %v1123, %v1122
        %v1142 = vpack.c.bf16 %v1125, %v1124
        %v1143 = vpack.c.bf16 %v1127, %v1126
        %s1144 = scalar_lea.vmem %s1, 256
        %v1145 = vld [vmem:[%s1144] sm:$0xf]
        %v1146 = vld [vmem:[%s1144 + $0x4] sm:$0xf]
        %v1147 = vld [vmem:[%s1144 + $0x8] sm:$0xf]
        %v1148 = vld [vmem:[%s1144 + $0xc] sm:$0xf]
        %v1149 = vld [vmem:[%s1144 + $0x10] sm:$0xf]
        %v1150 = vld [vmem:[%s1144 + $0x14] sm:$0xf]
        %v1151 = vld [vmem:[%s1144 + $0x18] sm:$0xf]
        %v1152 = vld [vmem:[%s1144 + $0x1c] sm:$0xf]
        %v1153 = vld [vmem:[%s1144 + $0x20] sm:$0xf]
        %v1154 = vld [vmem:[%s1144 + $0x24] sm:$0xf]
        %v1155 = vld [vmem:[%s1144 + $0x28] sm:$0xf]
        %v1156 = vld [vmem:[%s1144 + $0x2c] sm:$0xf]
        %v1157 = vld [vmem:[%s1144 + $0x30] sm:$0xf]
        %v1158 = vld [vmem:[%s1144 + $0x34] sm:$0xf]
        %v1159 = vld [vmem:[%s1144 + $0x38] sm:$0xf]
        %v1160 = vld [vmem:[%s1144 + $0x3c] sm:$0xf]
        %v1177 = vunpack.c.l.b16 %v1145
        %v1178 = vunpack.c.l.b16 %v1146
        %v1179 = vunpack.c.l.b16 %v1147
        %v1180 = vunpack.c.l.b16 %v1148
        %v1181 = vunpack.c.l.b16 %v1149
        %v1182 = vunpack.c.l.b16 %v1150
        %v1183 = vunpack.c.l.b16 %v1151
        %v1184 = vunpack.c.l.b16 %v1152
        %v1185 = vunpack.c.l.b16 %v1153
        %v1186 = vunpack.c.l.b16 %v1154
        %v1187 = vunpack.c.l.b16 %v1155
        %v1188 = vunpack.c.l.b16 %v1156
        %v1189 = vunpack.c.l.b16 %v1157
        %v1190 = vunpack.c.l.b16 %v1158
        %v1191 = vunpack.c.l.b16 %v1159
        %v1192 = vunpack.c.l.b16 %v1160
        %v1193 = vpack.c.b16 %v1178, %v1177
        %v1194 = vpack.c.b16 %v1180, %v1179
        %v1195 = vpack.c.b16 %v1182, %v1181
        %v1196 = vpack.c.b16 %v1184, %v1183
        %v1197 = vpack.c.b16 %v1186, %v1185
        %v1198 = vpack.c.b16 %v1188, %v1187
        %v1199 = vpack.c.b16 %v1190, %v1189
        %v1200 = vpack.c.b16 %v1192, %v1191
        %1209 = vmatpush.bf16.msra.mxu0 %v1200
        %1210 = vmatpush.bf16.msra.mxu0 %v1199
        %1211 = vmatpush.bf16.msra.mxu0 %v1198
        %1212 = vmatpush.bf16.msra.mxu0 %v1197
        %1213 = vmatpush.bf16.msra.mxu0 %v1196
        %1214 = vmatpush.bf16.msra.mxu0 %v1195
        %1215 = vmatpush.bf16.msra.mxu0 %v1194
        %1216 = vmatpush.bf16.msra.mxu0 %v1193
        %1217 = vmatmul.bf16.gmra.mxu0 %v1128
        %v1218 = vpop.f32.mrf.mxu0
        %v1219 = vadd.f32 0.0, %v1218
        %v1220 = vpop.f32.mrf.mxu0
        %v1221 = vadd.f32 0.0, %v1220
        %1222 = vmatmul.bf16.gmra.mxu0 %v1129
        %v1223 = vpop.f32.mrf.mxu0
        %v1224 = vadd.f32 0.0, %v1223
        %v1225 = vpop.f32.mrf.mxu0
        %v1226 = vadd.f32 0.0, %v1225
        %1227 = vmatmul.bf16.gmra.mxu0 %v1130
        %v1228 = vpop.f32.mrf.mxu0
        %v1229 = vadd.f32 0.0, %v1228
        %v1230 = vpop.f32.mrf.mxu0
        %v1231 = vadd.f32 0.0, %v1230
        %1232 = vmatmul.bf16.gmra.mxu0 %v1131
        %v1233 = vpop.f32.mrf.mxu0
        %v1234 = vadd.f32 0.0, %v1233
        %v1235 = vpop.f32.mrf.mxu0
        %v1236 = vadd.f32 0.0, %v1235
        %1237 = vmatmul.bf16.gmra.mxu0 %v1132
        %v1238 = vpop.f32.mrf.mxu0
        %v1239 = vadd.f32 0.0, %v1238
        %v1240 = vpop.f32.mrf.mxu0
        %v1241 = vadd.f32 0.0, %v1240
        %1242 = vmatmul.bf16.gmra.mxu0 %v1133
        %v1243 = vpop.f32.mrf.mxu0
        %v1244 = vadd.f32 0.0, %v1243
        %v1245 = vpop.f32.mrf.mxu0
        %v1246 = vadd.f32 0.0, %v1245
        %1247 = vmatmul.bf16.gmra.mxu0 %v1134
        %v1248 = vpop.f32.mrf.mxu0
        %v1249 = vadd.f32 0.0, %v1248
        %v1250 = vpop.f32.mrf.mxu0
        %v1251 = vadd.f32 0.0, %v1250
        %1252 = vmatmul.bf16.gmra.mxu0 %v1135
        %v1253 = vpop.f32.mrf.mxu0
        %v1254 = vadd.f32 0.0, %v1253
        %v1255 = vpop.f32.mrf.mxu0
        %v1256 = vadd.f32 0.0, %v1255
        %1257 = vmatmul.bf16.gmra.mxu0 %v1136
        %v1258 = vpop.f32.mrf.mxu0
        %v1259 = vadd.f32 0.0, %v1258
        %v1260 = vpop.f32.mrf.mxu0
        %v1261 = vadd.f32 0.0, %v1260
        %1262 = vmatmul.bf16.gmra.mxu0 %v1137
        %v1263 = vpop.f32.mrf.mxu0
        %v1264 = vadd.f32 0.0, %v1263
        %v1265 = vpop.f32.mrf.mxu0
        %v1266 = vadd.f32 0.0, %v1265
        %1267 = vmatmul.bf16.gmra.mxu0 %v1138
        %v1268 = vpop.f32.mrf.mxu0
        %v1269 = vadd.f32 0.0, %v1268
        %v1270 = vpop.f32.mrf.mxu0
        %v1271 = vadd.f32 0.0, %v1270
        %1272 = vmatmul.bf16.gmra.mxu0 %v1139
        %v1273 = vpop.f32.mrf.mxu0
        %v1274 = vadd.f32 0.0, %v1273
        %v1275 = vpop.f32.mrf.mxu0
        %v1276 = vadd.f32 0.0, %v1275
        %1277 = vmatmul.bf16.gmra.mxu0 %v1140
        %v1278 = vpop.f32.mrf.mxu0
        %v1279 = vadd.f32 0.0, %v1278
        %v1280 = vpop.f32.mrf.mxu0
        %v1281 = vadd.f32 0.0, %v1280
        %1282 = vmatmul.bf16.gmra.mxu0 %v1141
        %v1283 = vpop.f32.mrf.mxu0
        %v1284 = vadd.f32 0.0, %v1283
        %v1285 = vpop.f32.mrf.mxu0
        %v1286 = vadd.f32 0.0, %v1285
        %1287 = vmatmul.bf16.gmra.mxu0 %v1142
        %v1288 = vpop.f32.mrf.mxu0
        %v1289 = vadd.f32 0.0, %v1288
        %v1290 = vpop.f32.mrf.mxu0
        %v1291 = vadd.f32 0.0, %v1290
        %1292 = vmatmul.bf16.gmra.mxu0 %v1143
        %v1293 = vpop.f32.mrf.mxu0
        %v1294 = vadd.f32 0.0, %v1293
        %v1295 = vpop.f32.mrf.mxu0
        %v1296 = vadd.f32 0.0, %v1295
        %1297 = vdwg.mxu0
        %v1298 = vadd.f32 %v1064, %v1219
        %v1299 = vadd.f32 %v1065, %v1221
        %v1300 = vadd.f32 %v1066, %v1224
        %v1301 = vadd.f32 %v1067, %v1226
        %v1302 = vadd.f32 %v1068, %v1229
        %v1303 = vadd.f32 %v1069, %v1231
        %v1304 = vadd.f32 %v1070, %v1234
        %v1305 = vadd.f32 %v1071, %v1236
        %v1306 = vadd.f32 %v1072, %v1239
        %v1307 = vadd.f32 %v1073, %v1241
        %v1308 = vadd.f32 %v1074, %v1244
        %v1309 = vadd.f32 %v1075, %v1246
        %v1310 = vadd.f32 %v1076, %v1249
        %v1311 = vadd.f32 %v1077, %v1251
        %v1312 = vadd.f32 %v1078, %v1254
        %v1313 = vadd.f32 %v1079, %v1256
        %v1314 = vadd.f32 %v1080, %v1259
        %v1315 = vadd.f32 %v1081, %v1261
        %v1316 = vadd.f32 %v1082, %v1264
        %v1317 = vadd.f32 %v1083, %v1266
        %v1318 = vadd.f32 %v1084, %v1269
        %v1319 = vadd.f32 %v1085, %v1271
        %v1320 = vadd.f32 %v1086, %v1274
        %v1321 = vadd.f32 %v1087, %v1276
        %v1322 = vadd.f32 %v1088, %v1279
        %v1323 = vadd.f32 %v1089, %v1281
        %v1324 = vadd.f32 %v1090, %v1284
        %v1325 = vadd.f32 %v1091, %v1286
        %v1326 = vadd.f32 %v1092, %v1289
        %v1327 = vadd.f32 %v1093, %v1291
        %v1328 = vadd.f32 %v1094, %v1294
        %v1329 = vadd.f32 %v1095, %v1296
        %v1330 = vld [vmem:[%s861 + $0x2] sm:$0xff]
        %v1331 = vld [vmem:[%s861 + $0xa] sm:$0xff]
        %v1332 = vld [vmem:[%s861 + $0x1a] sm:$0xff]
        %v1333 = vld [vmem:[%s861 + $0x22] sm:$0xff]
        %v1334 = vld [vmem:[%s861 + $0x32] sm:$0xff]
        %v1335 = vld [vmem:[%s861 + $0x3a] sm:$0xff]
        %v1336 = vld [vmem:[%s861 + $0x4a] sm:$0xff]
        %v1337 = vld [vmem:[%s861 + $0x52] sm:$0xff]
        %v1338 = vld [vmem:[%s861 + $0x62] sm:$0xff]
        %v1339 = vld [vmem:[%s861 + $0x6a] sm:$0xff]
        %v1340 = vld [vmem:[%s861 + $0x7a] sm:$0xff]
        %v1341 = vld [vmem:[%s861 + $0x82] sm:$0xff]
        %v1342 = vld [vmem:[%s861 + $0x92] sm:$0xff]
        %v1343 = vld [vmem:[%s861 + $0x9a] sm:$0xff]
        %v1344 = vld [vmem:[%s861 + $0xaa] sm:$0xff]
        %v1345 = vld [vmem:[%s861 + $0xb2] sm:$0xff]
        %v1346 = vld [vmem:[%s861 + $0xc2] sm:$0xff]
        %v1347 = vld [vmem:[%s861 + $0xca] sm:$0xff]
        %v1348 = vld [vmem:[%s861 + $0xda] sm:$0xff]
        %v1349 = vld [vmem:[%s861 + $0xe2] sm:$0xff]
        %v1350 = vld [vmem:[%s861 + $0xf2] sm:$0xff]
        %v1351 = vld [vmem:[%s861 + $0xfa] sm:$0xff]
        %v1352 = vld [vmem:[%s861 + $0x10a] sm:$0xff]
        %v1353 = vld [vmem:[%s861 + $0x112] sm:$0xff]
        %v1354 = vld [vmem:[%s861 + $0x122] sm:$0xff]
        %v1355 = vld [vmem:[%s861 + $0x12a] sm:$0xff]
        %v1356 = vld [vmem:[%s861 + $0x13a] sm:$0xff]
        %v1357 = vld [vmem:[%s861 + $0x142] sm:$0xff]
        %v1358 = vld [vmem:[%s861 + $0x152] sm:$0xff]
        %v1359 = vld [vmem:[%s861 + $0x15a] sm:$0xff]
        %v1360 = vld [vmem:[%s861 + $0x16a] sm:$0xff]
        %v1361 = vld [vmem:[%s861 + $0x172] sm:$0xff]
        %v1362 = vpack.c.bf16 %v1331, %v1330
        %v1363 = vpack.c.bf16 %v1333, %v1332
        %v1364 = vpack.c.bf16 %v1335, %v1334
        %v1365 = vpack.c.bf16 %v1337, %v1336
        %v1366 = vpack.c.bf16 %v1339, %v1338
        %v1367 = vpack.c.bf16 %v1341, %v1340
        %v1368 = vpack.c.bf16 %v1343, %v1342
        %v1369 = vpack.c.bf16 %v1345, %v1344
        %v1370 = vpack.c.bf16 %v1347, %v1346
        %v1371 = vpack.c.bf16 %v1349, %v1348
        %v1372 = vpack.c.bf16 %v1351, %v1350
        %v1373 = vpack.c.bf16 %v1353, %v1352
        %v1374 = vpack.c.bf16 %v1355, %v1354
        %v1375 = vpack.c.bf16 %v1357, %v1356
        %v1376 = vpack.c.bf16 %v1359, %v1358
        %v1377 = vpack.c.bf16 %v1361, %v1360
        %s1378 = scalar_lea.vmem %s1, 320
        %v1379 = vld [vmem:[%s1378] sm:$0xf]
        %v1380 = vld [vmem:[%s1378 + $0x4] sm:$0xf]
        %v1381 = vld [vmem:[%s1378 + $0x8] sm:$0xf]
        %v1382 = vld [vmem:[%s1378 + $0xc] sm:$0xf]
        %v1383 = vld [vmem:[%s1378 + $0x10] sm:$0xf]
        %v1384 = vld [vmem:[%s1378 + $0x14] sm:$0xf]
        %v1385 = vld [vmem:[%s1378 + $0x18] sm:$0xf]
        %v1386 = vld [vmem:[%s1378 + $0x1c] sm:$0xf]
        %v1387 = vld [vmem:[%s1378 + $0x20] sm:$0xf]
        %v1388 = vld [vmem:[%s1378 + $0x24] sm:$0xf]
        %v1389 = vld [vmem:[%s1378 + $0x28] sm:$0xf]
        %v1390 = vld [vmem:[%s1378 + $0x2c] sm:$0xf]
        %v1391 = vld [vmem:[%s1378 + $0x30] sm:$0xf]
        %v1392 = vld [vmem:[%s1378 + $0x34] sm:$0xf]
        %v1393 = vld [vmem:[%s1378 + $0x38] sm:$0xf]
        %v1394 = vld [vmem:[%s1378 + $0x3c] sm:$0xf]
        %v1411 = vunpack.c.l.b16 %v1379
        %v1412 = vunpack.c.l.b16 %v1380
        %v1413 = vunpack.c.l.b16 %v1381
        %v1414 = vunpack.c.l.b16 %v1382
        %v1415 = vunpack.c.l.b16 %v1383
        %v1416 = vunpack.c.l.b16 %v1384
        %v1417 = vunpack.c.l.b16 %v1385
        %v1418 = vunpack.c.l.b16 %v1386
        %v1419 = vunpack.c.l.b16 %v1387
        %v1420 = vunpack.c.l.b16 %v1388
        %v1421 = vunpack.c.l.b16 %v1389
        %v1422 = vunpack.c.l.b16 %v1390
        %v1423 = vunpack.c.l.b16 %v1391
        %v1424 = vunpack.c.l.b16 %v1392
        %v1425 = vunpack.c.l.b16 %v1393
        %v1426 = vunpack.c.l.b16 %v1394
        %v1427 = vpack.c.b16 %v1412, %v1411
        %v1428 = vpack.c.b16 %v1414, %v1413
        %v1429 = vpack.c.b16 %v1416, %v1415
        %v1430 = vpack.c.b16 %v1418, %v1417
        %v1431 = vpack.c.b16 %v1420, %v1419
        %v1432 = vpack.c.b16 %v1422, %v1421
        %v1433 = vpack.c.b16 %v1424, %v1423
        %v1434 = vpack.c.b16 %v1426, %v1425
        %1443 = vmatpush.bf16.msra.mxu0 %v1434
        %1444 = vmatpush.bf16.msra.mxu0 %v1433
        %1445 = vmatpush.bf16.msra.mxu0 %v1432
        %1446 = vmatpush.bf16.msra.mxu0 %v1431
        %1447 = vmatpush.bf16.msra.mxu0 %v1430
        %1448 = vmatpush.bf16.msra.mxu0 %v1429
        %1449 = vmatpush.bf16.msra.mxu0 %v1428
        %1450 = vmatpush.bf16.msra.mxu0 %v1427
        %1451 = vmatmul.bf16.gmra.mxu0 %v1362
        %v1452 = vpop.f32.mrf.mxu0
        %v1453 = vadd.f32 0.0, %v1452
        %v1454 = vpop.f32.mrf.mxu0
        %v1455 = vadd.f32 0.0, %v1454
        %1456 = vmatmul.bf16.gmra.mxu0 %v1363
        %v1457 = vpop.f32.mrf.mxu0
        %v1458 = vadd.f32 0.0, %v1457
        %v1459 = vpop.f32.mrf.mxu0
        %v1460 = vadd.f32 0.0, %v1459
        %1461 = vmatmul.bf16.gmra.mxu0 %v1364
        %v1462 = vpop.f32.mrf.mxu0
        %v1463 = vadd.f32 0.0, %v1462
        %v1464 = vpop.f32.mrf.mxu0
        %v1465 = vadd.f32 0.0, %v1464
        %1466 = vmatmul.bf16.gmra.mxu0 %v1365
        %v1467 = vpop.f32.mrf.mxu0
        %v1468 = vadd.f32 0.0, %v1467
        %v1469 = vpop.f32.mrf.mxu0
        %v1470 = vadd.f32 0.0, %v1469
        %1471 = vmatmul.bf16.gmra.mxu0 %v1366
        %v1472 = vpop.f32.mrf.mxu0
        %v1473 = vadd.f32 0.0, %v1472
        %v1474 = vpop.f32.mrf.mxu0
        %v1475 = vadd.f32 0.0, %v1474
        %1476 = vmatmul.bf16.gmra.mxu0 %v1367
        %v1477 = vpop.f32.mrf.mxu0
        %v1478 = vadd.f32 0.0, %v1477
        %v1479 = vpop.f32.mrf.mxu0
        %v1480 = vadd.f32 0.0, %v1479
        %1481 = vmatmul.bf16.gmra.mxu0 %v1368
        %v1482 = vpop.f32.mrf.mxu0
        %v1483 = vadd.f32 0.0, %v1482
        %v1484 = vpop.f32.mrf.mxu0
        %v1485 = vadd.f32 0.0, %v1484
        %1486 = vmatmul.bf16.gmra.mxu0 %v1369
        %v1487 = vpop.f32.mrf.mxu0
        %v1488 = vadd.f32 0.0, %v1487
        %v1489 = vpop.f32.mrf.mxu0
        %v1490 = vadd.f32 0.0, %v1489
        %1491 = vmatmul.bf16.gmra.mxu0 %v1370
        %v1492 = vpop.f32.mrf.mxu0
        %v1493 = vadd.f32 0.0, %v1492
        %v1494 = vpop.f32.mrf.mxu0
        %v1495 = vadd.f32 0.0, %v1494
        %1496 = vmatmul.bf16.gmra.mxu0 %v1371
        %v1497 = vpop.f32.mrf.mxu0
        %v1498 = vadd.f32 0.0, %v1497
        %v1499 = vpop.f32.mrf.mxu0
        %v1500 = vadd.f32 0.0, %v1499
        %1501 = vmatmul.bf16.gmra.mxu0 %v1372
        %v1502 = vpop.f32.mrf.mxu0
        %v1503 = vadd.f32 0.0, %v1502
        %v1504 = vpop.f32.mrf.mxu0
        %v1505 = vadd.f32 0.0, %v1504
        %1506 = vmatmul.bf16.gmra.mxu0 %v1373
        %v1507 = vpop.f32.mrf.mxu0
        %v1508 = vadd.f32 0.0, %v1507
        %v1509 = vpop.f32.mrf.mxu0
        %v1510 = vadd.f32 0.0, %v1509
        %1511 = vmatmul.bf16.gmra.mxu0 %v1374
        %v1512 = vpop.f32.mrf.mxu0
        %v1513 = vadd.f32 0.0, %v1512
        %v1514 = vpop.f32.mrf.mxu0
        %v1515 = vadd.f32 0.0, %v1514
        %1516 = vmatmul.bf16.gmra.mxu0 %v1375
        %v1517 = vpop.f32.mrf.mxu0
        %v1518 = vadd.f32 0.0, %v1517
        %v1519 = vpop.f32.mrf.mxu0
        %v1520 = vadd.f32 0.0, %v1519
        %1521 = vmatmul.bf16.gmra.mxu0 %v1376
        %v1522 = vpop.f32.mrf.mxu0
        %v1523 = vadd.f32 0.0, %v1522
        %v1524 = vpop.f32.mrf.mxu0
        %v1525 = vadd.f32 0.0, %v1524
        %1526 = vmatmul.bf16.gmra.mxu0 %v1377
        %v1527 = vpop.f32.mrf.mxu0
        %v1528 = vadd.f32 0.0, %v1527
        %v1529 = vpop.f32.mrf.mxu0
        %v1530 = vadd.f32 0.0, %v1529
        %1531 = vdwg.mxu0
        %v1532 = vadd.f32 %v1298, %v1453
        %v1533 = vadd.f32 %v1299, %v1455
        %v1534 = vadd.f32 %v1300, %v1458
        %v1535 = vadd.f32 %v1301, %v1460
        %v1536 = vadd.f32 %v1302, %v1463
        %v1537 = vadd.f32 %v1303, %v1465
        %v1538 = vadd.f32 %v1304, %v1468
        %v1539 = vadd.f32 %v1305, %v1470
        %v1540 = vadd.f32 %v1306, %v1473
        %v1541 = vadd.f32 %v1307, %v1475
        %v1542 = vadd.f32 %v1308, %v1478
        %v1543 = vadd.f32 %v1309, %v1480
        %v1544 = vadd.f32 %v1310, %v1483
        %v1545 = vadd.f32 %v1311, %v1485
        %v1546 = vadd.f32 %v1312, %v1488
        %v1547 = vadd.f32 %v1313, %v1490
        %v1548 = vadd.f32 %v1314, %v1493
        %v1549 = vadd.f32 %v1315, %v1495
        %v1550 = vadd.f32 %v1316, %v1498
        %v1551 = vadd.f32 %v1317, %v1500
        %v1552 = vadd.f32 %v1318, %v1503
        %v1553 = vadd.f32 %v1319, %v1505
        %v1554 = vadd.f32 %v1320, %v1508
        %v1555 = vadd.f32 %v1321, %v1510
        %v1556 = vadd.f32 %v1322, %v1513
        %v1557 = vadd.f32 %v1323, %v1515
        %v1558 = vadd.f32 %v1324, %v1518
        %v1559 = vadd.f32 %v1325, %v1520
        %v1560 = vadd.f32 %v1326, %v1523
        %v1561 = vadd.f32 %v1327, %v1525
        %v1562 = vadd.f32 %v1328, %v1528
        %v1563 = vadd.f32 %v1329, %v1530
        %s1564 = scalar_lea.vmem %s222, 48
        %v1565 = vld [vmem:[%s1564] sm:$0xff]
        %v1566 = vld [vmem:[%s1564 + $0x8] sm:$0xff]
        %v1567 = vld [vmem:[%s1564 + $0x18] sm:$0xff]
        %v1568 = vld [vmem:[%s1564 + $0x20] sm:$0xff]
        %v1569 = vld [vmem:[%s1564 + $0x30] sm:$0xff]
        %v1570 = vld [vmem:[%s1564 + $0x38] sm:$0xff]
        %v1571 = vld [vmem:[%s1564 + $0x48] sm:$0xff]
        %v1572 = vld [vmem:[%s1564 + $0x50] sm:$0xff]
        %v1573 = vld [vmem:[%s1564 + $0x60] sm:$0xff]
        %v1574 = vld [vmem:[%s1564 + $0x68] sm:$0xff]
        %v1575 = vld [vmem:[%s1564 + $0x78] sm:$0xff]
        %v1576 = vld [vmem:[%s1564 + $0x80] sm:$0xff]
        %v1577 = vld [vmem:[%s1564 + $0x90] sm:$0xff]
        %v1578 = vld [vmem:[%s1564 + $0x98] sm:$0xff]
        %v1579 = vld [vmem:[%s1564 + $0xa8] sm:$0xff]
        %v1580 = vld [vmem:[%s1564 + $0xb0] sm:$0xff]
        %v1581 = vld [vmem:[%s1564 + $0xc0] sm:$0xff]
        %v1582 = vld [vmem:[%s1564 + $0xc8] sm:$0xff]
        %v1583 = vld [vmem:[%s1564 + $0xd8] sm:$0xff]
        %v1584 = vld [vmem:[%s1564 + $0xe0] sm:$0xff]
        %v1585 = vld [vmem:[%s1564 + $0xf0] sm:$0xff]
        %v1586 = vld [vmem:[%s1564 + $0xf8] sm:$0xff]
        %v1587 = vld [vmem:[%s1564 + $0x108] sm:$0xff]
        %v1588 = vld [vmem:[%s1564 + $0x110] sm:$0xff]
        %v1589 = vld [vmem:[%s1564 + $0x120] sm:$0xff]
        %v1590 = vld [vmem:[%s1564 + $0x128] sm:$0xff]
        %v1591 = vld [vmem:[%s1564 + $0x138] sm:$0xff]
        %v1592 = vld [vmem:[%s1564 + $0x140] sm:$0xff]
        %v1593 = vld [vmem:[%s1564 + $0x150] sm:$0xff]
        %v1594 = vld [vmem:[%s1564 + $0x158] sm:$0xff]
        %v1595 = vld [vmem:[%s1564 + $0x168] sm:$0xff]
        %v1596 = vld [vmem:[%s1564 + $0x170] sm:$0xff]
        %v1597 = vpack.c.bf16 %v1566, %v1565
        %v1598 = vpack.c.bf16 %v1568, %v1567
        %v1599 = vpack.c.bf16 %v1570, %v1569
        %v1600 = vpack.c.bf16 %v1572, %v1571
        %v1601 = vpack.c.bf16 %v1574, %v1573
        %v1602 = vpack.c.bf16 %v1576, %v1575
        %v1603 = vpack.c.bf16 %v1578, %v1577
        %v1604 = vpack.c.bf16 %v1580, %v1579
        %v1605 = vpack.c.bf16 %v1582, %v1581
        %v1606 = vpack.c.bf16 %v1584, %v1583
        %v1607 = vpack.c.bf16 %v1586, %v1585
        %v1608 = vpack.c.bf16 %v1588, %v1587
        %v1609 = vpack.c.bf16 %v1590, %v1589
        %v1610 = vpack.c.bf16 %v1592, %v1591
        %v1611 = vpack.c.bf16 %v1594, %v1593
        %v1612 = vpack.c.bf16 %v1596, %v1595
        %s1613 = scalar_lea.vmem %s1, 384
        %v1614 = vld [vmem:[%s1613] sm:$0xf]
        %v1615 = vld [vmem:[%s1613 + $0x4] sm:$0xf]
        %v1616 = vld [vmem:[%s1613 + $0x8] sm:$0xf]
        %v1617 = vld [vmem:[%s1613 + $0xc] sm:$0xf]
        %v1618 = vld [vmem:[%s1613 + $0x10] sm:$0xf]
        %v1619 = vld [vmem:[%s1613 + $0x14] sm:$0xf]
        %v1620 = vld [vmem:[%s1613 + $0x18] sm:$0xf]
        %v1621 = vld [vmem:[%s1613 + $0x1c] sm:$0xf]
        %v1622 = vld [vmem:[%s1613 + $0x20] sm:$0xf]
        %v1623 = vld [vmem:[%s1613 + $0x24] sm:$0xf]
        %v1624 = vld [vmem:[%s1613 + $0x28] sm:$0xf]
        %v1625 = vld [vmem:[%s1613 + $0x2c] sm:$0xf]
        %v1626 = vld [vmem:[%s1613 + $0x30] sm:$0xf]
        %v1627 = vld [vmem:[%s1613 + $0x34] sm:$0xf]
        %v1628 = vld [vmem:[%s1613 + $0x38] sm:$0xf]
        %v1629 = vld [vmem:[%s1613 + $0x3c] sm:$0xf]
        %v1646 = vunpack.c.l.b16 %v1614
        %v1647 = vunpack.c.l.b16 %v1615
        %v1648 = vunpack.c.l.b16 %v1616
        %v1649 = vunpack.c.l.b16 %v1617
        %v1650 = vunpack.c.l.b16 %v1618
        %v1651 = vunpack.c.l.b16 %v1619
        %v1652 = vunpack.c.l.b16 %v1620
        %v1653 = vunpack.c.l.b16 %v1621
        %v1654 = vunpack.c.l.b16 %v1622
        %v1655 = vunpack.c.l.b16 %v1623
        %v1656 = vunpack.c.l.b16 %v1624
        %v1657 = vunpack.c.l.b16 %v1625
        %v1658 = vunpack.c.l.b16 %v1626
        %v1659 = vunpack.c.l.b16 %v1627
        %v1660 = vunpack.c.l.b16 %v1628
        %v1661 = vunpack.c.l.b16 %v1629
        %v1662 = vpack.c.b16 %v1647, %v1646
        %v1663 = vpack.c.b16 %v1649, %v1648
        %v1664 = vpack.c.b16 %v1651, %v1650
        %v1665 = vpack.c.b16 %v1653, %v1652
        %v1666 = vpack.c.b16 %v1655, %v1654
        %v1667 = vpack.c.b16 %v1657, %v1656
        %v1668 = vpack.c.b16 %v1659, %v1658
        %v1669 = vpack.c.b16 %v1661, %v1660
        %1678 = vmatpush.bf16.msra.mxu0 %v1669
        %1679 = vmatpush.bf16.msra.mxu0 %v1668
        %1680 = vmatpush.bf16.msra.mxu0 %v1667
        %1681 = vmatpush.bf16.msra.mxu0 %v1666
        %1682 = vmatpush.bf16.msra.mxu0 %v1665
        %1683 = vmatpush.bf16.msra.mxu0 %v1664
        %1684 = vmatpush.bf16.msra.mxu0 %v1663
        %1685 = vmatpush.bf16.msra.mxu0 %v1662
        %1686 = vmatmul.bf16.gmra.mxu0 %v1597
        %v1687 = vpop.f32.mrf.mxu0
        %v1688 = vadd.f32 0.0, %v1687
        %v1689 = vpop.f32.mrf.mxu0
        %v1690 = vadd.f32 0.0, %v1689
        %1691 = vmatmul.bf16.gmra.mxu0 %v1598
        %v1692 = vpop.f32.mrf.mxu0
        %v1693 = vadd.f32 0.0, %v1692
        %v1694 = vpop.f32.mrf.mxu0
        %v1695 = vadd.f32 0.0, %v1694
        %1696 = vmatmul.bf16.gmra.mxu0 %v1599
        %v1697 = vpop.f32.mrf.mxu0
        %v1698 = vadd.f32 0.0, %v1697
        %v1699 = vpop.f32.mrf.mxu0
        %v1700 = vadd.f32 0.0, %v1699
        %1701 = vmatmul.bf16.gmra.mxu0 %v1600
        %v1702 = vpop.f32.mrf.mxu0
        %v1703 = vadd.f32 0.0, %v1702
        %v1704 = vpop.f32.mrf.mxu0
        %v1705 = vadd.f32 0.0, %v1704
        %1706 = vmatmul.bf16.gmra.mxu0 %v1601
        %v1707 = vpop.f32.mrf.mxu0
        %v1708 = vadd.f32 0.0, %v1707
        %v1709 = vpop.f32.mrf.mxu0
        %v1710 = vadd.f32 0.0, %v1709
        %1711 = vmatmul.bf16.gmra.mxu0 %v1602
        %v1712 = vpop.f32.mrf.mxu0
        %v1713 = vadd.f32 0.0, %v1712
        %v1714 = vpop.f32.mrf.mxu0
        %v1715 = vadd.f32 0.0, %v1714
        %1716 = vmatmul.bf16.gmra.mxu0 %v1603
        %v1717 = vpop.f32.mrf.mxu0
        %v1718 = vadd.f32 0.0, %v1717
        %v1719 = vpop.f32.mrf.mxu0
        %v1720 = vadd.f32 0.0, %v1719
        %1721 = vmatmul.bf16.gmra.mxu0 %v1604
        %v1722 = vpop.f32.mrf.mxu0
        %v1723 = vadd.f32 0.0, %v1722
        %v1724 = vpop.f32.mrf.mxu0
        %v1725 = vadd.f32 0.0, %v1724
        %1726 = vmatmul.bf16.gmra.mxu0 %v1605
        %v1727 = vpop.f32.mrf.mxu0
        %v1728 = vadd.f32 0.0, %v1727
        %v1729 = vpop.f32.mrf.mxu0
        %v1730 = vadd.f32 0.0, %v1729
        %1731 = vmatmul.bf16.gmra.mxu0 %v1606
        %v1732 = vpop.f32.mrf.mxu0
        %v1733 = vadd.f32 0.0, %v1732
        %v1734 = vpop.f32.mrf.mxu0
        %v1735 = vadd.f32 0.0, %v1734
        %1736 = vmatmul.bf16.gmra.mxu0 %v1607
        %v1737 = vpop.f32.mrf.mxu0
        %v1738 = vadd.f32 0.0, %v1737
        %v1739 = vpop.f32.mrf.mxu0
        %v1740 = vadd.f32 0.0, %v1739
        %1741 = vmatmul.bf16.gmra.mxu0 %v1608
        %v1742 = vpop.f32.mrf.mxu0
        %v1743 = vadd.f32 0.0, %v1742
        %v1744 = vpop.f32.mrf.mxu0
        %v1745 = vadd.f32 0.0, %v1744
        %1746 = vmatmul.bf16.gmra.mxu0 %v1609
        %v1747 = vpop.f32.mrf.mxu0
        %v1748 = vadd.f32 0.0, %v1747
        %v1749 = vpop.f32.mrf.mxu0
        %v1750 = vadd.f32 0.0, %v1749
        %1751 = vmatmul.bf16.gmra.mxu0 %v1610
        %v1752 = vpop.f32.mrf.mxu0
        %v1753 = vadd.f32 0.0, %v1752
        %v1754 = vpop.f32.mrf.mxu0
        %v1755 = vadd.f32 0.0, %v1754
        %1756 = vmatmul.bf16.gmra.mxu0 %v1611
        %v1757 = vpop.f32.mrf.mxu0
        %v1758 = vadd.f32 0.0, %v1757
        %v1759 = vpop.f32.mrf.mxu0
        %v1760 = vadd.f32 0.0, %v1759
        %1761 = vmatmul.bf16.gmra.mxu0 %v1612
        %v1762 = vpop.f32.mrf.mxu0
        %v1763 = vadd.f32 0.0, %v1762
        %v1764 = vpop.f32.mrf.mxu0
        %v1765 = vadd.f32 0.0, %v1764
        %1766 = vdwg.mxu0
        %v1767 = vadd.f32 %v1532, %v1688
        %v1768 = vadd.f32 %v1533, %v1690
        %v1769 = vadd.f32 %v1534, %v1693
        %v1770 = vadd.f32 %v1535, %v1695
        %v1771 = vadd.f32 %v1536, %v1698
        %v1772 = vadd.f32 %v1537, %v1700
        %v1773 = vadd.f32 %v1538, %v1703
        %v1774 = vadd.f32 %v1539, %v1705
        %v1775 = vadd.f32 %v1540, %v1708
        %v1776 = vadd.f32 %v1541, %v1710
        %v1777 = vadd.f32 %v1542, %v1713
        %v1778 = vadd.f32 %v1543, %v1715
        %v1779 = vadd.f32 %v1544, %v1718
        %v1780 = vadd.f32 %v1545, %v1720
        %v1781 = vadd.f32 %v1546, %v1723
        %v1782 = vadd.f32 %v1547, %v1725
        %v1783 = vadd.f32 %v1548, %v1728
        %v1784 = vadd.f32 %v1549, %v1730
        %v1785 = vadd.f32 %v1550, %v1733
        %v1786 = vadd.f32 %v1551, %v1735
        %v1787 = vadd.f32 %v1552, %v1738
        %v1788 = vadd.f32 %v1553, %v1740
        %v1789 = vadd.f32 %v1554, %v1743
        %v1790 = vadd.f32 %v1555, %v1745
        %v1791 = vadd.f32 %v1556, %v1748
        %v1792 = vadd.f32 %v1557, %v1750
        %v1793 = vadd.f32 %v1558, %v1753
        %v1794 = vadd.f32 %v1559, %v1755
        %v1795 = vadd.f32 %v1560, %v1758
        %v1796 = vadd.f32 %v1561, %v1760
        %v1797 = vadd.f32 %v1562, %v1763
        %v1798 = vadd.f32 %v1563, %v1765
        %v1799 = vld [vmem:[%s1564 + $0x1] sm:$0xff]
        %v1800 = vld [vmem:[%s1564 + $0x9] sm:$0xff]
        %v1801 = vld [vmem:[%s1564 + $0x19] sm:$0xff]
        %v1802 = vld [vmem:[%s1564 + $0x21] sm:$0xff]
        %v1803 = vld [vmem:[%s1564 + $0x31] sm:$0xff]
        %v1804 = vld [vmem:[%s1564 + $0x39] sm:$0xff]
        %v1805 = vld [vmem:[%s1564 + $0x49] sm:$0xff]
        %v1806 = vld [vmem:[%s1564 + $0x51] sm:$0xff]
        %v1807 = vld [vmem:[%s1564 + $0x61] sm:$0xff]
        %v1808 = vld [vmem:[%s1564 + $0x69] sm:$0xff]
        %v1809 = vld [vmem:[%s1564 + $0x79] sm:$0xff]
        %v1810 = vld [vmem:[%s1564 + $0x81] sm:$0xff]
        %v1811 = vld [vmem:[%s1564 + $0x91] sm:$0xff]
        %v1812 = vld [vmem:[%s1564 + $0x99] sm:$0xff]
        %v1813 = vld [vmem:[%s1564 + $0xa9] sm:$0xff]
        %v1814 = vld [vmem:[%s1564 + $0xb1] sm:$0xff]
        %v1815 = vld [vmem:[%s1564 + $0xc1] sm:$0xff]
        %v1816 = vld [vmem:[%s1564 + $0xc9] sm:$0xff]
        %v1817 = vld [vmem:[%s1564 + $0xd9] sm:$0xff]
        %v1818 = vld [vmem:[%s1564 + $0xe1] sm:$0xff]
        %v1819 = vld [vmem:[%s1564 + $0xf1] sm:$0xff]
        %v1820 = vld [vmem:[%s1564 + $0xf9] sm:$0xff]
        %v1821 = vld [vmem:[%s1564 + $0x109] sm:$0xff]
        %v1822 = vld [vmem:[%s1564 + $0x111] sm:$0xff]
        %v1823 = vld [vmem:[%s1564 + $0x121] sm:$0xff]
        %v1824 = vld [vmem:[%s1564 + $0x129] sm:$0xff]
        %v1825 = vld [vmem:[%s1564 + $0x139] sm:$0xff]
        %v1826 = vld [vmem:[%s1564 + $0x141] sm:$0xff]
        %v1827 = vld [vmem:[%s1564 + $0x151] sm:$0xff]
        %v1828 = vld [vmem:[%s1564 + $0x159] sm:$0xff]
        %v1829 = vld [vmem:[%s1564 + $0x169] sm:$0xff]
        %v1830 = vld [vmem:[%s1564 + $0x171] sm:$0xff]
        %v1831 = vpack.c.bf16 %v1800, %v1799
        %v1832 = vpack.c.bf16 %v1802, %v1801
        %v1833 = vpack.c.bf16 %v1804, %v1803
        %v1834 = vpack.c.bf16 %v1806, %v1805
        %v1835 = vpack.c.bf16 %v1808, %v1807
        %v1836 = vpack.c.bf16 %v1810, %v1809
        %v1837 = vpack.c.bf16 %v1812, %v1811
        %v1838 = vpack.c.bf16 %v1814, %v1813
        %v1839 = vpack.c.bf16 %v1816, %v1815
        %v1840 = vpack.c.bf16 %v1818, %v1817
        %v1841 = vpack.c.bf16 %v1820, %v1819
        %v1842 = vpack.c.bf16 %v1822, %v1821
        %v1843 = vpack.c.bf16 %v1824, %v1823
        %v1844 = vpack.c.bf16 %v1826, %v1825
        %v1845 = vpack.c.bf16 %v1828, %v1827
        %v1846 = vpack.c.bf16 %v1830, %v1829
        %s1847 = scalar_lea.vmem %s1, 448
        %v1848 = vld [vmem:[%s1847] sm:$0xf]
        %v1849 = vld [vmem:[%s1847 + $0x4] sm:$0xf]
        %v1850 = vld [vmem:[%s1847 + $0x8] sm:$0xf]
        %v1851 = vld [vmem:[%s1847 + $0xc] sm:$0xf]
        %v1852 = vld [vmem:[%s1847 + $0x10] sm:$0xf]
        %v1853 = vld [vmem:[%s1847 + $0x14] sm:$0xf]
        %v1854 = vld [vmem:[%s1847 + $0x18] sm:$0xf]
        %v1855 = vld [vmem:[%s1847 + $0x1c] sm:$0xf]
        %v1856 = vld [vmem:[%s1847 + $0x20] sm:$0xf]
        %v1857 = vld [vmem:[%s1847 + $0x24] sm:$0xf]
        %v1858 = vld [vmem:[%s1847 + $0x28] sm:$0xf]
        %v1859 = vld [vmem:[%s1847 + $0x2c] sm:$0xf]
        %v1860 = vld [vmem:[%s1847 + $0x30] sm:$0xf]
        %v1861 = vld [vmem:[%s1847 + $0x34] sm:$0xf]
        %v1862 = vld [vmem:[%s1847 + $0x38] sm:$0xf]
        %v1863 = vld [vmem:[%s1847 + $0x3c] sm:$0xf]
        %v1880 = vunpack.c.l.b16 %v1848
        %v1881 = vunpack.c.l.b16 %v1849
        %v1882 = vunpack.c.l.b16 %v1850
        %v1883 = vunpack.c.l.b16 %v1851
        %v1884 = vunpack.c.l.b16 %v1852
        %v1885 = vunpack.c.l.b16 %v1853
        %v1886 = vunpack.c.l.b16 %v1854
        %v1887 = vunpack.c.l.b16 %v1855
        %v1888 = vunpack.c.l.b16 %v1856
        %v1889 = vunpack.c.l.b16 %v1857
        %v1890 = vunpack.c.l.b16 %v1858
        %v1891 = vunpack.c.l.b16 %v1859
        %v1892 = vunpack.c.l.b16 %v1860
        %v1893 = vunpack.c.l.b16 %v1861
        %v1894 = vunpack.c.l.b16 %v1862
        %v1895 = vunpack.c.l.b16 %v1863
        %v1896 = vpack.c.b16 %v1881, %v1880
        %v1897 = vpack.c.b16 %v1883, %v1882
        %v1898 = vpack.c.b16 %v1885, %v1884
        %v1899 = vpack.c.b16 %v1887, %v1886
        %v1900 = vpack.c.b16 %v1889, %v1888
        %v1901 = vpack.c.b16 %v1891, %v1890
        %v1902 = vpack.c.b16 %v1893, %v1892
        %v1903 = vpack.c.b16 %v1895, %v1894
        %1912 = vmatpush.bf16.msra.mxu0 %v1903
        %1913 = vmatpush.bf16.msra.mxu0 %v1902
        %1914 = vmatpush.bf16.msra.mxu0 %v1901
        %1915 = vmatpush.bf16.msra.mxu0 %v1900
        %1916 = vmatpush.bf16.msra.mxu0 %v1899
        %1917 = vmatpush.bf16.msra.mxu0 %v1898
        %1918 = vmatpush.bf16.msra.mxu0 %v1897
        %1919 = vmatpush.bf16.msra.mxu0 %v1896
        %1920 = vmatmul.bf16.gmra.mxu0 %v1831
        %v1921 = vpop.f32.mrf.mxu0
        %v1922 = vadd.f32 0.0, %v1921
        %v1923 = vpop.f32.mrf.mxu0
        %v1924 = vadd.f32 0.0, %v1923
        %1925 = vmatmul.bf16.gmra.mxu0 %v1832
        %v1926 = vpop.f32.mrf.mxu0
        %v1927 = vadd.f32 0.0, %v1926
        %v1928 = vpop.f32.mrf.mxu0
        %v1929 = vadd.f32 0.0, %v1928
        %1930 = vmatmul.bf16.gmra.mxu0 %v1833
        %v1931 = vpop.f32.mrf.mxu0
        %v1932 = vadd.f32 0.0, %v1931
        %v1933 = vpop.f32.mrf.mxu0
        %v1934 = vadd.f32 0.0, %v1933
        %1935 = vmatmul.bf16.gmra.mxu0 %v1834
        %v1936 = vpop.f32.mrf.mxu0
        %v1937 = vadd.f32 0.0, %v1936
        %v1938 = vpop.f32.mrf.mxu0
        %v1939 = vadd.f32 0.0, %v1938
        %1940 = vmatmul.bf16.gmra.mxu0 %v1835
        %v1941 = vpop.f32.mrf.mxu0
        %v1942 = vadd.f32 0.0, %v1941
        %v1943 = vpop.f32.mrf.mxu0
        %v1944 = vadd.f32 0.0, %v1943
        %1945 = vmatmul.bf16.gmra.mxu0 %v1836
        %v1946 = vpop.f32.mrf.mxu0
        %v1947 = vadd.f32 0.0, %v1946
        %v1948 = vpop.f32.mrf.mxu0
        %v1949 = vadd.f32 0.0, %v1948
        %1950 = vmatmul.bf16.gmra.mxu0 %v1837
        %v1951 = vpop.f32.mrf.mxu0
        %v1952 = vadd.f32 0.0, %v1951
        %v1953 = vpop.f32.mrf.mxu0
        %v1954 = vadd.f32 0.0, %v1953
        %1955 = vmatmul.bf16.gmra.mxu0 %v1838
        %v1956 = vpop.f32.mrf.mxu0
        %v1957 = vadd.f32 0.0, %v1956
        %v1958 = vpop.f32.mrf.mxu0
        %v1959 = vadd.f32 0.0, %v1958
        %1960 = vmatmul.bf16.gmra.mxu0 %v1839
        %v1961 = vpop.f32.mrf.mxu0
        %v1962 = vadd.f32 0.0, %v1961
        %v1963 = vpop.f32.mrf.mxu0
        %v1964 = vadd.f32 0.0, %v1963
        %1965 = vmatmul.bf16.gmra.mxu0 %v1840
        %v1966 = vpop.f32.mrf.mxu0
        %v1967 = vadd.f32 0.0, %v1966
        %v1968 = vpop.f32.mrf.mxu0
        %v1969 = vadd.f32 0.0, %v1968
        %1970 = vmatmul.bf16.gmra.mxu0 %v1841
        %v1971 = vpop.f32.mrf.mxu0
        %v1972 = vadd.f32 0.0, %v1971
        %v1973 = vpop.f32.mrf.mxu0
        %v1974 = vadd.f32 0.0, %v1973
        %1975 = vmatmul.bf16.gmra.mxu0 %v1842
        %v1976 = vpop.f32.mrf.mxu0
        %v1977 = vadd.f32 0.0, %v1976
        %v1978 = vpop.f32.mrf.mxu0
        %v1979 = vadd.f32 0.0, %v1978
        %1980 = vmatmul.bf16.gmra.mxu0 %v1843
        %v1981 = vpop.f32.mrf.mxu0
        %v1982 = vadd.f32 0.0, %v1981
        %v1983 = vpop.f32.mrf.mxu0
        %v1984 = vadd.f32 0.0, %v1983
        %1985 = vmatmul.bf16.gmra.mxu0 %v1844
        %v1986 = vpop.f32.mrf.mxu0
        %v1987 = vadd.f32 0.0, %v1986
        %v1988 = vpop.f32.mrf.mxu0
        %v1989 = vadd.f32 0.0, %v1988
        %1990 = vmatmul.bf16.gmra.mxu0 %v1845
        %v1991 = vpop.f32.mrf.mxu0
        %v1992 = vadd.f32 0.0, %v1991
        %v1993 = vpop.f32.mrf.mxu0
        %v1994 = vadd.f32 0.0, %v1993
        %1995 = vmatmul.bf16.gmra.mxu0 %v1846
        %v1996 = vpop.f32.mrf.mxu0
        %v1997 = vadd.f32 0.0, %v1996
        %v1998 = vpop.f32.mrf.mxu0
        %v1999 = vadd.f32 0.0, %v1998
        %2000 = vdwg.mxu0
        %v2001 = vadd.f32 %v1767, %v1922
        %v2002 = vadd.f32 %v1768, %v1924
        %v2003 = vadd.f32 %v1769, %v1927
        %v2004 = vadd.f32 %v1770, %v1929
        %v2005 = vadd.f32 %v1771, %v1932
        %v2006 = vadd.f32 %v1772, %v1934
        %v2007 = vadd.f32 %v1773, %v1937
        %v2008 = vadd.f32 %v1774, %v1939
        %v2009 = vadd.f32 %v1775, %v1942
        %v2010 = vadd.f32 %v1776, %v1944
        %v2011 = vadd.f32 %v1777, %v1947
        %v2012 = vadd.f32 %v1778, %v1949
        %v2013 = vadd.f32 %v1779, %v1952
        %v2014 = vadd.f32 %v1780, %v1954
        %v2015 = vadd.f32 %v1781, %v1957
        %v2016 = vadd.f32 %v1782, %v1959
        %v2017 = vadd.f32 %v1783, %v1962
        %v2018 = vadd.f32 %v1784, %v1964
        %v2019 = vadd.f32 %v1785, %v1967
        %v2020 = vadd.f32 %v1786, %v1969
        %v2021 = vadd.f32 %v1787, %v1972
        %v2022 = vadd.f32 %v1788, %v1974
        %v2023 = vadd.f32 %v1789, %v1977
        %v2024 = vadd.f32 %v1790, %v1979
        %v2025 = vadd.f32 %v1791, %v1982
        %v2026 = vadd.f32 %v1792, %v1984
        %v2027 = vadd.f32 %v1793, %v1987
        %v2028 = vadd.f32 %v1794, %v1989
        %v2029 = vadd.f32 %v1795, %v1992
        %v2030 = vadd.f32 %v1796, %v1994
        %v2031 = vadd.f32 %v1797, %v1997
        %v2032 = vadd.f32 %v1798, %v1999
        %v2033 = vld [vmem:[%s1564 + $0x2] sm:$0xff]
        %v2034 = vld [vmem:[%s1564 + $0xa] sm:$0xff]
        %v2035 = vld [vmem:[%s1564 + $0x1a] sm:$0xff]
        %v2036 = vld [vmem:[%s1564 + $0x22] sm:$0xff]
        %v2037 = vld [vmem:[%s1564 + $0x32] sm:$0xff]
        %v2038 = vld [vmem:[%s1564 + $0x3a] sm:$0xff]
        %v2039 = vld [vmem:[%s1564 + $0x4a] sm:$0xff]
        %v2040 = vld [vmem:[%s1564 + $0x52] sm:$0xff]
        %v2041 = vld [vmem:[%s1564 + $0x62] sm:$0xff]
        %v2042 = vld [vmem:[%s1564 + $0x6a] sm:$0xff]
        %v2043 = vld [vmem:[%s1564 + $0x7a] sm:$0xff]
        %v2044 = vld [vmem:[%s1564 + $0x82] sm:$0xff]
        %v2045 = vld [vmem:[%s1564 + $0x92] sm:$0xff]
        %v2046 = vld [vmem:[%s1564 + $0x9a] sm:$0xff]
        %v2047 = vld [vmem:[%s1564 + $0xaa] sm:$0xff]
        %v2048 = vld [vmem:[%s1564 + $0xb2] sm:$0xff]
        %v2049 = vld [vmem:[%s1564 + $0xc2] sm:$0xff]
        %v2050 = vld [vmem:[%s1564 + $0xca] sm:$0xff]
        %v2051 = vld [vmem:[%s1564 + $0xda] sm:$0xff]
        %v2052 = vld [vmem:[%s1564 + $0xe2] sm:$0xff]
        %v2053 = vld [vmem:[%s1564 + $0xf2] sm:$0xff]
        %v2054 = vld [vmem:[%s1564 + $0xfa] sm:$0xff]
        %v2055 = vld [vmem:[%s1564 + $0x10a] sm:$0xff]
        %v2056 = vld [vmem:[%s1564 + $0x112] sm:$0xff]
        %v2057 = vld [vmem:[%s1564 + $0x122] sm:$0xff]
        %v2058 = vld [vmem:[%s1564 + $0x12a] sm:$0xff]
        %v2059 = vld [vmem:[%s1564 + $0x13a] sm:$0xff]
        %v2060 = vld [vmem:[%s1564 + $0x142] sm:$0xff]
        %v2061 = vld [vmem:[%s1564 + $0x152] sm:$0xff]
        %v2062 = vld [vmem:[%s1564 + $0x15a] sm:$0xff]
        %v2063 = vld [vmem:[%s1564 + $0x16a] sm:$0xff]
        %v2064 = vld [vmem:[%s1564 + $0x172] sm:$0xff]
        %v2065 = vpack.c.bf16 %v2034, %v2033
        %v2066 = vpack.c.bf16 %v2036, %v2035
        %v2067 = vpack.c.bf16 %v2038, %v2037
        %v2068 = vpack.c.bf16 %v2040, %v2039
        %v2069 = vpack.c.bf16 %v2042, %v2041
        %v2070 = vpack.c.bf16 %v2044, %v2043
        %v2071 = vpack.c.bf16 %v2046, %v2045
        %v2072 = vpack.c.bf16 %v2048, %v2047
        %v2073 = vpack.c.bf16 %v2050, %v2049
        %v2074 = vpack.c.bf16 %v2052, %v2051
        %v2075 = vpack.c.bf16 %v2054, %v2053
        %v2076 = vpack.c.bf16 %v2056, %v2055
        %v2077 = vpack.c.bf16 %v2058, %v2057
        %v2078 = vpack.c.bf16 %v2060, %v2059
        %v2079 = vpack.c.bf16 %v2062, %v2061
        %v2080 = vpack.c.bf16 %v2064, %v2063
        %s2081 = scalar_lea.vmem %s1, 512
        %v2082 = vld [vmem:[%s2081] sm:$0xf]
        %v2083 = vld [vmem:[%s2081 + $0x4] sm:$0xf]
        %v2084 = vld [vmem:[%s2081 + $0x8] sm:$0xf]
        %v2085 = vld [vmem:[%s2081 + $0xc] sm:$0xf]
        %v2086 = vld [vmem:[%s2081 + $0x10] sm:$0xf]
        %v2087 = vld [vmem:[%s2081 + $0x14] sm:$0xf]
        %v2088 = vld [vmem:[%s2081 + $0x18] sm:$0xf]
        %v2089 = vld [vmem:[%s2081 + $0x1c] sm:$0xf]
        %v2090 = vld [vmem:[%s2081 + $0x20] sm:$0xf]
        %v2091 = vld [vmem:[%s2081 + $0x24] sm:$0xf]
        %v2092 = vld [vmem:[%s2081 + $0x28] sm:$0xf]
        %v2093 = vld [vmem:[%s2081 + $0x2c] sm:$0xf]
        %v2094 = vld [vmem:[%s2081 + $0x30] sm:$0xf]
        %v2095 = vld [vmem:[%s2081 + $0x34] sm:$0xf]
        %v2096 = vld [vmem:[%s2081 + $0x38] sm:$0xf]
        %v2097 = vld [vmem:[%s2081 + $0x3c] sm:$0xf]
        %v2114 = vunpack.c.l.b16 %v2082
        %v2115 = vunpack.c.l.b16 %v2083
        %v2116 = vunpack.c.l.b16 %v2084
        %v2117 = vunpack.c.l.b16 %v2085
        %v2118 = vunpack.c.l.b16 %v2086
        %v2119 = vunpack.c.l.b16 %v2087
        %v2120 = vunpack.c.l.b16 %v2088
        %v2121 = vunpack.c.l.b16 %v2089
        %v2122 = vunpack.c.l.b16 %v2090
        %v2123 = vunpack.c.l.b16 %v2091
        %v2124 = vunpack.c.l.b16 %v2092
        %v2125 = vunpack.c.l.b16 %v2093
        %v2126 = vunpack.c.l.b16 %v2094
        %v2127 = vunpack.c.l.b16 %v2095
        %v2128 = vunpack.c.l.b16 %v2096
        %v2129 = vunpack.c.l.b16 %v2097
        %v2130 = vpack.c.b16 %v2115, %v2114
        %v2131 = vpack.c.b16 %v2117, %v2116
        %v2132 = vpack.c.b16 %v2119, %v2118
        %v2133 = vpack.c.b16 %v2121, %v2120
        %v2134 = vpack.c.b16 %v2123, %v2122
        %v2135 = vpack.c.b16 %v2125, %v2124
        %v2136 = vpack.c.b16 %v2127, %v2126
        %v2137 = vpack.c.b16 %v2129, %v2128
        %2146 = vmatpush.bf16.msra.mxu0 %v2137
        %2147 = vmatpush.bf16.msra.mxu0 %v2136
        %2148 = vmatpush.bf16.msra.mxu0 %v2135
        %2149 = vmatpush.bf16.msra.mxu0 %v2134
        %2150 = vmatpush.bf16.msra.mxu0 %v2133
        %2151 = vmatpush.bf16.msra.mxu0 %v2132
        %2152 = vmatpush.bf16.msra.mxu0 %v2131
        %2153 = vmatpush.bf16.msra.mxu0 %v2130
        %2154 = vmatmul.bf16.gmra.mxu0 %v2065
        %v2155 = vpop.f32.mrf.mxu0
        %v2156 = vadd.f32 0.0, %v2155
        %v2157 = vpop.f32.mrf.mxu0
        %v2158 = vadd.f32 0.0, %v2157
        %2159 = vmatmul.bf16.gmra.mxu0 %v2066
        %v2160 = vpop.f32.mrf.mxu0
        %v2161 = vadd.f32 0.0, %v2160
        %v2162 = vpop.f32.mrf.mxu0
        %v2163 = vadd.f32 0.0, %v2162
        %2164 = vmatmul.bf16.gmra.mxu0 %v2067
        %v2165 = vpop.f32.mrf.mxu0
        %v2166 = vadd.f32 0.0, %v2165
        %v2167 = vpop.f32.mrf.mxu0
        %v2168 = vadd.f32 0.0, %v2167
        %2169 = vmatmul.bf16.gmra.mxu0 %v2068
        %v2170 = vpop.f32.mrf.mxu0
        %v2171 = vadd.f32 0.0, %v2170
        %v2172 = vpop.f32.mrf.mxu0
        %v2173 = vadd.f32 0.0, %v2172
        %2174 = vmatmul.bf16.gmra.mxu0 %v2069
        %v2175 = vpop.f32.mrf.mxu0
        %v2176 = vadd.f32 0.0, %v2175
        %v2177 = vpop.f32.mrf.mxu0
        %v2178 = vadd.f32 0.0, %v2177
        %2179 = vmatmul.bf16.gmra.mxu0 %v2070
        %v2180 = vpop.f32.mrf.mxu0
        %v2181 = vadd.f32 0.0, %v2180
        %v2182 = vpop.f32.mrf.mxu0
        %v2183 = vadd.f32 0.0, %v2182
        %2184 = vmatmul.bf16.gmra.mxu0 %v2071
        %v2185 = vpop.f32.mrf.mxu0
        %v2186 = vadd.f32 0.0, %v2185
        %v2187 = vpop.f32.mrf.mxu0
        %v2188 = vadd.f32 0.0, %v2187
        %2189 = vmatmul.bf16.gmra.mxu0 %v2072
        %v2190 = vpop.f32.mrf.mxu0
        %v2191 = vadd.f32 0.0, %v2190
        %v2192 = vpop.f32.mrf.mxu0
        %v2193 = vadd.f32 0.0, %v2192
        %2194 = vmatmul.bf16.gmra.mxu0 %v2073
        %v2195 = vpop.f32.mrf.mxu0
        %v2196 = vadd.f32 0.0, %v2195
        %v2197 = vpop.f32.mrf.mxu0
        %v2198 = vadd.f32 0.0, %v2197
        %2199 = vmatmul.bf16.gmra.mxu0 %v2074
        %v2200 = vpop.f32.mrf.mxu0
        %v2201 = vadd.f32 0.0, %v2200
        %v2202 = vpop.f32.mrf.mxu0
        %v2203 = vadd.f32 0.0, %v2202
        %2204 = vmatmul.bf16.gmra.mxu0 %v2075
        %v2205 = vpop.f32.mrf.mxu0
        %v2206 = vadd.f32 0.0, %v2205
        %v2207 = vpop.f32.mrf.mxu0
        %v2208 = vadd.f32 0.0, %v2207
        %2209 = vmatmul.bf16.gmra.mxu0 %v2076
        %v2210 = vpop.f32.mrf.mxu0
        %v2211 = vadd.f32 0.0, %v2210
        %v2212 = vpop.f32.mrf.mxu0
        %v2213 = vadd.f32 0.0, %v2212
        %2214 = vmatmul.bf16.gmra.mxu0 %v2077
        %v2215 = vpop.f32.mrf.mxu0
        %v2216 = vadd.f32 0.0, %v2215
        %v2217 = vpop.f32.mrf.mxu0
        %v2218 = vadd.f32 0.0, %v2217
        %2219 = vmatmul.bf16.gmra.mxu0 %v2078
        %v2220 = vpop.f32.mrf.mxu0
        %v2221 = vadd.f32 0.0, %v2220
        %v2222 = vpop.f32.mrf.mxu0
        %v2223 = vadd.f32 0.0, %v2222
        %2224 = vmatmul.bf16.gmra.mxu0 %v2079
        %v2225 = vpop.f32.mrf.mxu0
        %v2226 = vadd.f32 0.0, %v2225
        %v2227 = vpop.f32.mrf.mxu0
        %v2228 = vadd.f32 0.0, %v2227
        %2229 = vmatmul.bf16.gmra.mxu0 %v2080
        %v2230 = vpop.f32.mrf.mxu0
        %v2231 = vadd.f32 0.0, %v2230
        %v2232 = vpop.f32.mrf.mxu0
        %v2233 = vadd.f32 0.0, %v2232
        %2234 = vdwg.mxu0
        %v2235 = vadd.f32 %v2001, %v2156
        %v2236 = vadd.f32 %v2002, %v2158
        %v2237 = vadd.f32 %v2003, %v2161
        %v2238 = vadd.f32 %v2004, %v2163
        %v2239 = vadd.f32 %v2005, %v2166
        %v2240 = vadd.f32 %v2006, %v2168
        %v2241 = vadd.f32 %v2007, %v2171
        %v2242 = vadd.f32 %v2008, %v2173
        %v2243 = vadd.f32 %v2009, %v2176
        %v2244 = vadd.f32 %v2010, %v2178
        %v2245 = vadd.f32 %v2011, %v2181
        %v2246 = vadd.f32 %v2012, %v2183
        %v2247 = vadd.f32 %v2013, %v2186
        %v2248 = vadd.f32 %v2014, %v2188
        %v2249 = vadd.f32 %v2015, %v2191
        %v2250 = vadd.f32 %v2016, %v2193
        %v2251 = vadd.f32 %v2017, %v2196
        %v2252 = vadd.f32 %v2018, %v2198
        %v2253 = vadd.f32 %v2019, %v2201
        %v2254 = vadd.f32 %v2020, %v2203
        %v2255 = vadd.f32 %v2021, %v2206
        %v2256 = vadd.f32 %v2022, %v2208
        %v2257 = vadd.f32 %v2023, %v2211
        %v2258 = vadd.f32 %v2024, %v2213
        %v2259 = vadd.f32 %v2025, %v2216
        %v2260 = vadd.f32 %v2026, %v2218
        %v2261 = vadd.f32 %v2027, %v2221
        %v2262 = vadd.f32 %v2028, %v2223
        %v2263 = vadd.f32 %v2029, %v2226
        %v2264 = vadd.f32 %v2030, %v2228
        %v2265 = vadd.f32 %v2031, %v2231
        %v2266 = vadd.f32 %v2032, %v2233
        %v2267 = vld [vmem:[%s2] sm:$0x1]
        %v2269 = vperm.slane %v2267, 0
        %v2271 = vadd.f32 %v2235, %v2269
        %v2272 = vadd.f32 %v2236, %v2269
        %v2273 = vadd.f32 %v2237, %v2269
        %v2274 = vadd.f32 %v2238, %v2269
        %v2275 = vadd.f32 %v2239, %v2269
        %v2276 = vadd.f32 %v2240, %v2269
        %v2277 = vadd.f32 %v2241, %v2269
        %v2278 = vadd.f32 %v2242, %v2269
        %v2279 = vadd.f32 %v2243, %v2269
        %v2280 = vadd.f32 %v2244, %v2269
        %v2281 = vadd.f32 %v2245, %v2269
        %v2282 = vadd.f32 %v2246, %v2269
        %v2283 = vadd.f32 %v2247, %v2269
        %v2284 = vadd.f32 %v2248, %v2269
        %v2285 = vadd.f32 %v2249, %v2269
        %v2286 = vadd.f32 %v2250, %v2269
        %v2287 = vadd.f32 %v2251, %v2269
        %v2288 = vadd.f32 %v2252, %v2269
        %v2289 = vadd.f32 %v2253, %v2269
        %v2290 = vadd.f32 %v2254, %v2269
        %v2291 = vadd.f32 %v2255, %v2269
        %v2292 = vadd.f32 %v2256, %v2269
        %v2293 = vadd.f32 %v2257, %v2269
        %v2294 = vadd.f32 %v2258, %v2269
        %v2295 = vadd.f32 %v2259, %v2269
        %v2296 = vadd.f32 %v2260, %v2269
        %v2297 = vadd.f32 %v2261, %v2269
        %v2298 = vadd.f32 %v2262, %v2269
        %v2299 = vadd.f32 %v2263, %v2269
        %v2300 = vadd.f32 %v2264, %v2269
        %v2301 = vadd.f32 %v2265, %v2269
        %v2302 = vadd.f32 %v2266, %v2269
        %v2303 = vmax.f32 %v2271, 0.0
        %v2304 = vmax.f32 %v2272, 0.0
        %v2305 = vmax.f32 %v2273, 0.0
        %v2306 = vmax.f32 %v2274, 0.0
        %v2307 = vmax.f32 %v2275, 0.0
        %v2308 = vmax.f32 %v2276, 0.0
        %v2309 = vmax.f32 %v2277, 0.0
        %v2310 = vmax.f32 %v2278, 0.0
        %v2311 = vmax.f32 %v2279, 0.0
        %v2312 = vmax.f32 %v2280, 0.0
        %v2313 = vmax.f32 %v2281, 0.0
        %v2314 = vmax.f32 %v2282, 0.0
        %v2315 = vmax.f32 %v2283, 0.0
        %v2316 = vmax.f32 %v2284, 0.0
        %v2317 = vmax.f32 %v2285, 0.0
        %v2318 = vmax.f32 %v2286, 0.0
        %v2319 = vmax.f32 %v2287, 0.0
        %v2320 = vmax.f32 %v2288, 0.0
        %v2321 = vmax.f32 %v2289, 0.0
        %v2322 = vmax.f32 %v2290, 0.0
        %v2323 = vmax.f32 %v2291, 0.0
        %v2324 = vmax.f32 %v2292, 0.0
        %v2325 = vmax.f32 %v2293, 0.0
        %v2326 = vmax.f32 %v2294, 0.0
        %v2327 = vmax.f32 %v2295, 0.0
        %v2328 = vmax.f32 %v2296, 0.0
        %v2329 = vmax.f32 %v2297, 0.0
        %v2330 = vmax.f32 %v2298, 0.0
        %v2331 = vmax.f32 %v2299, 0.0
        %v2332 = vmax.f32 %v2300, 0.0
        %v2333 = vmax.f32 %v2301, 0.0
        %v2334 = vmax.f32 %v2302, 0.0
        %2335 = vst [vmem:[#allocation2] sm:$0xf] 0
        %2336 = vst [vmem:[#allocation2 + $0x4] sm:$0xf] 0
        %2337 = vst [vmem:[#allocation2 + $0x8] sm:$0x1] 0
        %2338 = vst [vmem:[#allocation2 + $0xc] sm:$0xf] 0
        %2339 = vst [vmem:[#allocation2 + $0x10] sm:$0xf] 0
        %2340 = vst [vmem:[#allocation2 + $0x14] sm:$0x1] 0
        %2341 = vst [vmem:[#allocation2 + $0x18] sm:$0xf] 0
        %2342 = vst [vmem:[#allocation2 + $0x1c] sm:$0xf] 0
        %2343 = vst [vmem:[#allocation2 + $0x20] sm:$0x1] 0
        %2344 = vst [vmem:[#allocation2 + $0x24] sm:$0xf] 0
        %2345 = vst [vmem:[#allocation2 + $0x28] sm:$0xf] 0
        %2346 = vst [vmem:[#allocation2 + $0x2c] sm:$0x1] 0
        %2347 = vst [vmem:[#allocation2 + $0x30] sm:$0xf] 0
        %2348 = vst [vmem:[#allocation2 + $0x34] sm:$0xf] 0
        %2349 = vst [vmem:[#allocation2 + $0x38] sm:$0x1] 0
        %2350 = vst [vmem:[#allocation2 + $0x3c] sm:$0xf] 0
        %2351 = vst [vmem:[#allocation2 + $0x40] sm:$0xf] 0
        %2352 = vst [vmem:[#allocation2 + $0x44] sm:$0x1] 0
        %2353 = vst [vmem:[#allocation2 + $0x48] sm:$0xf] 0
        %2354 = vst [vmem:[#allocation2 + $0x4c] sm:$0xf] 0
        %2355 = vst [vmem:[#allocation2 + $0x50] sm:$0x1] 0
        %2356 = vst [vmem:[#allocation2 + $0x54] sm:$0xf] 0
        %2357 = vst [vmem:[#allocation2 + $0x58] sm:$0xf] 0
        %2358 = vst [vmem:[#allocation2 + $0x5c] sm:$0x1] 0
        %2359 = vst [vmem:[#allocation2 + $0x60] sm:$0xf] 0
        %2360 = vst [vmem:[#allocation2 + $0x64] sm:$0xf] 0
        %2361 = vst [vmem:[#allocation2 + $0x68] sm:$0x1] 0
        %2362 = vst [vmem:[#allocation2 + $0x6c] sm:$0xf] 0
        %2363 = vst [vmem:[#allocation2 + $0x70] sm:$0xf] 0
        %2364 = vst [vmem:[#allocation2 + $0x74] sm:$0x1] 0
        %2365 = vst [vmem:[#allocation2 + $0x78] sm:$0xf] 0
        %2366 = vst [vmem:[#allocation2 + $0x7c] sm:$0xf] 0
        %2367 = vst [vmem:[#allocation2 + $0x80] sm:$0x1] 0
        %2368 = vst [vmem:[#allocation2 + $0x84] sm:$0xf] 0
        %2369 = vst [vmem:[#allocation2 + $0x88] sm:$0xf] 0
        %2370 = vst [vmem:[#allocation2 + $0x8c] sm:$0x1] 0
        %2371 = vst [vmem:[#allocation2 + $0x90] sm:$0xf] 0
        %2372 = vst [vmem:[#allocation2 + $0x94] sm:$0xf] 0
        %2373 = vst [vmem:[#allocation2 + $0x98] sm:$0x1] 0
        %2374 = vst [vmem:[#allocation2 + $0x9c] sm:$0xf] 0
        %2375 = vst [vmem:[#allocation2 + $0xa0] sm:$0xf] 0
        %2376 = vst [vmem:[#allocation2 + $0xa4] sm:$0x1] 0
        %2377 = vst [vmem:[#allocation2 + $0xa8] sm:$0xf] 0
        %2378 = vst [vmem:[#allocation2 + $0xac] sm:$0xf] 0
        %2379 = vst [vmem:[#allocation2 + $0xb0] sm:$0x1] 0
        %2380 = vst [vmem:[#allocation2 + $0xb4] sm:$0xf] 0
        %2381 = vst [vmem:[#allocation2 + $0xb8] sm:$0xf] 0
        %2382 = vst [vmem:[#allocation2 + $0xbc] sm:$0x1] 0
        %2383 = vst [vmem:[#allocation2 + $0xc0] sm:$0xf] 0
        %2384 = vst [vmem:[#allocation2 + $0xc4] sm:$0xf] 0
        %2385 = vst [vmem:[#allocation2 + $0xc8] sm:$0x1] 0
        %2386 = vst [vmem:[#allocation2 + $0xcc] sm:$0xf] 0
        %2387 = vst [vmem:[#allocation2 + $0xd0] sm:$0xf] 0
        %2388 = vst [vmem:[#allocation2 + $0xd4] sm:$0x1] 0
        %v2389 = vpack.c.bf16 %v2303, %v2303
        %v2390 = vpack.c.bf16 %v2304, %v2304
        %v2391 = vpack.c.bf16 %v2305, %v2305
        %v2392 = vpack.c.bf16 %v2306, %v2306
        %v2393 = vpack.c.bf16 %v2307, %v2307
        %v2394 = vpack.c.bf16 %v2308, %v2308
        %v2395 = vpack.c.bf16 %v2309, %v2309
        %v2396 = vpack.c.bf16 %v2310, %v2310
        %v2397 = vpack.c.bf16 %v2311, %v2311
        %v2398 = vpack.c.bf16 %v2312, %v2312
        %v2399 = vpack.c.bf16 %v2313, %v2313
        %v2400 = vpack.c.bf16 %v2314, %v2314
        %v2401 = vpack.c.bf16 %v2315, %v2315
        %v2402 = vpack.c.bf16 %v2316, %v2316
        %v2403 = vpack.c.bf16 %v2317, %v2317
        %v2404 = vpack.c.bf16 %v2318, %v2318
        %v2405 = vpack.c.bf16 %v2319, %v2319
        %v2406 = vpack.c.bf16 %v2320, %v2320
        %v2407 = vpack.c.bf16 %v2321, %v2321
        %v2408 = vpack.c.bf16 %v2322, %v2322
        %v2409 = vpack.c.bf16 %v2323, %v2323
        %v2410 = vpack.c.bf16 %v2324, %v2324
        %v2411 = vpack.c.bf16 %v2325, %v2325
        %v2412 = vpack.c.bf16 %v2326, %v2326
        %v2413 = vpack.c.bf16 %v2327, %v2327
        %v2414 = vpack.c.bf16 %v2328, %v2328
        %v2415 = vpack.c.bf16 %v2329, %v2329
        %v2416 = vpack.c.bf16 %v2330, %v2330
        %v2417 = vpack.c.bf16 %v2331, %v2331
        %v2418 = vpack.c.bf16 %v2332, %v2332
        %v2419 = vpack.c.bf16 %v2333, %v2333
        %v2420 = vpack.c.bf16 %v2334, %v2334
        %vm2421 = vsmask.f32 256
        %vm2422 = vsmask.f32 4368
        %vm2423 = vmor %vm2421, %vm2422
        %v2425 = vshrl.u32 %v2389, 16
        %v2427 = vrot.slane %v2425, 7
        %v2428 = vshll.u32 %v2389, 16
        %v2430 = vor.u32 %v2427, %v2428
        %v2431 = vrot.slane %v2427, 4
        %v2433 = vshrl.u32 %v2390, 16
        %v2435 = vrot.slane %v2433, 7
        %v2436 = vshll.u32 %v2390, 16
        %v2438 = vor.u32 %v2435, %v2436
        %v2439 = vsel %vm2423, %v2431, %v2438
        %v2440 = vrot.slane %v2435, 4
        %v2442 = vshrl.u32 %v2391, 16
        %v2444 = vrot.slane %v2442, 7
        %v2445 = vshll.u32 %v2391, 16
        %v2447 = vor.u32 %v2444, %v2445
        %v2448 = vrot.slane %v2444, 4
        %v2450 = vshrl.u32 %v2392, 16
        %v2452 = vrot.slane %v2450, 7
        %v2453 = vshll.u32 %v2392, 16
        %v2455 = vor.u32 %v2452, %v2453
        %v2456 = vsel %vm2423, %v2448, %v2455
        %v2457 = vrot.slane %v2452, 4
        %v2459 = vshrl.u32 %v2393, 16
        %v2461 = vrot.slane %v2459, 7
        %v2462 = vshll.u32 %v2393, 16
        %v2464 = vor.u32 %v2461, %v2462
        %v2465 = vrot.slane %v2461, 4
        %v2467 = vshrl.u32 %v2394, 16
        %v2469 = vrot.slane %v2467, 7
        %v2470 = vshll.u32 %v2394, 16
        %v2472 = vor.u32 %v2469, %v2470
        %v2473 = vsel %vm2423, %v2465, %v2472
        %v2474 = vrot.slane %v2469, 4
        %v2476 = vshrl.u32 %v2395, 16
        %v2478 = vrot.slane %v2476, 7
        %v2479 = vshll.u32 %v2395, 16
        %v2481 = vor.u32 %v2478, %v2479
        %v2482 = vrot.slane %v2478, 4
        %v2484 = vshrl.u32 %v2396, 16
        %v2486 = vrot.slane %v2484, 7
        %v2487 = vshll.u32 %v2396, 16
        %v2489 = vor.u32 %v2486, %v2487
        %v2490 = vsel %vm2423, %v2482, %v2489
        %v2491 = vrot.slane %v2486, 4
        %v2493 = vshrl.u32 %v2397, 16
        %v2495 = vrot.slane %v2493, 7
        %v2496 = vshll.u32 %v2397, 16
        %v2498 = vor.u32 %v2495, %v2496
        %v2499 = vrot.slane %v2495, 4
        %v2501 = vshrl.u32 %v2398, 16
        %v2503 = vrot.slane %v2501, 7
        %v2504 = vshll.u32 %v2398, 16
        %v2506 = vor.u32 %v2503, %v2504
        %v2507 = vsel %vm2423, %v2499, %v2506
        %v2508 = vrot.slane %v2503, 4
        %v2510 = vshrl.u32 %v2399, 16
        %v2512 = vrot.slane %v2510, 7
        %v2513 = vshll.u32 %v2399, 16
        %v2515 = vor.u32 %v2512, %v2513
        %v2516 = vrot.slane %v2512, 4
        %v2518 = vshrl.u32 %v2400, 16
        %v2520 = vrot.slane %v2518, 7
        %v2521 = vshll.u32 %v2400, 16
        %v2523 = vor.u32 %v2520, %v2521
        %v2524 = vsel %vm2423, %v2516, %v2523
        %v2525 = vrot.slane %v2520, 4
        %v2527 = vshrl.u32 %v2401, 16
        %v2529 = vrot.slane %v2527, 7
        %v2530 = vshll.u32 %v2401, 16
        %v2532 = vor.u32 %v2529, %v2530
        %v2533 = vrot.slane %v2529, 4
        %v2535 = vshrl.u32 %v2402, 16
        %v2537 = vrot.slane %v2535, 7
        %v2538 = vshll.u32 %v2402, 16
        %v2540 = vor.u32 %v2537, %v2538
        %v2541 = vsel %vm2423, %v2533, %v2540
        %v2542 = vrot.slane %v2537, 4
        %v2544 = vshrl.u32 %v2403, 16
        %v2546 = vrot.slane %v2544, 7
        %v2547 = vshll.u32 %v2403, 16
        %v2549 = vor.u32 %v2546, %v2547
        %v2550 = vrot.slane %v2546, 4
        %v2552 = vshrl.u32 %v2404, 16
        %v2554 = vrot.slane %v2552, 7
        %v2555 = vshll.u32 %v2404, 16
        %v2557 = vor.u32 %v2554, %v2555
        %v2558 = vsel %vm2423, %v2550, %v2557
        %v2559 = vrot.slane %v2554, 4
        %v2561 = vshrl.u32 %v2405, 16
        %v2563 = vrot.slane %v2561, 7
        %v2564 = vshll.u32 %v2405, 16
        %v2566 = vor.u32 %v2563, %v2564
        %v2567 = vrot.slane %v2563, 4
        %v2569 = vshrl.u32 %v2406, 16
        %v2571 = vrot.slane %v2569, 7
        %v2572 = vshll.u32 %v2406, 16
        %v2574 = vor.u32 %v2571, %v2572
        %v2575 = vsel %vm2423, %v2567, %v2574
        %v2576 = vrot.slane %v2571, 4
        %v2578 = vshrl.u32 %v2407, 16
        %v2580 = vrot.slane %v2578, 7
        %v2581 = vshll.u32 %v2407, 16
        %v2583 = vor.u32 %v2580, %v2581
        %v2584 = vrot.slane %v2580, 4
        %v2586 = vshrl.u32 %v2408, 16
        %v2588 = vrot.slane %v2586, 7
        %v2589 = vshll.u32 %v2408, 16
        %v2591 = vor.u32 %v2588, %v2589
        %v2592 = vsel %vm2423, %v2584, %v2591
        %v2593 = vrot.slane %v2588, 4
        %v2595 = vshrl.u32 %v2409, 16
        %v2597 = vrot.slane %v2595, 7
        %v2598 = vshll.u32 %v2409, 16
        %v2600 = vor.u32 %v2597, %v2598
        %v2601 = vrot.slane %v2597, 4
        %v2603 = vshrl.u32 %v2410, 16
        %v2605 = vrot.slane %v2603, 7
        %v2606 = vshll.u32 %v2410, 16
        %v2608 = vor.u32 %v2605, %v2606
        %v2609 = vsel %vm2423, %v2601, %v2608
        %v2610 = vrot.slane %v2605, 4
        %v2612 = vshrl.u32 %v2411, 16
        %v2614 = vrot.slane %v2612, 7
        %v2615 = vshll.u32 %v2411, 16
        %v2617 = vor.u32 %v2614, %v2615
        %v2618 = vrot.slane %v2614, 4
        %v2620 = vshrl.u32 %v2412, 16
        %v2622 = vrot.slane %v2620, 7
        %v2623 = vshll.u32 %v2412, 16
        %v2625 = vor.u32 %v2622, %v2623
        %v2626 = vsel %vm2423, %v2618, %v2625
        %v2627 = vrot.slane %v2622, 4
        %v2629 = vshrl.u32 %v2413, 16
        %v2631 = vrot.slane %v2629, 7
        %v2632 = vshll.u32 %v2413, 16
        %v2634 = vor.u32 %v2631, %v2632
        %v2635 = vrot.slane %v2631, 4
        %v2637 = vshrl.u32 %v2414, 16
        %v2639 = vrot.slane %v2637, 7
        %v2640 = vshll.u32 %v2414, 16
        %v2642 = vor.u32 %v2639, %v2640
        %v2643 = vsel %vm2423, %v2635, %v2642
        %v2644 = vrot.slane %v2639, 4
        %v2646 = vshrl.u32 %v2415, 16
        %v2648 = vrot.slane %v2646, 7
        %v2649 = vshll.u32 %v2415, 16
        %v2651 = vor.u32 %v2648, %v2649
        %v2652 = vrot.slane %v2648, 4
        %v2654 = vshrl.u32 %v2416, 16
        %v2656 = vrot.slane %v2654, 7
        %v2657 = vshll.u32 %v2416, 16
        %v2659 = vor.u32 %v2656, %v2657
        %v2660 = vsel %vm2423, %v2652, %v2659
        %v2661 = vrot.slane %v2656, 4
        %v2663 = vshrl.u32 %v2417, 16
        %v2665 = vrot.slane %v2663, 7
        %v2666 = vshll.u32 %v2417, 16
        %v2668 = vor.u32 %v2665, %v2666
        %v2669 = vrot.slane %v2665, 4
        %v2671 = vshrl.u32 %v2418, 16
        %v2673 = vrot.slane %v2671, 7
        %v2674 = vshll.u32 %v2418, 16
        %v2676 = vor.u32 %v2673, %v2674
        %v2677 = vsel %vm2423, %v2669, %v2676
        %v2678 = vrot.slane %v2673, 4
        %v2680 = vshrl.u32 %v2419, 16
        %v2682 = vrot.slane %v2680, 7
        %v2683 = vshll.u32 %v2419, 16
        %v2685 = vor.u32 %v2682, %v2683
        %v2686 = vrot.slane %v2682, 4
        %v2688 = vshrl.u32 %v2420, 16
        %v2690 = vrot.slane %v2688, 7
        %v2691 = vshll.u32 %v2420, 16
        %v2693 = vor.u32 %v2690, %v2691
        %v2694 = vsel %vm2423, %v2686, %v2693
        %v2695 = vrot.slane %v2690, 4
        %s2744 = scalar_lea.vmem [#allocation2], 12
        %vm2745 = vcmask 1043456
        %vm2746 = vsmask.f32 7938
        %vm2747 = vmand %vm2745, %vm2746
        %v2748 = vld [vmem:[%s2744] sm:$0xf]
        %v2749 = vsel %vm2747, %v2430, %v2748
        %2750 = vst [vmem:[%s2744] sm:$0xf] %v2749
        %2751 = vst [vmem:[%s2744 + $0x4] sm:$0xf] %v2439
        %vm2752 = vcmask 1040384
        %vm2753 = vmand %vm2752, %vm2421
        %v2754 = vld [vmem:[%s2744 + $0x8] sm:$0x1]
        %v2755 = vsel %vm2753, %v2440, %v2754
        %2756 = vst [vmem:[%s2744 + $0x8] sm:$0x1] %v2755
        %v2757 = vld [vmem:[%s2744 + $0xc] sm:$0xf]
        %v2758 = vsel %vm2747, %v2447, %v2757
        %2759 = vst [vmem:[%s2744 + $0xc] sm:$0xf] %v2758
        %2760 = vst [vmem:[%s2744 + $0x10] sm:$0xf] %v2456
        %v2761 = vld [vmem:[%s2744 + $0x14] sm:$0x1]
        %v2762 = vsel %vm2753, %v2457, %v2761
        %2763 = vst [vmem:[%s2744 + $0x14] sm:$0x1] %v2762
        %v2764 = vld [vmem:[%s2744 + $0x18] sm:$0xf]
        %v2765 = vsel %vm2747, %v2464, %v2764
        %2766 = vst [vmem:[%s2744 + $0x18] sm:$0xf] %v2765
        %2767 = vst [vmem:[%s2744 + $0x1c] sm:$0xf] %v2473
        %v2768 = vld [vmem:[%s2744 + $0x20] sm:$0x1]
        %v2769 = vsel %vm2753, %v2474, %v2768
        %2770 = vst [vmem:[%s2744 + $0x20] sm:$0x1] %v2769
        %v2771 = vld [vmem:[%s2744 + $0x24] sm:$0xf]
        %v2772 = vsel %vm2747, %v2481, %v2771
        %2773 = vst [vmem:[%s2744 + $0x24] sm:$0xf] %v2772
        %2774 = vst [vmem:[%s2744 + $0x28] sm:$0xf] %v2490
        %v2775 = vld [vmem:[%s2744 + $0x2c] sm:$0x1]
        %v2776 = vsel %vm2753, %v2491, %v2775
        %2777 = vst [vmem:[%s2744 + $0x2c] sm:$0x1] %v2776
        %v2778 = vld [vmem:[%s2744 + $0x30] sm:$0xf]
        %v2779 = vsel %vm2747, %v2498, %v2778
        %2780 = vst [vmem:[%s2744 + $0x30] sm:$0xf] %v2779
        %2781 = vst [vmem:[%s2744 + $0x34] sm:$0xf] %v2507
        %v2782 = vld [vmem:[%s2744 + $0x38] sm:$0x1]
        %v2783 = vsel %vm2753, %v2508, %v2782
        %2784 = vst [vmem:[%s2744 + $0x38] sm:$0x1] %v2783
        %v2785 = vld [vmem:[%s2744 + $0x3c] sm:$0xf]
        %v2786 = vsel %vm2747, %v2515, %v2785
        %2787 = vst [vmem:[%s2744 + $0x3c] sm:$0xf] %v2786
        %2788 = vst [vmem:[%s2744 + $0x40] sm:$0xf] %v2524
        %v2789 = vld [vmem:[%s2744 + $0x44] sm:$0x1]
        %v2790 = vsel %vm2753, %v2525, %v2789
        %2791 = vst [vmem:[%s2744 + $0x44] sm:$0x1] %v2790
        %v2792 = vld [vmem:[%s2744 + $0x48] sm:$0xf]
        %v2793 = vsel %vm2747, %v2532, %v2792
        %2794 = vst [vmem:[%s2744 + $0x48] sm:$0xf] %v2793
        %2795 = vst [vmem:[%s2744 + $0x4c] sm:$0xf] %v2541
        %v2796 = vld [vmem:[%s2744 + $0x50] sm:$0x1]
        %v2797 = vsel %vm2753, %v2542, %v2796
        %2798 = vst [vmem:[%s2744 + $0x50] sm:$0x1] %v2797
        %v2799 = vld [vmem:[%s2744 + $0x54] sm:$0xf]
        %v2800 = vsel %vm2747, %v2549, %v2799
        %2801 = vst [vmem:[%s2744 + $0x54] sm:$0xf] %v2800
        %2802 = vst [vmem:[%s2744 + $0x58] sm:$0xf] %v2558
        %v2803 = vld [vmem:[%s2744 + $0x5c] sm:$0x1]
        %v2804 = vsel %vm2753, %v2559, %v2803
        %2805 = vst [vmem:[%s2744 + $0x5c] sm:$0x1] %v2804
        %v2806 = vld [vmem:[%s2744 + $0x60] sm:$0xf]
        %v2807 = vsel %vm2747, %v2566, %v2806
        %2808 = vst [vmem:[%s2744 + $0x60] sm:$0xf] %v2807
        %2809 = vst [vmem:[%s2744 + $0x64] sm:$0xf] %v2575
        %v2810 = vld [vmem:[%s2744 + $0x68] sm:$0x1]
        %v2811 = vsel %vm2753, %v2576, %v2810
        %2812 = vst [vmem:[%s2744 + $0x68] sm:$0x1] %v2811
        %v2813 = vld [vmem:[%s2744 + $0x6c] sm:$0xf]
        %v2814 = vsel %vm2747, %v2583, %v2813
        %2815 = vst [vmem:[%s2744 + $0x6c] sm:$0xf] %v2814
        %2816 = vst [vmem:[%s2744 + $0x70] sm:$0xf] %v2592
        %v2817 = vld [vmem:[%s2744 + $0x74] sm:$0x1]
        %v2818 = vsel %vm2753, %v2593, %v2817
        %2819 = vst [vmem:[%s2744 + $0x74] sm:$0x1] %v2818
        %v2820 = vld [vmem:[%s2744 + $0x78] sm:$0xf]
        %v2821 = vsel %vm2747, %v2600, %v2820
        %2822 = vst [vmem:[%s2744 + $0x78] sm:$0xf] %v2821
        %2823 = vst [vmem:[%s2744 + $0x7c] sm:$0xf] %v2609
        %v2824 = vld [vmem:[%s2744 + $0x80] sm:$0x1]
        %v2825 = vsel %vm2753, %v2610, %v2824
        %2826 = vst [vmem:[%s2744 + $0x80] sm:$0x1] %v2825
        %v2827 = vld [vmem:[%s2744 + $0x84] sm:$0xf]
        %v2828 = vsel %vm2747, %v2617, %v2827
        %2829 = vst [vmem:[%s2744 + $0x84] sm:$0xf] %v2828
        %2830 = vst [vmem:[%s2744 + $0x88] sm:$0xf] %v2626
        %v2831 = vld [vmem:[%s2744 + $0x8c] sm:$0x1]
        %v2832 = vsel %vm2753, %v2627, %v2831
        %2833 = vst [vmem:[%s2744 + $0x8c] sm:$0x1] %v2832
        %v2834 = vld [vmem:[%s2744 + $0x90] sm:$0xf]
        %v2835 = vsel %vm2747, %v2634, %v2834
        %2836 = vst [vmem:[%s2744 + $0x90] sm:$0xf] %v2835
        %2837 = vst [vmem:[%s2744 + $0x94] sm:$0xf] %v2643
        %v2838 = vld [vmem:[%s2744 + $0x98] sm:$0x1]
        %v2839 = vsel %vm2753, %v2644, %v2838
        %2840 = vst [vmem:[%s2744 + $0x98] sm:$0x1] %v2839
        %v2841 = vld [vmem:[%s2744 + $0x9c] sm:$0xf]
        %v2842 = vsel %vm2747, %v2651, %v2841
        %2843 = vst [vmem:[%s2744 + $0x9c] sm:$0xf] %v2842
        %2844 = vst [vmem:[%s2744 + $0xa0] sm:$0xf] %v2660
        %v2845 = vld [vmem:[%s2744 + $0xa4] sm:$0x1]
        %v2846 = vsel %vm2753, %v2661, %v2845
        %2847 = vst [vmem:[%s2744 + $0xa4] sm:$0x1] %v2846
        %v2848 = vld [vmem:[%s2744 + $0xa8] sm:$0xf]
        %v2849 = vsel %vm2747, %v2668, %v2848
        %2850 = vst [vmem:[%s2744 + $0xa8] sm:$0xf] %v2849
        %2851 = vst [vmem:[%s2744 + $0xac] sm:$0xf] %v2677
        %v2852 = vld [vmem:[%s2744 + $0xb0] sm:$0x1]
        %v2853 = vsel %vm2753, %v2678, %v2852
        %2854 = vst [vmem:[%s2744 + $0xb0] sm:$0x1] %v2853
        %v2855 = vld [vmem:[%s2744 + $0xb4] sm:$0xf]
        %v2856 = vsel %vm2747, %v2685, %v2855
        %2857 = vst [vmem:[%s2744 + $0xb4] sm:$0xf] %v2856
        %2858 = vst [vmem:[%s2744 + $0xb8] sm:$0xf] %v2694
        %v2859 = vld [vmem:[%s2744 + $0xbc] sm:$0x1]
        %v2860 = vsel %vm2753, %v2695, %v2859
        %2861 = vst [vmem:[%s2744 + $0xbc] sm:$0x1] %v2860
        %v2862 = vld [vmem:[#allocation2] sm:$0xf]
        %v2863 = vld [vmem:[#allocation2 + $0x4] sm:$0xf]
        %v2864 = vld [vmem:[#allocation2 + $0xc] sm:$0xf]
        %v2865 = vld [vmem:[#allocation2 + $0x10] sm:$0xf]
        %v2866 = vld [vmem:[#allocation2 + $0x18] sm:$0xf]
        %v2867 = vld [vmem:[#allocation2 + $0x1c] sm:$0xf]
        %v2868 = vld [vmem:[#allocation2 + $0x24] sm:$0xf]
        %v2869 = vld [vmem:[#allocation2 + $0x28] sm:$0xf]
        %v2870 = vld [vmem:[#allocation2 + $0x30] sm:$0xf]
        %v2871 = vld [vmem:[#allocation2 + $0x34] sm:$0xf]
        %v2872 = vld [vmem:[#allocation2 + $0x3c] sm:$0xf]
        %v2873 = vld [vmem:[#allocation2 + $0x40] sm:$0xf]
        %v2874 = vld [vmem:[#allocation2 + $0x48] sm:$0xf]
        %v2875 = vld [vmem:[#allocation2 + $0x4c] sm:$0xf]
        %v2876 = vld [vmem:[#allocation2 + $0x54] sm:$0xf]
        %v2877 = vld [vmem:[#allocation2 + $0x58] sm:$0xf]
        %v2878 = vld [vmem:[#allocation2 + $0x60] sm:$0xf]
        %v2879 = vld [vmem:[#allocation2 + $0x64] sm:$0xf]
        %v2880 = vld [vmem:[#allocation2 + $0x6c] sm:$0xf]
        %v2881 = vld [vmem:[#allocation2 + $0x70] sm:$0xf]
        %v2882 = vld [vmem:[#allocation2 + $0x78] sm:$0xf]
        %v2883 = vld [vmem:[#allocation2 + $0x7c] sm:$0xf]
        %v2884 = vld [vmem:[#allocation2 + $0x84] sm:$0xf]
        %v2885 = vld [vmem:[#allocation2 + $0x88] sm:$0xf]
        %v2886 = vld [vmem:[#allocation2 + $0x90] sm:$0xf]
        %v2887 = vld [vmem:[#allocation2 + $0x94] sm:$0xf]
        %v2888 = vld [vmem:[#allocation2 + $0x9c] sm:$0xf]
        %v2889 = vld [vmem:[#allocation2 + $0xa0] sm:$0xf]
        %v2890 = vld [vmem:[#allocation2 + $0xa8] sm:$0xf]
        %v2891 = vld [vmem:[#allocation2 + $0xac] sm:$0xf]
        %v2892 = vld [vmem:[#allocation2 + $0xb4] sm:$0xf]
        %v2893 = vld [vmem:[#allocation2 + $0xb8] sm:$0xf]
        %v2894 = vld [vmem:[%s3] sm:$0xf]
        %v2895 = vld [vmem:[%s3 + $0x4] sm:$0xf]
        %v2896 = vld [vmem:[%s3 + $0x8] sm:$0xf]
        %v2897 = vld [vmem:[%s3 + $0xc] sm:$0xf]
        %v2898 = vld [vmem:[%s3 + $0x10] sm:$0xf]
        %v2899 = vld [vmem:[%s3 + $0x14] sm:$0xf]
        %v2900 = vld [vmem:[%s3 + $0x18] sm:$0xf]
        %v2901 = vld [vmem:[%s3 + $0x1c] sm:$0xf]
        %v2902 = vld [vmem:[%s3 + $0x20] sm:$0xf]
        %v2903 = vld [vmem:[%s3 + $0x24] sm:$0xf]
        %v2904 = vld [vmem:[%s3 + $0x28] sm:$0xf]
        %v2905 = vld [vmem:[%s3 + $0x2c] sm:$0xf]
        %v2906 = vld [vmem:[%s3 + $0x30] sm:$0xf]
        %v2907 = vld [vmem:[%s3 + $0x34] sm:$0xf]
        %v2908 = vld [vmem:[%s3 + $0x38] sm:$0xf]
        %v2909 = vld [vmem:[%s3 + $0x3c] sm:$0xf]
        %v2910 = vld [vmem:[#allocation2 + $0x8] sm:$0x1]
        %v2911 = vld [vmem:[#allocation2 + $0x14] sm:$0x1]
        %v2912 = vld [vmem:[#allocation2 + $0x20] sm:$0x1]
        %v2913 = vld [vmem:[#allocation2 + $0x2c] sm:$0x1]
        %v2914 = vld [vmem:[#allocation2 + $0x38] sm:$0x1]
        %v2915 = vld [vmem:[#allocation2 + $0x44] sm:$0x1]
        %v2916 = vld [vmem:[#allocation2 + $0x50] sm:$0x1]
        %v2917 = vld [vmem:[#allocation2 + $0x5c] sm:$0x1]
        %v2918 = vld [vmem:[#allocation2 + $0x68] sm:$0x1]
        %v2919 = vld [vmem:[#allocation2 + $0x74] sm:$0x1]
        %v2920 = vld [vmem:[#allocation2 + $0x80] sm:$0x1]
        %v2921 = vld [vmem:[#allocation2 + $0x8c] sm:$0x1]
        %v2922 = vld [vmem:[#allocation2 + $0x98] sm:$0x1]
        %v2923 = vld [vmem:[#allocation2 + $0xa4] sm:$0x1]
        %v2924 = vld [vmem:[#allocation2 + $0xb0] sm:$0x1]
        %v2925 = vld [vmem:[#allocation2 + $0xbc] sm:$0x1]
        %vm2926 = vsmask.f32 3328
        %vm2927 = vsmask.f32 7440
        %vm2928 = vmor %vm2926, %vm2927
        %v2930 = vshrl.u32 %v2862, 16
        %v2932 = vrot.slane %v2930, 4
        %v2933 = vshll.u32 %v2862, 16
        %v2935 = vrot.slane %v2933, 5
        %v2936 = vor.u32 %v2932, %v2935
        %v2937 = vrot.slane %v2936, 4
        %v2939 = vshll.u32 %v2863, 16
        %v2941 = vrot.slane %v2939, 5
        %v2942 = vsel %vm2928, %v2937, %v2941
        %v2943 = vshrl.u32 %v2863, 16
        %v2945 = vrot.slane %v2943, 4
        %v2946 = vor.u32 %v2945, %v2941
        %v2947 = vrot.slane %v2946, 4
        %v2949 = vshll.u32 %v2910, 16
        %v2951 = vrot.slane %v2949, 5
        %v2952 = vsel %vm2928, %v2947, %v2951
        %v2954 = vshrl.u32 %v2864, 16
        %v2956 = vrot.slane %v2954, 4
        %v2957 = vshll.u32 %v2864, 16
        %v2959 = vrot.slane %v2957, 5
        %v2960 = vor.u32 %v2956, %v2959
        %v2961 = vrot.slane %v2960, 4
        %v2963 = vshll.u32 %v2865, 16
        %v2965 = vrot.slane %v2963, 5
        %v2966 = vsel %vm2928, %v2961, %v2965
        %v2967 = vshrl.u32 %v2865, 16
        %v2969 = vrot.slane %v2967, 4
        %v2970 = vor.u32 %v2969, %v2965
        %v2971 = vrot.slane %v2970, 4
        %v2973 = vshll.u32 %v2911, 16
        %v2975 = vrot.slane %v2973, 5
        %v2976 = vsel %vm2928, %v2971, %v2975
        %v2978 = vshrl.u32 %v2866, 16
        %v2980 = vrot.slane %v2978, 4
        %v2981 = vshll.u32 %v2866, 16
        %v2983 = vrot.slane %v2981, 5
        %v2984 = vor.u32 %v2980, %v2983
        %v2985 = vrot.slane %v2984, 4
        %v2987 = vshll.u32 %v2867, 16
        %v2989 = vrot.slane %v2987, 5
        %v2990 = vsel %vm2928, %v2985, %v2989
        %v2991 = vshrl.u32 %v2867, 16
        %v2993 = vrot.slane %v2991, 4
        %v2994 = vor.u32 %v2993, %v2989
        %v2995 = vrot.slane %v2994, 4
        %v2997 = vshll.u32 %v2912, 16
        %v2999 = vrot.slane %v2997, 5
        %v3000 = vsel %vm2928, %v2995, %v2999
        %v3002 = vshrl.u32 %v2868, 16
        %v3004 = vrot.slane %v3002, 4
        %v3005 = vshll.u32 %v2868, 16
        %v3007 = vrot.slane %v3005, 5
        %v3008 = vor.u32 %v3004, %v3007
        %v3009 = vrot.slane %v3008, 4
        %v3011 = vshll.u32 %v2869, 16
        %v3013 = vrot.slane %v3011, 5
        %v3014 = vsel %vm2928, %v3009, %v3013
        %v3015 = vshrl.u32 %v2869, 16
        %v3017 = vrot.slane %v3015, 4
        %v3018 = vor.u32 %v3017, %v3013
        %v3019 = vrot.slane %v3018, 4
        %v3021 = vshll.u32 %v2913, 16
        %v3023 = vrot.slane %v3021, 5
        %v3024 = vsel %vm2928, %v3019, %v3023
        %v3026 = vshrl.u32 %v2870, 16
        %v3028 = vrot.slane %v3026, 4
        %v3029 = vshll.u32 %v2870, 16
        %v3031 = vrot.slane %v3029, 5
        %v3032 = vor.u32 %v3028, %v3031
        %v3033 = vrot.slane %v3032, 4
        %v3035 = vshll.u32 %v2871, 16
        %v3037 = vrot.slane %v3035, 5
        %v3038 = vsel %vm2928, %v3033, %v3037
        %v3039 = vshrl.u32 %v2871, 16
        %v3041 = vrot.slane %v3039, 4
        %v3042 = vor.u32 %v3041, %v3037
        %v3043 = vrot.slane %v3042, 4
        %v3045 = vshll.u32 %v2914, 16
        %v3047 = vrot.slane %v3045, 5
        %v3048 = vsel %vm2928, %v3043, %v3047
        %v3050 = vshrl.u32 %v2872, 16
        %v3052 = vrot.slane %v3050, 4
        %v3053 = vshll.u32 %v2872, 16
        %v3055 = vrot.slane %v3053, 5
        %v3056 = vor.u32 %v3052, %v3055
        %v3057 = vrot.slane %v3056, 4
        %v3059 = vshll.u32 %v2873, 16
        %v3061 = vrot.slane %v3059, 5
        %v3062 = vsel %vm2928, %v3057, %v3061
        %v3063 = vshrl.u32 %v2873, 16
        %v3065 = vrot.slane %v3063, 4
        %v3066 = vor.u32 %v3065, %v3061
        %v3067 = vrot.slane %v3066, 4
        %v3069 = vshll.u32 %v2915, 16
        %v3071 = vrot.slane %v3069, 5
        %v3072 = vsel %vm2928, %v3067, %v3071
        %v3074 = vshrl.u32 %v2874, 16
        %v3076 = vrot.slane %v3074, 4
        %v3077 = vshll.u32 %v2874, 16
        %v3079 = vrot.slane %v3077, 5
        %v3080 = vor.u32 %v3076, %v3079
        %v3081 = vrot.slane %v3080, 4
        %v3083 = vshll.u32 %v2875, 16
        %v3085 = vrot.slane %v3083, 5
        %v3086 = vsel %vm2928, %v3081, %v3085
        %v3087 = vshrl.u32 %v2875, 16
        %v3089 = vrot.slane %v3087, 4
        %v3090 = vor.u32 %v3089, %v3085
        %v3091 = vrot.slane %v3090, 4
        %v3093 = vshll.u32 %v2916, 16
        %v3095 = vrot.slane %v3093, 5
        %v3096 = vsel %vm2928, %v3091, %v3095
        %v3098 = vshrl.u32 %v2876, 16
        %v3100 = vrot.slane %v3098, 4
        %v3101 = vshll.u32 %v2876, 16
        %v3103 = vrot.slane %v3101, 5
        %v3104 = vor.u32 %v3100, %v3103
        %v3105 = vrot.slane %v3104, 4
        %v3107 = vshll.u32 %v2877, 16
        %v3109 = vrot.slane %v3107, 5
        %v3110 = vsel %vm2928, %v3105, %v3109
        %v3111 = vshrl.u32 %v2877, 16
        %v3113 = vrot.slane %v3111, 4
        %v3114 = vor.u32 %v3113, %v3109
        %v3115 = vrot.slane %v3114, 4
        %v3117 = vshll.u32 %v2917, 16
        %v3119 = vrot.slane %v3117, 5
        %v3120 = vsel %vm2928, %v3115, %v3119
        %v3122 = vshrl.u32 %v2878, 16
        %v3124 = vrot.slane %v3122, 4
        %v3125 = vshll.u32 %v2878, 16
        %v3127 = vrot.slane %v3125, 5
        %v3128 = vor.u32 %v3124, %v3127
        %v3129 = vrot.slane %v3128, 4
        %v3131 = vshll.u32 %v2879, 16
        %v3133 = vrot.slane %v3131, 5
        %v3134 = vsel %vm2928, %v3129, %v3133
        %v3135 = vshrl.u32 %v2879, 16
        %v3137 = vrot.slane %v3135, 4
        %v3138 = vor.u32 %v3137, %v3133
        %v3139 = vrot.slane %v3138, 4
        %v3141 = vshll.u32 %v2918, 16
        %v3143 = vrot.slane %v3141, 5
        %v3144 = vsel %vm2928, %v3139, %v3143
        %v3146 = vshrl.u32 %v2880, 16
        %v3148 = vrot.slane %v3146, 4
        %v3149 = vshll.u32 %v2880, 16
        %v3151 = vrot.slane %v3149, 5
        %v3152 = vor.u32 %v3148, %v3151
        %v3153 = vrot.slane %v3152, 4
        %v3155 = vshll.u32 %v2881, 16
        %v3157 = vrot.slane %v3155, 5
        %v3158 = vsel %vm2928, %v3153, %v3157
        %v3159 = vshrl.u32 %v2881, 16
        %v3161 = vrot.slane %v3159, 4
        %v3162 = vor.u32 %v3161, %v3157
        %v3163 = vrot.slane %v3162, 4
        %v3165 = vshll.u32 %v2919, 16
        %v3167 = vrot.slane %v3165, 5
        %v3168 = vsel %vm2928, %v3163, %v3167
        %v3170 = vshrl.u32 %v2882, 16
        %v3172 = vrot.slane %v3170, 4
        %v3173 = vshll.u32 %v2882, 16
        %v3175 = vrot.slane %v3173, 5
        %v3176 = vor.u32 %v3172, %v3175
        %v3177 = vrot.slane %v3176, 4
        %v3179 = vshll.u32 %v2883, 16
        %v3181 = vrot.slane %v3179, 5
        %v3182 = vsel %vm2928, %v3177, %v3181
        %v3183 = vshrl.u32 %v2883, 16
        %v3185 = vrot.slane %v3183, 4
        %v3186 = vor.u32 %v3185, %v3181
        %v3187 = vrot.slane %v3186, 4
        %v3189 = vshll.u32 %v2920, 16
        %v3191 = vrot.slane %v3189, 5
        %v3192 = vsel %vm2928, %v3187, %v3191
        %v3194 = vshrl.u32 %v2884, 16
        %v3196 = vrot.slane %v3194, 4
        %v3197 = vshll.u32 %v2884, 16
        %v3199 = vrot.slane %v3197, 5
        %v3200 = vor.u32 %v3196, %v3199
        %v3201 = vrot.slane %v3200, 4
        %v3203 = vshll.u32 %v2885, 16
        %v3205 = vrot.slane %v3203, 5
        %v3206 = vsel %vm2928, %v3201, %v3205
        %v3207 = vshrl.u32 %v2885, 16
        %v3209 = vrot.slane %v3207, 4
        %v3210 = vor.u32 %v3209, %v3205
        %v3211 = vrot.slane %v3210, 4
        %v3213 = vshll.u32 %v2921, 16
        %v3215 = vrot.slane %v3213, 5
        %v3216 = vsel %vm2928, %v3211, %v3215
        %v3218 = vshrl.u32 %v2886, 16
        %v3220 = vrot.slane %v3218, 4
        %v3221 = vshll.u32 %v2886, 16
        %v3223 = vrot.slane %v3221, 5
        %v3224 = vor.u32 %v3220, %v3223
        %v3225 = vrot.slane %v3224, 4
        %v3227 = vshll.u32 %v2887, 16
        %v3229 = vrot.slane %v3227, 5
        %v3230 = vsel %vm2928, %v3225, %v3229
        %v3231 = vshrl.u32 %v2887, 16
        %v3233 = vrot.slane %v3231, 4
        %v3234 = vor.u32 %v3233, %v3229
        %v3235 = vrot.slane %v3234, 4
        %v3237 = vshll.u32 %v2922, 16
        %v3239 = vrot.slane %v3237, 5
        %v3240 = vsel %vm2928, %v3235, %v3239
        %v3242 = vshrl.u32 %v2888, 16
        %v3244 = vrot.slane %v3242, 4
        %v3245 = vshll.u32 %v2888, 16
        %v3247 = vrot.slane %v3245, 5
        %v3248 = vor.u32 %v3244, %v3247
        %v3249 = vrot.slane %v3248, 4
        %v3251 = vshll.u32 %v2889, 16
        %v3253 = vrot.slane %v3251, 5
        %v3254 = vsel %vm2928, %v3249, %v3253
        %v3255 = vshrl.u32 %v2889, 16
        %v3257 = vrot.slane %v3255, 4
        %v3258 = vor.u32 %v3257, %v3253
        %v3259 = vrot.slane %v3258, 4
        %v3261 = vshll.u32 %v2923, 16
        %v3263 = vrot.slane %v3261, 5
        %v3264 = vsel %vm2928, %v3259, %v3263
        %v3266 = vshrl.u32 %v2890, 16
        %v3268 = vrot.slane %v3266, 4
        %v3269 = vshll.u32 %v2890, 16
        %v3271 = vrot.slane %v3269, 5
        %v3272 = vor.u32 %v3268, %v3271
        %v3273 = vrot.slane %v3272, 4
        %v3275 = vshll.u32 %v2891, 16
        %v3277 = vrot.slane %v3275, 5
        %v3278 = vsel %vm2928, %v3273, %v3277
        %v3279 = vshrl.u32 %v2891, 16
        %v3281 = vrot.slane %v3279, 4
        %v3282 = vor.u32 %v3281, %v3277
        %v3283 = vrot.slane %v3282, 4
        %v3285 = vshll.u32 %v2924, 16
        %v3287 = vrot.slane %v3285, 5
        %v3288 = vsel %vm2928, %v3283, %v3287
        %v3290 = vshrl.u32 %v2892, 16
        %v3292 = vrot.slane %v3290, 4
        %v3293 = vshll.u32 %v2892, 16
        %v3295 = vrot.slane %v3293, 5
        %v3296 = vor.u32 %v3292, %v3295
        %v3297 = vrot.slane %v3296, 4
        %v3299 = vshll.u32 %v2893, 16
        %v3301 = vrot.slane %v3299, 5
        %v3302 = vsel %vm2928, %v3297, %v3301
        %v3303 = vshrl.u32 %v2893, 16
        %v3305 = vrot.slane %v3303, 4
        %v3306 = vor.u32 %v3305, %v3301
        %v3307 = vrot.slane %v3306, 4
        %v3309 = vshll.u32 %v2925, 16
        %v3311 = vrot.slane %v3309, 5
        %v3312 = vsel %vm2928, %v3307, %v3311
        %s3313 = scalar_lea.vmem %s3, 64
        %v3314 = vld [vmem:[%s3313] sm:$0xf]
        %v3315 = vld [vmem:[%s3313 + $0x4] sm:$0xf]
        %v3316 = vld [vmem:[%s3313 + $0x8] sm:$0xf]
        %v3317 = vld [vmem:[%s3313 + $0xc] sm:$0xf]
        %v3318 = vld [vmem:[%s3313 + $0x10] sm:$0xf]
        %v3319 = vld [vmem:[%s3313 + $0x14] sm:$0xf]
        %v3320 = vld [vmem:[%s3313 + $0x18] sm:$0xf]
        %v3321 = vld [vmem:[%s3313 + $0x1c] sm:$0xf]
        %v3322 = vld [vmem:[%s3313 + $0x20] sm:$0xf]
        %v3323 = vld [vmem:[%s3313 + $0x24] sm:$0xf]
        %v3324 = vld [vmem:[%s3313 + $0x28] sm:$0xf]
        %v3325 = vld [vmem:[%s3313 + $0x2c] sm:$0xf]
        %v3326 = vld [vmem:[%s3313 + $0x30] sm:$0xf]
        %v3327 = vld [vmem:[%s3313 + $0x34] sm:$0xf]
        %v3328 = vld [vmem:[%s3313 + $0x38] sm:$0xf]
        %v3329 = vld [vmem:[%s3313 + $0x3c] sm:$0xf]
        %v3330 = vunpack.c.l.b16 %v2942
        %v3331 = vunpack.c.l.b16 %v2952
        %v3332 = vunpack.c.l.b16 %v2966
        %v3333 = vunpack.c.l.b16 %v2976
        %v3334 = vunpack.c.l.b16 %v2990
        %v3335 = vunpack.c.l.b16 %v3000
        %v3336 = vunpack.c.l.b16 %v3014
        %v3337 = vunpack.c.l.b16 %v3024
        %v3338 = vunpack.c.l.b16 %v3038
        %v3339 = vunpack.c.l.b16 %v3048
        %v3340 = vunpack.c.l.b16 %v3062
        %v3341 = vunpack.c.l.b16 %v3072
        %v3342 = vunpack.c.l.b16 %v3086
        %v3343 = vunpack.c.l.b16 %v3096
        %v3344 = vunpack.c.l.b16 %v3110
        %v3345 = vunpack.c.l.b16 %v3120
        %v3346 = vunpack.c.l.b16 %v3134
        %v3347 = vunpack.c.l.b16 %v3144
        %v3348 = vunpack.c.l.b16 %v3158
        %v3349 = vunpack.c.l.b16 %v3168
        %v3350 = vunpack.c.l.b16 %v3182
        %v3351 = vunpack.c.l.b16 %v3192
        %v3352 = vunpack.c.l.b16 %v3206
        %v3353 = vunpack.c.l.b16 %v3216
        %v3354 = vunpack.c.l.b16 %v3230
        %v3355 = vunpack.c.l.b16 %v3240
        %v3356 = vunpack.c.l.b16 %v3254
        %v3357 = vunpack.c.l.b16 %v3264
        %v3358 = vunpack.c.l.b16 %v3278
        %v3359 = vunpack.c.l.b16 %v3288
        %v3360 = vunpack.c.l.b16 %v3302
        %v3361 = vunpack.c.l.b16 %v3312
        %v3362 = vpack.c.b16 %v3331, %v3330
        %v3363 = vpack.c.b16 %v3333, %v3332
        %v3364 = vpack.c.b16 %v3335, %v3334
        %v3365 = vpack.c.b16 %v3337, %v3336
        %v3366 = vpack.c.b16 %v3339, %v3338
        %v3367 = vpack.c.b16 %v3341, %v3340
        %v3368 = vpack.c.b16 %v3343, %v3342
        %v3369 = vpack.c.b16 %v3345, %v3344
        %v3370 = vpack.c.b16 %v3347, %v3346
        %v3371 = vpack.c.b16 %v3349, %v3348
        %v3372 = vpack.c.b16 %v3351, %v3350
        %v3373 = vpack.c.b16 %v3353, %v3352
        %v3374 = vpack.c.b16 %v3355, %v3354
        %v3375 = vpack.c.b16 %v3357, %v3356
        %v3376 = vpack.c.b16 %v3359, %v3358
        %v3377 = vpack.c.b16 %v3361, %v3360
        %v3410 = vunpack.c.l.b16 %v3314
        %v3411 = vunpack.c.l.b16 %v3315
        %v3412 = vunpack.c.l.b16 %v3316
        %v3413 = vunpack.c.l.b16 %v3317
        %v3414 = vunpack.c.l.b16 %v3318
        %v3415 = vunpack.c.l.b16 %v3319
        %v3416 = vunpack.c.l.b16 %v3320
        %v3417 = vunpack.c.l.b16 %v3321
        %v3418 = vunpack.c.l.b16 %v3322
        %v3419 = vunpack.c.l.b16 %v3323
        %v3420 = vunpack.c.l.b16 %v3324
        %v3421 = vunpack.c.l.b16 %v3325
        %v3422 = vunpack.c.l.b16 %v3326
        %v3423 = vunpack.c.l.b16 %v3327
        %v3424 = vunpack.c.l.b16 %v3328
        %v3425 = vunpack.c.l.b16 %v3329
        %v3426 = vpack.c.b16 %v3411, %v3410
        %v3427 = vpack.c.b16 %v3413, %v3412
        %v3428 = vpack.c.b16 %v3415, %v3414
        %v3429 = vpack.c.b16 %v3417, %v3416
        %v3430 = vpack.c.b16 %v3419, %v3418
        %v3431 = vpack.c.b16 %v3421, %v3420
        %v3432 = vpack.c.b16 %v3423, %v3422
        %v3433 = vpack.c.b16 %v3425, %v3424
        %3442 = vmatpush.bf16.msra.mxu0 %v3433
        %3443 = vmatpush.bf16.msra.mxu0 %v3432
        %3444 = vmatpush.bf16.msra.mxu0 %v3431
        %3445 = vmatpush.bf16.msra.mxu0 %v3430
        %3446 = vmatpush.bf16.msra.mxu0 %v3429
        %3447 = vmatpush.bf16.msra.mxu0 %v3428
        %3448 = vmatpush.bf16.msra.mxu0 %v3427
        %3449 = vmatpush.bf16.msra.mxu0 %v3426
        %3450 = vmatmul.bf16.gmra.mxu0 %v3362
        %v3451 = vpop.f32.mrf.mxu0
        %v3452 = vadd.f32 0.0, %v3451
        %v3453 = vpop.f32.mrf.mxu0
        %v3454 = vadd.f32 0.0, %v3453
        %3455 = vmatmul.bf16.gmra.mxu0 %v3363
        %v3456 = vpop.f32.mrf.mxu0
        %v3457 = vadd.f32 0.0, %v3456
        %v3458 = vpop.f32.mrf.mxu0
        %v3459 = vadd.f32 0.0, %v3458
        %3460 = vmatmul.bf16.gmra.mxu0 %v3364
        %v3461 = vpop.f32.mrf.mxu0
        %v3462 = vadd.f32 0.0, %v3461
        %v3463 = vpop.f32.mrf.mxu0
        %v3464 = vadd.f32 0.0, %v3463
        %3465 = vmatmul.bf16.gmra.mxu0 %v3365
        %v3466 = vpop.f32.mrf.mxu0
        %v3467 = vadd.f32 0.0, %v3466
        %v3468 = vpop.f32.mrf.mxu0
        %v3469 = vadd.f32 0.0, %v3468
        %3470 = vmatmul.bf16.gmra.mxu0 %v3366
        %v3471 = vpop.f32.mrf.mxu0
        %v3472 = vadd.f32 0.0, %v3471
        %v3473 = vpop.f32.mrf.mxu0
        %v3474 = vadd.f32 0.0, %v3473
        %3475 = vmatmul.bf16.gmra.mxu0 %v3367
        %v3476 = vpop.f32.mrf.mxu0
        %v3477 = vadd.f32 0.0, %v3476
        %v3478 = vpop.f32.mrf.mxu0
        %v3479 = vadd.f32 0.0, %v3478
        %3480 = vmatmul.bf16.gmra.mxu0 %v3368
        %v3481 = vpop.f32.mrf.mxu0
        %v3482 = vadd.f32 0.0, %v3481
        %v3483 = vpop.f32.mrf.mxu0
        %v3484 = vadd.f32 0.0, %v3483
        %3485 = vmatmul.bf16.gmra.mxu0 %v3369
        %v3486 = vpop.f32.mrf.mxu0
        %v3487 = vadd.f32 0.0, %v3486
        %v3488 = vpop.f32.mrf.mxu0
        %v3489 = vadd.f32 0.0, %v3488
        %3490 = vmatmul.bf16.gmra.mxu0 %v3370
        %v3491 = vpop.f32.mrf.mxu0
        %v3492 = vadd.f32 0.0, %v3491
        %v3493 = vpop.f32.mrf.mxu0
        %v3494 = vadd.f32 0.0, %v3493
        %3495 = vmatmul.bf16.gmra.mxu0 %v3371
        %v3496 = vpop.f32.mrf.mxu0
        %v3497 = vadd.f32 0.0, %v3496
        %v3498 = vpop.f32.mrf.mxu0
        %v3499 = vadd.f32 0.0, %v3498
        %3500 = vmatmul.bf16.gmra.mxu0 %v3372
        %v3501 = vpop.f32.mrf.mxu0
        %v3502 = vadd.f32 0.0, %v3501
        %v3503 = vpop.f32.mrf.mxu0
        %v3504 = vadd.f32 0.0, %v3503
        %3505 = vmatmul.bf16.gmra.mxu0 %v3373
        %v3506 = vpop.f32.mrf.mxu0
        %v3507 = vadd.f32 0.0, %v3506
        %v3508 = vpop.f32.mrf.mxu0
        %v3509 = vadd.f32 0.0, %v3508
        %3510 = vmatmul.bf16.gmra.mxu0 %v3374
        %v3511 = vpop.f32.mrf.mxu0
        %v3512 = vadd.f32 0.0, %v3511
        %v3513 = vpop.f32.mrf.mxu0
        %v3514 = vadd.f32 0.0, %v3513
        %3515 = vmatmul.bf16.gmra.mxu0 %v3375
        %v3516 = vpop.f32.mrf.mxu0
        %v3517 = vadd.f32 0.0, %v3516
        %v3518 = vpop.f32.mrf.mxu0
        %v3519 = vadd.f32 0.0, %v3518
        %3520 = vmatmul.bf16.gmra.mxu0 %v3376
        %v3521 = vpop.f32.mrf.mxu0
        %v3522 = vadd.f32 0.0, %v3521
        %v3523 = vpop.f32.mrf.mxu0
        %v3524 = vadd.f32 0.0, %v3523
        %3525 = vmatmul.bf16.gmra.mxu0 %v3377
        %v3526 = vpop.f32.mrf.mxu0
        %v3527 = vadd.f32 0.0, %v3526
        %v3528 = vpop.f32.mrf.mxu0
        %v3529 = vadd.f32 0.0, %v3528
        %3530 = vdwg.mxu0
        %v3563 = vunpack.c.l.b16 %v2862
        %v3564 = vunpack.c.l.b16 %v2863
        %v3565 = vunpack.c.l.b16 %v2864
        %v3566 = vunpack.c.l.b16 %v2865
        %v3567 = vunpack.c.l.b16 %v2866
        %v3568 = vunpack.c.l.b16 %v2867
        %v3569 = vunpack.c.l.b16 %v2868
        %v3570 = vunpack.c.l.b16 %v2869
        %v3571 = vunpack.c.l.b16 %v2870
        %v3572 = vunpack.c.l.b16 %v2871
        %v3573 = vunpack.c.l.b16 %v2872
        %v3574 = vunpack.c.l.b16 %v2873
        %v3575 = vunpack.c.l.b16 %v2874
        %v3576 = vunpack.c.l.b16 %v2875
        %v3577 = vunpack.c.l.b16 %v2876
        %v3578 = vunpack.c.l.b16 %v2877
        %v3579 = vunpack.c.l.b16 %v2878
        %v3580 = vunpack.c.l.b16 %v2879
        %v3581 = vunpack.c.l.b16 %v2880
        %v3582 = vunpack.c.l.b16 %v2881
        %v3583 = vunpack.c.l.b16 %v2882
        %v3584 = vunpack.c.l.b16 %v2883
        %v3585 = vunpack.c.l.b16 %v2884
        %v3586 = vunpack.c.l.b16 %v2885
        %v3587 = vunpack.c.l.b16 %v2886
        %v3588 = vunpack.c.l.b16 %v2887
        %v3589 = vunpack.c.l.b16 %v2888
        %v3590 = vunpack.c.l.b16 %v2889
        %v3591 = vunpack.c.l.b16 %v2890
        %v3592 = vunpack.c.l.b16 %v2891
        %v3593 = vunpack.c.l.b16 %v2892
        %v3594 = vunpack.c.l.b16 %v2893
        %v3595 = vpack.c.b16 %v3564, %v3563
        %v3596 = vpack.c.b16 %v3566, %v3565
        %v3597 = vpack.c.b16 %v3568, %v3567
        %v3598 = vpack.c.b16 %v3570, %v3569
        %v3599 = vpack.c.b16 %v3572, %v3571
        %v3600 = vpack.c.b16 %v3574, %v3573
        %v3601 = vpack.c.b16 %v3576, %v3575
        %v3602 = vpack.c.b16 %v3578, %v3577
        %v3603 = vpack.c.b16 %v3580, %v3579
        %v3604 = vpack.c.b16 %v3582, %v3581
        %v3605 = vpack.c.b16 %v3584, %v3583
        %v3606 = vpack.c.b16 %v3586, %v3585
        %v3607 = vpack.c.b16 %v3588, %v3587
        %v3608 = vpack.c.b16 %v3590, %v3589
        %v3609 = vpack.c.b16 %v3592, %v3591
        %v3610 = vpack.c.b16 %v3594, %v3593
        %v3643 = vunpack.c.l.b16 %v2894
        %v3644 = vunpack.c.l.b16 %v2895
        %v3645 = vunpack.c.l.b16 %v2896
        %v3646 = vunpack.c.l.b16 %v2897
        %v3647 = vunpack.c.l.b16 %v2898
        %v3648 = vunpack.c.l.b16 %v2899
        %v3649 = vunpack.c.l.b16 %v2900
        %v3650 = vunpack.c.l.b16 %v2901
        %v3651 = vunpack.c.l.b16 %v2902
        %v3652 = vunpack.c.l.b16 %v2903
        %v3653 = vunpack.c.l.b16 %v2904
        %v3654 = vunpack.c.l.b16 %v2905
        %v3655 = vunpack.c.l.b16 %v2906
        %v3656 = vunpack.c.l.b16 %v2907
        %v3657 = vunpack.c.l.b16 %v2908
        %v3658 = vunpack.c.l.b16 %v2909
        %v3659 = vpack.c.b16 %v3644, %v3643
        %v3660 = vpack.c.b16 %v3646, %v3645
        %v3661 = vpack.c.b16 %v3648, %v3647
        %v3662 = vpack.c.b16 %v3650, %v3649
        %v3663 = vpack.c.b16 %v3652, %v3651
        %v3664 = vpack.c.b16 %v3654, %v3653
        %v3665 = vpack.c.b16 %v3656, %v3655
        %v3666 = vpack.c.b16 %v3658, %v3657
        %3675 = vmatpush.bf16.msra.mxu0 %v3666
        %3676 = vmatpush.bf16.msra.mxu0 %v3665
        %3677 = vmatpush.bf16.msra.mxu0 %v3664
        %3678 = vmatpush.bf16.msra.mxu0 %v3663
        %3679 = vmatpush.bf16.msra.mxu0 %v3662
        %3680 = vmatpush.bf16.msra.mxu0 %v3661
        %3681 = vmatpush.bf16.msra.mxu0 %v3660
        %3682 = vmatpush.bf16.msra.mxu0 %v3659
        %3683 = vmatmul.bf16.gmra.mxu0 %v3595
        %v3684 = vpop.f32.mrf.mxu0
        %v3685 = vadd.f32 %v3452, %v3684
        %v3686 = vpop.f32.mrf.mxu0
        %v3687 = vadd.f32 %v3454, %v3686
        %3688 = vmatmul.bf16.gmra.mxu0 %v3596
        %v3689 = vpop.f32.mrf.mxu0
        %v3690 = vadd.f32 %v3457, %v3689
        %v3691 = vpop.f32.mrf.mxu0
        %v3692 = vadd.f32 %v3459, %v3691
        %3693 = vmatmul.bf16.gmra.mxu0 %v3597
        %v3694 = vpop.f32.mrf.mxu0
        %v3695 = vadd.f32 %v3462, %v3694
        %v3696 = vpop.f32.mrf.mxu0
        %v3697 = vadd.f32 %v3464, %v3696
        %3698 = vmatmul.bf16.gmra.mxu0 %v3598
        %v3699 = vpop.f32.mrf.mxu0
        %v3700 = vadd.f32 %v3467, %v3699
        %v3701 = vpop.f32.mrf.mxu0
        %v3702 = vadd.f32 %v3469, %v3701
        %3703 = vmatmul.bf16.gmra.mxu0 %v3599
        %v3704 = vpop.f32.mrf.mxu0
        %v3705 = vadd.f32 %v3472, %v3704
        %v3706 = vpop.f32.mrf.mxu0
        %v3707 = vadd.f32 %v3474, %v3706
        %3708 = vmatmul.bf16.gmra.mxu0 %v3600
        %v3709 = vpop.f32.mrf.mxu0
        %v3710 = vadd.f32 %v3477, %v3709
        %v3711 = vpop.f32.mrf.mxu0
        %v3712 = vadd.f32 %v3479, %v3711
        %3713 = vmatmul.bf16.gmra.mxu0 %v3601
        %v3714 = vpop.f32.mrf.mxu0
        %v3715 = vadd.f32 %v3482, %v3714
        %v3716 = vpop.f32.mrf.mxu0
        %v3717 = vadd.f32 %v3484, %v3716
        %3718 = vmatmul.bf16.gmra.mxu0 %v3602
        %v3719 = vpop.f32.mrf.mxu0
        %v3720 = vadd.f32 %v3487, %v3719
        %v3721 = vpop.f32.mrf.mxu0
        %v3722 = vadd.f32 %v3489, %v3721
        %3723 = vmatmul.bf16.gmra.mxu0 %v3603
        %v3724 = vpop.f32.mrf.mxu0
        %v3725 = vadd.f32 %v3492, %v3724
        %v3726 = vpop.f32.mrf.mxu0
        %v3727 = vadd.f32 %v3494, %v3726
        %3728 = vmatmul.bf16.gmra.mxu0 %v3604
        %v3729 = vpop.f32.mrf.mxu0
        %v3730 = vadd.f32 %v3497, %v3729
        %v3731 = vpop.f32.mrf.mxu0
        %v3732 = vadd.f32 %v3499, %v3731
        %3733 = vmatmul.bf16.gmra.mxu0 %v3605
        %v3734 = vpop.f32.mrf.mxu0
        %v3735 = vadd.f32 %v3502, %v3734
        %v3736 = vpop.f32.mrf.mxu0
        %v3737 = vadd.f32 %v3504, %v3736
        %3738 = vmatmul.bf16.gmra.mxu0 %v3606
        %v3739 = vpop.f32.mrf.mxu0
        %v3740 = vadd.f32 %v3507, %v3739
        %v3741 = vpop.f32.mrf.mxu0
        %v3742 = vadd.f32 %v3509, %v3741
        %3743 = vmatmul.bf16.gmra.mxu0 %v3607
        %v3744 = vpop.f32.mrf.mxu0
        %v3745 = vadd.f32 %v3512, %v3744
        %v3746 = vpop.f32.mrf.mxu0
        %v3747 = vadd.f32 %v3514, %v3746
        %3748 = vmatmul.bf16.gmra.mxu0 %v3608
        %v3749 = vpop.f32.mrf.mxu0
        %v3750 = vadd.f32 %v3517, %v3749
        %v3751 = vpop.f32.mrf.mxu0
        %v3752 = vadd.f32 %v3519, %v3751
        %3753 = vmatmul.bf16.gmra.mxu0 %v3609
        %v3754 = vpop.f32.mrf.mxu0
        %v3755 = vadd.f32 %v3522, %v3754
        %v3756 = vpop.f32.mrf.mxu0
        %v3757 = vadd.f32 %v3524, %v3756
        %3758 = vmatmul.bf16.gmra.mxu0 %v3610
        %v3759 = vpop.f32.mrf.mxu0
        %v3760 = vadd.f32 %v3527, %v3759
        %v3761 = vpop.f32.mrf.mxu0
        %v3762 = vadd.f32 %v3529, %v3761
        %3763 = vdwg.mxu0
        %v3764 = vld [vmem:[#allocation2] sm:$0xe]
        %v3765 = vld [vmem:[#allocation2 + $0xc] sm:$0xe]
        %v3766 = vld [vmem:[#allocation2 + $0x18] sm:$0xe]
        %v3767 = vld [vmem:[#allocation2 + $0x24] sm:$0xe]
        %v3768 = vld [vmem:[#allocation2 + $0x30] sm:$0xe]
        %v3769 = vld [vmem:[#allocation2 + $0x3c] sm:$0xe]
        %v3770 = vld [vmem:[#allocation2 + $0x48] sm:$0xe]
        %v3771 = vld [vmem:[#allocation2 + $0x54] sm:$0xe]
        %v3772 = vld [vmem:[#allocation2 + $0x60] sm:$0xe]
        %v3773 = vld [vmem:[#allocation2 + $0x6c] sm:$0xe]
        %v3774 = vld [vmem:[#allocation2 + $0x78] sm:$0xe]
        %v3775 = vld [vmem:[#allocation2 + $0x84] sm:$0xe]
        %v3776 = vld [vmem:[#allocation2 + $0x90] sm:$0xe]
        %v3777 = vld [vmem:[#allocation2 + $0x9c] sm:$0xe]
        %v3778 = vld [vmem:[#allocation2 + $0xa8] sm:$0xe]
        %v3779 = vld [vmem:[#allocation2 + $0xb4] sm:$0xe]
        %vm3812 = vcmask 1042432
        %vm3813 = vcmask 1046532
        %vm3814 = vmor %vm3812, %vm3813
        %v3815 = vrot.slane %v3764, 5
        %v3816 = vrot.slane %v3815, 4
        %v3817 = vrot.slane %v2863, 5
        %v3818 = vsel %vm3814, %v3816, %v3817
        %v3819 = vrot.slane %v3817, 4
        %v3820 = vrot.slane %v2910, 5
        %v3821 = vsel %vm3814, %v3819, %v3820
        %v3822 = vrot.slane %v3765, 5
        %v3823 = vrot.slane %v3822, 4
        %v3824 = vrot.slane %v2865, 5
        %v3825 = vsel %vm3814, %v3823, %v3824
        %v3826 = vrot.slane %v3824, 4
        %v3827 = vrot.slane %v2911, 5
        %v3828 = vsel %vm3814, %v3826, %v3827
        %v3829 = vrot.slane %v3766, 5
        %v3830 = vrot.slane %v3829, 4
        %v3831 = vrot.slane %v2867, 5
        %v3832 = vsel %vm3814, %v3830, %v3831
        %v3833 = vrot.slane %v3831, 4
        %v3834 = vrot.slane %v2912, 5
        %v3835 = vsel %vm3814, %v3833, %v3834
        %v3836 = vrot.slane %v3767, 5
        %v3837 = vrot.slane %v3836, 4
        %v3838 = vrot.slane %v2869, 5
        %v3839 = vsel %vm3814, %v3837, %v3838
        %v3840 = vrot.slane %v3838, 4
        %v3841 = vrot.slane %v2913, 5
        %v3842 = vsel %vm3814, %v3840, %v3841
        %v3843 = vrot.slane %v3768, 5
        %v3844 = vrot.slane %v3843, 4
        %v3845 = vrot.slane %v2871, 5
        %v3846 = vsel %vm3814, %v3844, %v3845
        %v3847 = vrot.slane %v3845, 4
        %v3848 = vrot.slane %v2914, 5
        %v3849 = vsel %vm3814, %v3847, %v3848
        %v3850 = vrot.slane %v3769, 5
        %v3851 = vrot.slane %v3850, 4
        %v3852 = vrot.slane %v2873, 5
        %v3853 = vsel %vm3814, %v3851, %v3852
        %v3854 = vrot.slane %v3852, 4
        %v3855 = vrot.slane %v2915, 5
        %v3856 = vsel %vm3814, %v3854, %v3855
        %v3857 = vrot.slane %v3770, 5
        %v3858 = vrot.slane %v3857, 4
        %v3859 = vrot.slane %v2875, 5
        %v3860 = vsel %vm3814, %v3858, %v3859
        %v3861 = vrot.slane %v3859, 4
        %v3862 = vrot.slane %v2916, 5
        %v3863 = vsel %vm3814, %v3861, %v3862
        %v3864 = vrot.slane %v3771, 5
        %v3865 = vrot.slane %v3864, 4
        %v3866 = vrot.slane %v2877, 5
        %v3867 = vsel %vm3814, %v3865, %v3866
        %v3868 = vrot.slane %v3866, 4
        %v3869 = vrot.slane %v2917, 5
        %v3870 = vsel %vm3814, %v3868, %v3869
        %v3871 = vrot.slane %v3772, 5
        %v3872 = vrot.slane %v3871, 4
        %v3873 = vrot.slane %v2879, 5
        %v3874 = vsel %vm3814, %v3872, %v3873
        %v3875 = vrot.slane %v3873, 4
        %v3876 = vrot.slane %v2918, 5
        %v3877 = vsel %vm3814, %v3875, %v3876
        %v3878 = vrot.slane %v3773, 5
        %v3879 = vrot.slane %v3878, 4
        %v3880 = vrot.slane %v2881, 5
        %v3881 = vsel %vm3814, %v3879, %v3880
        %v3882 = vrot.slane %v3880, 4
        %v3883 = vrot.slane %v2919, 5
        %v3884 = vsel %vm3814, %v3882, %v3883
        %v3885 = vrot.slane %v3774, 5
        %v3886 = vrot.slane %v3885, 4
        %v3887 = vrot.slane %v2883, 5
        %v3888 = vsel %vm3814, %v3886, %v3887
        %v3889 = vrot.slane %v3887, 4
        %v3890 = vrot.slane %v2920, 5
        %v3891 = vsel %vm3814, %v3889, %v3890
        %v3892 = vrot.slane %v3775, 5
        %v3893 = vrot.slane %v3892, 4
        %v3894 = vrot.slane %v2885, 5
        %v3895 = vsel %vm3814, %v3893, %v3894
        %v3896 = vrot.slane %v3894, 4
        %v3897 = vrot.slane %v2921, 5
        %v3898 = vsel %vm3814, %v3896, %v3897
        %v3899 = vrot.slane %v3776, 5
        %v3900 = vrot.slane %v3899, 4
        %v3901 = vrot.slane %v2887, 5
        %v3902 = vsel %vm3814, %v3900, %v3901
        %v3903 = vrot.slane %v3901, 4
        %v3904 = vrot.slane %v2922, 5
        %v3905 = vsel %vm3814, %v3903, %v3904
        %v3906 = vrot.slane %v3777, 5
        %v3907 = vrot.slane %v3906, 4
        %v3908 = vrot.slane %v2889, 5
        %v3909 = vsel %vm3814, %v3907, %v3908
        %v3910 = vrot.slane %v3908, 4
        %v3911 = vrot.slane %v2923, 5
        %v3912 = vsel %vm3814, %v3910, %v3911
        %v3913 = vrot.slane %v3778, 5
        %v3914 = vrot.slane %v3913, 4
        %v3915 = vrot.slane %v2891, 5
        %v3916 = vsel %vm3814, %v3914, %v3915
        %v3917 = vrot.slane %v3915, 4
        %v3918 = vrot.slane %v2924, 5
        %v3919 = vsel %vm3814, %v3917, %v3918
        %v3920 = vrot.slane %v3779, 5
        %v3921 = vrot.slane %v3920, 4
        %v3922 = vrot.slane %v2893, 5
        %v3923 = vsel %vm3814, %v3921, %v3922
        %v3924 = vrot.slane %v3922, 4
        %v3925 = vrot.slane %v2925, 5
        %v3926 = vsel %vm3814, %v3924, %v3925
        %s3927 = scalar_lea.vmem %s3, 128
        %v3928 = vld [vmem:[%s3927] sm:$0xf]
        %v3929 = vld [vmem:[%s3927 + $0x4] sm:$0xf]
        %v3930 = vld [vmem:[%s3927 + $0x8] sm:$0xf]
        %v3931 = vld [vmem:[%s3927 + $0xc] sm:$0xf]
        %v3932 = vld [vmem:[%s3927 + $0x10] sm:$0xf]
        %v3933 = vld [vmem:[%s3927 + $0x14] sm:$0xf]
        %v3934 = vld [vmem:[%s3927 + $0x18] sm:$0xf]
        %v3935 = vld [vmem:[%s3927 + $0x1c] sm:$0xf]
        %v3936 = vld [vmem:[%s3927 + $0x20] sm:$0xf]
        %v3937 = vld [vmem:[%s3927 + $0x24] sm:$0xf]
        %v3938 = vld [vmem:[%s3927 + $0x28] sm:$0xf]
        %v3939 = vld [vmem:[%s3927 + $0x2c] sm:$0xf]
        %v3940 = vld [vmem:[%s3927 + $0x30] sm:$0xf]
        %v3941 = vld [vmem:[%s3927 + $0x34] sm:$0xf]
        %v3942 = vld [vmem:[%s3927 + $0x38] sm:$0xf]
        %v3943 = vld [vmem:[%s3927 + $0x3c] sm:$0xf]
        %v3944 = vunpack.c.l.b16 %v3818
        %v3945 = vunpack.c.l.b16 %v3821
        %v3946 = vunpack.c.l.b16 %v3825
        %v3947 = vunpack.c.l.b16 %v3828
        %v3948 = vunpack.c.l.b16 %v3832
        %v3949 = vunpack.c.l.b16 %v3835
        %v3950 = vunpack.c.l.b16 %v3839
        %v3951 = vunpack.c.l.b16 %v3842
        %v3952 = vunpack.c.l.b16 %v3846
        %v3953 = vunpack.c.l.b16 %v3849
        %v3954 = vunpack.c.l.b16 %v3853
        %v3955 = vunpack.c.l.b16 %v3856
        %v3956 = vunpack.c.l.b16 %v3860
        %v3957 = vunpack.c.l.b16 %v3863
        %v3958 = vunpack.c.l.b16 %v3867
        %v3959 = vunpack.c.l.b16 %v3870
        %v3960 = vunpack.c.l.b16 %v3874
        %v3961 = vunpack.c.l.b16 %v3877
        %v3962 = vunpack.c.l.b16 %v3881
        %v3963 = vunpack.c.l.b16 %v3884
        %v3964 = vunpack.c.l.b16 %v3888
        %v3965 = vunpack.c.l.b16 %v3891
        %v3966 = vunpack.c.l.b16 %v3895
        %v3967 = vunpack.c.l.b16 %v3898
        %v3968 = vunpack.c.l.b16 %v3902
        %v3969 = vunpack.c.l.b16 %v3905
        %v3970 = vunpack.c.l.b16 %v3909
        %v3971 = vunpack.c.l.b16 %v3912
        %v3972 = vunpack.c.l.b16 %v3916
        %v3973 = vunpack.c.l.b16 %v3919
        %v3974 = vunpack.c.l.b16 %v3923
        %v3975 = vunpack.c.l.b16 %v3926
        %v3976 = vpack.c.b16 %v3945, %v3944
        %v3977 = vpack.c.b16 %v3947, %v3946
        %v3978 = vpack.c.b16 %v3949, %v3948
        %v3979 = vpack.c.b16 %v3951, %v3950
        %v3980 = vpack.c.b16 %v3953, %v3952
        %v3981 = vpack.c.b16 %v3955, %v3954
        %v3982 = vpack.c.b16 %v3957, %v3956
        %v3983 = vpack.c.b16 %v3959, %v3958
        %v3984 = vpack.c.b16 %v3961, %v3960
        %v3985 = vpack.c.b16 %v3963, %v3962
        %v3986 = vpack.c.b16 %v3965, %v3964
        %v3987 = vpack.c.b16 %v3967, %v3966
        %v3988 = vpack.c.b16 %v3969, %v3968
        %v3989 = vpack.c.b16 %v3971, %v3970
        %v3990 = vpack.c.b16 %v3973, %v3972
        %v3991 = vpack.c.b16 %v3975, %v3974
        %v4024 = vunpack.c.l.b16 %v3928
        %v4025 = vunpack.c.l.b16 %v3929
        %v4026 = vunpack.c.l.b16 %v3930
        %v4027 = vunpack.c.l.b16 %v3931
        %v4028 = vunpack.c.l.b16 %v3932
        %v4029 = vunpack.c.l.b16 %v3933
        %v4030 = vunpack.c.l.b16 %v3934
        %v4031 = vunpack.c.l.b16 %v3935
        %v4032 = vunpack.c.l.b16 %v3936
        %v4033 = vunpack.c.l.b16 %v3937
        %v4034 = vunpack.c.l.b16 %v3938
        %v4035 = vunpack.c.l.b16 %v3939
        %v4036 = vunpack.c.l.b16 %v3940
        %v4037 = vunpack.c.l.b16 %v3941
        %v4038 = vunpack.c.l.b16 %v3942
        %v4039 = vunpack.c.l.b16 %v3943
        %v4040 = vpack.c.b16 %v4025, %v4024
        %v4041 = vpack.c.b16 %v4027, %v4026
        %v4042 = vpack.c.b16 %v4029, %v4028
        %v4043 = vpack.c.b16 %v4031, %v4030
        %v4044 = vpack.c.b16 %v4033, %v4032
        %v4045 = vpack.c.b16 %v4035, %v4034
        %v4046 = vpack.c.b16 %v4037, %v4036
        %v4047 = vpack.c.b16 %v4039, %v4038
        %4056 = vmatpush.bf16.msra.mxu0 %v4047
        %4057 = vmatpush.bf16.msra.mxu0 %v4046
        %4058 = vmatpush.bf16.msra.mxu0 %v4045
        %4059 = vmatpush.bf16.msra.mxu0 %v4044
        %4060 = vmatpush.bf16.msra.mxu0 %v4043
        %4061 = vmatpush.bf16.msra.mxu0 %v4042
        %4062 = vmatpush.bf16.msra.mxu0 %v4041
        %4063 = vmatpush.bf16.msra.mxu0 %v4040
        %4064 = vmatmul.bf16.gmra.mxu0 %v3976
        %v4065 = vpop.f32.mrf.mxu0
        %v4066 = vadd.f32 0.0, %v4065
        %v4067 = vpop.f32.mrf.mxu0
        %v4068 = vadd.f32 0.0, %v4067
        %4069 = vmatmul.bf16.gmra.mxu0 %v3977
        %v4070 = vpop.f32.mrf.mxu0
        %v4071 = vadd.f32 0.0, %v4070
        %v4072 = vpop.f32.mrf.mxu0
        %v4073 = vadd.f32 0.0, %v4072
        %4074 = vmatmul.bf16.gmra.mxu0 %v3978
        %v4075 = vpop.f32.mrf.mxu0
        %v4076 = vadd.f32 0.0, %v4075
        %v4077 = vpop.f32.mrf.mxu0
        %v4078 = vadd.f32 0.0, %v4077
        %4079 = vmatmul.bf16.gmra.mxu0 %v3979
        %v4080 = vpop.f32.mrf.mxu0
        %v4081 = vadd.f32 0.0, %v4080
        %v4082 = vpop.f32.mrf.mxu0
        %v4083 = vadd.f32 0.0, %v4082
        %4084 = vmatmul.bf16.gmra.mxu0 %v3980
        %v4085 = vpop.f32.mrf.mxu0
        %v4086 = vadd.f32 0.0, %v4085
        %v4087 = vpop.f32.mrf.mxu0
        %v4088 = vadd.f32 0.0, %v4087
        %4089 = vmatmul.bf16.gmra.mxu0 %v3981
        %v4090 = vpop.f32.mrf.mxu0
        %v4091 = vadd.f32 0.0, %v4090
        %v4092 = vpop.f32.mrf.mxu0
        %v4093 = vadd.f32 0.0, %v4092
        %4094 = vmatmul.bf16.gmra.mxu0 %v3982
        %v4095 = vpop.f32.mrf.mxu0
        %v4096 = vadd.f32 0.0, %v4095
        %v4097 = vpop.f32.mrf.mxu0
        %v4098 = vadd.f32 0.0, %v4097
        %4099 = vmatmul.bf16.gmra.mxu0 %v3983
        %v4100 = vpop.f32.mrf.mxu0
        %v4101 = vadd.f32 0.0, %v4100
        %v4102 = vpop.f32.mrf.mxu0
        %v4103 = vadd.f32 0.0, %v4102
        %4104 = vmatmul.bf16.gmra.mxu0 %v3984
        %v4105 = vpop.f32.mrf.mxu0
        %v4106 = vadd.f32 0.0, %v4105
        %v4107 = vpop.f32.mrf.mxu0
        %v4108 = vadd.f32 0.0, %v4107
        %4109 = vmatmul.bf16.gmra.mxu0 %v3985
        %v4110 = vpop.f32.mrf.mxu0
        %v4111 = vadd.f32 0.0, %v4110
        %v4112 = vpop.f32.mrf.mxu0
        %v4113 = vadd.f32 0.0, %v4112
        %4114 = vmatmul.bf16.gmra.mxu0 %v3986
        %v4115 = vpop.f32.mrf.mxu0
        %v4116 = vadd.f32 0.0, %v4115
        %v4117 = vpop.f32.mrf.mxu0
        %v4118 = vadd.f32 0.0, %v4117
        %4119 = vmatmul.bf16.gmra.mxu0 %v3987
        %v4120 = vpop.f32.mrf.mxu0
        %v4121 = vadd.f32 0.0, %v4120
        %v4122 = vpop.f32.mrf.mxu0
        %v4123 = vadd.f32 0.0, %v4122
        %4124 = vmatmul.bf16.gmra.mxu0 %v3988
        %v4125 = vpop.f32.mrf.mxu0
        %v4126 = vadd.f32 0.0, %v4125
        %v4127 = vpop.f32.mrf.mxu0
        %v4128 = vadd.f32 0.0, %v4127
        %4129 = vmatmul.bf16.gmra.mxu0 %v3989
        %v4130 = vpop.f32.mrf.mxu0
        %v4131 = vadd.f32 0.0, %v4130
        %v4132 = vpop.f32.mrf.mxu0
        %v4133 = vadd.f32 0.0, %v4132
        %4134 = vmatmul.bf16.gmra.mxu0 %v3990
        %v4135 = vpop.f32.mrf.mxu0
        %v4136 = vadd.f32 0.0, %v4135
        %v4137 = vpop.f32.mrf.mxu0
        %v4138 = vadd.f32 0.0, %v4137
        %4139 = vmatmul.bf16.gmra.mxu0 %v3991
        %v4140 = vpop.f32.mrf.mxu0
        %v4141 = vadd.f32 0.0, %v4140
        %v4142 = vpop.f32.mrf.mxu0
        %v4143 = vadd.f32 0.0, %v4142
        %4144 = vdwg.mxu0
        %v4145 = vadd.f32 %v3685, %v4066
        %v4146 = vadd.f32 %v3687, %v4068
        %v4147 = vadd.f32 %v3690, %v4071
        %v4148 = vadd.f32 %v3692, %v4073
        %v4149 = vadd.f32 %v3695, %v4076
        %v4150 = vadd.f32 %v3697, %v4078
        %v4151 = vadd.f32 %v3700, %v4081
        %v4152 = vadd.f32 %v3702, %v4083
        %v4153 = vadd.f32 %v3705, %v4086
        %v4154 = vadd.f32 %v3707, %v4088
        %v4155 = vadd.f32 %v3710, %v4091
        %v4156 = vadd.f32 %v3712, %v4093
        %v4157 = vadd.f32 %v3715, %v4096
        %v4158 = vadd.f32 %v3717, %v4098
        %v4159 = vadd.f32 %v3720, %v4101
        %v4160 = vadd.f32 %v3722, %v4103
        %v4161 = vadd.f32 %v3725, %v4106
        %v4162 = vadd.f32 %v3727, %v4108
        %v4163 = vadd.f32 %v3730, %v4111
        %v4164 = vadd.f32 %v3732, %v4113
        %v4165 = vadd.f32 %v3735, %v4116
        %v4166 = vadd.f32 %v3737, %v4118
        %v4167 = vadd.f32 %v3740, %v4121
        %v4168 = vadd.f32 %v3742, %v4123
        %v4169 = vadd.f32 %v3745, %v4126
        %v4170 = vadd.f32 %v3747, %v4128
        %v4171 = vadd.f32 %v3750, %v4131
        %v4172 = vadd.f32 %v3752, %v4133
        %v4173 = vadd.f32 %v3755, %v4136
        %v4174 = vadd.f32 %v3757, %v4138
        %v4175 = vadd.f32 %v3760, %v4141
        %v4176 = vadd.f32 %v3762, %v4143
        %v4177 = vld [vmem:[%s2744] sm:$0xf]
        %v4178 = vld [vmem:[%s2744 + $0x4] sm:$0xf]
        %v4179 = vld [vmem:[%s2744 + $0xc] sm:$0xf]
        %v4180 = vld [vmem:[%s2744 + $0x10] sm:$0xf]
        %v4181 = vld [vmem:[%s2744 + $0x18] sm:$0xf]
        %v4182 = vld [vmem:[%s2744 + $0x1c] sm:$0xf]
        %v4183 = vld [vmem:[%s2744 + $0x24] sm:$0xf]
        %v4184 = vld [vmem:[%s2744 + $0x28] sm:$0xf]
        %v4185 = vld [vmem:[%s2744 + $0x30] sm:$0xf]
        %v4186 = vld [vmem:[%s2744 + $0x34] sm:$0xf]
        %v4187 = vld [vmem:[%s2744 + $0x3c] sm:$0xf]
        %v4188 = vld [vmem:[%s2744 + $0x40] sm:$0xf]
        %v4189 = vld [vmem:[%s2744 + $0x48] sm:$0xf]
        %v4190 = vld [vmem:[%s2744 + $0x4c] sm:$0xf]
        %v4191 = vld [vmem:[%s2744 + $0x54] sm:$0xf]
        %v4192 = vld [vmem:[%s2744 + $0x58] sm:$0xf]
        %v4193 = vld [vmem:[%s2744 + $0x60] sm:$0xf]
        %v4194 = vld [vmem:[%s2744 + $0x64] sm:$0xf]
        %v4195 = vld [vmem:[%s2744 + $0x6c] sm:$0xf]
        %v4196 = vld [vmem:[%s2744 + $0x70] sm:$0xf]
        %v4197 = vld [vmem:[%s2744 + $0x78] sm:$0xf]
        %v4198 = vld [vmem:[%s2744 + $0x7c] sm:$0xf]
        %v4199 = vld [vmem:[%s2744 + $0x84] sm:$0xf]
        %v4200 = vld [vmem:[%s2744 + $0x88] sm:$0xf]
        %v4201 = vld [vmem:[%s2744 + $0x90] sm:$0xf]
        %v4202 = vld [vmem:[%s2744 + $0x94] sm:$0xf]
        %v4203 = vld [vmem:[%s2744 + $0x9c] sm:$0xf]
        %v4204 = vld [vmem:[%s2744 + $0xa0] sm:$0xf]
        %v4205 = vld [vmem:[%s2744 + $0xa8] sm:$0xf]
        %v4206 = vld [vmem:[%s2744 + $0xac] sm:$0xf]
        %v4207 = vld [vmem:[%s2744 + $0xb4] sm:$0xf]
        %v4208 = vld [vmem:[%s2744 + $0xb8] sm:$0xf]
        %s4209 = scalar_lea.vmem %s3, 192
        %v4210 = vld [vmem:[%s4209] sm:$0xf]
        %v4211 = vld [vmem:[%s4209 + $0x4] sm:$0xf]
        %v4212 = vld [vmem:[%s4209 + $0x8] sm:$0xf]
        %v4213 = vld [vmem:[%s4209 + $0xc] sm:$0xf]
        %v4214 = vld [vmem:[%s4209 + $0x10] sm:$0xf]
        %v4215 = vld [vmem:[%s4209 + $0x14] sm:$0xf]
        %v4216 = vld [vmem:[%s4209 + $0x18] sm:$0xf]
        %v4217 = vld [vmem:[%s4209 + $0x1c] sm:$0xf]
        %v4218 = vld [vmem:[%s4209 + $0x20] sm:$0xf]
        %v4219 = vld [vmem:[%s4209 + $0x24] sm:$0xf]
        %v4220 = vld [vmem:[%s4209 + $0x28] sm:$0xf]
        %v4221 = vld [vmem:[%s4209 + $0x2c] sm:$0xf]
        %v4222 = vld [vmem:[%s4209 + $0x30] sm:$0xf]
        %v4223 = vld [vmem:[%s4209 + $0x34] sm:$0xf]
        %v4224 = vld [vmem:[%s4209 + $0x38] sm:$0xf]
        %v4225 = vld [vmem:[%s4209 + $0x3c] sm:$0xf]
        %v4258 = vunpack.c.l.b16 %v4177
        %v4259 = vunpack.c.l.b16 %v4178
        %v4260 = vunpack.c.l.b16 %v4179
        %v4261 = vunpack.c.l.b16 %v4180
        %v4262 = vunpack.c.l.b16 %v4181
        %v4263 = vunpack.c.l.b16 %v4182
        %v4264 = vunpack.c.l.b16 %v4183
        %v4265 = vunpack.c.l.b16 %v4184
        %v4266 = vunpack.c.l.b16 %v4185
        %v4267 = vunpack.c.l.b16 %v4186
        %v4268 = vunpack.c.l.b16 %v4187
        %v4269 = vunpack.c.l.b16 %v4188
        %v4270 = vunpack.c.l.b16 %v4189
        %v4271 = vunpack.c.l.b16 %v4190
        %v4272 = vunpack.c.l.b16 %v4191
        %v4273 = vunpack.c.l.b16 %v4192
        %v4274 = vunpack.c.l.b16 %v4193
        %v4275 = vunpack.c.l.b16 %v4194
        %v4276 = vunpack.c.l.b16 %v4195
        %v4277 = vunpack.c.l.b16 %v4196
        %v4278 = vunpack.c.l.b16 %v4197
        %v4279 = vunpack.c.l.b16 %v4198
        %v4280 = vunpack.c.l.b16 %v4199
        %v4281 = vunpack.c.l.b16 %v4200
        %v4282 = vunpack.c.l.b16 %v4201
        %v4283 = vunpack.c.l.b16 %v4202
        %v4284 = vunpack.c.l.b16 %v4203
        %v4285 = vunpack.c.l.b16 %v4204
        %v4286 = vunpack.c.l.b16 %v4205
        %v4287 = vunpack.c.l.b16 %v4206
        %v4288 = vunpack.c.l.b16 %v4207
        %v4289 = vunpack.c.l.b16 %v4208
        %v4290 = vpack.c.b16 %v4259, %v4258
        %v4291 = vpack.c.b16 %v4261, %v4260
        %v4292 = vpack.c.b16 %v4263, %v4262
        %v4293 = vpack.c.b16 %v4265, %v4264
        %v4294 = vpack.c.b16 %v4267, %v4266
        %v4295 = vpack.c.b16 %v4269, %v4268
        %v4296 = vpack.c.b16 %v4271, %v4270
        %v4297 = vpack.c.b16 %v4273, %v4272
        %v4298 = vpack.c.b16 %v4275, %v4274
        %v4299 = vpack.c.b16 %v4277, %v4276
        %v4300 = vpack.c.b16 %v4279, %v4278
        %v4301 = vpack.c.b16 %v4281, %v4280
        %v4302 = vpack.c.b16 %v4283, %v4282
        %v4303 = vpack.c.b16 %v4285, %v4284
        %v4304 = vpack.c.b16 %v4287, %v4286
        %v4305 = vpack.c.b16 %v4289, %v4288
        %v4338 = vunpack.c.l.b16 %v4210
        %v4339 = vunpack.c.l.b16 %v4211
        %v4340 = vunpack.c.l.b16 %v4212
        %v4341 = vunpack.c.l.b16 %v4213
        %v4342 = vunpack.c.l.b16 %v4214
        %v4343 = vunpack.c.l.b16 %v4215
        %v4344 = vunpack.c.l.b16 %v4216
        %v4345 = vunpack.c.l.b16 %v4217
        %v4346 = vunpack.c.l.b16 %v4218
        %v4347 = vunpack.c.l.b16 %v4219
        %v4348 = vunpack.c.l.b16 %v4220
        %v4349 = vunpack.c.l.b16 %v4221
        %v4350 = vunpack.c.l.b16 %v4222
        %v4351 = vunpack.c.l.b16 %v4223
        %v4352 = vunpack.c.l.b16 %v4224
        %v4353 = vunpack.c.l.b16 %v4225
        %v4354 = vpack.c.b16 %v4339, %v4338
        %v4355 = vpack.c.b16 %v4341, %v4340
        %v4356 = vpack.c.b16 %v4343, %v4342
        %v4357 = vpack.c.b16 %v4345, %v4344
        %v4358 = vpack.c.b16 %v4347, %v4346
        %v4359 = vpack.c.b16 %v4349, %v4348
        %v4360 = vpack.c.b16 %v4351, %v4350
        %v4361 = vpack.c.b16 %v4353, %v4352
        %4370 = vmatpush.bf16.msra.mxu0 %v4361
        %4371 = vmatpush.bf16.msra.mxu0 %v4360
        %4372 = vmatpush.bf16.msra.mxu0 %v4359
        %4373 = vmatpush.bf16.msra.mxu0 %v4358
        %4374 = vmatpush.bf16.msra.mxu0 %v4357
        %4375 = vmatpush.bf16.msra.mxu0 %v4356
        %4376 = vmatpush.bf16.msra.mxu0 %v4355
        %4377 = vmatpush.bf16.msra.mxu0 %v4354
        %4378 = vmatmul.bf16.gmra.mxu0 %v4290
        %v4379 = vpop.f32.mrf.mxu0
        %v4380 = vadd.f32 0.0, %v4379
        %v4381 = vpop.f32.mrf.mxu0
        %v4382 = vadd.f32 0.0, %v4381
        %4383 = vmatmul.bf16.gmra.mxu0 %v4291
        %v4384 = vpop.f32.mrf.mxu0
        %v4385 = vadd.f32 0.0, %v4384
        %v4386 = vpop.f32.mrf.mxu0
        %v4387 = vadd.f32 0.0, %v4386
        %4388 = vmatmul.bf16.gmra.mxu0 %v4292
        %v4389 = vpop.f32.mrf.mxu0
        %v4390 = vadd.f32 0.0, %v4389
        %v4391 = vpop.f32.mrf.mxu0
        %v4392 = vadd.f32 0.0, %v4391
        %4393 = vmatmul.bf16.gmra.mxu0 %v4293
        %v4394 = vpop.f32.mrf.mxu0
        %v4395 = vadd.f32 0.0, %v4394
        %v4396 = vpop.f32.mrf.mxu0
        %v4397 = vadd.f32 0.0, %v4396
        %4398 = vmatmul.bf16.gmra.mxu0 %v4294
        %v4399 = vpop.f32.mrf.mxu0
        %v4400 = vadd.f32 0.0, %v4399
        %v4401 = vpop.f32.mrf.mxu0
        %v4402 = vadd.f32 0.0, %v4401
        %4403 = vmatmul.bf16.gmra.mxu0 %v4295
        %v4404 = vpop.f32.mrf.mxu0
        %v4405 = vadd.f32 0.0, %v4404
        %v4406 = vpop.f32.mrf.mxu0
        %v4407 = vadd.f32 0.0, %v4406
        %4408 = vmatmul.bf16.gmra.mxu0 %v4296
        %v4409 = vpop.f32.mrf.mxu0
        %v4410 = vadd.f32 0.0, %v4409
        %v4411 = vpop.f32.mrf.mxu0
        %v4412 = vadd.f32 0.0, %v4411
        %4413 = vmatmul.bf16.gmra.mxu0 %v4297
        %v4414 = vpop.f32.mrf.mxu0
        %v4415 = vadd.f32 0.0, %v4414
        %v4416 = vpop.f32.mrf.mxu0
        %v4417 = vadd.f32 0.0, %v4416
        %4418 = vmatmul.bf16.gmra.mxu0 %v4298
        %v4419 = vpop.f32.mrf.mxu0
        %v4420 = vadd.f32 0.0, %v4419
        %v4421 = vpop.f32.mrf.mxu0
        %v4422 = vadd.f32 0.0, %v4421
        %4423 = vmatmul.bf16.gmra.mxu0 %v4299
        %v4424 = vpop.f32.mrf.mxu0
        %v4425 = vadd.f32 0.0, %v4424
        %v4426 = vpop.f32.mrf.mxu0
        %v4427 = vadd.f32 0.0, %v4426
        %4428 = vmatmul.bf16.gmra.mxu0 %v4300
        %v4429 = vpop.f32.mrf.mxu0
        %v4430 = vadd.f32 0.0, %v4429
        %v4431 = vpop.f32.mrf.mxu0
        %v4432 = vadd.f32 0.0, %v4431
        %4433 = vmatmul.bf16.gmra.mxu0 %v4301
        %v4434 = vpop.f32.mrf.mxu0
        %v4435 = vadd.f32 0.0, %v4434
        %v4436 = vpop.f32.mrf.mxu0
        %v4437 = vadd.f32 0.0, %v4436
        %4438 = vmatmul.bf16.gmra.mxu0 %v4302
        %v4439 = vpop.f32.mrf.mxu0
        %v4440 = vadd.f32 0.0, %v4439
        %v4441 = vpop.f32.mrf.mxu0
        %v4442 = vadd.f32 0.0, %v4441
        %4443 = vmatmul.bf16.gmra.mxu0 %v4303
        %v4444 = vpop.f32.mrf.mxu0
        %v4445 = vadd.f32 0.0, %v4444
        %v4446 = vpop.f32.mrf.mxu0
        %v4447 = vadd.f32 0.0, %v4446
        %4448 = vmatmul.bf16.gmra.mxu0 %v4304
        %v4449 = vpop.f32.mrf.mxu0
        %v4450 = vadd.f32 0.0, %v4449
        %v4451 = vpop.f32.mrf.mxu0
        %v4452 = vadd.f32 0.0, %v4451
        %4453 = vmatmul.bf16.gmra.mxu0 %v4305
        %v4454 = vpop.f32.mrf.mxu0
        %v4455 = vadd.f32 0.0, %v4454
        %v4456 = vpop.f32.mrf.mxu0
        %v4457 = vadd.f32 0.0, %v4456
        %4458 = vdwg.mxu0
        %v4459 = vadd.f32 %v4145, %v4380
        %v4460 = vadd.f32 %v4146, %v4382
        %v4461 = vadd.f32 %v4147, %v4385
        %v4462 = vadd.f32 %v4148, %v4387
        %v4463 = vadd.f32 %v4149, %v4390
        %v4464 = vadd.f32 %v4150, %v4392
        %v4465 = vadd.f32 %v4151, %v4395
        %v4466 = vadd.f32 %v4152, %v4397
        %v4467 = vadd.f32 %v4153, %v4400
        %v4468 = vadd.f32 %v4154, %v4402
        %v4469 = vadd.f32 %v4155, %v4405
        %v4470 = vadd.f32 %v4156, %v4407
        %v4471 = vadd.f32 %v4157, %v4410
        %v4472 = vadd.f32 %v4158, %v4412
        %v4473 = vadd.f32 %v4159, %v4415
        %v4474 = vadd.f32 %v4160, %v4417
        %v4475 = vadd.f32 %v4161, %v4420
        %v4476 = vadd.f32 %v4162, %v4422
        %v4477 = vadd.f32 %v4163, %v4425
        %v4478 = vadd.f32 %v4164, %v4427
        %v4479 = vadd.f32 %v4165, %v4430
        %v4480 = vadd.f32 %v4166, %v4432
        %v4481 = vadd.f32 %v4167, %v4435
        %v4482 = vadd.f32 %v4168, %v4437
        %v4483 = vadd.f32 %v4169, %v4440
        %v4484 = vadd.f32 %v4170, %v4442
        %v4485 = vadd.f32 %v4171, %v4445
        %v4486 = vadd.f32 %v4172, %v4447
        %v4487 = vadd.f32 %v4173, %v4450
        %v4488 = vadd.f32 %v4174, %v4452
        %v4489 = vadd.f32 %v4175, %v4455
        %v4490 = vadd.f32 %v4176, %v4457
        %v4491 = vld [vmem:[%s2744] sm:$0xf]
        %v4492 = vld [vmem:[%s2744 + $0x4] sm:$0xf]
        %v4493 = vld [vmem:[%s2744 + $0x8] sm:$0x1]
        %v4494 = vld [vmem:[%s2744 + $0xc] sm:$0xf]
        %v4495 = vld [vmem:[%s2744 + $0x10] sm:$0xf]
        %v4496 = vld [vmem:[%s2744 + $0x14] sm:$0x1]
        %v4497 = vld [vmem:[%s2744 + $0x18] sm:$0xf]
        %v4498 = vld [vmem:[%s2744 + $0x1c] sm:$0xf]
        %v4499 = vld [vmem:[%s2744 + $0x20] sm:$0x1]
        %v4500 = vld [vmem:[%s2744 + $0x24] sm:$0xf]
        %v4501 = vld [vmem:[%s2744 + $0x28] sm:$0xf]
        %v4502 = vld [vmem:[%s2744 + $0x2c] sm:$0x1]
        %v4503 = vld [vmem:[%s2744 + $0x30] sm:$0xf]
        %v4504 = vld [vmem:[%s2744 + $0x34] sm:$0xf]
        %v4505 = vld [vmem:[%s2744 + $0x38] sm:$0x1]
        %v4506 = vld [vmem:[%s2744 + $0x3c] sm:$0xf]
        %v4507 = vld [vmem:[%s2744 + $0x40] sm:$0xf]
        %v4508 = vld [vmem:[%s2744 + $0x44] sm:$0x1]
        %v4509 = vld [vmem:[%s2744 + $0x48] sm:$0xf]
        %v4510 = vld [vmem:[%s2744 + $0x4c] sm:$0xf]
        %v4511 = vld [vmem:[%s2744 + $0x50] sm:$0x1]
        %v4512 = vld [vmem:[%s2744 + $0x54] sm:$0xf]
        %v4513 = vld [vmem:[%s2744 + $0x58] sm:$0xf]
        %v4514 = vld [vmem:[%s2744 + $0x5c] sm:$0x1]
        %v4515 = vld [vmem:[%s2744 + $0x60] sm:$0xf]
        %v4516 = vld [vmem:[%s2744 + $0x64] sm:$0xf]
        %v4517 = vld [vmem:[%s2744 + $0x68] sm:$0x1]
        %v4518 = vld [vmem:[%s2744 + $0x6c] sm:$0xf]
        %v4519 = vld [vmem:[%s2744 + $0x70] sm:$0xf]
        %v4520 = vld [vmem:[%s2744 + $0x74] sm:$0x1]
        %v4521 = vld [vmem:[%s2744 + $0x78] sm:$0xf]
        %v4522 = vld [vmem:[%s2744 + $0x7c] sm:$0xf]
        %v4523 = vld [vmem:[%s2744 + $0x80] sm:$0x1]
        %v4524 = vld [vmem:[%s2744 + $0x84] sm:$0xf]
        %v4525 = vld [vmem:[%s2744 + $0x88] sm:$0xf]
        %v4526 = vld [vmem:[%s2744 + $0x8c] sm:$0x1]
        %v4527 = vld [vmem:[%s2744 + $0x90] sm:$0xf]
        %v4528 = vld [vmem:[%s2744 + $0x94] sm:$0xf]
        %v4529 = vld [vmem:[%s2744 + $0x98] sm:$0x1]
        %v4530 = vld [vmem:[%s2744 + $0x9c] sm:$0xf]
        %v4531 = vld [vmem:[%s2744 + $0xa0] sm:$0xf]
        %v4532 = vld [vmem:[%s2744 + $0xa4] sm:$0x1]
        %v4533 = vld [vmem:[%s2744 + $0xa8] sm:$0xf]
        %v4534 = vld [vmem:[%s2744 + $0xac] sm:$0xf]
        %v4535 = vld [vmem:[%s2744 + $0xb0] sm:$0x1]
        %v4536 = vld [vmem:[%s2744 + $0xb4] sm:$0xf]
        %v4537 = vld [vmem:[%s2744 + $0xb8] sm:$0xf]
        %v4538 = vld [vmem:[%s2744 + $0xbc] sm:$0x1]
        %v4540 = vshrl.u32 %v4491, 16
        %v4542 = vrot.slane %v4540, 4
        %v4543 = vshll.u32 %v4491, 16
        %v4545 = vrot.slane %v4543, 5
        %v4546 = vor.u32 %v4542, %v4545
        %v4547 = vrot.slane %v4546, 4
        %v4549 = vshll.u32 %v4492, 16
        %v4551 = vrot.slane %v4549, 5
        %v4552 = vsel %vm2928, %v4547, %v4551
        %v4553 = vshrl.u32 %v4492, 16
        %v4555 = vrot.slane %v4553, 4
        %v4556 = vor.u32 %v4555, %v4551
        %v4557 = vrot.slane %v4556, 4
        %v4559 = vshll.u32 %v4493, 16
        %v4561 = vrot.slane %v4559, 5
        %v4562 = vsel %vm2928, %v4557, %v4561
        %v4564 = vshrl.u32 %v4494, 16
        %v4566 = vrot.slane %v4564, 4
        %v4567 = vshll.u32 %v4494, 16
        %v4569 = vrot.slane %v4567, 5
        %v4570 = vor.u32 %v4566, %v4569
        %v4571 = vrot.slane %v4570, 4
        %v4573 = vshll.u32 %v4495, 16
        %v4575 = vrot.slane %v4573, 5
        %v4576 = vsel %vm2928, %v4571, %v4575
        %v4577 = vshrl.u32 %v4495, 16
        %v4579 = vrot.slane %v4577, 4
        %v4580 = vor.u32 %v4579, %v4575
        %v4581 = vrot.slane %v4580, 4
        %v4583 = vshll.u32 %v4496, 16
        %v4585 = vrot.slane %v4583, 5
        %v4586 = vsel %vm2928, %v4581, %v4585
        %v4588 = vshrl.u32 %v4497, 16
        %v4590 = vrot.slane %v4588, 4
        %v4591 = vshll.u32 %v4497, 16
        %v4593 = vrot.slane %v4591, 5
        %v4594 = vor.u32 %v4590, %v4593
        %v4595 = vrot.slane %v4594, 4
        %v4597 = vshll.u32 %v4498, 16
        %v4599 = vrot.slane %v4597, 5
        %v4600 = vsel %vm2928, %v4595, %v4599
        %v4601 = vshrl.u32 %v4498, 16
        %v4603 = vrot.slane %v4601, 4
        %v4604 = vor.u32 %v4603, %v4599
        %v4605 = vrot.slane %v4604, 4
        %v4607 = vshll.u32 %v4499, 16
        %v4609 = vrot.slane %v4607, 5
        %v4610 = vsel %vm2928, %v4605, %v4609
        %v4612 = vshrl.u32 %v4500, 16
        %v4614 = vrot.slane %v4612, 4
        %v4615 = vshll.u32 %v4500, 16
        %v4617 = vrot.slane %v4615, 5
        %v4618 = vor.u32 %v4614, %v4617
        %v4619 = vrot.slane %v4618, 4
        %v4621 = vshll.u32 %v4501, 16
        %v4623 = vrot.slane %v4621, 5
        %v4624 = vsel %vm2928, %v4619, %v4623
        %v4625 = vshrl.u32 %v4501, 16
        %v4627 = vrot.slane %v4625, 4
        %v4628 = vor.u32 %v4627, %v4623
        %v4629 = vrot.slane %v4628, 4
        %v4631 = vshll.u32 %v4502, 16
        %v4633 = vrot.slane %v4631, 5
        %v4634 = vsel %vm2928, %v4629, %v4633
        %v4636 = vshrl.u32 %v4503, 16
        %v4638 = vrot.slane %v4636, 4
        %v4639 = vshll.u32 %v4503, 16
        %v4641 = vrot.slane %v4639, 5
        %v4642 = vor.u32 %v4638, %v4641
        %v4643 = vrot.slane %v4642, 4
        %v4645 = vshll.u32 %v4504, 16
        %v4647 = vrot.slane %v4645, 5
        %v4648 = vsel %vm2928, %v4643, %v4647
        %v4649 = vshrl.u32 %v4504, 16
        %v4651 = vrot.slane %v4649, 4
        %v4652 = vor.u32 %v4651, %v4647
        %v4653 = vrot.slane %v4652, 4
        %v4655 = vshll.u32 %v4505, 16
        %v4657 = vrot.slane %v4655, 5
        %v4658 = vsel %vm2928, %v4653, %v4657
        %v4660 = vshrl.u32 %v4506, 16
        %v4662 = vrot.slane %v4660, 4
        %v4663 = vshll.u32 %v4506, 16
        %v4665 = vrot.slane %v4663, 5
        %v4666 = vor.u32 %v4662, %v4665
        %v4667 = vrot.slane %v4666, 4
        %v4669 = vshll.u32 %v4507, 16
        %v4671 = vrot.slane %v4669, 5
        %v4672 = vsel %vm2928, %v4667, %v4671
        %v4673 = vshrl.u32 %v4507, 16
        %v4675 = vrot.slane %v4673, 4
        %v4676 = vor.u32 %v4675, %v4671
        %v4677 = vrot.slane %v4676, 4
        %v4679 = vshll.u32 %v4508, 16
        %v4681 = vrot.slane %v4679, 5
        %v4682 = vsel %vm2928, %v4677, %v4681
        %v4684 = vshrl.u32 %v4509, 16
        %v4686 = vrot.slane %v4684, 4
        %v4687 = vshll.u32 %v4509, 16
        %v4689 = vrot.slane %v4687, 5
        %v4690 = vor.u32 %v4686, %v4689
        %v4691 = vrot.slane %v4690, 4
        %v4693 = vshll.u32 %v4510, 16
        %v4695 = vrot.slane %v4693, 5
        %v4696 = vsel %vm2928, %v4691, %v4695
        %v4697 = vshrl.u32 %v4510, 16
        %v4699 = vrot.slane %v4697, 4
        %v4700 = vor.u32 %v4699, %v4695
        %v4701 = vrot.slane %v4700, 4
        %v4703 = vshll.u32 %v4511, 16
        %v4705 = vrot.slane %v4703, 5
        %v4706 = vsel %vm2928, %v4701, %v4705
        %v4708 = vshrl.u32 %v4512, 16
        %v4710 = vrot.slane %v4708, 4
        %v4711 = vshll.u32 %v4512, 16
        %v4713 = vrot.slane %v4711, 5
        %v4714 = vor.u32 %v4710, %v4713
        %v4715 = vrot.slane %v4714, 4
        %v4717 = vshll.u32 %v4513, 16
        %v4719 = vrot.slane %v4717, 5
        %v4720 = vsel %vm2928, %v4715, %v4719
        %v4721 = vshrl.u32 %v4513, 16
        %v4723 = vrot.slane %v4721, 4
        %v4724 = vor.u32 %v4723, %v4719
        %v4725 = vrot.slane %v4724, 4
        %v4727 = vshll.u32 %v4514, 16
        %v4729 = vrot.slane %v4727, 5
        %v4730 = vsel %vm2928, %v4725, %v4729
        %v4732 = vshrl.u32 %v4515, 16
        %v4734 = vrot.slane %v4732, 4
        %v4735 = vshll.u32 %v4515, 16
        %v4737 = vrot.slane %v4735, 5
        %v4738 = vor.u32 %v4734, %v4737
        %v4739 = vrot.slane %v4738, 4
        %v4741 = vshll.u32 %v4516, 16
        %v4743 = vrot.slane %v4741, 5
        %v4744 = vsel %vm2928, %v4739, %v4743
        %v4745 = vshrl.u32 %v4516, 16
        %v4747 = vrot.slane %v4745, 4
        %v4748 = vor.u32 %v4747, %v4743
        %v4749 = vrot.slane %v4748, 4
        %v4751 = vshll.u32 %v4517, 16
        %v4753 = vrot.slane %v4751, 5
        %v4754 = vsel %vm2928, %v4749, %v4753
        %v4756 = vshrl.u32 %v4518, 16
        %v4758 = vrot.slane %v4756, 4
        %v4759 = vshll.u32 %v4518, 16
        %v4761 = vrot.slane %v4759, 5
        %v4762 = vor.u32 %v4758, %v4761
        %v4763 = vrot.slane %v4762, 4
        %v4765 = vshll.u32 %v4519, 16
        %v4767 = vrot.slane %v4765, 5
        %v4768 = vsel %vm2928, %v4763, %v4767
        %v4769 = vshrl.u32 %v4519, 16
        %v4771 = vrot.slane %v4769, 4
        %v4772 = vor.u32 %v4771, %v4767
        %v4773 = vrot.slane %v4772, 4
        %v4775 = vshll.u32 %v4520, 16
        %v4777 = vrot.slane %v4775, 5
        %v4778 = vsel %vm2928, %v4773, %v4777
        %v4780 = vshrl.u32 %v4521, 16
        %v4782 = vrot.slane %v4780, 4
        %v4783 = vshll.u32 %v4521, 16
        %v4785 = vrot.slane %v4783, 5
        %v4786 = vor.u32 %v4782, %v4785
        %v4787 = vrot.slane %v4786, 4
        %v4789 = vshll.u32 %v4522, 16
        %v4791 = vrot.slane %v4789, 5
        %v4792 = vsel %vm2928, %v4787, %v4791
        %v4793 = vshrl.u32 %v4522, 16
        %v4795 = vrot.slane %v4793, 4
        %v4796 = vor.u32 %v4795, %v4791
        %v4797 = vrot.slane %v4796, 4
        %v4799 = vshll.u32 %v4523, 16
        %v4801 = vrot.slane %v4799, 5
        %v4802 = vsel %vm2928, %v4797, %v4801
        %v4804 = vshrl.u32 %v4524, 16
        %v4806 = vrot.slane %v4804, 4
        %v4807 = vshll.u32 %v4524, 16
        %v4809 = vrot.slane %v4807, 5
        %v4810 = vor.u32 %v4806, %v4809
        %v4811 = vrot.slane %v4810, 4
        %v4813 = vshll.u32 %v4525, 16
        %v4815 = vrot.slane %v4813, 5
        %v4816 = vsel %vm2928, %v4811, %v4815
        %v4817 = vshrl.u32 %v4525, 16
        %v4819 = vrot.slane %v4817, 4
        %v4820 = vor.u32 %v4819, %v4815
        %v4821 = vrot.slane %v4820, 4
        %v4823 = vshll.u32 %v4526, 16
        %v4825 = vrot.slane %v4823, 5
        %v4826 = vsel %vm2928, %v4821, %v4825
        %v4828 = vshrl.u32 %v4527, 16
        %v4830 = vrot.slane %v4828, 4
        %v4831 = vshll.u32 %v4527, 16
        %v4833 = vrot.slane %v4831, 5
        %v4834 = vor.u32 %v4830, %v4833
        %v4835 = vrot.slane %v4834, 4
        %v4837 = vshll.u32 %v4528, 16
        %v4839 = vrot.slane %v4837, 5
        %v4840 = vsel %vm2928, %v4835, %v4839
        %v4841 = vshrl.u32 %v4528, 16
        %v4843 = vrot.slane %v4841, 4
        %v4844 = vor.u32 %v4843, %v4839
        %v4845 = vrot.slane %v4844, 4
        %v4847 = vshll.u32 %v4529, 16
        %v4849 = vrot.slane %v4847, 5
        %v4850 = vsel %vm2928, %v4845, %v4849
        %v4852 = vshrl.u32 %v4530, 16
        %v4854 = vrot.slane %v4852, 4
        %v4855 = vshll.u32 %v4530, 16
        %v4857 = vrot.slane %v4855, 5
        %v4858 = vor.u32 %v4854, %v4857
        %v4859 = vrot.slane %v4858, 4
        %v4861 = vshll.u32 %v4531, 16
        %v4863 = vrot.slane %v4861, 5
        %v4864 = vsel %vm2928, %v4859, %v4863
        %v4865 = vshrl.u32 %v4531, 16
        %v4867 = vrot.slane %v4865, 4
        %v4868 = vor.u32 %v4867, %v4863
        %v4869 = vrot.slane %v4868, 4
        %v4871 = vshll.u32 %v4532, 16
        %v4873 = vrot.slane %v4871, 5
        %v4874 = vsel %vm2928, %v4869, %v4873
        %v4876 = vshrl.u32 %v4533, 16
        %v4878 = vrot.slane %v4876, 4
        %v4879 = vshll.u32 %v4533, 16
        %v4881 = vrot.slane %v4879, 5
        %v4882 = vor.u32 %v4878, %v4881
        %v4883 = vrot.slane %v4882, 4
        %v4885 = vshll.u32 %v4534, 16
        %v4887 = vrot.slane %v4885, 5
        %v4888 = vsel %vm2928, %v4883, %v4887
        %v4889 = vshrl.u32 %v4534, 16
        %v4891 = vrot.slane %v4889, 4
        %v4892 = vor.u32 %v4891, %v4887
        %v4893 = vrot.slane %v4892, 4
        %v4895 = vshll.u32 %v4535, 16
        %v4897 = vrot.slane %v4895, 5
        %v4898 = vsel %vm2928, %v4893, %v4897
        %v4900 = vshrl.u32 %v4536, 16
        %v4902 = vrot.slane %v4900, 4
        %v4903 = vshll.u32 %v4536, 16
        %v4905 = vrot.slane %v4903, 5
        %v4906 = vor.u32 %v4902, %v4905
        %v4907 = vrot.slane %v4906, 4
        %v4909 = vshll.u32 %v4537, 16
        %v4911 = vrot.slane %v4909, 5
        %v4912 = vsel %vm2928, %v4907, %v4911
        %v4913 = vshrl.u32 %v4537, 16
        %v4915 = vrot.slane %v4913, 4
        %v4916 = vor.u32 %v4915, %v4911
        %v4917 = vrot.slane %v4916, 4
        %v4919 = vshll.u32 %v4538, 16
        %v4921 = vrot.slane %v4919, 5
        %v4922 = vsel %vm2928, %v4917, %v4921
        %s4923 = scalar_lea.vmem %s3, 256
        %v4924 = vld [vmem:[%s4923] sm:$0xf]
        %v4925 = vld [vmem:[%s4923 + $0x4] sm:$0xf]
        %v4926 = vld [vmem:[%s4923 + $0x8] sm:$0xf]
        %v4927 = vld [vmem:[%s4923 + $0xc] sm:$0xf]
        %v4928 = vld [vmem:[%s4923 + $0x10] sm:$0xf]
        %v4929 = vld [vmem:[%s4923 + $0x14] sm:$0xf]
        %v4930 = vld [vmem:[%s4923 + $0x18] sm:$0xf]
        %v4931 = vld [vmem:[%s4923 + $0x1c] sm:$0xf]
        %v4932 = vld [vmem:[%s4923 + $0x20] sm:$0xf]
        %v4933 = vld [vmem:[%s4923 + $0x24] sm:$0xf]
        %v4934 = vld [vmem:[%s4923 + $0x28] sm:$0xf]
        %v4935 = vld [vmem:[%s4923 + $0x2c] sm:$0xf]
        %v4936 = vld [vmem:[%s4923 + $0x30] sm:$0xf]
        %v4937 = vld [vmem:[%s4923 + $0x34] sm:$0xf]
        %v4938 = vld [vmem:[%s4923 + $0x38] sm:$0xf]
        %v4939 = vld [vmem:[%s4923 + $0x3c] sm:$0xf]
        %v4940 = vunpack.c.l.b16 %v4552
        %v4941 = vunpack.c.l.b16 %v4562
        %v4942 = vunpack.c.l.b16 %v4576
        %v4943 = vunpack.c.l.b16 %v4586
        %v4944 = vunpack.c.l.b16 %v4600
        %v4945 = vunpack.c.l.b16 %v4610
        %v4946 = vunpack.c.l.b16 %v4624
        %v4947 = vunpack.c.l.b16 %v4634
        %v4948 = vunpack.c.l.b16 %v4648
        %v4949 = vunpack.c.l.b16 %v4658
        %v4950 = vunpack.c.l.b16 %v4672
        %v4951 = vunpack.c.l.b16 %v4682
        %v4952 = vunpack.c.l.b16 %v4696
        %v4953 = vunpack.c.l.b16 %v4706
        %v4954 = vunpack.c.l.b16 %v4720
        %v4955 = vunpack.c.l.b16 %v4730
        %v4956 = vunpack.c.l.b16 %v4744
        %v4957 = vunpack.c.l.b16 %v4754
        %v4958 = vunpack.c.l.b16 %v4768
        %v4959 = vunpack.c.l.b16 %v4778
        %v4960 = vunpack.c.l.b16 %v4792
        %v4961 = vunpack.c.l.b16 %v4802
        %v4962 = vunpack.c.l.b16 %v4816
        %v4963 = vunpack.c.l.b16 %v4826
        %v4964 = vunpack.c.l.b16 %v4840
        %v4965 = vunpack.c.l.b16 %v4850
        %v4966 = vunpack.c.l.b16 %v4864
        %v4967 = vunpack.c.l.b16 %v4874
        %v4968 = vunpack.c.l.b16 %v4888
        %v4969 = vunpack.c.l.b16 %v4898
        %v4970 = vunpack.c.l.b16 %v4912
        %v4971 = vunpack.c.l.b16 %v4922
        %v4972 = vpack.c.b16 %v4941, %v4940
        %v4973 = vpack.c.b16 %v4943, %v4942
        %v4974 = vpack.c.b16 %v4945, %v4944
        %v4975 = vpack.c.b16 %v4947, %v4946
        %v4976 = vpack.c.b16 %v4949, %v4948
        %v4977 = vpack.c.b16 %v4951, %v4950
        %v4978 = vpack.c.b16 %v4953, %v4952
        %v4979 = vpack.c.b16 %v4955, %v4954
        %v4980 = vpack.c.b16 %v4957, %v4956
        %v4981 = vpack.c.b16 %v4959, %v4958
        %v4982 = vpack.c.b16 %v4961, %v4960
        %v4983 = vpack.c.b16 %v4963, %v4962
        %v4984 = vpack.c.b16 %v4965, %v4964
        %v4985 = vpack.c.b16 %v4967, %v4966
        %v4986 = vpack.c.b16 %v4969, %v4968
        %v4987 = vpack.c.b16 %v4971, %v4970
        %v5020 = vunpack.c.l.b16 %v4924
        %v5021 = vunpack.c.l.b16 %v4925
        %v5022 = vunpack.c.l.b16 %v4926
        %v5023 = vunpack.c.l.b16 %v4927
        %v5024 = vunpack.c.l.b16 %v4928
        %v5025 = vunpack.c.l.b16 %v4929
        %v5026 = vunpack.c.l.b16 %v4930
        %v5027 = vunpack.c.l.b16 %v4931
        %v5028 = vunpack.c.l.b16 %v4932
        %v5029 = vunpack.c.l.b16 %v4933
        %v5030 = vunpack.c.l.b16 %v4934
        %v5031 = vunpack.c.l.b16 %v4935
        %v5032 = vunpack.c.l.b16 %v4936
        %v5033 = vunpack.c.l.b16 %v4937
        %v5034 = vunpack.c.l.b16 %v4938
        %v5035 = vunpack.c.l.b16 %v4939
        %v5036 = vpack.c.b16 %v5021, %v5020
        %v5037 = vpack.c.b16 %v5023, %v5022
        %v5038 = vpack.c.b16 %v5025, %v5024
        %v5039 = vpack.c.b16 %v5027, %v5026
        %v5040 = vpack.c.b16 %v5029, %v5028
        %v5041 = vpack.c.b16 %v5031, %v5030
        %v5042 = vpack.c.b16 %v5033, %v5032
        %v5043 = vpack.c.b16 %v5035, %v5034
        %5052 = vmatpush.bf16.msra.mxu0 %v5043
        %5053 = vmatpush.bf16.msra.mxu0 %v5042
        %5054 = vmatpush.bf16.msra.mxu0 %v5041
        %5055 = vmatpush.bf16.msra.mxu0 %v5040
        %5056 = vmatpush.bf16.msra.mxu0 %v5039
        %5057 = vmatpush.bf16.msra.mxu0 %v5038
        %5058 = vmatpush.bf16.msra.mxu0 %v5037
        %5059 = vmatpush.bf16.msra.mxu0 %v5036
        %5060 = vmatmul.bf16.gmra.mxu0 %v4972
        %v5061 = vpop.f32.mrf.mxu0
        %v5062 = vadd.f32 0.0, %v5061
        %v5063 = vpop.f32.mrf.mxu0
        %v5064 = vadd.f32 0.0, %v5063
        %5065 = vmatmul.bf16.gmra.mxu0 %v4973
        %v5066 = vpop.f32.mrf.mxu0
        %v5067 = vadd.f32 0.0, %v5066
        %v5068 = vpop.f32.mrf.mxu0
        %v5069 = vadd.f32 0.0, %v5068
        %5070 = vmatmul.bf16.gmra.mxu0 %v4974
        %v5071 = vpop.f32.mrf.mxu0
        %v5072 = vadd.f32 0.0, %v5071
        %v5073 = vpop.f32.mrf.mxu0
        %v5074 = vadd.f32 0.0, %v5073
        %5075 = vmatmul.bf16.gmra.mxu0 %v4975
        %v5076 = vpop.f32.mrf.mxu0
        %v5077 = vadd.f32 0.0, %v5076
        %v5078 = vpop.f32.mrf.mxu0
        %v5079 = vadd.f32 0.0, %v5078
        %5080 = vmatmul.bf16.gmra.mxu0 %v4976
        %v5081 = vpop.f32.mrf.mxu0
        %v5082 = vadd.f32 0.0, %v5081
        %v5083 = vpop.f32.mrf.mxu0
        %v5084 = vadd.f32 0.0, %v5083
        %5085 = vmatmul.bf16.gmra.mxu0 %v4977
        %v5086 = vpop.f32.mrf.mxu0
        %v5087 = vadd.f32 0.0, %v5086
        %v5088 = vpop.f32.mrf.mxu0
        %v5089 = vadd.f32 0.0, %v5088
        %5090 = vmatmul.bf16.gmra.mxu0 %v4978
        %v5091 = vpop.f32.mrf.mxu0
        %v5092 = vadd.f32 0.0, %v5091
        %v5093 = vpop.f32.mrf.mxu0
        %v5094 = vadd.f32 0.0, %v5093
        %5095 = vmatmul.bf16.gmra.mxu0 %v4979
        %v5096 = vpop.f32.mrf.mxu0
        %v5097 = vadd.f32 0.0, %v5096
        %v5098 = vpop.f32.mrf.mxu0
        %v5099 = vadd.f32 0.0, %v5098
        %5100 = vmatmul.bf16.gmra.mxu0 %v4980
        %v5101 = vpop.f32.mrf.mxu0
        %v5102 = vadd.f32 0.0, %v5101
        %v5103 = vpop.f32.mrf.mxu0
        %v5104 = vadd.f32 0.0, %v5103
        %5105 = vmatmul.bf16.gmra.mxu0 %v4981
        %v5106 = vpop.f32.mrf.mxu0
        %v5107 = vadd.f32 0.0, %v5106
        %v5108 = vpop.f32.mrf.mxu0
        %v5109 = vadd.f32 0.0, %v5108
        %5110 = vmatmul.bf16.gmra.mxu0 %v4982
        %v5111 = vpop.f32.mrf.mxu0
        %v5112 = vadd.f32 0.0, %v5111
        %v5113 = vpop.f32.mrf.mxu0
        %v5114 = vadd.f32 0.0, %v5113
        %5115 = vmatmul.bf16.gmra.mxu0 %v4983
        %v5116 = vpop.f32.mrf.mxu0
        %v5117 = vadd.f32 0.0, %v5116
        %v5118 = vpop.f32.mrf.mxu0
        %v5119 = vadd.f32 0.0, %v5118
        %5120 = vmatmul.bf16.gmra.mxu0 %v4984
        %v5121 = vpop.f32.mrf.mxu0
        %v5122 = vadd.f32 0.0, %v5121
        %v5123 = vpop.f32.mrf.mxu0
        %v5124 = vadd.f32 0.0, %v5123
        %5125 = vmatmul.bf16.gmra.mxu0 %v4985
        %v5126 = vpop.f32.mrf.mxu0
        %v5127 = vadd.f32 0.0, %v5126
        %v5128 = vpop.f32.mrf.mxu0
        %v5129 = vadd.f32 0.0, %v5128
        %5130 = vmatmul.bf16.gmra.mxu0 %v4986
        %v5131 = vpop.f32.mrf.mxu0
        %v5132 = vadd.f32 0.0, %v5131
        %v5133 = vpop.f32.mrf.mxu0
        %v5134 = vadd.f32 0.0, %v5133
        %5135 = vmatmul.bf16.gmra.mxu0 %v4987
        %v5136 = vpop.f32.mrf.mxu0
        %v5137 = vadd.f32 0.0, %v5136
        %v5138 = vpop.f32.mrf.mxu0
        %v5139 = vadd.f32 0.0, %v5138
        %5140 = vdwg.mxu0
        %v5141 = vadd.f32 %v4459, %v5062
        %v5142 = vadd.f32 %v4460, %v5064
        %v5143 = vadd.f32 %v4461, %v5067
        %v5144 = vadd.f32 %v4462, %v5069
        %v5145 = vadd.f32 %v4463, %v5072
        %v5146 = vadd.f32 %v4464, %v5074
        %v5147 = vadd.f32 %v4465, %v5077
        %v5148 = vadd.f32 %v4466, %v5079
        %v5149 = vadd.f32 %v4467, %v5082
        %v5150 = vadd.f32 %v4468, %v5084
        %v5151 = vadd.f32 %v4469, %v5087
        %v5152 = vadd.f32 %v4470, %v5089
        %v5153 = vadd.f32 %v4471, %v5092
        %v5154 = vadd.f32 %v4472, %v5094
        %v5155 = vadd.f32 %v4473, %v5097
        %v5156 = vadd.f32 %v4474, %v5099
        %v5157 = vadd.f32 %v4475, %v5102
        %v5158 = vadd.f32 %v4476, %v5104
        %v5159 = vadd.f32 %v4477, %v5107
        %v5160 = vadd.f32 %v4478, %v5109
        %v5161 = vadd.f32 %v4479, %v5112
        %v5162 = vadd.f32 %v4480, %v5114
        %v5163 = vadd.f32 %v4481, %v5117
        %v5164 = vadd.f32 %v4482, %v5119
        %v5165 = vadd.f32 %v4483, %v5122
        %v5166 = vadd.f32 %v4484, %v5124
        %v5167 = vadd.f32 %v4485, %v5127
        %v5168 = vadd.f32 %v4486, %v5129
        %v5169 = vadd.f32 %v4487, %v5132
        %v5170 = vadd.f32 %v4488, %v5134
        %v5171 = vadd.f32 %v4489, %v5137
        %v5172 = vadd.f32 %v4490, %v5139
        %v5173 = vld [vmem:[%s2744] sm:$0xe]
        %v5174 = vld [vmem:[%s2744 + $0xc] sm:$0xe]
        %v5175 = vld [vmem:[%s2744 + $0x18] sm:$0xe]
        %v5176 = vld [vmem:[%s2744 + $0x24] sm:$0xe]
        %v5177 = vld [vmem:[%s2744 + $0x30] sm:$0xe]
        %v5178 = vld [vmem:[%s2744 + $0x3c] sm:$0xe]
        %v5179 = vld [vmem:[%s2744 + $0x48] sm:$0xe]
        %v5180 = vld [vmem:[%s2744 + $0x54] sm:$0xe]
        %v5181 = vld [vmem:[%s2744 + $0x60] sm:$0xe]
        %v5182 = vld [vmem:[%s2744 + $0x6c] sm:$0xe]
        %v5183 = vld [vmem:[%s2744 + $0x78] sm:$0xe]
        %v5184 = vld [vmem:[%s2744 + $0x84] sm:$0xe]
        %v5185 = vld [vmem:[%s2744 + $0x90] sm:$0xe]
        %v5186 = vld [vmem:[%s2744 + $0x9c] sm:$0xe]
        %v5187 = vld [vmem:[%s2744 + $0xa8] sm:$0xe]
        %v5188 = vld [vmem:[%s2744 + $0xb4] sm:$0xe]
        %v5237 = vrot.slane %v5173, 5
        %v5238 = vrot.slane %v5237, 4
        %v5239 = vrot.slane %v4492, 5
        %v5240 = vsel %vm3814, %v5238, %v5239
        %v5241 = vrot.slane %v5239, 4
        %v5242 = vrot.slane %v4493, 5
        %v5243 = vsel %vm3814, %v5241, %v5242
        %v5244 = vrot.slane %v5174, 5
        %v5245 = vrot.slane %v5244, 4
        %v5246 = vrot.slane %v4495, 5
        %v5247 = vsel %vm3814, %v5245, %v5246
        %v5248 = vrot.slane %v5246, 4
        %v5249 = vrot.slane %v4496, 5
        %v5250 = vsel %vm3814, %v5248, %v5249
        %v5251 = vrot.slane %v5175, 5
        %v5252 = vrot.slane %v5251, 4
        %v5253 = vrot.slane %v4498, 5
        %v5254 = vsel %vm3814, %v5252, %v5253
        %v5255 = vrot.slane %v5253, 4
        %v5256 = vrot.slane %v4499, 5
        %v5257 = vsel %vm3814, %v5255, %v5256
        %v5258 = vrot.slane %v5176, 5
        %v5259 = vrot.slane %v5258, 4
        %v5260 = vrot.slane %v4501, 5
        %v5261 = vsel %vm3814, %v5259, %v5260
        %v5262 = vrot.slane %v5260, 4
        %v5263 = vrot.slane %v4502, 5
        %v5264 = vsel %vm3814, %v5262, %v5263
        %v5265 = vrot.slane %v5177, 5
        %v5266 = vrot.slane %v5265, 4
        %v5267 = vrot.slane %v4504, 5
        %v5268 = vsel %vm3814, %v5266, %v5267
        %v5269 = vrot.slane %v5267, 4
        %v5270 = vrot.slane %v4505, 5
        %v5271 = vsel %vm3814, %v5269, %v5270
        %v5272 = vrot.slane %v5178, 5
        %v5273 = vrot.slane %v5272, 4
        %v5274 = vrot.slane %v4507, 5
        %v5275 = vsel %vm3814, %v5273, %v5274
        %v5276 = vrot.slane %v5274, 4
        %v5277 = vrot.slane %v4508, 5
        %v5278 = vsel %vm3814, %v5276, %v5277
        %v5279 = vrot.slane %v5179, 5
        %v5280 = vrot.slane %v5279, 4
        %v5281 = vrot.slane %v4510, 5
        %v5282 = vsel %vm3814, %v5280, %v5281
        %v5283 = vrot.slane %v5281, 4
        %v5284 = vrot.slane %v4511, 5
        %v5285 = vsel %vm3814, %v5283, %v5284
        %v5286 = vrot.slane %v5180, 5
        %v5287 = vrot.slane %v5286, 4
        %v5288 = vrot.slane %v4513, 5
        %v5289 = vsel %vm3814, %v5287, %v5288
        %v5290 = vrot.slane %v5288, 4
        %v5291 = vrot.slane %v4514, 5
        %v5292 = vsel %vm3814, %v5290, %v5291
        %v5293 = vrot.slane %v5181, 5
        %v5294 = vrot.slane %v5293, 4
        %v5295 = vrot.slane %v4516, 5
        %v5296 = vsel %vm3814, %v5294, %v5295
        %v5297 = vrot.slane %v5295, 4
        %v5298 = vrot.slane %v4517, 5
        %v5299 = vsel %vm3814, %v5297, %v5298
        %v5300 = vrot.slane %v5182, 5
        %v5301 = vrot.slane %v5300, 4
        %v5302 = vrot.slane %v4519, 5
        %v5303 = vsel %vm3814, %v5301, %v5302
        %v5304 = vrot.slane %v5302, 4
        %v5305 = vrot.slane %v4520, 5
        %v5306 = vsel %vm3814, %v5304, %v5305
        %v5307 = vrot.slane %v5183, 5
        %v5308 = vrot.slane %v5307, 4
        %v5309 = vrot.slane %v4522, 5
        %v5310 = vsel %vm3814, %v5308, %v5309
        %v5311 = vrot.slane %v5309, 4
        %v5312 = vrot.slane %v4523, 5
        %v5313 = vsel %vm3814, %v5311, %v5312
        %v5314 = vrot.slane %v5184, 5
        %v5315 = vrot.slane %v5314, 4
        %v5316 = vrot.slane %v4525, 5
        %v5317 = vsel %vm3814, %v5315, %v5316
        %v5318 = vrot.slane %v5316, 4
        %v5319 = vrot.slane %v4526, 5
        %v5320 = vsel %vm3814, %v5318, %v5319
        %v5321 = vrot.slane %v5185, 5
        %v5322 = vrot.slane %v5321, 4
        %v5323 = vrot.slane %v4528, 5
        %v5324 = vsel %vm3814, %v5322, %v5323
        %v5325 = vrot.slane %v5323, 4
        %v5326 = vrot.slane %v4529, 5
        %v5327 = vsel %vm3814, %v5325, %v5326
        %v5328 = vrot.slane %v5186, 5
        %v5329 = vrot.slane %v5328, 4
        %v5330 = vrot.slane %v4531, 5
        %v5331 = vsel %vm3814, %v5329, %v5330
        %v5332 = vrot.slane %v5330, 4
        %v5333 = vrot.slane %v4532, 5
        %v5334 = vsel %vm3814, %v5332, %v5333
        %v5335 = vrot.slane %v5187, 5
        %v5336 = vrot.slane %v5335, 4
        %v5337 = vrot.slane %v4534, 5
        %v5338 = vsel %vm3814, %v5336, %v5337
        %v5339 = vrot.slane %v5337, 4
        %v5340 = vrot.slane %v4535, 5
        %v5341 = vsel %vm3814, %v5339, %v5340
        %v5342 = vrot.slane %v5188, 5
        %v5343 = vrot.slane %v5342, 4
        %v5344 = vrot.slane %v4537, 5
        %v5345 = vsel %vm3814, %v5343, %v5344
        %v5346 = vrot.slane %v5344, 4
        %v5347 = vrot.slane %v4538, 5
        %v5348 = vsel %vm3814, %v5346, %v5347
        %s5349 = scalar_lea.vmem %s3, 320
        %v5350 = vld [vmem:[%s5349] sm:$0xf]
        %v5351 = vld [vmem:[%s5349 + $0x4] sm:$0xf]
        %v5352 = vld [vmem:[%s5349 + $0x8] sm:$0xf]
        %v5353 = vld [vmem:[%s5349 + $0xc] sm:$0xf]
        %v5354 = vld [vmem:[%s5349 + $0x10] sm:$0xf]
        %v5355 = vld [vmem:[%s5349 + $0x14] sm:$0xf]
        %v5356 = vld [vmem:[%s5349 + $0x18] sm:$0xf]
        %v5357 = vld [vmem:[%s5349 + $0x1c] sm:$0xf]
        %v5358 = vld [vmem:[%s5349 + $0x20] sm:$0xf]
        %v5359 = vld [vmem:[%s5349 + $0x24] sm:$0xf]
        %v5360 = vld [vmem:[%s5349 + $0x28] sm:$0xf]
        %v5361 = vld [vmem:[%s5349 + $0x2c] sm:$0xf]
        %v5362 = vld [vmem:[%s5349 + $0x30] sm:$0xf]
        %v5363 = vld [vmem:[%s5349 + $0x34] sm:$0xf]
        %v5364 = vld [vmem:[%s5349 + $0x38] sm:$0xf]
        %v5365 = vld [vmem:[%s5349 + $0x3c] sm:$0xf]
        %v5366 = vunpack.c.l.b16 %v5240
        %v5367 = vunpack.c.l.b16 %v5243
        %v5368 = vunpack.c.l.b16 %v5247
        %v5369 = vunpack.c.l.b16 %v5250
        %v5370 = vunpack.c.l.b16 %v5254
        %v5371 = vunpack.c.l.b16 %v5257
        %v5372 = vunpack.c.l.b16 %v5261
        %v5373 = vunpack.c.l.b16 %v5264
        %v5374 = vunpack.c.l.b16 %v5268
        %v5375 = vunpack.c.l.b16 %v5271
        %v5376 = vunpack.c.l.b16 %v5275
        %v5377 = vunpack.c.l.b16 %v5278
        %v5378 = vunpack.c.l.b16 %v5282
        %v5379 = vunpack.c.l.b16 %v5285
        %v5380 = vunpack.c.l.b16 %v5289
        %v5381 = vunpack.c.l.b16 %v5292
        %v5382 = vunpack.c.l.b16 %v5296
        %v5383 = vunpack.c.l.b16 %v5299
        %v5384 = vunpack.c.l.b16 %v5303
        %v5385 = vunpack.c.l.b16 %v5306
        %v5386 = vunpack.c.l.b16 %v5310
        %v5387 = vunpack.c.l.b16 %v5313
        %v5388 = vunpack.c.l.b16 %v5317
        %v5389 = vunpack.c.l.b16 %v5320
        %v5390 = vunpack.c.l.b16 %v5324
        %v5391 = vunpack.c.l.b16 %v5327
        %v5392 = vunpack.c.l.b16 %v5331
        %v5393 = vunpack.c.l.b16 %v5334
        %v5394 = vunpack.c.l.b16 %v5338
        %v5395 = vunpack.c.l.b16 %v5341
        %v5396 = vunpack.c.l.b16 %v5345
        %v5397 = vunpack.c.l.b16 %v5348
        %v5398 = vpack.c.b16 %v5367, %v5366
        %v5399 = vpack.c.b16 %v5369, %v5368
        %v5400 = vpack.c.b16 %v5371, %v5370
        %v5401 = vpack.c.b16 %v5373, %v5372
        %v5402 = vpack.c.b16 %v5375, %v5374
        %v5403 = vpack.c.b16 %v5377, %v5376
        %v5404 = vpack.c.b16 %v5379, %v5378
        %v5405 = vpack.c.b16 %v5381, %v5380
        %v5406 = vpack.c.b16 %v5383, %v5382
        %v5407 = vpack.c.b16 %v5385, %v5384
        %v5408 = vpack.c.b16 %v5387, %v5386
        %v5409 = vpack.c.b16 %v5389, %v5388
        %v5410 = vpack.c.b16 %v5391, %v5390
        %v5411 = vpack.c.b16 %v5393, %v5392
        %v5412 = vpack.c.b16 %v5395, %v5394
        %v5413 = vpack.c.b16 %v5397, %v5396
        %v5446 = vunpack.c.l.b16 %v5350
        %v5447 = vunpack.c.l.b16 %v5351
        %v5448 = vunpack.c.l.b16 %v5352
        %v5449 = vunpack.c.l.b16 %v5353
        %v5450 = vunpack.c.l.b16 %v5354
        %v5451 = vunpack.c.l.b16 %v5355
        %v5452 = vunpack.c.l.b16 %v5356
        %v5453 = vunpack.c.l.b16 %v5357
        %v5454 = vunpack.c.l.b16 %v5358
        %v5455 = vunpack.c.l.b16 %v5359
        %v5456 = vunpack.c.l.b16 %v5360
        %v5457 = vunpack.c.l.b16 %v5361
        %v5458 = vunpack.c.l.b16 %v5362
        %v5459 = vunpack.c.l.b16 %v5363
        %v5460 = vunpack.c.l.b16 %v5364
        %v5461 = vunpack.c.l.b16 %v5365
        %v5462 = vpack.c.b16 %v5447, %v5446
        %v5463 = vpack.c.b16 %v5449, %v5448
        %v5464 = vpack.c.b16 %v5451, %v5450
        %v5465 = vpack.c.b16 %v5453, %v5452
        %v5466 = vpack.c.b16 %v5455, %v5454
        %v5467 = vpack.c.b16 %v5457, %v5456
        %v5468 = vpack.c.b16 %v5459, %v5458
        %v5469 = vpack.c.b16 %v5461, %v5460
        %5478 = vmatpush.bf16.msra.mxu0 %v5469
        %5479 = vmatpush.bf16.msra.mxu0 %v5468
        %5480 = vmatpush.bf16.msra.mxu0 %v5467
        %5481 = vmatpush.bf16.msra.mxu0 %v5466
        %5482 = vmatpush.bf16.msra.mxu0 %v5465
        %5483 = vmatpush.bf16.msra.mxu0 %v5464
        %5484 = vmatpush.bf16.msra.mxu0 %v5463
        %5485 = vmatpush.bf16.msra.mxu0 %v5462
        %5486 = vmatmul.bf16.gmra.mxu0 %v5398
        %v5487 = vpop.f32.mrf.mxu0
        %v5488 = vadd.f32 0.0, %v5487
        %v5489 = vpop.f32.mrf.mxu0
        %v5490 = vadd.f32 0.0, %v5489
        %5491 = vmatmul.bf16.gmra.mxu0 %v5399
        %v5492 = vpop.f32.mrf.mxu0
        %v5493 = vadd.f32 0.0, %v5492
        %v5494 = vpop.f32.mrf.mxu0
        %v5495 = vadd.f32 0.0, %v5494
        %5496 = vmatmul.bf16.gmra.mxu0 %v5400
        %v5497 = vpop.f32.mrf.mxu0
        %v5498 = vadd.f32 0.0, %v5497
        %v5499 = vpop.f32.mrf.mxu0
        %v5500 = vadd.f32 0.0, %v5499
        %5501 = vmatmul.bf16.gmra.mxu0 %v5401
        %v5502 = vpop.f32.mrf.mxu0
        %v5503 = vadd.f32 0.0, %v5502
        %v5504 = vpop.f32.mrf.mxu0
        %v5505 = vadd.f32 0.0, %v5504
        %5506 = vmatmul.bf16.gmra.mxu0 %v5402
        %v5507 = vpop.f32.mrf.mxu0
        %v5508 = vadd.f32 0.0, %v5507
        %v5509 = vpop.f32.mrf.mxu0
        %v5510 = vadd.f32 0.0, %v5509
        %5511 = vmatmul.bf16.gmra.mxu0 %v5403
        %v5512 = vpop.f32.mrf.mxu0
        %v5513 = vadd.f32 0.0, %v5512
        %v5514 = vpop.f32.mrf.mxu0
        %v5515 = vadd.f32 0.0, %v5514
        %5516 = vmatmul.bf16.gmra.mxu0 %v5404
        %v5517 = vpop.f32.mrf.mxu0
        %v5518 = vadd.f32 0.0, %v5517
        %v5519 = vpop.f32.mrf.mxu0
        %v5520 = vadd.f32 0.0, %v5519
        %5521 = vmatmul.bf16.gmra.mxu0 %v5405
        %v5522 = vpop.f32.mrf.mxu0
        %v5523 = vadd.f32 0.0, %v5522
        %v5524 = vpop.f32.mrf.mxu0
        %v5525 = vadd.f32 0.0, %v5524
        %5526 = vmatmul.bf16.gmra.mxu0 %v5406
        %v5527 = vpop.f32.mrf.mxu0
        %v5528 = vadd.f32 0.0, %v5527
        %v5529 = vpop.f32.mrf.mxu0
        %v5530 = vadd.f32 0.0, %v5529
        %5531 = vmatmul.bf16.gmra.mxu0 %v5407
        %v5532 = vpop.f32.mrf.mxu0
        %v5533 = vadd.f32 0.0, %v5532
        %v5534 = vpop.f32.mrf.mxu0
        %v5535 = vadd.f32 0.0, %v5534
        %5536 = vmatmul.bf16.gmra.mxu0 %v5408
        %v5537 = vpop.f32.mrf.mxu0
        %v5538 = vadd.f32 0.0, %v5537
        %v5539 = vpop.f32.mrf.mxu0
        %v5540 = vadd.f32 0.0, %v5539
        %5541 = vmatmul.bf16.gmra.mxu0 %v5409
        %v5542 = vpop.f32.mrf.mxu0
        %v5543 = vadd.f32 0.0, %v5542
        %v5544 = vpop.f32.mrf.mxu0
        %v5545 = vadd.f32 0.0, %v5544
        %5546 = vmatmul.bf16.gmra.mxu0 %v5410
        %v5547 = vpop.f32.mrf.mxu0
        %v5548 = vadd.f32 0.0, %v5547
        %v5549 = vpop.f32.mrf.mxu0
        %v5550 = vadd.f32 0.0, %v5549
        %5551 = vmatmul.bf16.gmra.mxu0 %v5411
        %v5552 = vpop.f32.mrf.mxu0
        %v5553 = vadd.f32 0.0, %v5552
        %v5554 = vpop.f32.mrf.mxu0
        %v5555 = vadd.f32 0.0, %v5554
        %5556 = vmatmul.bf16.gmra.mxu0 %v5412
        %v5557 = vpop.f32.mrf.mxu0
        %v5558 = vadd.f32 0.0, %v5557
        %v5559 = vpop.f32.mrf.mxu0
        %v5560 = vadd.f32 0.0, %v5559
        %5561 = vmatmul.bf16.gmra.mxu0 %v5413
        %v5562 = vpop.f32.mrf.mxu0
        %v5563 = vadd.f32 0.0, %v5562
        %v5564 = vpop.f32.mrf.mxu0
        %v5565 = vadd.f32 0.0, %v5564
        %5566 = vdwg.mxu0
        %v5567 = vadd.f32 %v5141, %v5488
        %v5568 = vadd.f32 %v5142, %v5490
        %v5569 = vadd.f32 %v5143, %v5493
        %v5570 = vadd.f32 %v5144, %v5495
        %v5571 = vadd.f32 %v5145, %v5498
        %v5572 = vadd.f32 %v5146, %v5500
        %v5573 = vadd.f32 %v5147, %v5503
        %v5574 = vadd.f32 %v5148, %v5505
        %v5575 = vadd.f32 %v5149, %v5508
        %v5576 = vadd.f32 %v5150, %v5510
        %v5577 = vadd.f32 %v5151, %v5513
        %v5578 = vadd.f32 %v5152, %v5515
        %v5579 = vadd.f32 %v5153, %v5518
        %v5580 = vadd.f32 %v5154, %v5520
        %v5581 = vadd.f32 %v5155, %v5523
        %v5582 = vadd.f32 %v5156, %v5525
        %v5583 = vadd.f32 %v5157, %v5528
        %v5584 = vadd.f32 %v5158, %v5530
        %v5585 = vadd.f32 %v5159, %v5533
        %v5586 = vadd.f32 %v5160, %v5535
        %v5587 = vadd.f32 %v5161, %v5538
        %v5588 = vadd.f32 %v5162, %v5540
        %v5589 = vadd.f32 %v5163, %v5543
        %v5590 = vadd.f32 %v5164, %v5545
        %v5591 = vadd.f32 %v5165, %v5548
        %v5592 = vadd.f32 %v5166, %v5550
        %v5593 = vadd.f32 %v5167, %v5553
        %v5594 = vadd.f32 %v5168, %v5555
        %v5595 = vadd.f32 %v5169, %v5558
        %v5596 = vadd.f32 %v5170, %v5560
        %v5597 = vadd.f32 %v5171, %v5563
        %v5598 = vadd.f32 %v5172, %v5565
        %s5599 = scalar_lea.vmem [#allocation2], 24
        %v5600 = vld [vmem:[%s5599] sm:$0xf]
        %v5601 = vld [vmem:[%s5599 + $0x4] sm:$0xf]
        %v5602 = vld [vmem:[%s5599 + $0xc] sm:$0xf]
        %v5603 = vld [vmem:[%s5599 + $0x10] sm:$0xf]
        %v5604 = vld [vmem:[%s5599 + $0x18] sm:$0xf]
        %v5605 = vld [vmem:[%s5599 + $0x1c] sm:$0xf]
        %v5606 = vld [vmem:[%s5599 + $0x24] sm:$0xf]
        %v5607 = vld [vmem:[%s5599 + $0x28] sm:$0xf]
        %v5608 = vld [vmem:[%s5599 + $0x30] sm:$0xf]
        %v5609 = vld [vmem:[%s5599 + $0x34] sm:$0xf]
        %v5610 = vld [vmem:[%s5599 + $0x3c] sm:$0xf]
        %v5611 = vld [vmem:[%s5599 + $0x40] sm:$0xf]
        %v5612 = vld [vmem:[%s5599 + $0x48] sm:$0xf]
        %v5613 = vld [vmem:[%s5599 + $0x4c] sm:$0xf]
        %v5614 = vld [vmem:[%s5599 + $0x54] sm:$0xf]
        %v5615 = vld [vmem:[%s5599 + $0x58] sm:$0xf]
        %v5616 = vld [vmem:[%s5599 + $0x60] sm:$0xf]
        %v5617 = vld [vmem:[%s5599 + $0x64] sm:$0xf]
        %v5618 = vld [vmem:[%s5599 + $0x6c] sm:$0xf]
        %v5619 = vld [vmem:[%s5599 + $0x70] sm:$0xf]
        %v5620 = vld [vmem:[%s5599 + $0x78] sm:$0xf]
        %v5621 = vld [vmem:[%s5599 + $0x7c] sm:$0xf]
        %v5622 = vld [vmem:[%s5599 + $0x84] sm:$0xf]
        %v5623 = vld [vmem:[%s5599 + $0x88] sm:$0xf]
        %v5624 = vld [vmem:[%s5599 + $0x90] sm:$0xf]
        %v5625 = vld [vmem:[%s5599 + $0x94] sm:$0xf]
        %v5626 = vld [vmem:[%s5599 + $0x9c] sm:$0xf]
        %v5627 = vld [vmem:[%s5599 + $0xa0] sm:$0xf]
        %v5628 = vld [vmem:[%s5599 + $0xa8] sm:$0xf]
        %v5629 = vld [vmem:[%s5599 + $0xac] sm:$0xf]
        %v5630 = vld [vmem:[%s5599 + $0xb4] sm:$0xf]
        %v5631 = vld [vmem:[%s5599 + $0xb8] sm:$0xf]
        %s5632 = scalar_lea.vmem %s3, 384
        %v5633 = vld [vmem:[%s5632] sm:$0xf]
        %v5634 = vld [vmem:[%s5632 + $0x4] sm:$0xf]
        %v5635 = vld [vmem:[%s5632 + $0x8] sm:$0xf]
        %v5636 = vld [vmem:[%s5632 + $0xc] sm:$0xf]
        %v5637 = vld [vmem:[%s5632 + $0x10] sm:$0xf]
        %v5638 = vld [vmem:[%s5632 + $0x14] sm:$0xf]
        %v5639 = vld [vmem:[%s5632 + $0x18] sm:$0xf]
        %v5640 = vld [vmem:[%s5632 + $0x1c] sm:$0xf]
        %v5641 = vld [vmem:[%s5632 + $0x20] sm:$0xf]
        %v5642 = vld [vmem:[%s5632 + $0x24] sm:$0xf]
        %v5643 = vld [vmem:[%s5632 + $0x28] sm:$0xf]
        %v5644 = vld [vmem:[%s5632 + $0x2c] sm:$0xf]
        %v5645 = vld [vmem:[%s5632 + $0x30] sm:$0xf]
        %v5646 = vld [vmem:[%s5632 + $0x34] sm:$0xf]
        %v5647 = vld [vmem:[%s5632 + $0x38] sm:$0xf]
        %v5648 = vld [vmem:[%s5632 + $0x3c] sm:$0xf]
        %v5681 = vunpack.c.l.b16 %v5600
        %v5682 = vunpack.c.l.b16 %v5601
        %v5683 = vunpack.c.l.b16 %v5602
        %v5684 = vunpack.c.l.b16 %v5603
        %v5685 = vunpack.c.l.b16 %v5604
        %v5686 = vunpack.c.l.b16 %v5605
        %v5687 = vunpack.c.l.b16 %v5606
        %v5688 = vunpack.c.l.b16 %v5607
        %v5689 = vunpack.c.l.b16 %v5608
        %v5690 = vunpack.c.l.b16 %v5609
        %v5691 = vunpack.c.l.b16 %v5610
        %v5692 = vunpack.c.l.b16 %v5611
        %v5693 = vunpack.c.l.b16 %v5612
        %v5694 = vunpack.c.l.b16 %v5613
        %v5695 = vunpack.c.l.b16 %v5614
        %v5696 = vunpack.c.l.b16 %v5615
        %v5697 = vunpack.c.l.b16 %v5616
        %v5698 = vunpack.c.l.b16 %v5617
        %v5699 = vunpack.c.l.b16 %v5618
        %v5700 = vunpack.c.l.b16 %v5619
        %v5701 = vunpack.c.l.b16 %v5620
        %v5702 = vunpack.c.l.b16 %v5621
        %v5703 = vunpack.c.l.b16 %v5622
        %v5704 = vunpack.c.l.b16 %v5623
        %v5705 = vunpack.c.l.b16 %v5624
        %v5706 = vunpack.c.l.b16 %v5625
        %v5707 = vunpack.c.l.b16 %v5626
        %v5708 = vunpack.c.l.b16 %v5627
        %v5709 = vunpack.c.l.b16 %v5628
        %v5710 = vunpack.c.l.b16 %v5629
        %v5711 = vunpack.c.l.b16 %v5630
        %v5712 = vunpack.c.l.b16 %v5631
        %v5713 = vpack.c.b16 %v5682, %v5681
        %v5714 = vpack.c.b16 %v5684, %v5683
        %v5715 = vpack.c.b16 %v5686, %v5685
        %v5716 = vpack.c.b16 %v5688, %v5687
        %v5717 = vpack.c.b16 %v5690, %v5689
        %v5718 = vpack.c.b16 %v5692, %v5691
        %v5719 = vpack.c.b16 %v5694, %v5693
        %v5720 = vpack.c.b16 %v5696, %v5695
        %v5721 = vpack.c.b16 %v5698, %v5697
        %v5722 = vpack.c.b16 %v5700, %v5699
        %v5723 = vpack.c.b16 %v5702, %v5701
        %v5724 = vpack.c.b16 %v5704, %v5703
        %v5725 = vpack.c.b16 %v5706, %v5705
        %v5726 = vpack.c.b16 %v5708, %v5707
        %v5727 = vpack.c.b16 %v5710, %v5709
        %v5728 = vpack.c.b16 %v5712, %v5711
        %v5761 = vunpack.c.l.b16 %v5633
        %v5762 = vunpack.c.l.b16 %v5634
        %v5763 = vunpack.c.l.b16 %v5635
        %v5764 = vunpack.c.l.b16 %v5636
        %v5765 = vunpack.c.l.b16 %v5637
        %v5766 = vunpack.c.l.b16 %v5638
        %v5767 = vunpack.c.l.b16 %v5639
        %v5768 = vunpack.c.l.b16 %v5640
        %v5769 = vunpack.c.l.b16 %v5641
        %v5770 = vunpack.c.l.b16 %v5642
        %v5771 = vunpack.c.l.b16 %v5643
        %v5772 = vunpack.c.l.b16 %v5644
        %v5773 = vunpack.c.l.b16 %v5645
        %v5774 = vunpack.c.l.b16 %v5646
        %v5775 = vunpack.c.l.b16 %v5647
        %v5776 = vunpack.c.l.b16 %v5648
        %v5777 = vpack.c.b16 %v5762, %v5761
        %v5778 = vpack.c.b16 %v5764, %v5763
        %v5779 = vpack.c.b16 %v5766, %v5765
        %v5780 = vpack.c.b16 %v5768, %v5767
        %v5781 = vpack.c.b16 %v5770, %v5769
        %v5782 = vpack.c.b16 %v5772, %v5771
        %v5783 = vpack.c.b16 %v5774, %v5773
        %v5784 = vpack.c.b16 %v5776, %v5775
        %5793 = vmatpush.bf16.msra.mxu0 %v5784
        %5794 = vmatpush.bf16.msra.mxu0 %v5783
        %5795 = vmatpush.bf16.msra.mxu0 %v5782
        %5796 = vmatpush.bf16.msra.mxu0 %v5781
        %5797 = vmatpush.bf16.msra.mxu0 %v5780
        %5798 = vmatpush.bf16.msra.mxu0 %v5779
        %5799 = vmatpush.bf16.msra.mxu0 %v5778
        %5800 = vmatpush.bf16.msra.mxu0 %v5777
        %5801 = vmatmul.bf16.gmra.mxu0 %v5713
        %v5802 = vpop.f32.mrf.mxu0
        %v5803 = vadd.f32 0.0, %v5802
        %v5804 = vpop.f32.mrf.mxu0
        %v5805 = vadd.f32 0.0, %v5804
        %5806 = vmatmul.bf16.gmra.mxu0 %v5714
        %v5807 = vpop.f32.mrf.mxu0
        %v5808 = vadd.f32 0.0, %v5807
        %v5809 = vpop.f32.mrf.mxu0
        %v5810 = vadd.f32 0.0, %v5809
        %5811 = vmatmul.bf16.gmra.mxu0 %v5715
        %v5812 = vpop.f32.mrf.mxu0
        %v5813 = vadd.f32 0.0, %v5812
        %v5814 = vpop.f32.mrf.mxu0
        %v5815 = vadd.f32 0.0, %v5814
        %5816 = vmatmul.bf16.gmra.mxu0 %v5716
        %v5817 = vpop.f32.mrf.mxu0
        %v5818 = vadd.f32 0.0, %v5817
        %v5819 = vpop.f32.mrf.mxu0
        %v5820 = vadd.f32 0.0, %v5819
        %5821 = vmatmul.bf16.gmra.mxu0 %v5717
        %v5822 = vpop.f32.mrf.mxu0
        %v5823 = vadd.f32 0.0, %v5822
        %v5824 = vpop.f32.mrf.mxu0
        %v5825 = vadd.f32 0.0, %v5824
        %5826 = vmatmul.bf16.gmra.mxu0 %v5718
        %v5827 = vpop.f32.mrf.mxu0
        %v5828 = vadd.f32 0.0, %v5827
        %v5829 = vpop.f32.mrf.mxu0
        %v5830 = vadd.f32 0.0, %v5829
        %5831 = vmatmul.bf16.gmra.mxu0 %v5719
        %v5832 = vpop.f32.mrf.mxu0
        %v5833 = vadd.f32 0.0, %v5832
        %v5834 = vpop.f32.mrf.mxu0
        %v5835 = vadd.f32 0.0, %v5834
        %5836 = vmatmul.bf16.gmra.mxu0 %v5720
        %v5837 = vpop.f32.mrf.mxu0
        %v5838 = vadd.f32 0.0, %v5837
        %v5839 = vpop.f32.mrf.mxu0
        %v5840 = vadd.f32 0.0, %v5839
        %5841 = vmatmul.bf16.gmra.mxu0 %v5721
        %v5842 = vpop.f32.mrf.mxu0
        %v5843 = vadd.f32 0.0, %v5842
        %v5844 = vpop.f32.mrf.mxu0
        %v5845 = vadd.f32 0.0, %v5844
        %5846 = vmatmul.bf16.gmra.mxu0 %v5722
        %v5847 = vpop.f32.mrf.mxu0
        %v5848 = vadd.f32 0.0, %v5847
        %v5849 = vpop.f32.mrf.mxu0
        %v5850 = vadd.f32 0.0, %v5849
        %5851 = vmatmul.bf16.gmra.mxu0 %v5723
        %v5852 = vpop.f32.mrf.mxu0
        %v5853 = vadd.f32 0.0, %v5852
        %v5854 = vpop.f32.mrf.mxu0
        %v5855 = vadd.f32 0.0, %v5854
        %5856 = vmatmul.bf16.gmra.mxu0 %v5724
        %v5857 = vpop.f32.mrf.mxu0
        %v5858 = vadd.f32 0.0, %v5857
        %v5859 = vpop.f32.mrf.mxu0
        %v5860 = vadd.f32 0.0, %v5859
        %5861 = vmatmul.bf16.gmra.mxu0 %v5725
        %v5862 = vpop.f32.mrf.mxu0
        %v5863 = vadd.f32 0.0, %v5862
        %v5864 = vpop.f32.mrf.mxu0
        %v5865 = vadd.f32 0.0, %v5864
        %5866 = vmatmul.bf16.gmra.mxu0 %v5726
        %v5867 = vpop.f32.mrf.mxu0
        %v5868 = vadd.f32 0.0, %v5867
        %v5869 = vpop.f32.mrf.mxu0
        %v5870 = vadd.f32 0.0, %v5869
        %5871 = vmatmul.bf16.gmra.mxu0 %v5727
        %v5872 = vpop.f32.mrf.mxu0
        %v5873 = vadd.f32 0.0, %v5872
        %v5874 = vpop.f32.mrf.mxu0
        %v5875 = vadd.f32 0.0, %v5874
        %5876 = vmatmul.bf16.gmra.mxu0 %v5728
        %v5877 = vpop.f32.mrf.mxu0
        %v5878 = vadd.f32 0.0, %v5877
        %v5879 = vpop.f32.mrf.mxu0
        %v5880 = vadd.f32 0.0, %v5879
        %5881 = vdwg.mxu0
        %v5882 = vadd.f32 %v5567, %v5803
        %v5883 = vadd.f32 %v5568, %v5805
        %v5884 = vadd.f32 %v5569, %v5808
        %v5885 = vadd.f32 %v5570, %v5810
        %v5886 = vadd.f32 %v5571, %v5813
        %v5887 = vadd.f32 %v5572, %v5815
        %v5888 = vadd.f32 %v5573, %v5818
        %v5889 = vadd.f32 %v5574, %v5820
        %v5890 = vadd.f32 %v5575, %v5823
        %v5891 = vadd.f32 %v5576, %v5825
        %v5892 = vadd.f32 %v5577, %v5828
        %v5893 = vadd.f32 %v5578, %v5830
        %v5894 = vadd.f32 %v5579, %v5833
        %v5895 = vadd.f32 %v5580, %v5835
        %v5896 = vadd.f32 %v5581, %v5838
        %v5897 = vadd.f32 %v5582, %v5840
        %v5898 = vadd.f32 %v5583, %v5843
        %v5899 = vadd.f32 %v5584, %v5845
        %v5900 = vadd.f32 %v5585, %v5848
        %v5901 = vadd.f32 %v5586, %v5850
        %v5902 = vadd.f32 %v5587, %v5853
        %v5903 = vadd.f32 %v5588, %v5855
        %v5904 = vadd.f32 %v5589, %v5858
        %v5905 = vadd.f32 %v5590, %v5860
        %v5906 = vadd.f32 %v5591, %v5863
        %v5907 = vadd.f32 %v5592, %v5865
        %v5908 = vadd.f32 %v5593, %v5868
        %v5909 = vadd.f32 %v5594, %v5870
        %v5910 = vadd.f32 %v5595, %v5873
        %v5911 = vadd.f32 %v5596, %v5875
        %v5912 = vadd.f32 %v5597, %v5878
        %v5913 = vadd.f32 %v5598, %v5880
        %v5914 = vld [vmem:[%s5599] sm:$0xf]
        %v5915 = vld [vmem:[%s5599 + $0x4] sm:$0xf]
        %v5916 = vld [vmem:[%s5599 + $0x8] sm:$0x1]
        %v5917 = vld [vmem:[%s5599 + $0xc] sm:$0xf]
        %v5918 = vld [vmem:[%s5599 + $0x10] sm:$0xf]
        %v5919 = vld [vmem:[%s5599 + $0x14] sm:$0x1]
        %v5920 = vld [vmem:[%s5599 + $0x18] sm:$0xf]
        %v5921 = vld [vmem:[%s5599 + $0x1c] sm:$0xf]
        %v5922 = vld [vmem:[%s5599 + $0x20] sm:$0x1]
        %v5923 = vld [vmem:[%s5599 + $0x24] sm:$0xf]
        %v5924 = vld [vmem:[%s5599 + $0x28] sm:$0xf]
        %v5925 = vld [vmem:[%s5599 + $0x2c] sm:$0x1]
        %v5926 = vld [vmem:[%s5599 + $0x30] sm:$0xf]
        %v5927 = vld [vmem:[%s5599 + $0x34] sm:$0xf]
        %v5928 = vld [vmem:[%s5599 + $0x38] sm:$0x1]
        %v5929 = vld [vmem:[%s5599 + $0x3c] sm:$0xf]
        %v5930 = vld [vmem:[%s5599 + $0x40] sm:$0xf]
        %v5931 = vld [vmem:[%s5599 + $0x44] sm:$0x1]
        %v5932 = vld [vmem:[%s5599 + $0x48] sm:$0xf]
        %v5933 = vld [vmem:[%s5599 + $0x4c] sm:$0xf]
        %v5934 = vld [vmem:[%s5599 + $0x50] sm:$0x1]
        %v5935 = vld [vmem:[%s5599 + $0x54] sm:$0xf]
        %v5936 = vld [vmem:[%s5599 + $0x58] sm:$0xf]
        %v5937 = vld [vmem:[%s5599 + $0x5c] sm:$0x1]
        %v5938 = vld [vmem:[%s5599 + $0x60] sm:$0xf]
        %v5939 = vld [vmem:[%s5599 + $0x64] sm:$0xf]
        %v5940 = vld [vmem:[%s5599 + $0x68] sm:$0x1]
        %v5941 = vld [vmem:[%s5599 + $0x6c] sm:$0xf]
        %v5942 = vld [vmem:[%s5599 + $0x70] sm:$0xf]
        %v5943 = vld [vmem:[%s5599 + $0x74] sm:$0x1]
        %v5944 = vld [vmem:[%s5599 + $0x78] sm:$0xf]
        %v5945 = vld [vmem:[%s5599 + $0x7c] sm:$0xf]
        %v5946 = vld [vmem:[%s5599 + $0x80] sm:$0x1]
        %v5947 = vld [vmem:[%s5599 + $0x84] sm:$0xf]
        %v5948 = vld [vmem:[%s5599 + $0x88] sm:$0xf]
        %v5949 = vld [vmem:[%s5599 + $0x8c] sm:$0x1]
        %v5950 = vld [vmem:[%s5599 + $0x90] sm:$0xf]
        %v5951 = vld [vmem:[%s5599 + $0x94] sm:$0xf]
        %v5952 = vld [vmem:[%s5599 + $0x98] sm:$0x1]
        %v5953 = vld [vmem:[%s5599 + $0x9c] sm:$0xf]
        %v5954 = vld [vmem:[%s5599 + $0xa0] sm:$0xf]
        %v5955 = vld [vmem:[%s5599 + $0xa4] sm:$0x1]
        %v5956 = vld [vmem:[%s5599 + $0xa8] sm:$0xf]
        %v5957 = vld [vmem:[%s5599 + $0xac] sm:$0xf]
        %v5958 = vld [vmem:[%s5599 + $0xb0] sm:$0x1]
        %v5959 = vld [vmem:[%s5599 + $0xb4] sm:$0xf]
        %v5960 = vld [vmem:[%s5599 + $0xb8] sm:$0xf]
        %v5961 = vld [vmem:[%s5599 + $0xbc] sm:$0x1]
        %v5963 = vshrl.u32 %v5914, 16
        %v5965 = vrot.slane %v5963, 4
        %v5966 = vshll.u32 %v5914, 16
        %v5968 = vrot.slane %v5966, 5
        %v5969 = vor.u32 %v5965, %v5968
        %v5970 = vrot.slane %v5969, 4
        %v5972 = vshll.u32 %v5915, 16
        %v5974 = vrot.slane %v5972, 5
        %v5975 = vsel %vm2928, %v5970, %v5974
        %v5976 = vshrl.u32 %v5915, 16
        %v5978 = vrot.slane %v5976, 4
        %v5979 = vor.u32 %v5978, %v5974
        %v5980 = vrot.slane %v5979, 4
        %v5982 = vshll.u32 %v5916, 16
        %v5984 = vrot.slane %v5982, 5
        %v5985 = vsel %vm2928, %v5980, %v5984
        %v5987 = vshrl.u32 %v5917, 16
        %v5989 = vrot.slane %v5987, 4
        %v5990 = vshll.u32 %v5917, 16
        %v5992 = vrot.slane %v5990, 5
        %v5993 = vor.u32 %v5989, %v5992
        %v5994 = vrot.slane %v5993, 4
        %v5996 = vshll.u32 %v5918, 16
        %v5998 = vrot.slane %v5996, 5
        %v5999 = vsel %vm2928, %v5994, %v5998
        %v6000 = vshrl.u32 %v5918, 16
        %v6002 = vrot.slane %v6000, 4
        %v6003 = vor.u32 %v6002, %v5998
        %v6004 = vrot.slane %v6003, 4
        %v6006 = vshll.u32 %v5919, 16
        %v6008 = vrot.slane %v6006, 5
        %v6009 = vsel %vm2928, %v6004, %v6008
        %v6011 = vshrl.u32 %v5920, 16
        %v6013 = vrot.slane %v6011, 4
        %v6014 = vshll.u32 %v5920, 16
        %v6016 = vrot.slane %v6014, 5
        %v6017 = vor.u32 %v6013, %v6016
        %v6018 = vrot.slane %v6017, 4
        %v6020 = vshll.u32 %v5921, 16
        %v6022 = vrot.slane %v6020, 5
        %v6023 = vsel %vm2928, %v6018, %v6022
        %v6024 = vshrl.u32 %v5921, 16
        %v6026 = vrot.slane %v6024, 4
        %v6027 = vor.u32 %v6026, %v6022
        %v6028 = vrot.slane %v6027, 4
        %v6030 = vshll.u32 %v5922, 16
        %v6032 = vrot.slane %v6030, 5
        %v6033 = vsel %vm2928, %v6028, %v6032
        %v6035 = vshrl.u32 %v5923, 16
        %v6037 = vrot.slane %v6035, 4
        %v6038 = vshll.u32 %v5923, 16
        %v6040 = vrot.slane %v6038, 5
        %v6041 = vor.u32 %v6037, %v6040
        %v6042 = vrot.slane %v6041, 4
        %v6044 = vshll.u32 %v5924, 16
        %v6046 = vrot.slane %v6044, 5
        %v6047 = vsel %vm2928, %v6042, %v6046
        %v6048 = vshrl.u32 %v5924, 16
        %v6050 = vrot.slane %v6048, 4
        %v6051 = vor.u32 %v6050, %v6046
        %v6052 = vrot.slane %v6051, 4
        %v6054 = vshll.u32 %v5925, 16
        %v6056 = vrot.slane %v6054, 5
        %v6057 = vsel %vm2928, %v6052, %v6056
        %v6059 = vshrl.u32 %v5926, 16
        %v6061 = vrot.slane %v6059, 4
        %v6062 = vshll.u32 %v5926, 16
        %v6064 = vrot.slane %v6062, 5
        %v6065 = vor.u32 %v6061, %v6064
        %v6066 = vrot.slane %v6065, 4
        %v6068 = vshll.u32 %v5927, 16
        %v6070 = vrot.slane %v6068, 5
        %v6071 = vsel %vm2928, %v6066, %v6070
        %v6072 = vshrl.u32 %v5927, 16
        %v6074 = vrot.slane %v6072, 4
        %v6075 = vor.u32 %v6074, %v6070
        %v6076 = vrot.slane %v6075, 4
        %v6078 = vshll.u32 %v5928, 16
        %v6080 = vrot.slane %v6078, 5
        %v6081 = vsel %vm2928, %v6076, %v6080
        %v6083 = vshrl.u32 %v5929, 16
        %v6085 = vrot.slane %v6083, 4
        %v6086 = vshll.u32 %v5929, 16
        %v6088 = vrot.slane %v6086, 5
        %v6089 = vor.u32 %v6085, %v6088
        %v6090 = vrot.slane %v6089, 4
        %v6092 = vshll.u32 %v5930, 16
        %v6094 = vrot.slane %v6092, 5
        %v6095 = vsel %vm2928, %v6090, %v6094
        %v6096 = vshrl.u32 %v5930, 16
        %v6098 = vrot.slane %v6096, 4
        %v6099 = vor.u32 %v6098, %v6094
        %v6100 = vrot.slane %v6099, 4
        %v6102 = vshll.u32 %v5931, 16
        %v6104 = vrot.slane %v6102, 5
        %v6105 = vsel %vm2928, %v6100, %v6104
        %v6107 = vshrl.u32 %v5932, 16
        %v6109 = vrot.slane %v6107, 4
        %v6110 = vshll.u32 %v5932, 16
        %v6112 = vrot.slane %v6110, 5
        %v6113 = vor.u32 %v6109, %v6112
        %v6114 = vrot.slane %v6113, 4
        %v6116 = vshll.u32 %v5933, 16
        %v6118 = vrot.slane %v6116, 5
        %v6119 = vsel %vm2928, %v6114, %v6118
        %v6120 = vshrl.u32 %v5933, 16
        %v6122 = vrot.slane %v6120, 4
        %v6123 = vor.u32 %v6122, %v6118
        %v6124 = vrot.slane %v6123, 4
        %v6126 = vshll.u32 %v5934, 16
        %v6128 = vrot.slane %v6126, 5
        %v6129 = vsel %vm2928, %v6124, %v6128
        %v6131 = vshrl.u32 %v5935, 16
        %v6133 = vrot.slane %v6131, 4
        %v6134 = vshll.u32 %v5935, 16
        %v6136 = vrot.slane %v6134, 5
        %v6137 = vor.u32 %v6133, %v6136
        %v6138 = vrot.slane %v6137, 4
        %v6140 = vshll.u32 %v5936, 16
        %v6142 = vrot.slane %v6140, 5
        %v6143 = vsel %vm2928, %v6138, %v6142
        %v6144 = vshrl.u32 %v5936, 16
        %v6146 = vrot.slane %v6144, 4
        %v6147 = vor.u32 %v6146, %v6142
        %v6148 = vrot.slane %v6147, 4
        %v6150 = vshll.u32 %v5937, 16
        %v6152 = vrot.slane %v6150, 5
        %v6153 = vsel %vm2928, %v6148, %v6152
        %v6155 = vshrl.u32 %v5938, 16
        %v6157 = vrot.slane %v6155, 4
        %v6158 = vshll.u32 %v5938, 16
        %v6160 = vrot.slane %v6158, 5
        %v6161 = vor.u32 %v6157, %v6160
        %v6162 = vrot.slane %v6161, 4
        %v6164 = vshll.u32 %v5939, 16
        %v6166 = vrot.slane %v6164, 5
        %v6167 = vsel %vm2928, %v6162, %v6166
        %v6168 = vshrl.u32 %v5939, 16
        %v6170 = vrot.slane %v6168, 4
        %v6171 = vor.u32 %v6170, %v6166
        %v6172 = vrot.slane %v6171, 4
        %v6174 = vshll.u32 %v5940, 16
        %v6176 = vrot.slane %v6174, 5
        %v6177 = vsel %vm2928, %v6172, %v6176
        %v6179 = vshrl.u32 %v5941, 16
        %v6181 = vrot.slane %v6179, 4
        %v6182 = vshll.u32 %v5941, 16
        %v6184 = vrot.slane %v6182, 5
        %v6185 = vor.u32 %v6181, %v6184
        %v6186 = vrot.slane %v6185, 4
        %v6188 = vshll.u32 %v5942, 16
        %v6190 = vrot.slane %v6188, 5
        %v6191 = vsel %vm2928, %v6186, %v6190
        %v6192 = vshrl.u32 %v5942, 16
        %v6194 = vrot.slane %v6192, 4
        %v6195 = vor.u32 %v6194, %v6190
        %v6196 = vrot.slane %v6195, 4
        %v6198 = vshll.u32 %v5943, 16
        %v6200 = vrot.slane %v6198, 5
        %v6201 = vsel %vm2928, %v6196, %v6200
        %v6203 = vshrl.u32 %v5944, 16
        %v6205 = vrot.slane %v6203, 4
        %v6206 = vshll.u32 %v5944, 16
        %v6208 = vrot.slane %v6206, 5
        %v6209 = vor.u32 %v6205, %v6208
        %v6210 = vrot.slane %v6209, 4
        %v6212 = vshll.u32 %v5945, 16
        %v6214 = vrot.slane %v6212, 5
        %v6215 = vsel %vm2928, %v6210, %v6214
        %v6216 = vshrl.u32 %v5945, 16
        %v6218 = vrot.slane %v6216, 4
        %v6219 = vor.u32 %v6218, %v6214
        %v6220 = vrot.slane %v6219, 4
        %v6222 = vshll.u32 %v5946, 16
        %v6224 = vrot.slane %v6222, 5
        %v6225 = vsel %vm2928, %v6220, %v6224
        %v6227 = vshrl.u32 %v5947, 16
        %v6229 = vrot.slane %v6227, 4
        %v6230 = vshll.u32 %v5947, 16
        %v6232 = vrot.slane %v6230, 5
        %v6233 = vor.u32 %v6229, %v6232
        %v6234 = vrot.slane %v6233, 4
        %v6236 = vshll.u32 %v5948, 16
        %v6238 = vrot.slane %v6236, 5
        %v6239 = vsel %vm2928, %v6234, %v6238
        %v6240 = vshrl.u32 %v5948, 16
        %v6242 = vrot.slane %v6240, 4
        %v6243 = vor.u32 %v6242, %v6238
        %v6244 = vrot.slane %v6243, 4
        %v6246 = vshll.u32 %v5949, 16
        %v6248 = vrot.slane %v6246, 5
        %v6249 = vsel %vm2928, %v6244, %v6248
        %v6251 = vshrl.u32 %v5950, 16
        %v6253 = vrot.slane %v6251, 4
        %v6254 = vshll.u32 %v5950, 16
        %v6256 = vrot.slane %v6254, 5
        %v6257 = vor.u32 %v6253, %v6256
        %v6258 = vrot.slane %v6257, 4
        %v6260 = vshll.u32 %v5951, 16
        %v6262 = vrot.slane %v6260, 5
        %v6263 = vsel %vm2928, %v6258, %v6262
        %v6264 = vshrl.u32 %v5951, 16
        %v6266 = vrot.slane %v6264, 4
        %v6267 = vor.u32 %v6266, %v6262
        %v6268 = vrot.slane %v6267, 4
        %v6270 = vshll.u32 %v5952, 16
        %v6272 = vrot.slane %v6270, 5
        %v6273 = vsel %vm2928, %v6268, %v6272
        %v6275 = vshrl.u32 %v5953, 16
        %v6277 = vrot.slane %v6275, 4
        %v6278 = vshll.u32 %v5953, 16
        %v6280 = vrot.slane %v6278, 5
        %v6281 = vor.u32 %v6277, %v6280
        %v6282 = vrot.slane %v6281, 4
        %v6284 = vshll.u32 %v5954, 16
        %v6286 = vrot.slane %v6284, 5
        %v6287 = vsel %vm2928, %v6282, %v6286
        %v6288 = vshrl.u32 %v5954, 16
        %v6290 = vrot.slane %v6288, 4
        %v6291 = vor.u32 %v6290, %v6286
        %v6292 = vrot.slane %v6291, 4
        %v6294 = vshll.u32 %v5955, 16
        %v6296 = vrot.slane %v6294, 5
        %v6297 = vsel %vm2928, %v6292, %v6296
        %v6299 = vshrl.u32 %v5956, 16
        %v6301 = vrot.slane %v6299, 4
        %v6302 = vshll.u32 %v5956, 16
        %v6304 = vrot.slane %v6302, 5
        %v6305 = vor.u32 %v6301, %v6304
        %v6306 = vrot.slane %v6305, 4
        %v6308 = vshll.u32 %v5957, 16
        %v6310 = vrot.slane %v6308, 5
        %v6311 = vsel %vm2928, %v6306, %v6310
        %v6312 = vshrl.u32 %v5957, 16
        %v6314 = vrot.slane %v6312, 4
        %v6315 = vor.u32 %v6314, %v6310
        %v6316 = vrot.slane %v6315, 4
        %v6318 = vshll.u32 %v5958, 16
        %v6320 = vrot.slane %v6318, 5
        %v6321 = vsel %vm2928, %v6316, %v6320
        %v6323 = vshrl.u32 %v5959, 16
        %v6325 = vrot.slane %v6323, 4
        %v6326 = vshll.u32 %v5959, 16
        %v6328 = vrot.slane %v6326, 5
        %v6329 = vor.u32 %v6325, %v6328
        %v6330 = vrot.slane %v6329, 4
        %v6332 = vshll.u32 %v5960, 16
        %v6334 = vrot.slane %v6332, 5
        %v6335 = vsel %vm2928, %v6330, %v6334
        %v6336 = vshrl.u32 %v5960, 16
        %v6338 = vrot.slane %v6336, 4
        %v6339 = vor.u32 %v6338, %v6334
        %v6340 = vrot.slane %v6339, 4
        %v6342 = vshll.u32 %v5961, 16
        %v6344 = vrot.slane %v6342, 5
        %v6345 = vsel %vm2928, %v6340, %v6344
        %s6346 = scalar_lea.vmem %s3, 448
        %v6347 = vld [vmem:[%s6346] sm:$0xf]
        %v6348 = vld [vmem:[%s6346 + $0x4] sm:$0xf]
        %v6349 = vld [vmem:[%s6346 + $0x8] sm:$0xf]
        %v6350 = vld [vmem:[%s6346 + $0xc] sm:$0xf]
        %v6351 = vld [vmem:[%s6346 + $0x10] sm:$0xf]
        %v6352 = vld [vmem:[%s6346 + $0x14] sm:$0xf]
        %v6353 = vld [vmem:[%s6346 + $0x18] sm:$0xf]
        %v6354 = vld [vmem:[%s6346 + $0x1c] sm:$0xf]
        %v6355 = vld [vmem:[%s6346 + $0x20] sm:$0xf]
        %v6356 = vld [vmem:[%s6346 + $0x24] sm:$0xf]
        %v6357 = vld [vmem:[%s6346 + $0x28] sm:$0xf]
        %v6358 = vld [vmem:[%s6346 + $0x2c] sm:$0xf]
        %v6359 = vld [vmem:[%s6346 + $0x30] sm:$0xf]
        %v6360 = vld [vmem:[%s6346 + $0x34] sm:$0xf]
        %v6361 = vld [vmem:[%s6346 + $0x38] sm:$0xf]
        %v6362 = vld [vmem:[%s6346 + $0x3c] sm:$0xf]
        %v6363 = vunpack.c.l.b16 %v5975
        %v6364 = vunpack.c.l.b16 %v5985
        %v6365 = vunpack.c.l.b16 %v5999
        %v6366 = vunpack.c.l.b16 %v6009
        %v6367 = vunpack.c.l.b16 %v6023
        %v6368 = vunpack.c.l.b16 %v6033
        %v6369 = vunpack.c.l.b16 %v6047
        %v6370 = vunpack.c.l.b16 %v6057
        %v6371 = vunpack.c.l.b16 %v6071
        %v6372 = vunpack.c.l.b16 %v6081
        %v6373 = vunpack.c.l.b16 %v6095
        %v6374 = vunpack.c.l.b16 %v6105
        %v6375 = vunpack.c.l.b16 %v6119
        %v6376 = vunpack.c.l.b16 %v6129
        %v6377 = vunpack.c.l.b16 %v6143
        %v6378 = vunpack.c.l.b16 %v6153
        %v6379 = vunpack.c.l.b16 %v6167
        %v6380 = vunpack.c.l.b16 %v6177
        %v6381 = vunpack.c.l.b16 %v6191
        %v6382 = vunpack.c.l.b16 %v6201
        %v6383 = vunpack.c.l.b16 %v6215
        %v6384 = vunpack.c.l.b16 %v6225
        %v6385 = vunpack.c.l.b16 %v6239
        %v6386 = vunpack.c.l.b16 %v6249
        %v6387 = vunpack.c.l.b16 %v6263
        %v6388 = vunpack.c.l.b16 %v6273
        %v6389 = vunpack.c.l.b16 %v6287
        %v6390 = vunpack.c.l.b16 %v6297
        %v6391 = vunpack.c.l.b16 %v6311
        %v6392 = vunpack.c.l.b16 %v6321
        %v6393 = vunpack.c.l.b16 %v6335
        %v6394 = vunpack.c.l.b16 %v6345
        %v6395 = vpack.c.b16 %v6364, %v6363
        %v6396 = vpack.c.b16 %v6366, %v6365
        %v6397 = vpack.c.b16 %v6368, %v6367
        %v6398 = vpack.c.b16 %v6370, %v6369
        %v6399 = vpack.c.b16 %v6372, %v6371
        %v6400 = vpack.c.b16 %v6374, %v6373
        %v6401 = vpack.c.b16 %v6376, %v6375
        %v6402 = vpack.c.b16 %v6378, %v6377
        %v6403 = vpack.c.b16 %v6380, %v6379
        %v6404 = vpack.c.b16 %v6382, %v6381
        %v6405 = vpack.c.b16 %v6384, %v6383
        %v6406 = vpack.c.b16 %v6386, %v6385
        %v6407 = vpack.c.b16 %v6388, %v6387
        %v6408 = vpack.c.b16 %v6390, %v6389
        %v6409 = vpack.c.b16 %v6392, %v6391
        %v6410 = vpack.c.b16 %v6394, %v6393
        %v6443 = vunpack.c.l.b16 %v6347
        %v6444 = vunpack.c.l.b16 %v6348
        %v6445 = vunpack.c.l.b16 %v6349
        %v6446 = vunpack.c.l.b16 %v6350
        %v6447 = vunpack.c.l.b16 %v6351
        %v6448 = vunpack.c.l.b16 %v6352
        %v6449 = vunpack.c.l.b16 %v6353
        %v6450 = vunpack.c.l.b16 %v6354
        %v6451 = vunpack.c.l.b16 %v6355
        %v6452 = vunpack.c.l.b16 %v6356
        %v6453 = vunpack.c.l.b16 %v6357
        %v6454 = vunpack.c.l.b16 %v6358
        %v6455 = vunpack.c.l.b16 %v6359
        %v6456 = vunpack.c.l.b16 %v6360
        %v6457 = vunpack.c.l.b16 %v6361
        %v6458 = vunpack.c.l.b16 %v6362
        %v6459 = vpack.c.b16 %v6444, %v6443
        %v6460 = vpack.c.b16 %v6446, %v6445
        %v6461 = vpack.c.b16 %v6448, %v6447
        %v6462 = vpack.c.b16 %v6450, %v6449
        %v6463 = vpack.c.b16 %v6452, %v6451
        %v6464 = vpack.c.b16 %v6454, %v6453
        %v6465 = vpack.c.b16 %v6456, %v6455
        %v6466 = vpack.c.b16 %v6458, %v6457
        %6475 = vmatpush.bf16.msra.mxu0 %v6466
        %6476 = vmatpush.bf16.msra.mxu0 %v6465
        %6477 = vmatpush.bf16.msra.mxu0 %v6464
        %6478 = vmatpush.bf16.msra.mxu0 %v6463
        %6479 = vmatpush.bf16.msra.mxu0 %v6462
        %6480 = vmatpush.bf16.msra.mxu0 %v6461
        %6481 = vmatpush.bf16.msra.mxu0 %v6460
        %6482 = vmatpush.bf16.msra.mxu0 %v6459
        %6483 = vmatmul.bf16.gmra.mxu0 %v6395
        %v6484 = vpop.f32.mrf.mxu0
        %v6485 = vadd.f32 0.0, %v6484
        %v6486 = vpop.f32.mrf.mxu0
        %v6487 = vadd.f32 0.0, %v6486
        %6488 = vmatmul.bf16.gmra.mxu0 %v6396
        %v6489 = vpop.f32.mrf.mxu0
        %v6490 = vadd.f32 0.0, %v6489
        %v6491 = vpop.f32.mrf.mxu0
        %v6492 = vadd.f32 0.0, %v6491
        %6493 = vmatmul.bf16.gmra.mxu0 %v6397
        %v6494 = vpop.f32.mrf.mxu0
        %v6495 = vadd.f32 0.0, %v6494
        %v6496 = vpop.f32.mrf.mxu0
        %v6497 = vadd.f32 0.0, %v6496
        %6498 = vmatmul.bf16.gmra.mxu0 %v6398
        %v6499 = vpop.f32.mrf.mxu0
        %v6500 = vadd.f32 0.0, %v6499
        %v6501 = vpop.f32.mrf.mxu0
        %v6502 = vadd.f32 0.0, %v6501
        %6503 = vmatmul.bf16.gmra.mxu0 %v6399
        %v6504 = vpop.f32.mrf.mxu0
        %v6505 = vadd.f32 0.0, %v6504
        %v6506 = vpop.f32.mrf.mxu0
        %v6507 = vadd.f32 0.0, %v6506
        %6508 = vmatmul.bf16.gmra.mxu0 %v6400
        %v6509 = vpop.f32.mrf.mxu0
        %v6510 = vadd.f32 0.0, %v6509
        %v6511 = vpop.f32.mrf.mxu0
        %v6512 = vadd.f32 0.0, %v6511
        %6513 = vmatmul.bf16.gmra.mxu0 %v6401
        %v6514 = vpop.f32.mrf.mxu0
        %v6515 = vadd.f32 0.0, %v6514
        %v6516 = vpop.f32.mrf.mxu0
        %v6517 = vadd.f32 0.0, %v6516
        %6518 = vmatmul.bf16.gmra.mxu0 %v6402
        %v6519 = vpop.f32.mrf.mxu0
        %v6520 = vadd.f32 0.0, %v6519
        %v6521 = vpop.f32.mrf.mxu0
        %v6522 = vadd.f32 0.0, %v6521
        %6523 = vmatmul.bf16.gmra.mxu0 %v6403
        %v6524 = vpop.f32.mrf.mxu0
        %v6525 = vadd.f32 0.0, %v6524
        %v6526 = vpop.f32.mrf.mxu0
        %v6527 = vadd.f32 0.0, %v6526
        %6528 = vmatmul.bf16.gmra.mxu0 %v6404
        %v6529 = vpop.f32.mrf.mxu0
        %v6530 = vadd.f32 0.0, %v6529
        %v6531 = vpop.f32.mrf.mxu0
        %v6532 = vadd.f32 0.0, %v6531
        %6533 = vmatmul.bf16.gmra.mxu0 %v6405
        %v6534 = vpop.f32.mrf.mxu0
        %v6535 = vadd.f32 0.0, %v6534
        %v6536 = vpop.f32.mrf.mxu0
        %v6537 = vadd.f32 0.0, %v6536
        %6538 = vmatmul.bf16.gmra.mxu0 %v6406
        %v6539 = vpop.f32.mrf.mxu0
        %v6540 = vadd.f32 0.0, %v6539
        %v6541 = vpop.f32.mrf.mxu0
        %v6542 = vadd.f32 0.0, %v6541
        %6543 = vmatmul.bf16.gmra.mxu0 %v6407
        %v6544 = vpop.f32.mrf.mxu0
        %v6545 = vadd.f32 0.0, %v6544
        %v6546 = vpop.f32.mrf.mxu0
        %v6547 = vadd.f32 0.0, %v6546
        %6548 = vmatmul.bf16.gmra.mxu0 %v6408
        %v6549 = vpop.f32.mrf.mxu0
        %v6550 = vadd.f32 0.0, %v6549
        %v6551 = vpop.f32.mrf.mxu0
        %v6552 = vadd.f32 0.0, %v6551
        %6553 = vmatmul.bf16.gmra.mxu0 %v6409
        %v6554 = vpop.f32.mrf.mxu0
        %v6555 = vadd.f32 0.0, %v6554
        %v6556 = vpop.f32.mrf.mxu0
        %v6557 = vadd.f32 0.0, %v6556
        %6558 = vmatmul.bf16.gmra.mxu0 %v6410
        %v6559 = vpop.f32.mrf.mxu0
        %v6560 = vadd.f32 0.0, %v6559
        %v6561 = vpop.f32.mrf.mxu0
        %v6562 = vadd.f32 0.0, %v6561
        %6563 = vdwg.mxu0
        %v6564 = vadd.f32 %v5882, %v6485
        %v6565 = vadd.f32 %v5883, %v6487
        %v6566 = vadd.f32 %v5884, %v6490
        %v6567 = vadd.f32 %v5885, %v6492
        %v6568 = vadd.f32 %v5886, %v6495
        %v6569 = vadd.f32 %v5887, %v6497
        %v6570 = vadd.f32 %v5888, %v6500
        %v6571 = vadd.f32 %v5889, %v6502
        %v6572 = vadd.f32 %v5890, %v6505
        %v6573 = vadd.f32 %v5891, %v6507
        %v6574 = vadd.f32 %v5892, %v6510
        %v6575 = vadd.f32 %v5893, %v6512
        %v6576 = vadd.f32 %v5894, %v6515
        %v6577 = vadd.f32 %v5895, %v6517
        %v6578 = vadd.f32 %v5896, %v6520
        %v6579 = vadd.f32 %v5897, %v6522
        %v6580 = vadd.f32 %v5898, %v6525
        %v6581 = vadd.f32 %v5899, %v6527
        %v6582 = vadd.f32 %v5900, %v6530
        %v6583 = vadd.f32 %v5901, %v6532
        %v6584 = vadd.f32 %v5902, %v6535
        %v6585 = vadd.f32 %v5903, %v6537
        %v6586 = vadd.f32 %v5904, %v6540
        %v6587 = vadd.f32 %v5905, %v6542
        %v6588 = vadd.f32 %v5906, %v6545
        %v6589 = vadd.f32 %v5907, %v6547
        %v6590 = vadd.f32 %v5908, %v6550
        %v6591 = vadd.f32 %v5909, %v6552
        %v6592 = vadd.f32 %v5910, %v6555
        %v6593 = vadd.f32 %v5911, %v6557
        %v6594 = vadd.f32 %v5912, %v6560
        %v6595 = vadd.f32 %v5913, %v6562
        %v6596 = vld [vmem:[%s5599] sm:$0xe]
        %v6597 = vld [vmem:[%s5599 + $0xc] sm:$0xe]
        %v6598 = vld [vmem:[%s5599 + $0x18] sm:$0xe]
        %v6599 = vld [vmem:[%s5599 + $0x24] sm:$0xe]
        %v6600 = vld [vmem:[%s5599 + $0x30] sm:$0xe]
        %v6601 = vld [vmem:[%s5599 + $0x3c] sm:$0xe]
        %v6602 = vld [vmem:[%s5599 + $0x48] sm:$0xe]
        %v6603 = vld [vmem:[%s5599 + $0x54] sm:$0xe]
        %v6604 = vld [vmem:[%s5599 + $0x60] sm:$0xe]
        %v6605 = vld [vmem:[%s5599 + $0x6c] sm:$0xe]
        %v6606 = vld [vmem:[%s5599 + $0x78] sm:$0xe]
        %v6607 = vld [vmem:[%s5599 + $0x84] sm:$0xe]
        %v6608 = vld [vmem:[%s5599 + $0x90] sm:$0xe]
        %v6609 = vld [vmem:[%s5599 + $0x9c] sm:$0xe]
        %v6610 = vld [vmem:[%s5599 + $0xa8] sm:$0xe]
        %v6611 = vld [vmem:[%s5599 + $0xb4] sm:$0xe]
        %v6660 = vrot.slane %v6596, 5
        %v6661 = vrot.slane %v6660, 4
        %v6662 = vrot.slane %v5915, 5
        %v6663 = vsel %vm3814, %v6661, %v6662
        %v6664 = vrot.slane %v6662, 4
        %v6665 = vrot.slane %v5916, 5
        %v6666 = vsel %vm3814, %v6664, %v6665
        %v6667 = vrot.slane %v6597, 5
        %v6668 = vrot.slane %v6667, 4
        %v6669 = vrot.slane %v5918, 5
        %v6670 = vsel %vm3814, %v6668, %v6669
        %v6671 = vrot.slane %v6669, 4
        %v6672 = vrot.slane %v5919, 5
        %v6673 = vsel %vm3814, %v6671, %v6672
        %v6674 = vrot.slane %v6598, 5
        %v6675 = vrot.slane %v6674, 4
        %v6676 = vrot.slane %v5921, 5
        %v6677 = vsel %vm3814, %v6675, %v6676
        %v6678 = vrot.slane %v6676, 4
        %v6679 = vrot.slane %v5922, 5
        %v6680 = vsel %vm3814, %v6678, %v6679
        %v6681 = vrot.slane %v6599, 5
        %v6682 = vrot.slane %v6681, 4
        %v6683 = vrot.slane %v5924, 5
        %v6684 = vsel %vm3814, %v6682, %v6683
        %v6685 = vrot.slane %v6683, 4
        %v6686 = vrot.slane %v5925, 5
        %v6687 = vsel %vm3814, %v6685, %v6686
        %v6688 = vrot.slane %v6600, 5
        %v6689 = vrot.slane %v6688, 4
        %v6690 = vrot.slane %v5927, 5
        %v6691 = vsel %vm3814, %v6689, %v6690
        %v6692 = vrot.slane %v6690, 4
        %v6693 = vrot.slane %v5928, 5
        %v6694 = vsel %vm3814, %v6692, %v6693
        %v6695 = vrot.slane %v6601, 5
        %v6696 = vrot.slane %v6695, 4
        %v6697 = vrot.slane %v5930, 5
        %v6698 = vsel %vm3814, %v6696, %v6697
        %v6699 = vrot.slane %v6697, 4
        %v6700 = vrot.slane %v5931, 5
        %v6701 = vsel %vm3814, %v6699, %v6700
        %v6702 = vrot.slane %v6602, 5
        %v6703 = vrot.slane %v6702, 4
        %v6704 = vrot.slane %v5933, 5
        %v6705 = vsel %vm3814, %v6703, %v6704
        %v6706 = vrot.slane %v6704, 4
        %v6707 = vrot.slane %v5934, 5
        %v6708 = vsel %vm3814, %v6706, %v6707
        %v6709 = vrot.slane %v6603, 5
        %v6710 = vrot.slane %v6709, 4
        %v6711 = vrot.slane %v5936, 5
        %v6712 = vsel %vm3814, %v6710, %v6711
        %v6713 = vrot.slane %v6711, 4
        %v6714 = vrot.slane %v5937, 5
        %v6715 = vsel %vm3814, %v6713, %v6714
        %v6716 = vrot.slane %v6604, 5
        %v6717 = vrot.slane %v6716, 4
        %v6718 = vrot.slane %v5939, 5
        %v6719 = vsel %vm3814, %v6717, %v6718
        %v6720 = vrot.slane %v6718, 4
        %v6721 = vrot.slane %v5940, 5
        %v6722 = vsel %vm3814, %v6720, %v6721
        %v6723 = vrot.slane %v6605, 5
        %v6724 = vrot.slane %v6723, 4
        %v6725 = vrot.slane %v5942, 5
        %v6726 = vsel %vm3814, %v6724, %v6725
        %v6727 = vrot.slane %v6725, 4
        %v6728 = vrot.slane %v5943, 5
        %v6729 = vsel %vm3814, %v6727, %v6728
        %v6730 = vrot.slane %v6606, 5
        %v6731 = vrot.slane %v6730, 4
        %v6732 = vrot.slane %v5945, 5
        %v6733 = vsel %vm3814, %v6731, %v6732
        %v6734 = vrot.slane %v6732, 4
        %v6735 = vrot.slane %v5946, 5
        %v6736 = vsel %vm3814, %v6734, %v6735
        %v6737 = vrot.slane %v6607, 5
        %v6738 = vrot.slane %v6737, 4
        %v6739 = vrot.slane %v5948, 5
        %v6740 = vsel %vm3814, %v6738, %v6739
        %v6741 = vrot.slane %v6739, 4
        %v6742 = vrot.slane %v5949, 5
        %v6743 = vsel %vm3814, %v6741, %v6742
        %v6744 = vrot.slane %v6608, 5
        %v6745 = vrot.slane %v6744, 4
        %v6746 = vrot.slane %v5951, 5
        %v6747 = vsel %vm3814, %v6745, %v6746
        %v6748 = vrot.slane %v6746, 4
        %v6749 = vrot.slane %v5952, 5
        %v6750 = vsel %vm3814, %v6748, %v6749
        %v6751 = vrot.slane %v6609, 5
        %v6752 = vrot.slane %v6751, 4
        %v6753 = vrot.slane %v5954, 5
        %v6754 = vsel %vm3814, %v6752, %v6753
        %v6755 = vrot.slane %v6753, 4
        %v6756 = vrot.slane %v5955, 5
        %v6757 = vsel %vm3814, %v6755, %v6756
        %v6758 = vrot.slane %v6610, 5
        %v6759 = vrot.slane %v6758, 4
        %v6760 = vrot.slane %v5957, 5
        %v6761 = vsel %vm3814, %v6759, %v6760
        %v6762 = vrot.slane %v6760, 4
        %v6763 = vrot.slane %v5958, 5
        %v6764 = vsel %vm3814, %v6762, %v6763
        %v6765 = vrot.slane %v6611, 5
        %v6766 = vrot.slane %v6765, 4
        %v6767 = vrot.slane %v5960, 5
        %v6768 = vsel %vm3814, %v6766, %v6767
        %v6769 = vrot.slane %v6767, 4
        %v6770 = vrot.slane %v5961, 5
        %v6771 = vsel %vm3814, %v6769, %v6770
        %s6772 = scalar_lea.vmem %s3, 512
        %v6773 = vld [vmem:[%s6772] sm:$0xf]
        %v6774 = vld [vmem:[%s6772 + $0x4] sm:$0xf]
        %v6775 = vld [vmem:[%s6772 + $0x8] sm:$0xf]
        %v6776 = vld [vmem:[%s6772 + $0xc] sm:$0xf]
        %v6777 = vld [vmem:[%s6772 + $0x10] sm:$0xf]
        %v6778 = vld [vmem:[%s6772 + $0x14] sm:$0xf]
        %v6779 = vld [vmem:[%s6772 + $0x18] sm:$0xf]
        %v6780 = vld [vmem:[%s6772 + $0x1c] sm:$0xf]
        %v6781 = vld [vmem:[%s6772 + $0x20] sm:$0xf]
        %v6782 = vld [vmem:[%s6772 + $0x24] sm:$0xf]
        %v6783 = vld [vmem:[%s6772 + $0x28] sm:$0xf]
        %v6784 = vld [vmem:[%s6772 + $0x2c] sm:$0xf]
        %v6785 = vld [vmem:[%s6772 + $0x30] sm:$0xf]
        %v6786 = vld [vmem:[%s6772 + $0x34] sm:$0xf]
        %v6787 = vld [vmem:[%s6772 + $0x38] sm:$0xf]
        %v6788 = vld [vmem:[%s6772 + $0x3c] sm:$0xf]
        %v6789 = vunpack.c.l.b16 %v6663
        %v6790 = vunpack.c.l.b16 %v6666
        %v6791 = vunpack.c.l.b16 %v6670
        %v6792 = vunpack.c.l.b16 %v6673
        %v6793 = vunpack.c.l.b16 %v6677
        %v6794 = vunpack.c.l.b16 %v6680
        %v6795 = vunpack.c.l.b16 %v6684
        %v6796 = vunpack.c.l.b16 %v6687
        %v6797 = vunpack.c.l.b16 %v6691
        %v6798 = vunpack.c.l.b16 %v6694
        %v6799 = vunpack.c.l.b16 %v6698
        %v6800 = vunpack.c.l.b16 %v6701
        %v6801 = vunpack.c.l.b16 %v6705
        %v6802 = vunpack.c.l.b16 %v6708
        %v6803 = vunpack.c.l.b16 %v6712
        %v6804 = vunpack.c.l.b16 %v6715
        %v6805 = vunpack.c.l.b16 %v6719
        %v6806 = vunpack.c.l.b16 %v6722
        %v6807 = vunpack.c.l.b16 %v6726
        %v6808 = vunpack.c.l.b16 %v6729
        %v6809 = vunpack.c.l.b16 %v6733
        %v6810 = vunpack.c.l.b16 %v6736
        %v6811 = vunpack.c.l.b16 %v6740
        %v6812 = vunpack.c.l.b16 %v6743
        %v6813 = vunpack.c.l.b16 %v6747
        %v6814 = vunpack.c.l.b16 %v6750
        %v6815 = vunpack.c.l.b16 %v6754
        %v6816 = vunpack.c.l.b16 %v6757
        %v6817 = vunpack.c.l.b16 %v6761
        %v6818 = vunpack.c.l.b16 %v6764
        %v6819 = vunpack.c.l.b16 %v6768
        %v6820 = vunpack.c.l.b16 %v6771
        %v6821 = vpack.c.b16 %v6790, %v6789
        %v6822 = vpack.c.b16 %v6792, %v6791
        %v6823 = vpack.c.b16 %v6794, %v6793
        %v6824 = vpack.c.b16 %v6796, %v6795
        %v6825 = vpack.c.b16 %v6798, %v6797
        %v6826 = vpack.c.b16 %v6800, %v6799
        %v6827 = vpack.c.b16 %v6802, %v6801
        %v6828 = vpack.c.b16 %v6804, %v6803
        %v6829 = vpack.c.b16 %v6806, %v6805
        %v6830 = vpack.c.b16 %v6808, %v6807
        %v6831 = vpack.c.b16 %v6810, %v6809
        %v6832 = vpack.c.b16 %v6812, %v6811
        %v6833 = vpack.c.b16 %v6814, %v6813
        %v6834 = vpack.c.b16 %v6816, %v6815
        %v6835 = vpack.c.b16 %v6818, %v6817
        %v6836 = vpack.c.b16 %v6820, %v6819
        %v6869 = vunpack.c.l.b16 %v6773
        %v6870 = vunpack.c.l.b16 %v6774
        %v6871 = vunpack.c.l.b16 %v6775
        %v6872 = vunpack.c.l.b16 %v6776
        %v6873 = vunpack.c.l.b16 %v6777
        %v6874 = vunpack.c.l.b16 %v6778
        %v6875 = vunpack.c.l.b16 %v6779
        %v6876 = vunpack.c.l.b16 %v6780
        %v6877 = vunpack.c.l.b16 %v6781
        %v6878 = vunpack.c.l.b16 %v6782
        %v6879 = vunpack.c.l.b16 %v6783
        %v6880 = vunpack.c.l.b16 %v6784
        %v6881 = vunpack.c.l.b16 %v6785
        %v6882 = vunpack.c.l.b16 %v6786
        %v6883 = vunpack.c.l.b16 %v6787
        %v6884 = vunpack.c.l.b16 %v6788
        %v6885 = vpack.c.b16 %v6870, %v6869
        %v6886 = vpack.c.b16 %v6872, %v6871
        %v6887 = vpack.c.b16 %v6874, %v6873
        %v6888 = vpack.c.b16 %v6876, %v6875
        %v6889 = vpack.c.b16 %v6878, %v6877
        %v6890 = vpack.c.b16 %v6880, %v6879
        %v6891 = vpack.c.b16 %v6882, %v6881
        %v6892 = vpack.c.b16 %v6884, %v6883
        %6901 = vmatpush.bf16.msra.mxu0 %v6892
        %6902 = vmatpush.bf16.msra.mxu0 %v6891
        %6903 = vmatpush.bf16.msra.mxu0 %v6890
        %6904 = vmatpush.bf16.msra.mxu0 %v6889
        %6905 = vmatpush.bf16.msra.mxu0 %v6888
        %6906 = vmatpush.bf16.msra.mxu0 %v6887
        %6907 = vmatpush.bf16.msra.mxu0 %v6886
        %6908 = vmatpush.bf16.msra.mxu0 %v6885
        %6909 = vmatmul.bf16.gmra.mxu0 %v6821
        %v6910 = vpop.f32.mrf.mxu0
        %v6911 = vadd.f32 0.0, %v6910
        %v6912 = vpop.f32.mrf.mxu0
        %v6913 = vadd.f32 0.0, %v6912
        %6914 = vmatmul.bf16.gmra.mxu0 %v6822
        %v6915 = vpop.f32.mrf.mxu0
        %v6916 = vadd.f32 0.0, %v6915
        %v6917 = vpop.f32.mrf.mxu0
        %v6918 = vadd.f32 0.0, %v6917
        %6919 = vmatmul.bf16.gmra.mxu0 %v6823
        %v6920 = vpop.f32.mrf.mxu0
        %v6921 = vadd.f32 0.0, %v6920
        %v6922 = vpop.f32.mrf.mxu0
        %v6923 = vadd.f32 0.0, %v6922
        %6924 = vmatmul.bf16.gmra.mxu0 %v6824
        %v6925 = vpop.f32.mrf.mxu0
        %v6926 = vadd.f32 0.0, %v6925
        %v6927 = vpop.f32.mrf.mxu0
        %v6928 = vadd.f32 0.0, %v6927
        %6929 = vmatmul.bf16.gmra.mxu0 %v6825
        %v6930 = vpop.f32.mrf.mxu0
        %v6931 = vadd.f32 0.0, %v6930
        %v6932 = vpop.f32.mrf.mxu0
        %v6933 = vadd.f32 0.0, %v6932
        %6934 = vmatmul.bf16.gmra.mxu0 %v6826
        %v6935 = vpop.f32.mrf.mxu0
        %v6936 = vadd.f32 0.0, %v6935
        %v6937 = vpop.f32.mrf.mxu0
        %v6938 = vadd.f32 0.0, %v6937
        %6939 = vmatmul.bf16.gmra.mxu0 %v6827
        %v6940 = vpop.f32.mrf.mxu0
        %v6941 = vadd.f32 0.0, %v6940
        %v6942 = vpop.f32.mrf.mxu0
        %v6943 = vadd.f32 0.0, %v6942
        %6944 = vmatmul.bf16.gmra.mxu0 %v6828
        %v6945 = vpop.f32.mrf.mxu0
        %v6946 = vadd.f32 0.0, %v6945
        %v6947 = vpop.f32.mrf.mxu0
        %v6948 = vadd.f32 0.0, %v6947
        %6949 = vmatmul.bf16.gmra.mxu0 %v6829
        %v6950 = vpop.f32.mrf.mxu0
        %v6951 = vadd.f32 0.0, %v6950
        %v6952 = vpop.f32.mrf.mxu0
        %v6953 = vadd.f32 0.0, %v6952
        %6954 = vmatmul.bf16.gmra.mxu0 %v6830
        %v6955 = vpop.f32.mrf.mxu0
        %v6956 = vadd.f32 0.0, %v6955
        %v6957 = vpop.f32.mrf.mxu0
        %v6958 = vadd.f32 0.0, %v6957
        %6959 = vmatmul.bf16.gmra.mxu0 %v6831
        %v6960 = vpop.f32.mrf.mxu0
        %v6961 = vadd.f32 0.0, %v6960
        %v6962 = vpop.f32.mrf.mxu0
        %v6963 = vadd.f32 0.0, %v6962
        %6964 = vmatmul.bf16.gmra.mxu0 %v6832
        %v6965 = vpop.f32.mrf.mxu0
        %v6966 = vadd.f32 0.0, %v6965
        %v6967 = vpop.f32.mrf.mxu0
        %v6968 = vadd.f32 0.0, %v6967
        %6969 = vmatmul.bf16.gmra.mxu0 %v6833
        %v6970 = vpop.f32.mrf.mxu0
        %v6971 = vadd.f32 0.0, %v6970
        %v6972 = vpop.f32.mrf.mxu0
        %v6973 = vadd.f32 0.0, %v6972
        %6974 = vmatmul.bf16.gmra.mxu0 %v6834
        %v6975 = vpop.f32.mrf.mxu0
        %v6976 = vadd.f32 0.0, %v6975
        %v6977 = vpop.f32.mrf.mxu0
        %v6978 = vadd.f32 0.0, %v6977
        %6979 = vmatmul.bf16.gmra.mxu0 %v6835
        %v6980 = vpop.f32.mrf.mxu0
        %v6981 = vadd.f32 0.0, %v6980
        %v6982 = vpop.f32.mrf.mxu0
        %v6983 = vadd.f32 0.0, %v6982
        %6984 = vmatmul.bf16.gmra.mxu0 %v6836
        %v6985 = vpop.f32.mrf.mxu0
        %v6986 = vadd.f32 0.0, %v6985
        %v6987 = vpop.f32.mrf.mxu0
        %v6988 = vadd.f32 0.0, %v6987
        %6989 = vdwg.mxu0
        %v6990 = vadd.f32 %v6564, %v6911
        %v6991 = vadd.f32 %v6565, %v6913
        %v6992 = vadd.f32 %v6566, %v6916
        %v6993 = vadd.f32 %v6567, %v6918
        %v6994 = vadd.f32 %v6568, %v6921
        %v6995 = vadd.f32 %v6569, %v6923
        %v6996 = vadd.f32 %v6570, %v6926
        %v6997 = vadd.f32 %v6571, %v6928
        %v6998 = vadd.f32 %v6572, %v6931
        %v6999 = vadd.f32 %v6573, %v6933
        %v7000 = vadd.f32 %v6574, %v6936
        %v7001 = vadd.f32 %v6575, %v6938
        %v7002 = vadd.f32 %v6576, %v6941
        %v7003 = vadd.f32 %v6577, %v6943
        %v7004 = vadd.f32 %v6578, %v6946
        %v7005 = vadd.f32 %v6579, %v6948
        %v7006 = vadd.f32 %v6580, %v6951
        %v7007 = vadd.f32 %v6581, %v6953
        %v7008 = vadd.f32 %v6582, %v6956
        %v7009 = vadd.f32 %v6583, %v6958
        %v7010 = vadd.f32 %v6584, %v6961
        %v7011 = vadd.f32 %v6585, %v6963
        %v7012 = vadd.f32 %v6586, %v6966
        %v7013 = vadd.f32 %v6587, %v6968
        %v7014 = vadd.f32 %v6588, %v6971
        %v7015 = vadd.f32 %v6589, %v6973
        %v7016 = vadd.f32 %v6590, %v6976
        %v7017 = vadd.f32 %v6591, %v6978
        %v7018 = vadd.f32 %v6592, %v6981
        %v7019 = vadd.f32 %v6593, %v6983
        %v7020 = vadd.f32 %v6594, %v6986
        %v7021 = vadd.f32 %v6595, %v6988
        %v7022 = vld [vmem:[%s4] sm:$0x1]
        %v7024 = vperm.slane %v7022, 0
        %v7026 = vadd.f32 %v6990, %v7024
        %v7027 = vadd.f32 %v6991, %v7024
        %v7028 = vadd.f32 %v6992, %v7024
        %v7029 = vadd.f32 %v6993, %v7024
        %v7030 = vadd.f32 %v6994, %v7024
        %v7031 = vadd.f32 %v6995, %v7024
        %v7032 = vadd.f32 %v6996, %v7024
        %v7033 = vadd.f32 %v6997, %v7024
        %v7034 = vadd.f32 %v6998, %v7024
        %v7035 = vadd.f32 %v6999, %v7024
        %v7036 = vadd.f32 %v7000, %v7024
        %v7037 = vadd.f32 %v7001, %v7024
        %v7038 = vadd.f32 %v7002, %v7024
        %v7039 = vadd.f32 %v7003, %v7024
        %v7040 = vadd.f32 %v7004, %v7024
        %v7041 = vadd.f32 %v7005, %v7024
        %v7042 = vadd.f32 %v7006, %v7024
        %v7043 = vadd.f32 %v7007, %v7024
        %v7044 = vadd.f32 %v7008, %v7024
        %v7045 = vadd.f32 %v7009, %v7024
        %v7046 = vadd.f32 %v7010, %v7024
        %v7047 = vadd.f32 %v7011, %v7024
        %v7048 = vadd.f32 %v7012, %v7024
        %v7049 = vadd.f32 %v7013, %v7024
        %v7050 = vadd.f32 %v7014, %v7024
        %v7051 = vadd.f32 %v7015, %v7024
        %v7052 = vadd.f32 %v7016, %v7024
        %v7053 = vadd.f32 %v7017, %v7024
        %v7054 = vadd.f32 %v7018, %v7024
        %v7055 = vadd.f32 %v7019, %v7024
        %v7056 = vadd.f32 %v7020, %v7024
        %v7057 = vadd.f32 %v7021, %v7024
        %v7058 = vld [vmem:[%s861 + $0x1] sm:$0xff]
        %v7059 = vld [vmem:[%s861 + $0x9] sm:$0xff]
        %v7060 = vld [vmem:[%s861 + $0x19] sm:$0xff]
        %v7061 = vld [vmem:[%s861 + $0x21] sm:$0xff]
        %v7062 = vld [vmem:[%s861 + $0x31] sm:$0xff]
        %v7063 = vld [vmem:[%s861 + $0x39] sm:$0xff]
        %v7064 = vld [vmem:[%s861 + $0x49] sm:$0xff]
        %v7065 = vld [vmem:[%s861 + $0x51] sm:$0xff]
        %v7066 = vld [vmem:[%s861 + $0x61] sm:$0xff]
        %v7067 = vld [vmem:[%s861 + $0x69] sm:$0xff]
        %v7068 = vld [vmem:[%s861 + $0x79] sm:$0xff]
        %v7069 = vld [vmem:[%s861 + $0x81] sm:$0xff]
        %v7070 = vld [vmem:[%s861 + $0x91] sm:$0xff]
        %v7071 = vld [vmem:[%s861 + $0x99] sm:$0xff]
        %v7072 = vld [vmem:[%s861 + $0xa9] sm:$0xff]
        %v7073 = vld [vmem:[%s861 + $0xb1] sm:$0xff]
        %v7074 = vld [vmem:[%s861 + $0xc1] sm:$0xff]
        %v7075 = vld [vmem:[%s861 + $0xc9] sm:$0xff]
        %v7076 = vld [vmem:[%s861 + $0xd9] sm:$0xff]
        %v7077 = vld [vmem:[%s861 + $0xe1] sm:$0xff]
        %v7078 = vld [vmem:[%s861 + $0xf1] sm:$0xff]
        %v7079 = vld [vmem:[%s861 + $0xf9] sm:$0xff]
        %v7080 = vld [vmem:[%s861 + $0x109] sm:$0xff]
        %v7081 = vld [vmem:[%s861 + $0x111] sm:$0xff]
        %v7082 = vld [vmem:[%s861 + $0x121] sm:$0xff]
        %v7083 = vld [vmem:[%s861 + $0x129] sm:$0xff]
        %v7084 = vld [vmem:[%s861 + $0x139] sm:$0xff]
        %v7085 = vld [vmem:[%s861 + $0x141] sm:$0xff]
        %v7086 = vld [vmem:[%s861 + $0x151] sm:$0xff]
        %v7087 = vld [vmem:[%s861 + $0x159] sm:$0xff]
        %v7088 = vld [vmem:[%s861 + $0x169] sm:$0xff]
        %v7089 = vld [vmem:[%s861 + $0x171] sm:$0xff]
        %v7090 = vadd.f32 %v7026, %v7058
        %v7091 = vadd.f32 %v7027, %v7059
        %v7092 = vadd.f32 %v7028, %v7060
        %v7093 = vadd.f32 %v7029, %v7061
        %v7094 = vadd.f32 %v7030, %v7062
        %v7095 = vadd.f32 %v7031, %v7063
        %v7096 = vadd.f32 %v7032, %v7064
        %v7097 = vadd.f32 %v7033, %v7065
        %v7098 = vadd.f32 %v7034, %v7066
        %v7099 = vadd.f32 %v7035, %v7067
        %v7100 = vadd.f32 %v7036, %v7068
        %v7101 = vadd.f32 %v7037, %v7069
        %v7102 = vadd.f32 %v7038, %v7070
        %v7103 = vadd.f32 %v7039, %v7071
        %v7104 = vadd.f32 %v7040, %v7072
        %v7105 = vadd.f32 %v7041, %v7073
        %v7106 = vadd.f32 %v7042, %v7074
        %v7107 = vadd.f32 %v7043, %v7075
        %v7108 = vadd.f32 %v7044, %v7076
        %v7109 = vadd.f32 %v7045, %v7077
        %v7110 = vadd.f32 %v7046, %v7078
        %v7111 = vadd.f32 %v7047, %v7079
        %v7112 = vadd.f32 %v7048, %v7080
        %v7113 = vadd.f32 %v7049, %v7081
        %v7114 = vadd.f32 %v7050, %v7082
        %v7115 = vadd.f32 %v7051, %v7083
        %v7116 = vadd.f32 %v7052, %v7084
        %v7117 = vadd.f32 %v7053, %v7085
        %v7118 = vadd.f32 %v7054, %v7086
        %v7119 = vadd.f32 %v7055, %v7087
        %v7120 = vadd.f32 %v7056, %v7088
        %v7121 = vadd.f32 %v7057, %v7089
        %7122 = vst [vmem:[%s217] sm:$0xff] %v7090
        %7123 = vst [vmem:[%s217 + $0x8] sm:$0xff] %v7091
        %7124 = vst [vmem:[%s217 + $0x10] sm:$0xff] %v7092
        %7125 = vst [vmem:[%s217 + $0x18] sm:$0xff] %v7093
        %7126 = vst [vmem:[%s217 + $0x20] sm:$0xff] %v7094
        %7127 = vst [vmem:[%s217 + $0x28] sm:$0xff] %v7095
        %7128 = vst [vmem:[%s217 + $0x30] sm:$0xff] %v7096
        %7129 = vst [vmem:[%s217 + $0x38] sm:$0xff] %v7097
        %7130 = vst [vmem:[%s217 + $0x40] sm:$0xff] %v7098
        %7131 = vst [vmem:[%s217 + $0x48] sm:$0xff] %v7099
        %7132 = vst [vmem:[%s217 + $0x50] sm:$0xff] %v7100
        %7133 = vst [vmem:[%s217 + $0x58] sm:$0xff] %v7101
        %7134 = vst [vmem:[%s217 + $0x60] sm:$0xff] %v7102
        %7135 = vst [vmem:[%s217 + $0x68] sm:$0xff] %v7103
        %7136 = vst [vmem:[%s217 + $0x70] sm:$0xff] %v7104
        %7137 = vst [vmem:[%s217 + $0x78] sm:$0xff] %v7105
        %7138 = vst [vmem:[%s217 + $0x80] sm:$0xff] %v7106
        %7139 = vst [vmem:[%s217 + $0x88] sm:$0xff] %v7107
        %7140 = vst [vmem:[%s217 + $0x90] sm:$0xff] %v7108
        %7141 = vst [vmem:[%s217 + $0x98] sm:$0xff] %v7109
        %7142 = vst [vmem:[%s217 + $0xa0] sm:$0xff] %v7110
        %7143 = vst [vmem:[%s217 + $0xa8] sm:$0xff] %v7111
        %7144 = vst [vmem:[%s217 + $0xb0] sm:$0xff] %v7112
        %7145 = vst [vmem:[%s217 + $0xb8] sm:$0xff] %v7113
        %7146 = vst [vmem:[%s217 + $0xc0] sm:$0xff] %v7114
        %7147 = vst [vmem:[%s217 + $0xc8] sm:$0xff] %v7115
        %7148 = vst [vmem:[%s217 + $0xd0] sm:$0xff] %v7116
        %7149 = vst [vmem:[%s217 + $0xd8] sm:$0xff] %v7117
        %7150 = vst [vmem:[%s217 + $0xe0] sm:$0xff] %v7118
        %7151 = vst [vmem:[%s217 + $0xe8] sm:$0xff] %v7119
        %7152 = vst [vmem:[%s217 + $0xf0] sm:$0xff] %v7120
        %7153 = vst [vmem:[%s217 + $0xf8] sm:$0xff] %v7121
        %s7154 = sand.u32 %s137, 1
        %s7155 = scalar_lea.sflag [#allocation4], %s7154
        %s7156 = sand.u32 %s137, 1
        %s7157 = smul.addr %s7156, 256
        %s7158 = scalar_lea.vmem [#allocation3], %s7157
        // Predicated region
        $region41: #{tpu_custom_call.1} parent=39 // pred_check
          %p7159 = pneg %p147
        $region42: #{tpu_custom_call.1} parent=39 // pred_check_branch
          %7161 = sbr.rel (%p7159) target = $region44
        $region43: #{tpu_custom_call.1} parent=39 // pred_region
          %7163 = vsyncadd %s7155, 0
          %s7164 = smul.addr %s19, 32
          %s7165 = smul.addr %s7164, 8
          %s7166 = scalar_lea.hbm %s5, %s7165
          %s7167 = sshll.u32 %s7158, 4
          %s7168 = int_to_ptr.vmem [resolvable:$true] %s7167
          %s7169 = sshll.u32 %s7166, 4
          %s7170 = int_to_ptr.hbm [resolvable:$true] %s7169
          %7175 = dma.vmem_to_hbm [thread:$0]  %s7168, 4096, %s7170, %s7155, 128, 128, 8
        $region44: #{tpu_custom_call.1} parent=39 // pred_fallthru
          _
      $region40: #{tpu_custom_call.1} parent=5 // pred_fallthru
        _
      %p7176 = scmp.le.s32.totalorder 2, %s14
      // Predicated region
      $region45: #{tpu_custom_call.1} parent=5 // pred_check
        %p7177 = pneg %p7176
      $region46: #{tpu_custom_call.1} parent=5 // pred_check_branch
        %7179 = sbr.rel (%p7177) target = $region48
      $region47: #{tpu_custom_call.1} parent=5 // pred_region
        %s7180 = ssub.s32 %s14, 2
        // Predicated region
        $region49: #{tpu_custom_call.1} parent=47 // pred_check
          %p7181 = pneg %p153
        $region50: #{tpu_custom_call.1} parent=47 // pred_check_branch
          %7183 = sbr.rel (%p7181) target = $region52
        $region51: #{tpu_custom_call.1} parent=47 // pred_region
          %s7184 = sand.u32 %s138, 1
          %s7185 = scalar_lea.sflag [#allocation4], %s7184
          %s7186 = sand.u32 %s138, 1
          %s7187 = smul.addr %s7186, 256
          %s7188 = scalar_lea.vmem [#allocation3], %s7187
          %7190 = dma.done %s7185, 4096
        $region52: #{tpu_custom_call.1} parent=47 // pred_fallthru
          _
      $region48: #{tpu_custom_call.1} parent=5 // pred_fallthru
        _
    $region6: #{tpu_custom_call.1} parent=1 // loop_footer
      %s18 = sadd.s32 1, %s14
    $region7: #{tpu_custom_call.1} parent=1 // loop_footer_branch
      %13 = sbr.rel target = $region3
    $region8: #{tpu_custom_call.1} parent=1 // loop_exit
      _
    %7191 = vsyncpa [#allocation4], 1
    %s7192 = scalar_lea.sflag [#allocation4], 1
    %7193 = vsyncpa %s7192, 1

</llo_original>
